<compile_context>
chip_gen: v6e
topology: v6e:2x2x1
jax: 0.10.0
libtpu: 0.0.40
codegen_flags: <defaults>
</compile_context>

<pallas_src>
import functools

import numpy as np
import jax
import jax.numpy as jnp
from jax.experimental import pallas as pl
from jax.experimental.pallas import tpu as pltpu

NB_FILTER = [8, 16, 32]       # args.nb_filter  (nb_filter[0]*4 == nb_filter[2])
KSIZE, STRIDE, PAD = 3, 1, 1  # args.kernel_size / args.stride / args.pad
EPS = 1e-12                   # avoids 0/0 in the l1-norm fusion weights


def _round_up(n, m):
    return ((n + m - 1) // m) * m


# ---------------- capability probes (pltpu.roll support / VMEM size) ----------

_ROLL_OK = None


def _roll_supported():
    """True iff pltpu.roll compiles, runs and matches np.roll on this backend."""
    global _ROLL_OK
    if _ROLL_OK is None:
        try:
            x = np.arange(8 * 128, dtype=np.float32).reshape(8, 128)

            def _probe(x_ref, o_ref):
                o_ref[...] = pltpu.roll(x_ref[...], shift=5, axis=1)

            y = pl.pallas_call(
                _probe,
                out_shape=jax.ShapeDtypeStruct((8, 128), jnp.float32),
                in_specs=[pl.BlockSpec(memory_space=pltpu.MemorySpace.VMEM)],
                out_specs=pl.BlockSpec(memory_space=pltpu.MemorySpace.VMEM),
            )(jnp.asarray(x))
            y = np.asarray(jax.block_until_ready(y))
            _ROLL_OK = bool(np.array_equal(y, np.roll(x, 5, axis=1)))
        except Exception:
            _ROLL_OK = False
    return _ROLL_OK


_VMEM_LIMIT = None


def _vmem_limit_bytes():
    """Per-generation VMEM budget: ~96 MiB on v5e/v6e, ~48 MiB on v7x; 32 MiB
    conservative fallback when no TPU is attached (interpret mode)."""
    global _VMEM_LIMIT
    if _VMEM_LIMIT is None:
        try:
            info = pltpu.get_tpu_info()
            cap = int(getattr(info, "vmem_capacity_bytes", 128 * 1024 * 1024))
            _VMEM_LIMIT = min(cap * 3 // 4, 100 * 1024 * 1024)
        except Exception:
            _VMEM_LIMIT = 32 * 1024 * 1024
    return _VMEM_LIMIT


# ----------------------------- fused Pallas kernel ---------------------------

def _gen_net_kernel(xc_ref, mask_ref,
                    we1_ref, be1_ref, we2_ref, be2_ref,
                    wpre_ref, bpre_ref, wrc_ref, brc_ref, wpost_ref, bpost_ref,
                    wd1_ref, bd1_ref, wd2_ref, bd2_ref, wd3_ref, bd3_ref,
                    wd4_ref, bd4_ref,
                    o_ref, *, wp, width, guard, p_img, use_roll):
    """Whole GenerativeNet forward.  Lanes of every encoder/res2net activation
    hold BOTH images side by side: [img-1 flat-padded pixels | img-2 ...]."""
    mask2 = mask_ref[...]                    # (1, 2P): 1.0 on interior pixels
    mask1 = mask2[:, :p_img]                 # (1, P): single-image interior mask
    deltas = [(kh - 1) * wp + (kw - 1) for kh in range(3) for kw in range(3)]

    def mm(w_ref, x_cols, b_ref, mask, relu=True):
        # ONE MXU matmul per conv: (Cout, K) @ (K, N), f32 in / f32 accumulate.
        acc = jnp.dot(w_ref[...], x_cols, preferred_element_type=jnp.float32)
        acc = acc + b_ref[...]
        if relu:
            acc = jnp.maximum(acc, 0.0)
        if mask is not None:
            acc = acc * mask                 # re-zero padding ring (and lane tail)
        return acc

    def im2col(x):
        # x: (Cin, N) f32 with zero ring/tail -> (9*Cin, N) tap-shifted slab.
        n = x.shape[1]
        if use_roll:
            # XLU lane rotation; wrap only pollutes the masked ring/tail pixels.
            cols = [x if d == 0 else pltpu.roll(x, shift=(-d) % n, axis=1)
                    for d in deltas]
        else:
            # Fallback: 128-aligned zero-guard concat + static lane slices.
            zg = jnp.zeros((x.shape[0], guard), x.dtype)
            xg = jnp.concatenate([zg, x, zg], axis=1)
            cols = [xg[:, guard + d: guard + d + n] for d in deltas]
        return jnp.concatenate(cols, axis=0)             # sublane-aligned stack

    def conv3(x, w_ref, b_ref, mask, relu=True):
        return mm(w_ref, im2col(x), b_ref, mask, relu)

    def conv1(x, w_ref, b_ref, mask):                    # 1x1 conv
        return mm(w_ref, x, b_ref, mask, True)

    # ---- shared encoder, both images at once (lane-concatenated) ----
    c = mm(we1_ref, xc_ref[...], be1_ref, mask2, True)   # 1  -> 16 (im2col given)
    c = conv3(c, we2_ref, be2_ref, mask2)                # 16 -> 32

    # ---- res2net path (1x1 -> Res2NetBlock -> 1x1), still both images ----
    a = conv1(c, wpre_ref, bpre_ref, mask2)              # 32 -> 32
    spx = [a[i * width:(i + 1) * width, :] for i in range(4)]
    outs = [spx[0]]                                      # stage 0: passthrough
    y = None
    for i in range(1, 4):
        xi = spx[i] if i == 1 else y + spx[i]
        y = conv3(xi, wrc_ref, brc_ref, mask2)           # shared ConvLayer,
        y = conv3(y, wrc_ref, brc_ref, mask2)            # applied twice
        outs.append(y)
    a = jnp.concatenate(outs, axis=0)                    # (32, 2P)
    r = conv1(a, wpost_ref, bpost_ref, mask2)            # 32 -> 32

    # ---- split per-image halves; 'l1-norm' fusion (exact weights) ----
    en = c + r                                           # (32, 2P)
    en1 = en[:, :p_img]                                  # 128-aligned lane slices
    en2 = en[:, p_img:]
    s1 = jnp.sum(jnp.abs(en1), axis=0, keepdims=True)    # (1, P) sublane reduce
    s2 = jnp.sum(jnp.abs(en2), axis=0, keepdims=True)
    # exact s1/(s1+s2), s2/(s1+s2); EPS only avoids the reference's 0/0 NaN
    f = (s1 * en1 + s2 * en2) / (s1 + s2 + EPS)

    # ---- decoder (single image width) ----
    d = conv3(f, wd1_ref, bd1_ref, mask1)                # 32 -> 32
    d = conv3(d, wd2_ref, bd2_ref, mask1)                # 32 -> 16
    d = conv3(d, wd3_ref, bd3_ref, mask1)                # 16 -> 8
    d = conv3(d, wd4_ref, bd4_ref, None, relu=False)     # 8 -> 1, is_last (no ReLU)
    o_ref[...] = d


# ------------------------------- wrappers -------------------------------------

def _prep_w3(w):   # (3,3,Cin,Cout) -> (Cout, 9*Cin) f32, tap-major/channel-minor
    kh, kw, cin, cout = w.shape
    return jnp.transpose(w, (3, 0, 1, 2)).reshape(cout, kh * kw * cin).astype(jnp.float32)


def _prep_w1(w):   # (1,1,Cin,Cout) -> (Cout, Cin) f32
    return jnp.transpose(w[0, 0], (1, 0)).astype(jnp.float32)


def _prep_b(b):    # (Cout,) -> (Cout, 1) f32 (lane-broadcast inside the kernel)
    return b.reshape(-1, 1).astype(jnp.float32)


def _input_cols(img_hw, hp, wp, p):
    """First-layer (Cin=1) im2col: (9, P); row t holds the tap-(kh,kw) shifted
    padded-flat image.  Done once in XLA on the tiny 1-channel input."""
    flat = jnp.pad(img_hw, ((PAD, PAD), (PAD, PAD))).reshape(hp * wp)
    cols = []
    for kh in range(3):
        for kw in range(3):
            d = (kh - 1) * wp + (kw - 1)
            cols.append(jnp.roll(flat, -d))     # wrap only pollutes masked ring
    xc = jnp.stack(cols, axis=0)
    return jnp.pad(xc, ((0, 0), (0, p - hp * wp)))


def _interior_mask(h, w, hp, wp, p):
    m = np.zeros((hp, wp), np.float32)
    m[PAD:h + PAD, PAD:w + PAD] = 1.0
    m = np.pad(m.reshape(-1), (0, p - hp * wp))
    return jnp.asarray(m.reshape(1, p))


def generative_net(x1_nchw, x2_nchw, params):
    n, cin, h, w = x1_nchw.shape
    assert n == 1 and cin == 1, "reference l1-norm fusion only supports N=1, 1-channel input"
    hp, wp = h + 2 * PAD, w + 2 * PAD
    p = _round_up(hp * wp, 128)
    guard = _round_up(wp + 1, 128)

    # Lane-concatenate both images: [image-1 | image-2] along the pixel axis.
    xc = jnp.concatenate([_input_cols(x1_nchw[0, 0], hp, wp, p),
                          _input_cols(x2_nchw[0, 0], hp, wp, p)], axis=1)
    mask1 = _interior_mask(h, w, hp, wp, p)
    mask2 = jnp.concatenate([mask1, mask1], axis=1)

    wl = []
    for name in ("enc1", "enc2"):
        wt, bt = params[name]
        wl += [_prep_w3(wt), _prep_b(bt)]
    wt, bt = params["r2n_pre"];  wl += [_prep_w1(wt), _prep_b(bt)]
    wt, bt = params["r2n_conv"]; wl += [_prep_w3(wt), _prep_b(bt)]
    wt, bt = params["r2n_post"]; wl += [_prep_w1(wt), _prep_b(bt)]
    for name in ("dec1", "dec2", "dec3", "dec4"):
        wt, bt = params[name]
        wl += [_prep_w3(wt), _prep_b(bt)]

    kern = functools.partial(_gen_net_kernel, wp=wp, width=NB_FILTER[2] // 4,
                             guard=guard, p_img=p, use_roll=_roll_supported())
    out_flat = pl.pallas_call(
        kern,
        out_shape=jax.ShapeDtypeStruct((1, p), jnp.float32),
        in_specs=[pl.BlockSpec(memory_space=pltpu.MemorySpace.VMEM)] * (2 + len(wl)),
        out_specs=pl.BlockSpec(memory_space=pltpu.MemorySpace.VMEM),
        compiler_params=pltpu.CompilerParams(vmem_limit_bytes=_vmem_limit_bytes()),
    )(xc, mask2, *wl)

    out = out_flat[0, :hp * wp].reshape(hp, wp)[PAD:h + PAD, PAD:w + PAD]
    return out[None, None]                      # back to NCHW: (1, 1, H, W)


# ------------------------------- params ---------------------------------------

def init_params(key):
    def conv_init(k, kh, kw, cin, cout):
        k1, k2 = jax.random.split(k)
        fan_in = kh * kw * cin
        wgt = jax.random.normal(k1, (kh, kw, cin, cout), jnp.float32) / jnp.sqrt(fan_in)
        b = 0.01 * jax.random.normal(k2, (cout,), jnp.float32)
        return wgt, b

    c0, c1, c2 = NB_FILTER
    width = c2 // 4
    keys = jax.random.split(key, 9)
    return {
        "enc1":     conv_init(keys[0], KSIZE, KSIZE, 1, c1),
        "enc2":     conv_init(keys[1], KSIZE, KSIZE, c1, c2),
        "r2n_pre":  conv_init(keys[2], 1, 1, c2, c2),
        "r2n_conv": conv_init(keys[3], KSIZE, KSIZE, width, width),  # shared conv
        "r2n_post": conv_init(keys[4], 1, 1, c2, c2),
        "dec1":     conv_init(keys[5], KSIZE, KSIZE, c0 * 4, c2),
        "dec2":     conv_init(keys[6], KSIZE, KSIZE, c2, c1),
        "dec3":     conv_init(keys[7], KSIZE, KSIZE, c1, c0),
        "dec4":     conv_init(keys[8], KSIZE, KSIZE, c0, 1),
    }


if __name__ == "__main__":
    key = jax.random.PRNGKey(0)
    kx1, kx2, kp = jax.random.split(key, 3)
    H = W = 16
    x1 = jax.random.uniform(kx1, (1, 1, H, W), jnp.float32)
    x2 = jax.random.uniform(kx2, (1, 1, H, W), jnp.float32)
    params = init_params(kp)

    _roll_supported()          # run the capability probe once, outside jit tracing
    _vmem_limit_bytes()

    fwd = jax.jit(generative_net)
    out = fwd(x1, x2, params)
    jax.block_until_ready(out)
    assert out.shape == (1, 1, H, W) and out.dtype == jnp.float32
    assert bool(jnp.all(jnp.isfinite(out)))
    print("KERNEL_OK")
</pallas_src>

<mosaic_0001>
module attributes {stable_mosaic.version = 11 : i64} {
  func.func @_probe(%arg0: memref<8x128xf32, #tpu.memory_space<vmem>>, %arg1: memref<8x128xf32, #tpu.memory_space<vmem>>) attributes {dimension_semantics = [], scalar_prefetch = 0 : i64, scratch_operands = 0 : i64, tpu.core_type = #tpu.core_type<tc>} {
    %c0 = arith.constant 0 : index
    %c0_0 = arith.constant 0 : index
    %0 = vector.load %arg0[%c0, %c0_0] : memref<8x128xf32, #tpu.memory_space<vmem>>, vector<8x128xf32>
    %c5_i32 = arith.constant 5 : i32
    %1 = tpu.dynamic_rotate %0 by %c5_i32 dim 1 : vector<8x128xf32>, i32 -> vector<8x128xf32>
    %c0_1 = arith.constant 0 : index
    %c0_2 = arith.constant 0 : index
    %2 = vector.load %arg1[%c0_1, %c0_2] : memref<8x128xf32, #tpu.memory_space<vmem>>, vector<8x128xf32>
    tpu.vector_store %arg1[%c0_1, %c0_2], %1 {strides = array<i32>} : memref<8x128xf32, #tpu.memory_space<vmem>>, vector<8x128xf32>,
    return
  }
}

module attributes {stable_mosaic.version = 11 : i64} {
  func.func @_gen_net_kernel(%arg0: memref<9x768xf32, #tpu.memory_space<vmem>>, %arg1: memref<1x768xf32, #tpu.memory_space<vmem>>, %arg2: memref<16x9xf32, #tpu.memory_space<vmem>>, %arg3: memref<16x1xf32, #tpu.memory_space<vmem>>, %arg4: memref<32x144xf32, #tpu.memory_space<vmem>>, %arg5: memref<32x1xf32, #tpu.memory_space<vmem>>, %arg6: memref<32x32xf32, #tpu.memory_space<vmem>>, %arg7: memref<32x1xf32, #tpu.memory_space<vmem>>, %arg8: memref<8x72xf32, #tpu.memory_space<vmem>>, %arg9: memref<8x1xf32, #tpu.memory_space<vmem>>, %arg10: memref<32x32xf32, #tpu.memory_space<vmem>>, %arg11: memref<32x1xf32, #tpu.memory_space<vmem>>, %arg12: memref<32x288xf32, #tpu.memory_space<vmem>>, %arg13: memref<32x1xf32, #tpu.memory_space<vmem>>, %arg14: memref<16x288xf32, #tpu.memory_space<vmem>>, %arg15: memref<16x1xf32, #tpu.memory_space<vmem>>, %arg16: memref<8x144xf32, #tpu.memory_space<vmem>>, %arg17: memref<8x1xf32, #tpu.memory_space<vmem>>, %arg18: memref<1x72xf32, #tpu.memory_space<vmem>>, %arg19: memref<1x1xf32, #tpu.memory_space<vmem>>, %arg20: memref<1x384xf32, #tpu.memory_space<vmem>>) attributes {dimension_semantics = [], scalar_prefetch = 0 : i64, scratch_operands = 0 : i64, tpu.core_type = #tpu.core_type<tc>} {
    %c0 = arith.constant 0 : index
    %c0_0 = arith.constant 0 : index
    %0 = vector.load %arg1[%c0, %c0_0] : memref<1x768xf32, #tpu.memory_space<vmem>>, vector<1x768xf32>
    %1 = vector.extract_strided_slice %0 {offsets = [0, 0], sizes = [1, 384], strides = [1, 1]} : vector<1x768xf32> to vector<1x384xf32>
    %c0_1 = arith.constant 0 : index
    %c0_2 = arith.constant 0 : index
    %2 = vector.load %arg0[%c0_1, %c0_2] : memref<9x768xf32, #tpu.memory_space<vmem>>, vector<9x768xf32>
    %c0_3 = arith.constant 0 : index
    %c0_4 = arith.constant 0 : index
    %3 = vector.load %arg2[%c0_3, %c0_4] : memref<16x9xf32, #tpu.memory_space<vmem>>, vector<16x9xf32>
    %cst = arith.constant dense<0.000000e+00> : vector<16x768xf32>
    %4 = tpu.matmul %3, %2, %cst {dimension_numbers = #tpu.dot_dimension_numbers<[1], [0], [0], [1], [0, 0, 1, 1], [], []>} : vector<16x9xf32>, vector<9x768xf32>, vector<16x768xf32> -> vector<16x768xf32>
    %c0_5 = arith.constant 0 : index
    %c0_6 = arith.constant 0 : index
    %5 = vector.load %arg3[%c0_5, %c0_6] : memref<16x1xf32, #tpu.memory_space<vmem>>, vector<16x1xf32>
    %6 = vector.broadcast %5 : vector<16x1xf32> to vector<16x768xf32>
    %7 = arith.addf %4, %6 : vector<16x768xf32>
    %cst_7 = arith.constant 0.000000e+00 : f32
    %8 = vector.broadcast %cst_7 : f32 to vector<16x768xf32>
    %9 = arith.maximumf %7, %8 : vector<16x768xf32>
    %10 = vector.broadcast %0 : vector<1x768xf32> to vector<16x768xf32>
    %11 = arith.mulf %9, %10 : vector<16x768xf32>
    %cst_8 = arith.constant 0.000000e+00 : f32
    %12 = vector.broadcast %cst_8 : f32 to vector<16x128xf32>
    %13 = tpu.concatenate %12, %11, %12 in 1 : vector<16x128xf32>, vector<16x768xf32>, vector<16x128xf32> -> vector<16x1024xf32>
    %14 = vector.extract_strided_slice %13 {offsets = [0, 109], sizes = [16, 768], strides = [1, 1]} : vector<16x1024xf32> to vector<16x768xf32>
    %15 = vector.extract_strided_slice %13 {offsets = [0, 110], sizes = [16, 768], strides = [1, 1]} : vector<16x1024xf32> to vector<16x768xf32>
    %16 = vector.extract_strided_slice %13 {offsets = [0, 111], sizes = [16, 768], strides = [1, 1]} : vector<16x1024xf32> to vector<16x768xf32>
    %17 = vector.extract_strided_slice %13 {offsets = [0, 127], sizes = [16, 768], strides = [1, 1]} : vector<16x1024xf32> to vector<16x768xf32>
    %18 = vector.extract_strided_slice %13 {offsets = [0, 128], sizes = [16, 768], strides = [1, 1]} : vector<16x1024xf32> to vector<16x768xf32>
    %19 = vector.extract_strided_slice %13 {offsets = [0, 129], sizes = [16, 768], strides = [1, 1]} : vector<16x1024xf32> to vector<16x768xf32>
    %20 = vector.extract_strided_slice %13 {offsets = [0, 145], sizes = [16, 768], strides = [1, 1]} : vector<16x1024xf32> to vector<16x768xf32>
    %21 = vector.extract_strided_slice %13 {offsets = [0, 146], sizes = [16, 768], strides = [1, 1]} : vector<16x1024xf32> to vector<16x768xf32>
    %22 = vector.extract_strided_slice %13 {offsets = [0, 147], sizes = [16, 768], strides = [1, 1]} : vector<16x1024xf32> to vector<16x768xf32>
    %23 = tpu.concatenate %14, %15, %16, %17, %18, %19, %20, %21, %22 in 0 : vector<16x768xf32>, vector<16x768xf32>, vector<16x768xf32>, vector<16x768xf32>, vector<16x768xf32>, vector<16x768xf32>, vector<16x768xf32>, vector<16x768xf32>, vector<16x768xf32> -> vector<144x768xf32>
    %c0_9 = arith.constant 0 : index
    %c0_10 = arith.constant 0 : index
    %24 = vector.load %arg4[%c0_9, %c0_10] : memref<32x144xf32, #tpu.memory_space<vmem>>, vector<32x144xf32>
    %cst_11 = arith.constant dense<0.000000e+00> : vector<32x768xf32>
    %25 = tpu.matmul %24, %23, %cst_11 {dimension_numbers = #tpu.dot_dimension_numbers<[1], [0], [0], [1], [0, 0, 1, 1], [], []>} : vector<32x144xf32>, vector<144x768xf32>, vector<32x768xf32> -> vector<32x768xf32>
    %c0_12 = arith.constant 0 : index
    %c0_13 = arith.constant 0 : index
    %26 = vector.load %arg5[%c0_12, %c0_13] : memref<32x1xf32, #tpu.memory_space<vmem>>, vector<32x1xf32>
    %27 = vector.broadcast %26 : vector<32x1xf32> to vector<32x768xf32>
    %28 = arith.addf %25, %27 : vector<32x768xf32>
    %cst_14 = arith.constant 0.000000e+00 : f32
    %29 = vector.broadcast %cst_14 : f32 to vector<32x768xf32>
    %30 = arith.maximumf %28, %29 : vector<32x768xf32>
    %31 = vector.broadcast %0 : vector<1x768xf32> to vector<32x768xf32>
    %32 = arith.mulf %30, %31 : vector<32x768xf32>
    %c0_15 = arith.constant 0 : index
    %c0_16 = arith.constant 0 : index
    %33 = vector.load %arg6[%c0_15, %c0_16] : memref<32x32xf32, #tpu.memory_space<vmem>>, vector<32x32xf32>
    %cst_17 = arith.constant dense<0.000000e+00> : vector<32x768xf32>
    %34 = tpu.matmul %33, %32, %cst_17 {dimension_numbers = #tpu.dot_dimension_numbers<[1], [0], [0], [1], [0, 0, 1, 1], [], []>} : vector<32x32xf32>, vector<32x768xf32>, vector<32x768xf32> -> vector<32x768xf32>
    %c0_18 = arith.constant 0 : index
    %c0_19 = arith.constant 0 : index
    %35 = vector.load %arg7[%c0_18, %c0_19] : memref<32x1xf32, #tpu.memory_space<vmem>>, vector<32x1xf32>
    %36 = vector.broadcast %35 : vector<32x1xf32> to vector<32x768xf32>
    %37 = arith.addf %34, %36 : vector<32x768xf32>
    %cst_20 = arith.constant 0.000000e+00 : f32
    %38 = vector.broadcast %cst_20 : f32 to vector<32x768xf32>
    %39 = arith.maximumf %37, %38 : vector<32x768xf32>
    %40 = vector.broadcast %0 : vector<1x768xf32> to vector<32x768xf32>
    %41 = arith.mulf %39, %40 : vector<32x768xf32>
    %42 = vector.extract_strided_slice %41 {offsets = [0, 0], sizes = [8, 768], strides = [1, 1]} : vector<32x768xf32> to vector<8x768xf32>
    %43 = vector.extract_strided_slice %41 {offsets = [8, 0], sizes = [8, 768], strides = [1, 1]} : vector<32x768xf32> to vector<8x768xf32>
    %44 = vector.extract_strided_slice %41 {offsets = [16, 0], sizes = [8, 768], strides = [1, 1]} : vector<32x768xf32> to vector<8x768xf32>
    %45 = vector.extract_strided_slice %41 {offsets = [24, 0], sizes = [8, 768], strides = [1, 1]} : vector<32x768xf32> to vector<8x768xf32>
    %cst_21 = arith.constant 0.000000e+00 : f32
    %46 = vector.broadcast %cst_21 : f32 to vector<8x128xf32>
    %47 = tpu.concatenate %46, %43, %46 in 1 : vector<8x128xf32>, vector<8x768xf32>, vector<8x128xf32> -> vector<8x1024xf32>
    %48 = vector.extract_strided_slice %47 {offsets = [0, 109], sizes = [8, 768], strides = [1, 1]} : vector<8x1024xf32> to vector<8x768xf32>
    %49 = vector.extract_strided_slice %47 {offsets = [0, 110], sizes = [8, 768], strides = [1, 1]} : vector<8x1024xf32> to vector<8x768xf32>
    %50 = vector.extract_strided_slice %47 {offsets = [0, 111], sizes = [8, 768], strides = [1, 1]} : vector<8x1024xf32> to vector<8x768xf32>
    %51 = vector.extract_strided_slice %47 {offsets = [0, 127], sizes = [8, 768], strides = [1, 1]} : vector<8x1024xf32> to vector<8x768xf32>
    %52 = vector.extract_strided_slice %47 {offsets = [0, 128], sizes = [8, 768], strides = [1, 1]} : vector<8x1024xf32> to vector<8x768xf32>
    %53 = vector.extract_strided_slice %47 {offsets = [0, 129], sizes = [8, 768], strides = [1, 1]} : vector<8x1024xf32> to vector<8x768xf32>
    %54 = vector.extract_strided_slice %47 {offsets = [0, 145], sizes = [8, 768], strides = [1, 1]} : vector<8x1024xf32> to vector<8x768xf32>
    %55 = vector.extract_strided_slice %47 {offsets = [0, 146], sizes = [8, 768], strides = [1, 1]} : vector<8x1024xf32> to vector<8x768xf32>
    %56 = vector.extract_strided_slice %47 {offsets = [0, 147], sizes = [8, 768], strides = [1, 1]} : vector<8x1024xf32> to vector<8x768xf32>
    %57 = tpu.concatenate %48, %49, %50, %51, %52, %53, %54, %55, %56 in 0 : vector<8x768xf32>, vector<8x768xf32>, vector<8x768xf32>, vector<8x768xf32>, vector<8x768xf32>, vector<8x768xf32>, vector<8x768xf32>, vector<8x768xf32>, vector<8x768xf32> -> vector<72x768xf32>
    %c0_22 = arith.constant 0 : index
    %c0_23 = arith.constant 0 : index
    %58 = vector.load %arg8[%c0_22, %c0_23] : memref<8x72xf32, #tpu.memory_space<vmem>>, vector<8x72xf32>
    %cst_24 = arith.constant dense<0.000000e+00> : vector<8x768xf32>
    %59 = tpu.matmul %58, %57, %cst_24 {dimension_numbers = #tpu.dot_dimension_numbers<[1], [0], [0], [1], [0, 0, 1, 1], [], []>} : vector<8x72xf32>, vector<72x768xf32>, vector<8x768xf32> -> vector<8x768xf32>
    %c0_25 = arith.constant 0 : index
    %c0_26 = arith.constant 0 : index
    %60 = vector.load %arg9[%c0_25, %c0_26] : memref<8x1xf32, #tpu.memory_space<vmem>>, vector<8x1xf32>
    %61 = vector.broadcast %60 : vector<8x1xf32> to vector<8x768xf32>
    %62 = arith.addf %59, %61 : vector<8x768xf32>
    %cst_27 = arith.constant 0.000000e+00 : f32
    %63 = vector.broadcast %cst_27 : f32 to vector<8x768xf32>
    %64 = arith.maximumf %62, %63 : vector<8x768xf32>
    %65 = vector.broadcast %0 : vector<1x768xf32> to vector<8x768xf32>
    %66 = arith.mulf %64, %65 : vector<8x768xf32>
    %cst_28 = arith.constant 0.000000e+00 : f32
    %67 = vector.broadcast %cst_28 : f32 to vector<8x128xf32>
    %68 = tpu.concatenate %67, %66, %67 in 1 : vector<8x128xf32>, vector<8x768xf32>, vector<8x128xf32> -> vector<8x1024xf32>
    %69 = vector.extract_strided_slice %68 {offsets = [0, 109], sizes = [8, 768], strides = [1, 1]} : vector<8x1024xf32> to vector<8x768xf32>
    %70 = vector.extract_strided_slice %68 {offsets = [0, 110], sizes = [8, 768], strides = [1, 1]} : vector<8x1024xf32> to vector<8x768xf32>
    %71 = vector.extract_strided_slice %68 {offsets = [0, 111], sizes = [8, 768], strides = [1, 1]} : vector<8x1024xf32> to vector<8x768xf32>
    %72 = vector.extract_strided_slice %68 {offsets = [0, 127], sizes = [8, 768], strides = [1, 1]} : vector<8x1024xf32> to vector<8x768xf32>
    %73 = vector.extract_strided_slice %68 {offsets = [0, 128], sizes = [8, 768], strides = [1, 1]} : vector<8x1024xf32> to vector<8x768xf32>
    %74 = vector.extract_strided_slice %68 {offsets = [0, 129], sizes = [8, 768], strides = [1, 1]} : vector<8x1024xf32> to vector<8x768xf32>
    %75 = vector.extract_strided_slice %68 {offsets = [0, 145], sizes = [8, 768], strides = [1, 1]} : vector<8x1024xf32> to vector<8x768xf32>
    %76 = vector.extract_strided_slice %68 {offsets = [0, 146], sizes = [8, 768], strides = [1, 1]} : vector<8x1024xf32> to vector<8x768xf32>
    %77 = vector.extract_strided_slice %68 {offsets = [0, 147], sizes = [8, 768], strides = [1, 1]} : vector<8x1024xf32> to vector<8x768xf32>
    %78 = tpu.concatenate %69, %70, %71, %72, %73, %74, %75, %76, %77 in 0 : vector<8x768xf32>, vector<8x768xf32>, vector<8x768xf32>, vector<8x768xf32>, vector<8x768xf32>, vector<8x768xf32>, vector<8x768xf32>, vector<8x768xf32>, vector<8x768xf32> -> vector<72x768xf32>
    %c0_29 = arith.constant 0 : index
    %c0_30 = arith.constant 0 : index
    %79 = vector.load %arg8[%c0_29, %c0_30] : memref<8x72xf32, #tpu.memory_space<vmem>>, vector<8x72xf32>
    %cst_31 = arith.constant dense<0.000000e+00> : vector<8x768xf32>
    %80 = tpu.matmul %79, %78, %cst_31 {dimension_numbers = #tpu.dot_dimension_numbers<[1], [0], [0], [1], [0, 0, 1, 1], [], []>} : vector<8x72xf32>, vector<72x768xf32>, vector<8x768xf32> -> vector<8x768xf32>
    %c0_32 = arith.constant 0 : index
    %c0_33 = arith.constant 0 : index
    %81 = vector.load %arg9[%c0_32, %c0_33] : memref<8x1xf32, #tpu.memory_space<vmem>>, vector<8x1xf32>
    %82 = vector.broadcast %81 : vector<8x1xf32> to vector<8x768xf32>
    %83 = arith.addf %80, %82 : vector<8x768xf32>
    %cst_34 = arith.constant 0.000000e+00 : f32
    %84 = vector.broadcast %cst_34 : f32 to vector<8x768xf32>
    %85 = arith.maximumf %83, %84 : vector<8x768xf32>
    %86 = vector.broadcast %0 : vector<1x768xf32> to vector<8x768xf32>
    %87 = arith.mulf %85, %86 : vector<8x768xf32>
    %88 = arith.addf %87, %44 : vector<8x768xf32>
    %cst_35 = arith.constant 0.000000e+00 : f32
    %89 = vector.broadcast %cst_35 : f32 to vector<8x128xf32>
    %90 = tpu.concatenate %89, %88, %89 in 1 : vector<8x128xf32>, vector<8x768xf32>, vector<8x128xf32> -> vector<8x1024xf32>
    %91 = vector.extract_strided_slice %90 {offsets = [0, 109], sizes = [8, 768], strides = [1, 1]} : vector<8x1024xf32> to vector<8x768xf32>
    %92 = vector.extract_strided_slice %90 {offsets = [0, 110], sizes = [8, 768], strides = [1, 1]} : vector<8x1024xf32> to vector<8x768xf32>
    %93 = vector.extract_strided_slice %90 {offsets = [0, 111], sizes = [8, 768], strides = [1, 1]} : vector<8x1024xf32> to vector<8x768xf32>
    %94 = vector.extract_strided_slice %90 {offsets = [0, 127], sizes = [8, 768], strides = [1, 1]} : vector<8x1024xf32> to vector<8x768xf32>
    %95 = vector.extract_strided_slice %90 {offsets = [0, 128], sizes = [8, 768], strides = [1, 1]} : vector<8x1024xf32> to vector<8x768xf32>
    %96 = vector.extract_strided_slice %90 {offsets = [0, 129], sizes = [8, 768], strides = [1, 1]} : vector<8x1024xf32> to vector<8x768xf32>
    %97 = vector.extract_strided_slice %90 {offsets = [0, 145], sizes = [8, 768], strides = [1, 1]} : vector<8x1024xf32> to vector<8x768xf32>
    %98 = vector.extract_strided_slice %90 {offsets = [0, 146], sizes = [8, 768], strides = [1, 1]} : vector<8x1024xf32> to vector<8x768xf32>
    %99 = vector.extract_strided_slice %90 {offsets = [0, 147], sizes = [8, 768], strides = [1, 1]} : vector<8x1024xf32> to vector<8x768xf32>
    %100 = tpu.concatenate %91, %92, %93, %94, %95, %96, %97, %98, %99 in 0 : vector<8x768xf32>, vector<8x768xf32>, vector<8x768xf32>, vector<8x768xf32>, vector<8x768xf32>, vector<8x768xf32>, vector<8x768xf32>, vector<8x768xf32>, vector<8x768xf32> -> vector<72x768xf32>
    %c0_36 = arith.constant 0 : index
    %c0_37 = arith.constant 0 : index
    %101 = vector.load %arg8[%c0_36, %c0_37] : memref<8x72xf32, #tpu.memory_space<vmem>>, vector<8x72xf32>
    %cst_38 = arith.constant dense<0.000000e+00> : vector<8x768xf32>
    %102 = tpu.matmul %101, %100, %cst_38 {dimension_numbers = #tpu.dot_dimension_numbers<[1], [0], [0], [1], [0, 0, 1, 1], [], []>} : vector<8x72xf32>, vector<72x768xf32>, vector<8x768xf32> -> vector<8x768xf32>
    %c0_39 = arith.constant 0 : index
    %c0_40 = arith.constant 0 : index
    %103 = vector.load %arg9[%c0_39, %c0_40] : memref<8x1xf32, #tpu.memory_space<vmem>>, vector<8x1xf32>
    %104 = vector.broadcast %103 : vector<8x1xf32> to vector<8x768xf32>
    %105 = arith.addf %102, %104 : vector<8x768xf32>
    %cst_41 = arith.constant 0.000000e+00 : f32
    %106 = vector.broadcast %cst_41 : f32 to vector<8x768xf32>
    %107 = arith.maximumf %105, %106 : vector<8x768xf32>
    %108 = vector.broadcast %0 : vector<1x768xf32> to vector<8x768xf32>
    %109 = arith.mulf %107, %108 : vector<8x768xf32>
    %cst_42 = arith.constant 0.000000e+00 : f32
    %110 = vector.broadcast %cst_42 : f32 to vector<8x128xf32>
    %111 = tpu.concatenate %110, %109, %110 in 1 : vector<8x128xf32>, vector<8x768xf32>, vector<8x128xf32> -> vector<8x1024xf32>
    %112 = vector.extract_strided_slice %111 {offsets = [0, 109], sizes = [8, 768], strides = [1, 1]} : vector<8x1024xf32> to vector<8x768xf32>
    %113 = vector.extract_strided_slice %111 {offsets = [0, 110], sizes = [8, 768], strides = [1, 1]} : vector<8x1024xf32> to vector<8x768xf32>
    %114 = vector.extract_strided_slice %111 {offsets = [0, 111], sizes = [8, 768], strides = [1, 1]} : vector<8x1024xf32> to vector<8x768xf32>
    %115 = vector.extract_strided_slice %111 {offsets = [0, 127], sizes = [8, 768], strides = [1, 1]} : vector<8x1024xf32> to vector<8x768xf32>
    %116 = vector.extract_strided_slice %111 {offsets = [0, 128], sizes = [8, 768], strides = [1, 1]} : vector<8x1024xf32> to vector<8x768xf32>
    %117 = vector.extract_strided_slice %111 {offsets = [0, 129], sizes = [8, 768], strides = [1, 1]} : vector<8x1024xf32> to vector<8x768xf32>
    %118 = vector.extract_strided_slice %111 {offsets = [0, 145], sizes = [8, 768], strides = [1, 1]} : vector<8x1024xf32> to vector<8x768xf32>
    %119 = vector.extract_strided_slice %111 {offsets = [0, 146], sizes = [8, 768], strides = [1, 1]} : vector<8x1024xf32> to vector<8x768xf32>
    %120 = vector.extract_strided_slice %111 {offsets = [0, 147], sizes = [8, 768], strides = [1, 1]} : vector<8x1024xf32> to vector<8x768xf32>
    %121 = tpu.concatenate %112, %113, %114, %115, %116, %117, %118, %119, %120 in 0 : vector<8x768xf32>, vector<8x768xf32>, vector<8x768xf32>, vector<8x768xf32>, vector<8x768xf32>, vector<8x768xf32>, vector<8x768xf32>, vector<8x768xf32>, vector<8x768xf32> -> vector<72x768xf32>
    %c0_43 = arith.constant 0 : index
    %c0_44 = arith.constant 0 : index
    %122 = vector.load %arg8[%c0_43, %c0_44] : memref<8x72xf32, #tpu.memory_space<vmem>>, vector<8x72xf32>
    %cst_45 = arith.constant dense<0.000000e+00> : vector<8x768xf32>
    %123 = tpu.matmul %122, %121, %cst_45 {dimension_numbers = #tpu.dot_dimension_numbers<[1], [0], [0], [1], [0, 0, 1, 1], [], []>} : vector<8x72xf32>, vector<72x768xf32>, vector<8x768xf32> -> vector<8x768xf32>
    %c0_46 = arith.constant 0 : index
    %c0_47 = arith.constant 0 : index
    %124 = vector.load %arg9[%c0_46, %c0_47] : memref<8x1xf32, #tpu.memory_space<vmem>>, vector<8x1xf32>
    %125 = vector.broadcast %124 : vector<8x1xf32> to vector<8x768xf32>
    %126 = arith.addf %123, %125 : vector<8x768xf32>
    %cst_48 = arith.constant 0.000000e+00 : f32
    %127 = vector.broadcast %cst_48 : f32 to vector<8x768xf32>
    %128 = arith.maximumf %126, %127 : vector<8x768xf32>
    %129 = vector.broadcast %0 : vector<1x768xf32> to vector<8x768xf32>
    %130 = arith.mulf %128, %129 : vector<8x768xf32>
    %131 = arith.addf %130, %45 : vector<8x768xf32>
    %cst_49 = arith.constant 0.000000e+00 : f32
    %132 = vector.broadcast %cst_49 : f32 to vector<8x128xf32>
    %133 = tpu.concatenate %132, %131, %132 in 1 : vector<8x128xf32>, vector<8x768xf32>, vector<8x128xf32> -> vector<8x1024xf32>
    %134 = vector.extract_strided_slice %133 {offsets = [0, 109], sizes = [8, 768], strides = [1, 1]} : vector<8x1024xf32> to vector<8x768xf32>
    %135 = vector.extract_strided_slice %133 {offsets = [0, 110], sizes = [8, 768], strides = [1, 1]} : vector<8x1024xf32> to vector<8x768xf32>
    %136 = vector.extract_strided_slice %133 {offsets = [0, 111], sizes = [8, 768], strides = [1, 1]} : vector<8x1024xf32> to vector<8x768xf32>
    %137 = vector.extract_strided_slice %133 {offsets = [0, 127], sizes = [8, 768], strides = [1, 1]} : vector<8x1024xf32> to vector<8x768xf32>
    %138 = vector.extract_strided_slice %133 {offsets = [0, 128], sizes = [8, 768], strides = [1, 1]} : vector<8x1024xf32> to vector<8x768xf32>
    %139 = vector.extract_strided_slice %133 {offsets = [0, 129], sizes = [8, 768], strides = [1, 1]} : vector<8x1024xf32> to vector<8x768xf32>
    %140 = vector.extract_strided_slice %133 {offsets = [0, 145], sizes = [8, 768], strides = [1, 1]} : vector<8x1024xf32> to vector<8x768xf32>
    %141 = vector.extract_strided_slice %133 {offsets = [0, 146], sizes = [8, 768], strides = [1, 1]} : vector<8x1024xf32> to vector<8x768xf32>
    %142 = vector.extract_strided_slice %133 {offsets = [0, 147], sizes = [8, 768], strides = [1, 1]} : vector<8x1024xf32> to vector<8x768xf32>
    %143 = tpu.concatenate %134, %135, %136, %137, %138, %139, %140, %141, %142 in 0 : vector<8x768xf32>, vector<8x768xf32>, vector<8x768xf32>, vector<8x768xf32>, vector<8x768xf32>, vector<8x768xf32>, vector<8x768xf32>, vector<8x768xf32>, vector<8x768xf32> -> vector<72x768xf32>
    %c0_50 = arith.constant 0 : index
    %c0_51 = arith.constant 0 : index
    %144 = vector.load %arg8[%c0_50, %c0_51] : memref<8x72xf32, #tpu.memory_space<vmem>>, vector<8x72xf32>
    %cst_52 = arith.constant dense<0.000000e+00> : vector<8x768xf32>
    %145 = tpu.matmul %144, %143, %cst_52 {dimension_numbers = #tpu.dot_dimension_numbers<[1], [0], [0], [1], [0, 0, 1, 1], [], []>} : vector<8x72xf32>, vector<72x768xf32>, vector<8x768xf32> -> vector<8x768xf32>
    %c0_53 = arith.constant 0 : index
    %c0_54 = arith.constant 0 : index
    %146 = vector.load %arg9[%c0_53, %c0_54] : memref<8x1xf32, #tpu.memory_space<vmem>>, vector<8x1xf32>
    %147 = vector.broadcast %146 : vector<8x1xf32> to vector<8x768xf32>
    %148 = arith.addf %145, %147 : vector<8x768xf32>
    %cst_55 = arith.constant 0.000000e+00 : f32
    %149 = vector.broadcast %cst_55 : f32 to vector<8x768xf32>
    %150 = arith.maximumf %148, %149 : vector<8x768xf32>
    %151 = vector.broadcast %0 : vector<1x768xf32> to vector<8x768xf32>
    %152 = arith.mulf %150, %151 : vector<8x768xf32>
    %cst_56 = arith.constant 0.000000e+00 : f32
    %153 = vector.broadcast %cst_56 : f32 to vector<8x128xf32>
    %154 = tpu.concatenate %153, %152, %153 in 1 : vector<8x128xf32>, vector<8x768xf32>, vector<8x128xf32> -> vector<8x1024xf32>
    %155 = vector.extract_strided_slice %154 {offsets = [0, 109], sizes = [8, 768], strides = [1, 1]} : vector<8x1024xf32> to vector<8x768xf32>
    %156 = vector.extract_strided_slice %154 {offsets = [0, 110], sizes = [8, 768], strides = [1, 1]} : vector<8x1024xf32> to vector<8x768xf32>
    %157 = vector.extract_strided_slice %154 {offsets = [0, 111], sizes = [8, 768], strides = [1, 1]} : vector<8x1024xf32> to vector<8x768xf32>
    %158 = vector.extract_strided_slice %154 {offsets = [0, 127], sizes = [8, 768], strides = [1, 1]} : vector<8x1024xf32> to vector<8x768xf32>
    %159 = vector.extract_strided_slice %154 {offsets = [0, 128], sizes = [8, 768], strides = [1, 1]} : vector<8x1024xf32> to vector<8x768xf32>
    %160 = vector.extract_strided_slice %154 {offsets = [0, 129], sizes = [8, 768], strides = [1, 1]} : vector<8x1024xf32> to vector<8x768xf32>
    %161 = vector.extract_strided_slice %154 {offsets = [0, 145], sizes = [8, 768], strides = [1, 1]} : vector<8x1024xf32> to vector<8x768xf32>
    %162 = vector.extract_strided_slice %154 {offsets = [0, 146], sizes = [8, 768], strides = [1, 1]} : vector<8x1024xf32> to vector<8x768xf32>
    %163 = vector.extract_strided_slice %154 {offsets = [0, 147], sizes = [8, 768], strides = [1, 1]} : vector<8x1024xf32> to vector<8x768xf32>
    %164 = tpu.concatenate %155, %156, %157, %158, %159, %160, %161, %162, %163 in 0 : vector<8x768xf32>, vector<8x768xf32>, vector<8x768xf32>, vector<8x768xf32>, vector<8x768xf32>, vector<8x768xf32>, vector<8x768xf32>, vector<8x768xf32>, vector<8x768xf32> -> vector<72x768xf32>
    %c0_57 = arith.constant 0 : index
    %c0_58 = arith.constant 0 : index
    %165 = vector.load %arg8[%c0_57, %c0_58] : memref<8x72xf32, #tpu.memory_space<vmem>>, vector<8x72xf32>
    %cst_59 = arith.constant dense<0.000000e+00> : vector<8x768xf32>
    %166 = tpu.matmul %165, %164, %cst_59 {dimension_numbers = #tpu.dot_dimension_numbers<[1], [0], [0], [1], [0, 0, 1, 1], [], []>} : vector<8x72xf32>, vector<72x768xf32>, vector<8x768xf32> -> vector<8x768xf32>
    %c0_60 = arith.constant 0 : index
    %c0_61 = arith.constant 0 : index
    %167 = vector.load %arg9[%c0_60, %c0_61] : memref<8x1xf32, #tpu.memory_space<vmem>>, vector<8x1xf32>
    %168 = vector.broadcast %167 : vector<8x1xf32> to vector<8x768xf32>
    %169 = arith.addf %166, %168 : vector<8x768xf32>
    %cst_62 = arith.constant 0.000000e+00 : f32
    %170 = vector.broadcast %cst_62 : f32 to vector<8x768xf32>
    %171 = arith.maximumf %169, %170 : vector<8x768xf32>
    %172 = vector.broadcast %0 : vector<1x768xf32> to vector<8x768xf32>
    %173 = arith.mulf %171, %172 : vector<8x768xf32>
    %174 = tpu.concatenate %42, %87, %130, %173 in 0 : vector<8x768xf32>, vector<8x768xf32>, vector<8x768xf32>, vector<8x768xf32> -> vector<32x768xf32>
    %c0_63 = arith.constant 0 : index
    %c0_64 = arith.constant 0 : index
    %175 = vector.load %arg10[%c0_63, %c0_64] : memref<32x32xf32, #tpu.memory_space<vmem>>, vector<32x32xf32>
    %cst_65 = arith.constant dense<0.000000e+00> : vector<32x768xf32>
    %176 = tpu.matmul %175, %174, %cst_65 {dimension_numbers = #tpu.dot_dimension_numbers<[1], [0], [0], [1], [0, 0, 1, 1], [], []>} : vector<32x32xf32>, vector<32x768xf32>, vector<32x768xf32> -> vector<32x768xf32>
    %c0_66 = arith.constant 0 : index
    %c0_67 = arith.constant 0 : index
    %177 = vector.load %arg11[%c0_66, %c0_67] : memref<32x1xf32, #tpu.memory_space<vmem>>, vector<32x1xf32>
    %178 = vector.broadcast %177 : vector<32x1xf32> to vector<32x768xf32>
    %179 = arith.addf %176, %178 : vector<32x768xf32>
    %cst_68 = arith.constant 0.000000e+00 : f32
    %180 = vector.broadcast %cst_68 : f32 to vector<32x768xf32>
    %181 = arith.maximumf %179, %180 : vector<32x768xf32>
    %182 = vector.broadcast %0 : vector<1x768xf32> to vector<32x768xf32>
    %183 = arith.mulf %181, %182 : vector<32x768xf32>
    %184 = arith.addf %32, %183 : vector<32x768xf32>
    %185 = vector.extract_strided_slice %184 {offsets = [0, 0], sizes = [32, 384], strides = [1, 1]} : vector<32x768xf32> to vector<32x384xf32>
    %186 = vector.extract_strided_slice %184 {offsets = [0, 384], sizes = [32, 384], strides = [1, 1]} : vector<32x768xf32> to vector<32x384xf32>
    %187 = math.absf %185 : vector<32x384xf32>
    %cst_69 = arith.constant dense<0.000000e+00> : vector<384xf32>
    %188 = vector.multi_reduction <add>, %187, %cst_69 [0] : vector<32x384xf32> to vector<384xf32>
    %189 = vector.shape_cast %188 : vector<384xf32> to vector<1x384xf32>
    %190 = math.absf %186 : vector<32x384xf32>
    %cst_70 = arith.constant dense<0.000000e+00> : vector<384xf32>
    %191 = vector.multi_reduction <add>, %190, %cst_70 [0] : vector<32x384xf32> to vector<384xf32>
    %192 = vector.shape_cast %191 : vector<384xf32> to vector<1x384xf32>
    %193 = vector.broadcast %189 : vector<1x384xf32> to vector<32x384xf32>
    %194 = arith.mulf %193, %185 : vector<32x384xf32>
    %195 = vector.broadcast %192 : vector<1x384xf32> to vector<32x384xf32>
    %196 = arith.mulf %195, %186 : vector<32x384xf32>
    %197 = arith.addf %194, %196 : vector<32x384xf32>
    %198 = arith.addf %189, %192 : vector<1x384xf32>
    %cst_71 = arith.constant 9.99999996E-13 : f32
    %199 = vector.broadcast %cst_71 : f32 to vector<1x384xf32>
    %200 = arith.addf %198, %199 : vector<1x384xf32>
    %201 = vector.broadcast %200 : vector<1x384xf32> to vector<32x384xf32>
    %202 = arith.divf %197, %201 : vector<32x384xf32>
    %cst_72 = arith.constant 0.000000e+00 : f32
    %203 = vector.broadcast %cst_72 : f32 to vector<32x128xf32>
    %204 = tpu.concatenate %203, %202, %203 in 1 : vector<32x128xf32>, vector<32x384xf32>, vector<32x128xf32> -> vector<32x640xf32>
    %205 = vector.extract_strided_slice %204 {offsets = [0, 109], sizes = [32, 384], strides = [1, 1]} : vector<32x640xf32> to vector<32x384xf32>
    %206 = vector.extract_strided_slice %204 {offsets = [0, 110], sizes = [32, 384], strides = [1, 1]} : vector<32x640xf32> to vector<32x384xf32>
    %207 = vector.extract_strided_slice %204 {offsets = [0, 111], sizes = [32, 384], strides = [1, 1]} : vector<32x640xf32> to vector<32x384xf32>
    %208 = vector.extract_strided_slice %204 {offsets = [0, 127], sizes = [32, 384], strides = [1, 1]} : vector<32x640xf32> to vector<32x384xf32>
    %209 = vector.extract_strided_slice %204 {offsets = [0, 128], sizes = [32, 384], strides = [1, 1]} : vector<32x640xf32> to vector<32x384xf32>
    %210 = vector.extract_strided_slice %204 {offsets = [0, 129], sizes = [32, 384], strides = [1, 1]} : vector<32x640xf32> to vector<32x384xf32>
    %211 = vector.extract_strided_slice %204 {offsets = [0, 145], sizes = [32, 384], strides = [1, 1]} : vector<32x640xf32> to vector<32x384xf32>
    %212 = vector.extract_strided_slice %204 {offsets = [0, 146], sizes = [32, 384], strides = [1, 1]} : vector<32x640xf32> to vector<32x384xf32>
    %213 = vector.extract_strided_slice %204 {offsets = [0, 147], sizes = [32, 384], strides = [1, 1]} : vector<32x640xf32> to vector<32x384xf32>
    %214 = tpu.concatenate %205, %206, %207, %208, %209, %210, %211, %212, %213 in 0 : vector<32x384xf32>, vector<32x384xf32>, vector<32x384xf32>, vector<32x384xf32>, vector<32x384xf32>, vector<32x384xf32>, vector<32x384xf32>, vector<32x384xf32>, vector<32x384xf32> -> vector<288x384xf32>
    %c0_73 = arith.constant 0 : index
    %c0_74 = arith.constant 0 : index
    %215 = vector.load %arg12[%c0_73, %c0_74] : memref<32x288xf32, #tpu.memory_space<vmem>>, vector<32x288xf32>
    %cst_75 = arith.constant dense<0.000000e+00> : vector<32x384xf32>
    %216 = tpu.matmul %215, %214, %cst_75 {dimension_numbers = #tpu.dot_dimension_numbers<[1], [0], [0], [1], [0, 0, 1, 1], [], []>} : vector<32x288xf32>, vector<288x384xf32>, vector<32x384xf32> -> vector<32x384xf32>
    %c0_76 = arith.constant 0 : index
    %c0_77 = arith.constant 0 : index
    %217 = vector.load %arg13[%c0_76, %c0_77] : memref<32x1xf32, #tpu.memory_space<vmem>>, vector<32x1xf32>
    %218 = vector.broadcast %217 : vector<32x1xf32> to vector<32x384xf32>
    %219 = arith.addf %216, %218 : vector<32x384xf32>
    %cst_78 = arith.constant 0.000000e+00 : f32
    %220 = vector.broadcast %cst_78 : f32 to vector<32x384xf32>
    %221 = arith.maximumf %219, %220 : vector<32x384xf32>
    %222 = vector.broadcast %1 : vector<1x384xf32> to vector<32x384xf32>
    %223 = arith.mulf %221, %222 : vector<32x384xf32>
    %cst_79 = arith.constant 0.000000e+00 : f32
    %224 = vector.broadcast %cst_79 : f32 to vector<32x128xf32>
    %225 = tpu.concatenate %224, %223, %224 in 1 : vector<32x128xf32>, vector<32x384xf32>, vector<32x128xf32> -> vector<32x640xf32>
    %226 = vector.extract_strided_slice %225 {offsets = [0, 109], sizes = [32, 384], strides = [1, 1]} : vector<32x640xf32> to vector<32x384xf32>
    %227 = vector.extract_strided_slice %225 {offsets = [0, 110], sizes = [32, 384], strides = [1, 1]} : vector<32x640xf32> to vector<32x384xf32>
    %228 = vector.extract_strided_slice %225 {offsets = [0, 111], sizes = [32, 384], strides = [1, 1]} : vector<32x640xf32> to vector<32x384xf32>
    %229 = vector.extract_strided_slice %225 {offsets = [0, 127], sizes = [32, 384], strides = [1, 1]} : vector<32x640xf32> to vector<32x384xf32>
    %230 = vector.extract_strided_slice %225 {offsets = [0, 128], sizes = [32, 384], strides = [1, 1]} : vector<32x640xf32> to vector<32x384xf32>
    %231 = vector.extract_strided_slice %225 {offsets = [0, 129], sizes = [32, 384], strides = [1, 1]} : vector<32x640xf32> to vector<32x384xf32>
    %232 = vector.extract_strided_slice %225 {offsets = [0, 145], sizes = [32, 384], strides = [1, 1]} : vector<32x640xf32> to vector<32x384xf32>
    %233 = vector.extract_strided_slice %225 {offsets = [0, 146], sizes = [32, 384], strides = [1, 1]} : vector<32x640xf32> to vector<32x384xf32>
    %234 = vector.extract_strided_slice %225 {offsets = [0, 147], sizes = [32, 384], strides = [1, 1]} : vector<32x640xf32> to vector<32x384xf32>
    %235 = tpu.concatenate %226, %227, %228, %229, %230, %231, %232, %233, %234 in 0 : vector<32x384xf32>, vector<32x384xf32>, vector<32x384xf32>, vector<32x384xf32>, vector<32x384xf32>, vector<32x384xf32>, vector<32x384xf32>, vector<32x384xf32>, vector<32x384xf32> -> vector<288x384xf32>
    %c0_80 = arith.constant 0 : index
    %c0_81 = arith.constant 0 : index
    %236 = vector.load %arg14[%c0_80, %c0_81] : memref<16x288xf32, #tpu.memory_space<vmem>>, vector<16x288xf32>
    %cst_82 = arith.constant dense<0.000000e+00> : vector<16x384xf32>
    %237 = tpu.matmul %236, %235, %cst_82 {dimension_numbers = #tpu.dot_dimension_numbers<[1], [0], [0], [1], [0, 0, 1, 1], [], []>} : vector<16x288xf32>, vector<288x384xf32>, vector<16x384xf32> -> vector<16x384xf32>
    %c0_83 = arith.constant 0 : index
    %c0_84 = arith.constant 0 : index
    %238 = vector.load %arg15[%c0_83, %c0_84] : memref<16x1xf32, #tpu.memory_space<vmem>>, vector<16x1xf32>
    %239 = vector.broadcast %238 : vector<16x1xf32> to vector<16x384xf32>
    %240 = arith.addf %237, %239 : vector<16x384xf32>
    %cst_85 = arith.constant 0.000000e+00 : f32
    %241 = vector.broadcast %cst_85 : f32 to vector<16x384xf32>
    %242 = arith.maximumf %240, %241 : vector<16x384xf32>
    %243 = vector.broadcast %1 : vector<1x384xf32> to vector<16x384xf32>
    %244 = arith.mulf %242, %243 : vector<16x384xf32>
    %cst_86 = arith.constant 0.000000e+00 : f32
    %245 = vector.broadcast %cst_86 : f32 to vector<16x128xf32>
    %246 = tpu.concatenate %245, %244, %245 in 1 : vector<16x128xf32>, vector<16x384xf32>, vector<16x128xf32> -> vector<16x640xf32>
    %247 = vector.extract_strided_slice %246 {offsets = [0, 109], sizes = [16, 384], strides = [1, 1]} : vector<16x640xf32> to vector<16x384xf32>
    %248 = vector.extract_strided_slice %246 {offsets = [0, 110], sizes = [16, 384], strides = [1, 1]} : vector<16x640xf32> to vector<16x384xf32>
    %249 = vector.extract_strided_slice %246 {offsets = [0, 111], sizes = [16, 384], strides = [1, 1]} : vector<16x640xf32> to vector<16x384xf32>
    %250 = vector.extract_strided_slice %246 {offsets = [0, 127], sizes = [16, 384], strides = [1, 1]} : vector<16x640xf32> to vector<16x384xf32>
    %251 = vector.extract_strided_slice %246 {offsets = [0, 128], sizes = [16, 384], strides = [1, 1]} : vector<16x640xf32> to vector<16x384xf32>
    %252 = vector.extract_strided_slice %246 {offsets = [0, 129], sizes = [16, 384], strides = [1, 1]} : vector<16x640xf32> to vector<16x384xf32>
    %253 = vector.extract_strided_slice %246 {offsets = [0, 145], sizes = [16, 384], strides = [1, 1]} : vector<16x640xf32> to vector<16x384xf32>
    %254 = vector.extract_strided_slice %246 {offsets = [0, 146], sizes = [16, 384], strides = [1, 1]} : vector<16x640xf32> to vector<16x384xf32>
    %255 = vector.extract_strided_slice %246 {offsets = [0, 147], sizes = [16, 384], strides = [1, 1]} : vector<16x640xf32> to vector<16x384xf32>
    %256 = tpu.concatenate %247, %248, %249, %250, %251, %252, %253, %254, %255 in 0 : vector<16x384xf32>, vector<16x384xf32>, vector<16x384xf32>, vector<16x384xf32>, vector<16x384xf32>, vector<16x384xf32>, vector<16x384xf32>, vector<16x384xf32>, vector<16x384xf32> -> vector<144x384xf32>
    %c0_87 = arith.constant 0 : index
    %c0_88 = arith.constant 0 : index
    %257 = vector.load %arg16[%c0_87, %c0_88] : memref<8x144xf32, #tpu.memory_space<vmem>>, vector<8x144xf32>
    %cst_89 = arith.constant dense<0.000000e+00> : vector<8x384xf32>
    %258 = tpu.matmul %257, %256, %cst_89 {dimension_numbers = #tpu.dot_dimension_numbers<[1], [0], [0], [1], [0, 0, 1, 1], [], []>} : vector<8x144xf32>, vector<144x384xf32>, vector<8x384xf32> -> vector<8x384xf32>
    %c0_90 = arith.constant 0 : index
    %c0_91 = arith.constant 0 : index
    %259 = vector.load %arg17[%c0_90, %c0_91] : memref<8x1xf32, #tpu.memory_space<vmem>>, vector<8x1xf32>
    %260 = vector.broadcast %259 : vector<8x1xf32> to vector<8x384xf32>
    %261 = arith.addf %258, %260 : vector<8x384xf32>
    %cst_92 = arith.constant 0.000000e+00 : f32
    %262 = vector.broadcast %cst_92 : f32 to vector<8x384xf32>
    %263 = arith.maximumf %261, %262 : vector<8x384xf32>
    %264 = vector.broadcast %1 : vector<1x384xf32> to vector<8x384xf32>
    %265 = arith.mulf %263, %264 : vector<8x384xf32>
    %cst_93 = arith.constant 0.000000e+00 : f32
    %266 = vector.broadcast %cst_93 : f32 to vector<8x128xf32>
    %267 = tpu.concatenate %266, %265, %266 in 1 : vector<8x128xf32>, vector<8x384xf32>, vector<8x128xf32> -> vector<8x640xf32>
    %268 = vector.extract_strided_slice %267 {offsets = [0, 109], sizes = [8, 384], strides = [1, 1]} : vector<8x640xf32> to vector<8x384xf32>
    %269 = vector.extract_strided_slice %267 {offsets = [0, 110], sizes = [8, 384], strides = [1, 1]} : vector<8x640xf32> to vector<8x384xf32>
    %270 = vector.extract_strided_slice %267 {offsets = [0, 111], sizes = [8, 384], strides = [1, 1]} : vector<8x640xf32> to vector<8x384xf32>
    %271 = vector.extract_strided_slice %267 {offsets = [0, 127], sizes = [8, 384], strides = [1, 1]} : vector<8x640xf32> to vector<8x384xf32>
    %272 = vector.extract_strided_slice %267 {offsets = [0, 128], sizes = [8, 384], strides = [1, 1]} : vector<8x640xf32> to vector<8x384xf32>
    %273 = vector.extract_strided_slice %267 {offsets = [0, 129], sizes = [8, 384], strides = [1, 1]} : vector<8x640xf32> to vector<8x384xf32>
    %274 = vector.extract_strided_slice %267 {offsets = [0, 145], sizes = [8, 384], strides = [1, 1]} : vector<8x640xf32> to vector<8x384xf32>
    %275 = vector.extract_strided_slice %267 {offsets = [0, 146], sizes = [8, 384], strides = [1, 1]} : vector<8x640xf32> to vector<8x384xf32>
    %276 = vector.extract_strided_slice %267 {offsets = [0, 147], sizes = [8, 384], strides = [1, 1]} : vector<8x640xf32> to vector<8x384xf32>
    %277 = tpu.concatenate %268, %269, %270, %271, %272, %273, %274, %275, %276 in 0 : vector<8x384xf32>, vector<8x384xf32>, vector<8x384xf32>, vector<8x384xf32>, vector<8x384xf32>, vector<8x384xf32>, vector<8x384xf32>, vector<8x384xf32>, vector<8x384xf32> -> vector<72x384xf32>
    %c0_94 = arith.constant 0 : index
    %c0_95 = arith.constant 0 : index
    %278 = vector.load %arg18[%c0_94, %c0_95] : memref<1x72xf32, #tpu.memory_space<vmem>>, vector<1x72xf32>
    %cst_96 = arith.constant dense<0.000000e+00> : vector<1x384xf32>
    %279 = tpu.matmul %278, %277, %cst_96 {dimension_numbers = #tpu.dot_dimension_numbers<[1], [0], [0], [1], [0, 0, 1, 1], [], []>} : vector<1x72xf32>, vector<72x384xf32>, vector<1x384xf32> -> vector<1x384xf32>
    %c0_97 = arith.constant 0 : index
    %c0_98 = arith.constant 0 : index
    %280 = vector.load %arg19[%c0_97, %c0_98] : memref<1x1xf32, #tpu.memory_space<vmem>>, vector<1x1xf32>
    %281 = vector.broadcast %280 : vector<1x1xf32> to vector<1x384xf32>
    %282 = arith.addf %279, %281 : vector<1x384xf32>
    %c0_99 = arith.constant 0 : index
    %c0_100 = arith.constant 0 : index
    %283 = vector.load %arg20[%c0_99, %c0_100] : memref<1x384xf32, #tpu.memory_space<vmem>>, vector<1x384xf32>
    tpu.vector_store %arg20[%c0_99, %c0_100], %282 {strides = array<i32>} : memref<1x384xf32, #tpu.memory_space<vmem>>, vector<1x384xf32>,
    return
  }
}

</mosaic_0001>

<llo_original>
// kernel: tpu_custom_call.1
$region0: #{tpu_custom_call.1}
  #allocation0 [shape = 'u32[]', space=smem, size = 0x4, offset = 0x4, fixed_abs, tag = 'smem constant byte address 0x4 - core index']
  #allocation1 [shape = 'u32[144,128]{1,0:T(1,128)}', space=vmem, size = 0x12000, scoped, tag = 'internal scratch']
  %s0 = inlined_call_operand.hbm [shape: f32[8,128], index: 0, kind: input, shape index: {}]
  %s1 = inlined_call_operand.hbm [shape: f32[8,128], index: 1, kind: output, shape index: {}]
  %s2 = sld [smem:[#allocation0]]
  $region18: #{tpu_custom_call.1} parent=0
    _
  %s4 = ssub.s32 1, %s2
  %s5 = scalar_select 0, %s4, %s2
  $region1: #{tpu_custom_call.1} parent=0
    #allocation2 [shape = 'u8[4096]{0}', space=vmem, size = 0x1000, scoped, tag = 'input window, operand 0, single buffered']
    #allocation3 [shape = 's32[1]{0}', space=sflag, size = 0x4, scoped, tag = 'scoped memory for tpu_custom_call.1']
    #allocation4 [shape = 's32[1]{0}', space=sflag, size = 0x4, scoped, tag = 'scoped memory for tpu_custom_call.1']
    #allocation5 [shape = 'u8[4096]{0}', space=vmem, size = 0x1000, scoped, tag = 'output window, operand 0, single buffered']
    %6 = vsyncpa [#allocation3], 0
    %7 = vsyncpa [#allocation4], 0
    // Predicated region
    $region2: #{tpu_custom_call.1} parent=1 // pred_check
      _
    $region3: #{tpu_custom_call.1} parent=1 // pred_check_branch
      %9 = sbr.rel (0) target = $region5
    $region4: #{tpu_custom_call.1} parent=1 // pred_region
      %s11 = ssub.s32 128, 128
      %12 = vsyncadd [#allocation3], %s11
      %s14 = sshll.u32 [#allocation2], 4
      %s15 = int_to_ptr.vmem [resolvable:$true] %s14
      %17 = dma.hbm_to_vmem [thread:$0]  %s0, 128, %s15, [#allocation3]
    $region5: #{tpu_custom_call.1} parent=1 // pred_fallthru
      _
    // Predicated region
    $region6: #{tpu_custom_call.1} parent=1 // pred_check
      _
    $region7: #{tpu_custom_call.1} parent=1 // pred_check_branch
      %19 = sbr.rel (0) target = $region9
    $region8: #{tpu_custom_call.1} parent=1 // pred_region
      %20 = dma.done [#allocation3], 128
    $region9: #{tpu_custom_call.1} parent=1 // pred_fallthru
      _
    %v21 = vld [vmem:[#allocation2] sm:$0xff]
    %22 = vrot.lane.b32.xlu0 %v21, 5
    %v23 = vpop.permute.xlu0 %22
    %24 = vst [vmem:[#allocation5] sm:$0xff] %v23
    // Predicated region
    $region10: #{tpu_custom_call.1} parent=1 // pred_check
      _
    $region11: #{tpu_custom_call.1} parent=1 // pred_check_branch
      %26 = sbr.rel (0) target = $region13
    $region12: #{tpu_custom_call.1} parent=1 // pred_region
      %s28 = ssub.s32 128, 128
      %29 = vsyncadd [#allocation4], %s28
      %s31 = sshll.u32 [#allocation5], 4
      %s32 = int_to_ptr.vmem [resolvable:$true] %s31
      %34 = dma.vmem_to_hbm [thread:$0]  %s32, 128, %s1, [#allocation4]
    $region13: #{tpu_custom_call.1} parent=1 // pred_fallthru
      _
    // Predicated region
    $region14: #{tpu_custom_call.1} parent=1 // pred_check
      _
    $region15: #{tpu_custom_call.1} parent=1 // pred_check_branch
      %36 = sbr.rel (0) target = $region17
    $region16: #{tpu_custom_call.1} parent=1 // pred_region
      %37 = dma.done [#allocation4], 128
    $region17: #{tpu_custom_call.1} parent=1 // pred_fallthru
      _
    %38 = vsyncpa [#allocation3], 1
    %39 = vsyncpa [#allocation4], 1

// kernel: squeeze.9
$region0: #{squeeze.9}
  %s0 = inlined_call_operand.vmem [shape: f32[324], index: 0, kind: input, shape index: {}]
  %s1 = inlined_call_operand.vmem [shape: f32[18,18], index: 1, kind: output, shape index: {}]
  $region1: #{squeeze.9} parent=0
    #allocation0 [shape = 'u8[4096]{0}', space=vmem, size = 0x1000, scoped, tag = 'scoped mem for input reshape']
    %s3 = sshll.u32 1, 4
    %s4 = ssub.s32 %s3, 1
    %v5 = vld [vmem:[%s0] sm:%s4]
    %6 = vst [vmem:[#allocation0] sm:%s4] %v5
    %v7 = vld [vmem:[#allocation0] sm:$0x1]
    %vm8 = vcmask 146432
    %9 = vst.msk [vmem:[%s1] sm:$0x1] %vm8, %v7
    %s10 = scalar_lea.vmem [#allocation0], 2
    %v11 = vld [vmem:[%s10] sm:$0x1]
    %12 = vrot.lane.b32.xlu0 %v11, 114
    %v13 = vpop.permute.xlu0 %12
    %vm14 = vcmask 146432
    %s15 = scalar_lea.vmem %s1, 15
    %16 = vst.msk [vmem:[%s15] sm:$0x1] %vm14, %v13
    %s17 = scalar_lea.vmem [#allocation0], 1
    %v18 = vld [vmem:[%s17] sm:$0x1]
    %19 = vrot.lane.b32.xlu0 %v18, 112
    %v20 = vpop.permute.xlu0 %19
    %vm21 = vcmask 146432
    %s22 = scalar_lea.vmem %s1, 8
    %23 = vst.msk [vmem:[%s22] sm:$0x1] %vm21, %v20
    %v24 = vld [vmem:[#allocation0] sm:$0x1]
    %25 = vrot.lane.b32.xlu0 %v24, 110
    %v26 = vpop.permute.xlu0 %25
    %vm27 = vcmask 146432
    %s28 = scalar_lea.vmem %s1, 1
    %29 = vst.msk [vmem:[%s28] sm:$0x1] %vm27, %v26
    %s30 = scalar_lea.vmem [#allocation0], 2
    %v31 = vld [vmem:[%s30] sm:$0x1]
    %32 = vrot.lane.b32.xlu0 %v31, 96
    %v33 = vpop.permute.xlu0 %32
    %vm34 = vcmask 146432
    %s35 = scalar_lea.vmem %s1, 16
    %36 = vst.msk [vmem:[%s35] sm:$0x1] %vm34, %v33
    %s37 = scalar_lea.vmem [#allocation0], 1
    %v38 = vld [vmem:[%s37] sm:$0x1]
    %39 = vrot.lane.b32.xlu0 %v38, 94
    %v40 = vpop.permute.xlu0 %39
    %vm41 = vcmask 146432
    %s42 = scalar_lea.vmem %s1, 9
    %43 = vst.msk [vmem:[%s42] sm:$0x1] %vm41, %v40
    %v44 = vld [vmem:[#allocation0] sm:$0x1]
    %45 = vrot.lane.b32.xlu0 %v44, 92
    %v46 = vpop.permute.xlu0 %45
    %vm47 = vcmask 146432
    %s48 = scalar_lea.vmem %s1, 2
    %49 = vst.msk [vmem:[%s48] sm:$0x1] %vm47, %v46
    %s50 = scalar_lea.vmem [#allocation0], 2
    %v51 = vld [vmem:[%s50] sm:$0x1]
    %52 = vrot.lane.b32.xlu0 %v51, 78
    %v53 = vpop.permute.xlu0 %52
    %vm54 = vcmask 146432
    %s55 = scalar_lea.vmem %s1, 17
    %56 = vst.msk [vmem:[%s55] sm:$0x1] %vm54, %v53
    %s57 = scalar_lea.vmem [#allocation0], 1
    %v58 = vld [vmem:[%s57] sm:$0x1]
    %59 = vrot.lane.b32.xlu0 %v58, 76
    %v60 = vpop.permute.xlu0 %59
    %vm61 = vcmask 146432
    %s62 = scalar_lea.vmem %s1, 10
    %63 = vst.msk [vmem:[%s62] sm:$0x1] %vm61, %v60
    %v64 = vld [vmem:[#allocation0] sm:$0x1]
    %65 = vrot.lane.b32.xlu0 %v64, 74
    %v66 = vpop.permute.xlu0 %65
    %vm67 = vcmask 146432
    %s68 = scalar_lea.vmem %s1, 3
    %69 = vst.msk [vmem:[%s68] sm:$0x1] %vm67, %v66
    %s70 = scalar_lea.vmem [#allocation0], 1
    %v71 = vld [vmem:[%s70] sm:$0x1]
    %72 = vrot.lane.b32.xlu0 %v71, 58
    %v73 = vpop.permute.xlu0 %72
    %vm74 = vcmask 146432
    %s75 = scalar_lea.vmem %s1, 11
    %76 = vst.msk [vmem:[%s75] sm:$0x1] %vm74, %v73
    %v77 = vld [vmem:[#allocation0] sm:$0x1]
    %78 = vrot.lane.b32.xlu0 %v77, 56
    %v79 = vpop.permute.xlu0 %78
    %vm80 = vcmask 146432
    %s81 = scalar_lea.vmem %s1, 4
    %82 = vst.msk [vmem:[%s81] sm:$0x1] %vm80, %v79
    %s83 = scalar_lea.vmem [#allocation0], 1
    %v84 = vld [vmem:[%s83] sm:$0x1]
    %85 = vrot.lane.b32.xlu0 %v84, 40
    %v86 = vpop.permute.xlu0 %85
    %vm87 = vcmask 146432
    %s88 = scalar_lea.vmem %s1, 12
    %89 = vst.msk [vmem:[%s88] sm:$0x1] %vm87, %v86
    %v90 = vld [vmem:[#allocation0] sm:$0x1]
    %91 = vrot.lane.b32.xlu0 %v90, 38
    %v92 = vpop.permute.xlu0 %91
    %vm93 = vcmask 146432
    %s94 = scalar_lea.vmem %s1, 5
    %95 = vst.msk [vmem:[%s94] sm:$0x1] %vm93, %v92
    %s96 = scalar_lea.vmem [#allocation0], 1
    %v97 = vld [vmem:[%s96] sm:$0x1]
    %98 = vrot.lane.b32.xlu0 %v97, 22
    %v99 = vpop.permute.xlu0 %98
    %vm100 = vcmask 146432
    %s101 = scalar_lea.vmem %s1, 13
    %102 = vst.msk [vmem:[%s101] sm:$0x1] %vm100, %v99
    %v103 = vld [vmem:[#allocation0] sm:$0x1]
    %104 = vrot.lane.b32.xlu0 %v103, 20
    %v105 = vpop.permute.xlu0 %104
    %vm106 = vcmask 146432
    %s107 = scalar_lea.vmem %s1, 6
    %108 = vst.msk [vmem:[%s107] sm:$0x1] %vm106, %v105
    %s109 = scalar_lea.vmem [#allocation0], 1
    %v110 = vld [vmem:[%s109] sm:$0x1]
    %s111 = scalar_lea.vmem [#allocation0], 2
    %v112 = vld [vmem:[%s111] sm:$0x1]
    %vm113 = vcmask 1014784
    %v114 = vsel %vm113, %v112, %v110
    %115 = vrot.lane.b32.xlu0 %v114, 4
    %v116 = vpop.permute.xlu0 %115
    %vm117 = vcmask 31744
    %s118 = scalar_lea.vmem %s1, 14
    %119 = vst.msk [vmem:[%s118] sm:$0x1] %vm117, %v116
    %vm120 = vcmask 146464
    %s121 = scalar_lea.vmem %s1, 14
    %122 = vst.msk [vmem:[%s121] sm:$0x1] %vm120, %v116
    %v123 = vld [vmem:[#allocation0] sm:$0x1]
    %s124 = scalar_lea.vmem [#allocation0], 1
    %v125 = vld [vmem:[%s124] sm:$0x1]
    %vm126 = vcmask 1031168
    %v127 = vsel %vm126, %v125, %v123
    %128 = vrot.lane.b32.xlu0 %v127, 2
    %v129 = vpop.permute.xlu0 %128
    %vm130 = vcmask 15360
    %s131 = scalar_lea.vmem %s1, 7
    %132 = vst.msk [vmem:[%s131] sm:$0x1] %vm130, %v129
    %vm133 = vcmask 146448
    %s134 = scalar_lea.vmem %s1, 7
    %135 = vst.msk [vmem:[%s134] sm:$0x1] %vm133, %v129

// kernel: generative_net.1
$region0: #{generative_net.1}
  #allocation0 [shape = 'u32[]', space=smem, size = 0x4, offset = 0x4, fixed_abs, tag = 'smem constant byte address 0x4 - core index']
  #allocation1 [shape = 'u32[144,128]{1,0:T(1,128)}', space=vmem, size = 0x12000, scoped, tag = 'internal scratch']
  #allocation2 [shape = 'f32[1,1]{1,0:T(1,128)S(1)}', space=vmem, size = 0x200, scoped, tag = 'scoped memory for generative_net.1']
  %s0 = inlined_call_operand.vmem [shape: f32[9,768], index: 0, kind: input, shape index: {}]
  %s1 = inlined_call_operand.vmem [shape: f32[1,768], index: 1, kind: input, shape index: {}]
  %s2 = inlined_call_operand.vmem [shape: f32[16,9], index: 2, kind: input, shape index: {}]
  %s3 = inlined_call_operand.vmem [shape: f32[16,1], index: 3, kind: input, shape index: {}]
  %s4 = inlined_call_operand.vmem [shape: f32[32,144], index: 4, kind: input, shape index: {}]
  %s5 = inlined_call_operand.vmem [shape: f32[32,1], index: 5, kind: input, shape index: {}]
  %s6 = inlined_call_operand.vmem [shape: f32[32,32], index: 6, kind: input, shape index: {}]
  %s7 = inlined_call_operand.vmem [shape: f32[32,1], index: 7, kind: input, shape index: {}]
  %s8 = inlined_call_operand.vmem [shape: f32[8,72], index: 8, kind: input, shape index: {}]
  %s9 = inlined_call_operand.vmem [shape: f32[8,1], index: 9, kind: input, shape index: {}]
  %s10 = inlined_call_operand.vmem [shape: f32[32,32], index: 10, kind: input, shape index: {}]
  %s11 = inlined_call_operand.vmem [shape: f32[32,1], index: 11, kind: input, shape index: {}]
  %s12 = inlined_call_operand.vmem [shape: f32[32,288], index: 12, kind: input, shape index: {}]
  %s13 = inlined_call_operand.vmem [shape: f32[32,1], index: 13, kind: input, shape index: {}]
  %s14 = inlined_call_operand.vmem [shape: f32[16,288], index: 14, kind: input, shape index: {}]
  %s15 = inlined_call_operand.vmem [shape: f32[16,1], index: 15, kind: input, shape index: {}]
  %s16 = inlined_call_operand.vmem [shape: f32[8,144], index: 16, kind: input, shape index: {}]
  %s17 = inlined_call_operand.vmem [shape: f32[8,1], index: 17, kind: input, shape index: {}]
  %s18 = inlined_call_operand.vmem [shape: f32[1,72], index: 18, kind: input, shape index: {}]
  %s19 = inlined_call_operand.<no memory space> [shape: f32[1,1], index: 19, kind: input, shape index: {}]
  %s20 = inlined_call_operand.vmem [shape: f32[1,384], index: 20, kind: output, shape index: {}]
  %s21 = sld [smem:[#allocation0]]
  $region90: #{generative_net.1} parent=0
    _
  %s23 = ssub.s32 1, %s21
  %s24 = scalar_select 0, %s23, %s21
  %v25 = vstv %s19
  %26 = vst [vmem:[#allocation2] sm:$0x1] %v25
  // Predicated region
  $region2: #{generative_net.1} parent=0 // pred_check
    _
  $region3: #{generative_net.1} parent=0 // pred_check_branch
    %28 = sbr.rel (0) target = $region5
  $region4: #{generative_net.1} parent=0 // pred_region
    _
  $region5: #{generative_net.1} parent=0 // pred_fallthru
    _
  // Predicated region
  $region6: #{generative_net.1} parent=0 // pred_check
    _
  $region7: #{generative_net.1} parent=0 // pred_check_branch
    %30 = sbr.rel (0) target = $region9
  $region8: #{generative_net.1} parent=0 // pred_region
    _
  $region9: #{generative_net.1} parent=0 // pred_fallthru
    _
  // Predicated region
  $region10: #{generative_net.1} parent=0 // pred_check
    _
  $region11: #{generative_net.1} parent=0 // pred_check_branch
    %32 = sbr.rel (0) target = $region13
  $region12: #{generative_net.1} parent=0 // pred_region
    _
  $region13: #{generative_net.1} parent=0 // pred_fallthru
    _
  // Predicated region
  $region14: #{generative_net.1} parent=0 // pred_check
    _
  $region15: #{generative_net.1} parent=0 // pred_check_branch
    %34 = sbr.rel (0) target = $region17
  $region16: #{generative_net.1} parent=0 // pred_region
    _
  $region17: #{generative_net.1} parent=0 // pred_fallthru
    _
  // Predicated region
  $region18: #{generative_net.1} parent=0 // pred_check
    _
  $region19: #{generative_net.1} parent=0 // pred_check_branch
    %36 = sbr.rel (0) target = $region21
  $region20: #{generative_net.1} parent=0 // pred_region
    _
  $region21: #{generative_net.1} parent=0 // pred_fallthru
    _
  // Predicated region
  $region22: #{generative_net.1} parent=0 // pred_check
    _
  $region23: #{generative_net.1} parent=0 // pred_check_branch
    %38 = sbr.rel (0) target = $region25
  $region24: #{generative_net.1} parent=0 // pred_region
    _
  $region25: #{generative_net.1} parent=0 // pred_fallthru
    _
  // Predicated region
  $region26: #{generative_net.1} parent=0 // pred_check
    _
  $region27: #{generative_net.1} parent=0 // pred_check_branch
    %40 = sbr.rel (0) target = $region29
  $region28: #{generative_net.1} parent=0 // pred_region
    _
  $region29: #{generative_net.1} parent=0 // pred_fallthru
    _
  // Predicated region
  $region30: #{generative_net.1} parent=0 // pred_check
    _
  $region31: #{generative_net.1} parent=0 // pred_check_branch
    %42 = sbr.rel (0) target = $region33
  $region32: #{generative_net.1} parent=0 // pred_region
    _
  $region33: #{generative_net.1} parent=0 // pred_fallthru
    _
  // Predicated region
  $region34: #{generative_net.1} parent=0 // pred_check
    _
  $region35: #{generative_net.1} parent=0 // pred_check_branch
    %44 = sbr.rel (0) target = $region37
  $region36: #{generative_net.1} parent=0 // pred_region
    _
  $region37: #{generative_net.1} parent=0 // pred_fallthru
    _
  // Predicated region
  $region38: #{generative_net.1} parent=0 // pred_check
    _
  $region39: #{generative_net.1} parent=0 // pred_check_branch
    %46 = sbr.rel (0) target = $region41
  $region40: #{generative_net.1} parent=0 // pred_region
    _
  $region41: #{generative_net.1} parent=0 // pred_fallthru
    _
  // Predicated region
  $region42: #{generative_net.1} parent=0 // pred_check
    _
  $region43: #{generative_net.1} parent=0 // pred_check_branch
    %48 = sbr.rel (0) target = $region45
  $region44: #{generative_net.1} parent=0 // pred_region
    _
  $region45: #{generative_net.1} parent=0 // pred_fallthru
    _
  // Predicated region
  $region46: #{generative_net.1} parent=0 // pred_check
    _
  $region47: #{generative_net.1} parent=0 // pred_check_branch
    %50 = sbr.rel (0) target = $region49
  $region48: #{generative_net.1} parent=0 // pred_region
    _
  $region49: #{generative_net.1} parent=0 // pred_fallthru
    _
  // Predicated region
  $region50: #{generative_net.1} parent=0 // pred_check
    _
  $region51: #{generative_net.1} parent=0 // pred_check_branch
    %52 = sbr.rel (0) target = $region53
  $region52: #{generative_net.1} parent=0 // pred_region
    _
  $region53: #{generative_net.1} parent=0 // pred_fallthru
    _
  // Predicated region
  $region54: #{generative_net.1} parent=0 // pred_check
    _
  $region55: #{generative_net.1} parent=0 // pred_check_branch
    %54 = sbr.rel (0) target = $region57
  $region56: #{generative_net.1} parent=0 // pred_region
    _
  $region57: #{generative_net.1} parent=0 // pred_fallthru
    _
  // Predicated region
  $region58: #{generative_net.1} parent=0 // pred_check
    _
  $region59: #{generative_net.1} parent=0 // pred_check_branch
    %56 = sbr.rel (0) target = $region61
  $region60: #{generative_net.1} parent=0 // pred_region
    _
  $region61: #{generative_net.1} parent=0 // pred_fallthru
    _
  // Predicated region
  $region62: #{generative_net.1} parent=0 // pred_check
    _
  $region63: #{generative_net.1} parent=0 // pred_check_branch
    %58 = sbr.rel (0) target = $region65
  $region64: #{generative_net.1} parent=0 // pred_region
    _
  $region65: #{generative_net.1} parent=0 // pred_fallthru
    _
  // Predicated region
  $region66: #{generative_net.1} parent=0 // pred_check
    _
  $region67: #{generative_net.1} parent=0 // pred_check_branch
    %60 = sbr.rel (0) target = $region69
  $region68: #{generative_net.1} parent=0 // pred_region
    _
  $region69: #{generative_net.1} parent=0 // pred_fallthru
    _
  // Predicated region
  $region70: #{generative_net.1} parent=0 // pred_check
    _
  $region71: #{generative_net.1} parent=0 // pred_check_branch
    %62 = sbr.rel (0) target = $region73
  $region72: #{generative_net.1} parent=0 // pred_region
    _
  $region73: #{generative_net.1} parent=0 // pred_fallthru
    _
  // Predicated region
  $region74: #{generative_net.1} parent=0 // pred_check
    _
  $region75: #{generative_net.1} parent=0 // pred_check_branch
    %64 = sbr.rel (0) target = $region77
  $region76: #{generative_net.1} parent=0 // pred_region
    _
  $region77: #{generative_net.1} parent=0 // pred_fallthru
    _
  // Predicated region
  $region78: #{generative_net.1} parent=0 // pred_check
    _
  $region79: #{generative_net.1} parent=0 // pred_check_branch
    %66 = sbr.rel (0) target = $region81
  $region80: #{generative_net.1} parent=0 // pred_region
    _
  $region81: #{generative_net.1} parent=0 // pred_fallthru
    _
  %v67 = vld [vmem:[%s1] sm:$0x3f]
  %v68 = vld [vmem:[%s0] sm:$0xff]
  %v69 = vld [vmem:[%s0 + $0x8] sm:$0xff]
  %v70 = vld [vmem:[%s0 + $0x10] sm:$0xff]
  %v71 = vld [vmem:[%s0 + $0x18] sm:$0xff]
  %v72 = vld [vmem:[%s0 + $0x20] sm:$0xff]
  %v73 = vld [vmem:[%s0 + $0x28] sm:$0xff]
  %v74 = vld [vmem:[%s0 + $0x30] sm:$0x1]
  %v75 = vld [vmem:[%s0 + $0x38] sm:$0x1]
  %v76 = vld [vmem:[%s0 + $0x40] sm:$0x1]
  %v77 = vld [vmem:[%s0 + $0x48] sm:$0x1]
  %v78 = vld [vmem:[%s0 + $0x50] sm:$0x1]
  %v79 = vld [vmem:[%s0 + $0x58] sm:$0x1]
  %v80 = vld [vmem:[%s2] sm:$0xff]
  %v81 = vld [vmem:[%s2 + $0x8] sm:$0xff]
  %v82 = vld [vmem:[%s3] sm:$0xff]
  %v83 = vld [vmem:[%s3 + $0x8] sm:$0xff]
  %85 = vset.pattern.permute.xlu0 0
  %86 = vperm.xlu0 %85, %v82
  %v87 = vpop.permute.xlu0 %86
  %90 = vset.pattern.permute.xlu0 0
  %91 = vperm.xlu0 %90, %v83
  %v92 = vpop.permute.xlu0 %91
  %vm94 = vcmask 72704
  %v96 = vsel %vm94, %v80, 0
  %v99 = vsel %vm94, %v81, 0
  %vm101 = vcmask 1040384
  %v103 = vsel %vm101, %v74, 0
  %v106 = vsel %vm101, %v75, 0
  %v109 = vsel %vm101, %v76, 0
  %v112 = vsel %vm101, %v77, 0
  %v115 = vsel %vm101, %v78, 0
  %v118 = vsel %vm101, %v79, 0
  %120 = vmatprep.subr.mxu0 0.0
  %121 = vmatpush1.msra.mxu0 0.0
  %122 = vmatprep.subr.mxu0 0.0
  %123 = vmatpush1.msra.mxu0 0.0
  %124 = vmatprep.subr.mxu0 0.0
  %125 = vmatpush1.msra.mxu0 0.0
  %126 = vmatprep.subr.mxu0 0.0
  %127 = vmatpush1.msra.mxu0 0.0
  %128 = vmatprep.subr.mxu0 0.0
  %129 = vmatpush1.msra.mxu0 0.0
  %130 = vmatprep.subr.mxu0 0.0
  %131 = vmatpush1.msra.mxu0 0.0
  %132 = vmatprep.subr.mxu0 0.0
  %133 = vmatpush1.msra.mxu0 0.0
  %134 = vmatprep.subr.mxu0 0.0
  %135 = vmatpush1.msra.mxu0 0.0
  %136 = vmatprep.subr.mxu0 0.0
  %137 = vmatpush1.msra.mxu0 0.0
  %138 = vmatprep.subr.mxu0 0.0
  %139 = vmatpush1.msra.mxu0 0.0
  %140 = vmatprep.subr.mxu0 0.0
  %141 = vmatpush1.msra.mxu0 0.0
  %142 = vmatprep.subr.mxu0 0.0
  %143 = vmatpush1.msra.mxu0 0.0
  %144 = vmatprep.subr.mxu0 0.0
  %145 = vmatpush1.msra.mxu0 0.0
  %146 = vmatprep.subr.mxu0 0.0
  %147 = vmatpush1.msra.mxu0 0.0
  %148 = vmatprep.subr.mxu0 %v106
  %149 = vmatpush1.msra.mxu0 %v103
  %150 = vmatprep.subr.mxu0 %v69
  %151 = vmatpush1.msra.mxu0 %v68
  %152 = vmatprep.subr.mxu0 0.0
  %153 = vmatpush2.msra.mxu0 0.0
  %154 = vmatprep.subr.mxu0 0.0
  %155 = vmatpush2.msra.mxu0 0.0
  %156 = vmatprep.subr.mxu0 0.0
  %157 = vmatpush2.msra.mxu0 0.0
  %158 = vmatprep.subr.mxu0 0.0
  %159 = vmatpush2.msra.mxu0 0.0
  %160 = vmatprep.subr.mxu0 0.0
  %161 = vmatpush2.msra.mxu0 0.0
  %162 = vmatprep.subr.mxu0 0.0
  %163 = vmatpush2.msra.mxu0 0.0
  %164 = vmatprep.subr.mxu0 0.0
  %165 = vmatpush2.msra.mxu0 0.0
  %166 = vmatprep.subr.mxu0 0.0
  %167 = vmatpush2.msra.mxu0 0.0
  %168 = vmatprep.subr.mxu0 0.0
  %169 = vmatpush2.msra.mxu0 0.0
  %170 = vmatprep.subr.mxu0 0.0
  %171 = vmatpush2.msra.mxu0 0.0
  %172 = vmatprep.subr.mxu0 0.0
  %173 = vmatpush2.msra.mxu0 0.0
  %174 = vmatprep.subr.mxu0 0.0
  %175 = vmatpush2.msra.mxu0 0.0
  %176 = vmatprep.subr.mxu0 0.0
  %177 = vmatpush2.msra.mxu0 0.0
  %178 = vmatprep.subr.mxu0 0.0
  %179 = vmatpush2.msra.mxu0 0.0
  %180 = vmatprep.subr.mxu0 0.0
  %181 = vmatpush2.msra.mxu0 0.0
  %182 = vmatprep.subr.mxu0 0.0
  %183 = vmatpush2.msra.mxu0 0.0
  %184 = vmatprep.mubr.f32.mxu0 0.0
  %185 = vmatmul.mubr.f32.gmra.mxu0 %v96
  %v186 = vpop.f32.mrf.mxu0
  %v187 = vadd.f32 %v87, %v186
  %v188 = vpop.f32.mrf.mxu0
  %v189 = vadd.f32 %v87, %v188
  %190 = vmatprep.mubr.f32.mxu0 0.0
  %191 = vmatmul.mubr.f32.gmra.mxu0 %v99
  %v192 = vpop.f32.mrf.mxu0
  %v193 = vadd.f32 %v92, %v192
  %v194 = vpop.f32.mrf.mxu0
  %v195 = vadd.f32 %v92, %v194
  %196 = vdwg.mxu0
  %197 = vmatprep.subr.mxu0 0.0
  %198 = vmatpush1.msra.mxu0 0.0
  %199 = vmatprep.subr.mxu0 0.0
  %200 = vmatpush1.msra.mxu0 0.0
  %201 = vmatprep.subr.mxu0 0.0
  %202 = vmatpush1.msra.mxu0 0.0
  %203 = vmatprep.subr.mxu0 0.0
  %204 = vmatpush1.msra.mxu0 0.0
  %205 = vmatprep.subr.mxu0 0.0
  %206 = vmatpush1.msra.mxu0 0.0
  %207 = vmatprep.subr.mxu0 0.0
  %208 = vmatpush1.msra.mxu0 0.0
  %209 = vmatprep.subr.mxu0 0.0
  %210 = vmatpush1.msra.mxu0 0.0
  %211 = vmatprep.subr.mxu0 0.0
  %212 = vmatpush1.msra.mxu0 0.0
  %213 = vmatprep.subr.mxu0 0.0
  %214 = vmatpush1.msra.mxu0 0.0
  %215 = vmatprep.subr.mxu0 0.0
  %216 = vmatpush1.msra.mxu0 0.0
  %217 = vmatprep.subr.mxu0 0.0
  %218 = vmatpush1.msra.mxu0 0.0
  %219 = vmatprep.subr.mxu0 0.0
  %220 = vmatpush1.msra.mxu0 0.0
  %221 = vmatprep.subr.mxu0 0.0
  %222 = vmatpush1.msra.mxu0 0.0
  %223 = vmatprep.subr.mxu0 0.0
  %224 = vmatpush1.msra.mxu0 0.0
  %225 = vmatprep.subr.mxu0 %v112
  %226 = vmatpush1.msra.mxu0 %v109
  %227 = vmatprep.subr.mxu0 %v71
  %228 = vmatpush1.msra.mxu0 %v70
  %229 = vmatprep.subr.mxu0 0.0
  %230 = vmatpush2.msra.mxu0 0.0
  %231 = vmatprep.subr.mxu0 0.0
  %232 = vmatpush2.msra.mxu0 0.0
  %233 = vmatprep.subr.mxu0 0.0
  %234 = vmatpush2.msra.mxu0 0.0
  %235 = vmatprep.subr.mxu0 0.0
  %236 = vmatpush2.msra.mxu0 0.0
  %237 = vmatprep.subr.mxu0 0.0
  %238 = vmatpush2.msra.mxu0 0.0
  %239 = vmatprep.subr.mxu0 0.0
  %240 = vmatpush2.msra.mxu0 0.0
  %241 = vmatprep.subr.mxu0 0.0
  %242 = vmatpush2.msra.mxu0 0.0
  %243 = vmatprep.subr.mxu0 0.0
  %244 = vmatpush2.msra.mxu0 0.0
  %245 = vmatprep.subr.mxu0 0.0
  %246 = vmatpush2.msra.mxu0 0.0
  %247 = vmatprep.subr.mxu0 0.0
  %248 = vmatpush2.msra.mxu0 0.0
  %249 = vmatprep.subr.mxu0 0.0
  %250 = vmatpush2.msra.mxu0 0.0
  %251 = vmatprep.subr.mxu0 0.0
  %252 = vmatpush2.msra.mxu0 0.0
  %253 = vmatprep.subr.mxu0 0.0
  %254 = vmatpush2.msra.mxu0 0.0
  %255 = vmatprep.subr.mxu0 0.0
  %256 = vmatpush2.msra.mxu0 0.0
  %257 = vmatprep.subr.mxu0 0.0
  %258 = vmatpush2.msra.mxu0 0.0
  %259 = vmatprep.subr.mxu0 0.0
  %260 = vmatpush2.msra.mxu0 0.0
  %261 = vmatprep.mubr.f32.mxu0 0.0
  %262 = vmatmul.mubr.f32.gmra.mxu0 %v96
  %v263 = vpop.f32.mrf.mxu0
  %v264 = vadd.f32 %v87, %v263
  %v265 = vpop.f32.mrf.mxu0
  %v266 = vadd.f32 %v87, %v265
  %267 = vmatprep.mubr.f32.mxu0 0.0
  %268 = vmatmul.mubr.f32.gmra.mxu0 %v99
  %v269 = vpop.f32.mrf.mxu0
  %v270 = vadd.f32 %v92, %v269
  %v271 = vpop.f32.mrf.mxu0
  %v272 = vadd.f32 %v92, %v271
  %273 = vdwg.mxu0
  %274 = vmatprep.subr.mxu0 0.0
  %275 = vmatpush1.msra.mxu0 0.0
  %276 = vmatprep.subr.mxu0 0.0
  %277 = vmatpush1.msra.mxu0 0.0
  %278 = vmatprep.subr.mxu0 0.0
  %279 = vmatpush1.msra.mxu0 0.0
  %280 = vmatprep.subr.mxu0 0.0
  %281 = vmatpush1.msra.mxu0 0.0
  %282 = vmatprep.subr.mxu0 0.0
  %283 = vmatpush1.msra.mxu0 0.0
  %284 = vmatprep.subr.mxu0 0.0
  %285 = vmatpush1.msra.mxu0 0.0
  %286 = vmatprep.subr.mxu0 0.0
  %287 = vmatpush1.msra.mxu0 0.0
  %288 = vmatprep.subr.mxu0 0.0
  %289 = vmatpush1.msra.mxu0 0.0
  %290 = vmatprep.subr.mxu0 0.0
  %291 = vmatpush1.msra.mxu0 0.0
  %292 = vmatprep.subr.mxu0 0.0
  %293 = vmatpush1.msra.mxu0 0.0
  %294 = vmatprep.subr.mxu0 0.0
  %295 = vmatpush1.msra.mxu0 0.0
  %296 = vmatprep.subr.mxu0 0.0
  %297 = vmatpush1.msra.mxu0 0.0
  %298 = vmatprep.subr.mxu0 0.0
  %299 = vmatpush1.msra.mxu0 0.0
  %300 = vmatprep.subr.mxu0 0.0
  %301 = vmatpush1.msra.mxu0 0.0
  %302 = vmatprep.subr.mxu0 %v118
  %303 = vmatpush1.msra.mxu0 %v115
  %304 = vmatprep.subr.mxu0 %v73
  %305 = vmatpush1.msra.mxu0 %v72
  %306 = vmatprep.subr.mxu0 0.0
  %307 = vmatpush2.msra.mxu0 0.0
  %308 = vmatprep.subr.mxu0 0.0
  %309 = vmatpush2.msra.mxu0 0.0
  %310 = vmatprep.subr.mxu0 0.0
  %311 = vmatpush2.msra.mxu0 0.0
  %312 = vmatprep.subr.mxu0 0.0
  %313 = vmatpush2.msra.mxu0 0.0
  %314 = vmatprep.subr.mxu0 0.0
  %315 = vmatpush2.msra.mxu0 0.0
  %316 = vmatprep.subr.mxu0 0.0
  %317 = vmatpush2.msra.mxu0 0.0
  %318 = vmatprep.subr.mxu0 0.0
  %319 = vmatpush2.msra.mxu0 0.0
  %320 = vmatprep.subr.mxu0 0.0
  %321 = vmatpush2.msra.mxu0 0.0
  %322 = vmatprep.subr.mxu0 0.0
  %323 = vmatpush2.msra.mxu0 0.0
  %324 = vmatprep.subr.mxu0 0.0
  %325 = vmatpush2.msra.mxu0 0.0
  %326 = vmatprep.subr.mxu0 0.0
  %327 = vmatpush2.msra.mxu0 0.0
  %328 = vmatprep.subr.mxu0 0.0
  %329 = vmatpush2.msra.mxu0 0.0
  %330 = vmatprep.subr.mxu0 0.0
  %331 = vmatpush2.msra.mxu0 0.0
  %332 = vmatprep.subr.mxu0 0.0
  %333 = vmatpush2.msra.mxu0 0.0
  %334 = vmatprep.subr.mxu0 0.0
  %335 = vmatpush2.msra.mxu0 0.0
  %336 = vmatprep.subr.mxu0 0.0
  %337 = vmatpush2.msra.mxu0 0.0
  %338 = vmatprep.mubr.f32.mxu0 0.0
  %339 = vmatmul.mubr.f32.gmra.mxu0 %v96
  %v340 = vpop.f32.mrf.mxu0
  %v341 = vadd.f32 %v87, %v340
  %v342 = vpop.f32.mrf.mxu0
  %v343 = vadd.f32 %v87, %v342
  %344 = vmatprep.mubr.f32.mxu0 0.0
  %345 = vmatmul.mubr.f32.gmra.mxu0 %v99
  %v346 = vpop.f32.mrf.mxu0
  %v347 = vadd.f32 %v92, %v346
  %v348 = vpop.f32.mrf.mxu0
  %v349 = vadd.f32 %v92, %v348
  %350 = vdwg.mxu0
  %v351 = vmax.f32 %v187, 0.0
  %v352 = vmax.f32 %v189, 0.0
  %v353 = vmax.f32 %v264, 0.0
  %v354 = vmax.f32 %v266, 0.0
  %v355 = vmax.f32 %v341, 0.0
  %v356 = vmax.f32 %v343, 0.0
  %v357 = vmax.f32 %v193, 0.0
  %v358 = vmax.f32 %v195, 0.0
  %v359 = vmax.f32 %v270, 0.0
  %v360 = vmax.f32 %v272, 0.0
  %v361 = vmax.f32 %v347, 0.0
  %v362 = vmax.f32 %v349, 0.0
  %v364 = vlaneseq
  %v365 = vshrl.u32 %v364, 7
  %v366 = vsub.s32 0, %v365
  %v367 = vrot.slane %v67, %v366
  %v368 = vlaneseq
  %v369 = vshrl.u32 %v368, 7
  %v370 = vsub.s32 1, %v369
  %v371 = vrot.slane %v67, %v370
  %v372 = vlaneseq
  %v373 = vshrl.u32 %v372, 7
  %v374 = vsub.s32 2, %v373
  %v375 = vrot.slane %v67, %v374
  %v376 = vlaneseq
  %v377 = vshrl.u32 %v376, 7
  %v378 = vsub.s32 3, %v377
  %v379 = vrot.slane %v67, %v378
  %v380 = vlaneseq
  %v381 = vshrl.u32 %v380, 7
  %v382 = vsub.s32 4, %v381
  %v383 = vrot.slane %v67, %v382
  %v384 = vlaneseq
  %v385 = vshrl.u32 %v384, 7
  %v386 = vsub.s32 5, %v385
  %v387 = vrot.slane %v67, %v386
  %v394 = vmul.f32 %v351, %v367
  %v395 = vmul.f32 %v352, %v371
  %v396 = vmul.f32 %v353, %v375
  %v397 = vmul.f32 %v354, %v379
  %v398 = vmul.f32 %v355, %v383
  %v399 = vmul.f32 %v356, %v387
  %v400 = vmul.f32 %v357, %v367
  %v401 = vmul.f32 %v358, %v371
  %v402 = vmul.f32 %v359, %v375
  %v403 = vmul.f32 %v360, %v379
  %v404 = vmul.f32 %v361, %v383
  %v405 = vmul.f32 %v362, %v387
  %419 = vrot.lane.b32.xlu0 0.0, 127
  %v420 = vpop.permute.xlu0 %419
  %421 = vrot.lane.b32.xlu0 %v394, 127
  %v422 = vpop.permute.xlu0 %421
  %423 = vrot.lane.b32.xlu0 %v395, 127
  %v424 = vpop.permute.xlu0 %423
  %425 = vrot.lane.b32.xlu0 %v396, 127
  %v426 = vpop.permute.xlu0 %425
  %427 = vrot.lane.b32.xlu0 %v397, 127
  %v428 = vpop.permute.xlu0 %427
  %429 = vrot.lane.b32.xlu0 %v398, 127
  %v430 = vpop.permute.xlu0 %429
  %431 = vrot.lane.b32.xlu0 %v399, 127
  %v432 = vpop.permute.xlu0 %431
  %433 = vrot.lane.b32.xlu0 %v400, 127
  %v434 = vpop.permute.xlu0 %433
  %435 = vrot.lane.b32.xlu0 %v401, 127
  %v436 = vpop.permute.xlu0 %435
  %437 = vrot.lane.b32.xlu0 %v402, 127
  %v438 = vpop.permute.xlu0 %437
  %439 = vrot.lane.b32.xlu0 %v403, 127
  %v440 = vpop.permute.xlu0 %439
  %441 = vrot.lane.b32.xlu0 %v404, 127
  %v442 = vpop.permute.xlu0 %441
  %443 = vrot.lane.b32.xlu0 %v405, 127
  %v444 = vpop.permute.xlu0 %443
  %vm445 = vcmask 1039360
  %v446 = vsel %vm445, %v420, %v422
  %v447 = vsel %vm445, %v422, %v424
  %v448 = vsel %vm445, %v424, %v426
  %v449 = vsel %vm445, %v426, %v428
  %v450 = vsel %vm445, %v428, %v430
  %v451 = vsel %vm445, %v430, %v432
  %v452 = vsel %vm445, %v420, %v434
  %v453 = vsel %vm445, %v434, %v436
  %v454 = vsel %vm445, %v436, %v438
  %v455 = vsel %vm445, %v438, %v440
  %v456 = vsel %vm445, %v440, %v442
  %v457 = vsel %vm445, %v442, %v444
  %458 = vrot.lane.b32.xlu0 0.0, 126
  %v459 = vpop.permute.xlu0 %458
  %460 = vrot.lane.b32.xlu0 %v394, 126
  %v461 = vpop.permute.xlu0 %460
  %462 = vrot.lane.b32.xlu0 %v395, 126
  %v463 = vpop.permute.xlu0 %462
  %464 = vrot.lane.b32.xlu0 %v396, 126
  %v465 = vpop.permute.xlu0 %464
  %466 = vrot.lane.b32.xlu0 %v397, 126
  %v467 = vpop.permute.xlu0 %466
  %468 = vrot.lane.b32.xlu0 %v398, 126
  %v469 = vpop.permute.xlu0 %468
  %470 = vrot.lane.b32.xlu0 %v399, 126
  %v471 = vpop.permute.xlu0 %470
  %472 = vrot.lane.b32.xlu0 %v400, 126
  %v473 = vpop.permute.xlu0 %472
  %474 = vrot.lane.b32.xlu0 %v401, 126
  %v475 = vpop.permute.xlu0 %474
  %476 = vrot.lane.b32.xlu0 %v402, 126
  %v477 = vpop.permute.xlu0 %476
  %478 = vrot.lane.b32.xlu0 %v403, 126
  %v479 = vpop.permute.xlu0 %478
  %480 = vrot.lane.b32.xlu0 %v404, 126
  %v481 = vpop.permute.xlu0 %480
  %482 = vrot.lane.b32.xlu0 %v405, 126
  %v483 = vpop.permute.xlu0 %482
  %vm484 = vcmask 1031168
  %v485 = vsel %vm484, %v459, %v461
  %v486 = vsel %vm484, %v461, %v463
  %v487 = vsel %vm484, %v463, %v465
  %v488 = vsel %vm484, %v465, %v467
  %v489 = vsel %vm484, %v467, %v469
  %v490 = vsel %vm484, %v469, %v471
  %v491 = vsel %vm484, %v459, %v473
  %v492 = vsel %vm484, %v473, %v475
  %v493 = vsel %vm484, %v475, %v477
  %v494 = vsel %vm484, %v477, %v479
  %v495 = vsel %vm484, %v479, %v481
  %v496 = vsel %vm484, %v481, %v483
  %497 = vrot.lane.b32.xlu0 0.0, 110
  %v498 = vpop.permute.xlu0 %497
  %499 = vrot.lane.b32.xlu0 %v394, 110
  %v500 = vpop.permute.xlu0 %499
  %501 = vrot.lane.b32.xlu0 %v395, 110
  %v502 = vpop.permute.xlu0 %501
  %503 = vrot.lane.b32.xlu0 %v396, 110
  %v504 = vpop.permute.xlu0 %503
  %505 = vrot.lane.b32.xlu0 %v397, 110
  %v506 = vpop.permute.xlu0 %505
  %507 = vrot.lane.b32.xlu0 %v398, 110
  %v508 = vpop.permute.xlu0 %507
  %509 = vrot.lane.b32.xlu0 %v399, 110
  %v510 = vpop.permute.xlu0 %509
  %511 = vrot.lane.b32.xlu0 %v400, 110
  %v512 = vpop.permute.xlu0 %511
  %513 = vrot.lane.b32.xlu0 %v401, 110
  %v514 = vpop.permute.xlu0 %513
  %515 = vrot.lane.b32.xlu0 %v402, 110
  %v516 = vpop.permute.xlu0 %515
  %517 = vrot.lane.b32.xlu0 %v403, 110
  %v518 = vpop.permute.xlu0 %517
  %519 = vrot.lane.b32.xlu0 %v404, 110
  %v520 = vpop.permute.xlu0 %519
  %521 = vrot.lane.b32.xlu0 %v405, 110
  %v522 = vpop.permute.xlu0 %521
  %vm523 = vcmask 900096
  %v524 = vsel %vm523, %v498, %v500
  %v525 = vsel %vm523, %v500, %v502
  %v526 = vsel %vm523, %v502, %v504
  %v527 = vsel %vm523, %v504, %v506
  %v528 = vsel %vm523, %v506, %v508
  %v529 = vsel %vm523, %v508, %v510
  %v530 = vsel %vm523, %v498, %v512
  %v531 = vsel %vm523, %v512, %v514
  %v532 = vsel %vm523, %v514, %v516
  %v533 = vsel %vm523, %v516, %v518
  %v534 = vsel %vm523, %v518, %v520
  %v535 = vsel %vm523, %v520, %v522
  %536 = vrot.lane.b32.xlu0 %v394, 109
  %v537 = vpop.permute.xlu0 %536
  %538 = vrot.lane.b32.xlu0 %v395, 109
  %v539 = vpop.permute.xlu0 %538
  %540 = vrot.lane.b32.xlu0 %v396, 109
  %v541 = vpop.permute.xlu0 %540
  %542 = vrot.lane.b32.xlu0 %v397, 109
  %v543 = vpop.permute.xlu0 %542
  %544 = vrot.lane.b32.xlu0 %v398, 109
  %v545 = vpop.permute.xlu0 %544
  %546 = vrot.lane.b32.xlu0 %v399, 109
  %v547 = vpop.permute.xlu0 %546
  %548 = vrot.lane.b32.xlu0 %v400, 109
  %v549 = vpop.permute.xlu0 %548
  %550 = vrot.lane.b32.xlu0 %v401, 109
  %v551 = vpop.permute.xlu0 %550
  %552 = vrot.lane.b32.xlu0 %v402, 109
  %v553 = vpop.permute.xlu0 %552
  %554 = vrot.lane.b32.xlu0 %v403, 109
  %v555 = vpop.permute.xlu0 %554
  %556 = vrot.lane.b32.xlu0 %v404, 109
  %v557 = vpop.permute.xlu0 %556
  %558 = vrot.lane.b32.xlu0 %v405, 109
  %v559 = vpop.permute.xlu0 %558
  %vm560 = vcmask 891904
  %v561 = vsel %vm560, %v537, %v539
  %v562 = vsel %vm560, %v539, %v541
  %v563 = vsel %vm560, %v541, %v543
  %v564 = vsel %vm560, %v543, %v545
  %v565 = vsel %vm560, %v545, %v547
  %v566 = vsel %vm560, %v549, %v551
  %v567 = vsel %vm560, %v551, %v553
  %v568 = vsel %vm560, %v553, %v555
  %v569 = vsel %vm560, %v555, %v557
  %v570 = vsel %vm560, %v557, %v559
  %571 = vrot.lane.b32.xlu0 %v394, 108
  %v572 = vpop.permute.xlu0 %571
  %573 = vrot.lane.b32.xlu0 %v395, 108
  %v574 = vpop.permute.xlu0 %573
  %575 = vrot.lane.b32.xlu0 %v396, 108
  %v576 = vpop.permute.xlu0 %575
  %577 = vrot.lane.b32.xlu0 %v397, 108
  %v578 = vpop.permute.xlu0 %577
  %579 = vrot.lane.b32.xlu0 %v398, 108
  %v580 = vpop.permute.xlu0 %579
  %581 = vrot.lane.b32.xlu0 %v399, 108
  %v582 = vpop.permute.xlu0 %581
  %583 = vrot.lane.b32.xlu0 0.0, 108
  %v584 = vpop.permute.xlu0 %583
  %585 = vrot.lane.b32.xlu0 %v400, 108
  %v586 = vpop.permute.xlu0 %585
  %587 = vrot.lane.b32.xlu0 %v401, 108
  %v588 = vpop.permute.xlu0 %587
  %589 = vrot.lane.b32.xlu0 %v402, 108
  %v590 = vpop.permute.xlu0 %589
  %591 = vrot.lane.b32.xlu0 %v403, 108
  %v592 = vpop.permute.xlu0 %591
  %593 = vrot.lane.b32.xlu0 %v404, 108
  %v594 = vpop.permute.xlu0 %593
  %595 = vrot.lane.b32.xlu0 %v405, 108
  %v596 = vpop.permute.xlu0 %595
  %vm597 = vcmask 883712
  %v598 = vsel %vm597, %v572, %v574
  %v599 = vsel %vm597, %v574, %v576
  %v600 = vsel %vm597, %v576, %v578
  %v601 = vsel %vm597, %v578, %v580
  %v602 = vsel %vm597, %v580, %v582
  %v603 = vsel %vm597, %v582, %v584
  %v604 = vsel %vm597, %v586, %v588
  %v605 = vsel %vm597, %v588, %v590
  %v606 = vsel %vm597, %v590, %v592
  %v607 = vsel %vm597, %v592, %v594
  %v608 = vsel %vm597, %v594, %v596
  %v609 = vsel %vm597, %v596, %v584
  %610 = vrot.lane.b32.xlu0 %v394, 92
  %v611 = vpop.permute.xlu0 %610
  %612 = vrot.lane.b32.xlu0 %v395, 92
  %v613 = vpop.permute.xlu0 %612
  %614 = vrot.lane.b32.xlu0 %v396, 92
  %v615 = vpop.permute.xlu0 %614
  %616 = vrot.lane.b32.xlu0 %v397, 92
  %v617 = vpop.permute.xlu0 %616
  %618 = vrot.lane.b32.xlu0 %v398, 92
  %v619 = vpop.permute.xlu0 %618
  %620 = vrot.lane.b32.xlu0 %v399, 92
  %v621 = vpop.permute.xlu0 %620
  %622 = vrot.lane.b32.xlu0 0.0, 92
  %v623 = vpop.permute.xlu0 %622
  %624 = vrot.lane.b32.xlu0 %v400, 92
  %v625 = vpop.permute.xlu0 %624
  %626 = vrot.lane.b32.xlu0 %v401, 92
  %v627 = vpop.permute.xlu0 %626
  %628 = vrot.lane.b32.xlu0 %v402, 92
  %v629 = vpop.permute.xlu0 %628
  %630 = vrot.lane.b32.xlu0 %v403, 92
  %v631 = vpop.permute.xlu0 %630
  %632 = vrot.lane.b32.xlu0 %v404, 92
  %v633 = vpop.permute.xlu0 %632
  %634 = vrot.lane.b32.xlu0 %v405, 92
  %v635 = vpop.permute.xlu0 %634
  %vm636 = vcmask 752640
  %v637 = vsel %vm636, %v611, %v613
  %v638 = vsel %vm636, %v613, %v615
  %v639 = vsel %vm636, %v615, %v617
  %v640 = vsel %vm636, %v617, %v619
  %v641 = vsel %vm636, %v619, %v621
  %v642 = vsel %vm636, %v621, %v623
  %v643 = vsel %vm636, %v625, %v627
  %v644 = vsel %vm636, %v627, %v629
  %v645 = vsel %vm636, %v629, %v631
  %v646 = vsel %vm636, %v631, %v633
  %v647 = vsel %vm636, %v633, %v635
  %v648 = vsel %vm636, %v635, %v623
  %649 = vrot.lane.b32.xlu0 %v394, 91
  %v650 = vpop.permute.xlu0 %649
  %651 = vrot.lane.b32.xlu0 %v395, 91
  %v652 = vpop.permute.xlu0 %651
  %653 = vrot.lane.b32.xlu0 %v396, 91
  %v654 = vpop.permute.xlu0 %653
  %655 = vrot.lane.b32.xlu0 %v397, 91
  %v656 = vpop.permute.xlu0 %655
  %657 = vrot.lane.b32.xlu0 %v398, 91
  %v658 = vpop.permute.xlu0 %657
  %659 = vrot.lane.b32.xlu0 %v399, 91
  %v660 = vpop.permute.xlu0 %659
  %661 = vrot.lane.b32.xlu0 0.0, 91
  %v662 = vpop.permute.xlu0 %661
  %663 = vrot.lane.b32.xlu0 %v400, 91
  %v664 = vpop.permute.xlu0 %663
  %665 = vrot.lane.b32.xlu0 %v401, 91
  %v666 = vpop.permute.xlu0 %665
  %667 = vrot.lane.b32.xlu0 %v402, 91
  %v668 = vpop.permute.xlu0 %667
  %669 = vrot.lane.b32.xlu0 %v403, 91
  %v670 = vpop.permute.xlu0 %669
  %671 = vrot.lane.b32.xlu0 %v404, 91
  %v672 = vpop.permute.xlu0 %671
  %673 = vrot.lane.b32.xlu0 %v405, 91
  %v674 = vpop.permute.xlu0 %673
  %vm675 = vcmask 744448
  %v676 = vsel %vm675, %v650, %v652
  %v677 = vsel %vm675, %v652, %v654
  %v678 = vsel %vm675, %v654, %v656
  %v679 = vsel %vm675, %v656, %v658
  %v680 = vsel %vm675, %v658, %v660
  %v681 = vsel %vm675, %v660, %v662
  %v682 = vsel %vm675, %v664, %v666
  %v683 = vsel %vm675, %v666, %v668
  %v684 = vsel %vm675, %v668, %v670
  %v685 = vsel %vm675, %v670, %v672
  %v686 = vsel %vm675, %v672, %v674
  %v687 = vsel %vm675, %v674, %v662
  %688 = vrot.lane.b32.xlu0 %v394, 90
  %v689 = vpop.permute.xlu0 %688
  %690 = vrot.lane.b32.xlu0 %v395, 90
  %v691 = vpop.permute.xlu0 %690
  %692 = vrot.lane.b32.xlu0 %v396, 90
  %v693 = vpop.permute.xlu0 %692
  %694 = vrot.lane.b32.xlu0 %v397, 90
  %v695 = vpop.permute.xlu0 %694
  %696 = vrot.lane.b32.xlu0 %v398, 90
  %v697 = vpop.permute.xlu0 %696
  %698 = vrot.lane.b32.xlu0 %v399, 90
  %v699 = vpop.permute.xlu0 %698
  %700 = vrot.lane.b32.xlu0 0.0, 90
  %v701 = vpop.permute.xlu0 %700
  %702 = vrot.lane.b32.xlu0 %v400, 90
  %v703 = vpop.permute.xlu0 %702
  %704 = vrot.lane.b32.xlu0 %v401, 90
  %v705 = vpop.permute.xlu0 %704
  %706 = vrot.lane.b32.xlu0 %v402, 90
  %v707 = vpop.permute.xlu0 %706
  %708 = vrot.lane.b32.xlu0 %v403, 90
  %v709 = vpop.permute.xlu0 %708
  %710 = vrot.lane.b32.xlu0 %v404, 90
  %v711 = vpop.permute.xlu0 %710
  %712 = vrot.lane.b32.xlu0 %v405, 90
  %v713 = vpop.permute.xlu0 %712
  %vm714 = vcmask 736256
  %v715 = vsel %vm714, %v689, %v691
  %v716 = vsel %vm714, %v691, %v693
  %v717 = vsel %vm714, %v693, %v695
  %v718 = vsel %vm714, %v695, %v697
  %v719 = vsel %vm714, %v697, %v699
  %v720 = vsel %vm714, %v699, %v701
  %v721 = vsel %vm714, %v703, %v705
  %v722 = vsel %vm714, %v705, %v707
  %v723 = vsel %vm714, %v707, %v709
  %v724 = vsel %vm714, %v709, %v711
  %v725 = vsel %vm714, %v711, %v713
  %v726 = vsel %vm714, %v713, %v701
  %v727 = vld [vmem:[%s4] sm:$0xff]
  %v728 = vld [vmem:[%s4 + $0x8] sm:$0xff]
  %v729 = vld [vmem:[%s4 + $0x10] sm:$0xff]
  %v730 = vld [vmem:[%s4 + $0x18] sm:$0xff]
  %v731 = vld [vmem:[%s4 + $0x20] sm:$0xff]
  %v732 = vld [vmem:[%s4 + $0x28] sm:$0xff]
  %v733 = vld [vmem:[%s4 + $0x30] sm:$0xff]
  %v734 = vld [vmem:[%s4 + $0x38] sm:$0xff]
  %v735 = vld [vmem:[%s5] sm:$0xff]
  %v736 = vld [vmem:[%s5 + $0x8] sm:$0xff]
  %v737 = vld [vmem:[%s5 + $0x10] sm:$0xff]
  %v738 = vld [vmem:[%s5 + $0x18] sm:$0xff]
  %740 = vset.pattern.permute.xlu0 0
  %741 = vperm.xlu0 %740, %v735
  %v742 = vpop.permute.xlu0 %741
  %745 = vset.pattern.permute.xlu0 0
  %746 = vperm.xlu0 %745, %v736
  %v747 = vpop.permute.xlu0 %746
  %750 = vset.pattern.permute.xlu0 0
  %751 = vperm.xlu0 %750, %v737
  %v752 = vpop.permute.xlu0 %751
  %755 = vset.pattern.permute.xlu0 0
  %756 = vperm.xlu0 %755, %v738
  %v757 = vpop.permute.xlu0 %756
  %759 = vrot.lane.b32.xlu0 0.0, 19
  %v760 = vpop.permute.xlu0 %759
  %761 = vrot.lane.b32.xlu0 %v394, 19
  %v762 = vpop.permute.xlu0 %761
  %763 = vrot.lane.b32.xlu0 %v395, 19
  %v764 = vpop.permute.xlu0 %763
  %765 = vrot.lane.b32.xlu0 %v396, 19
  %v766 = vpop.permute.xlu0 %765
  %767 = vrot.lane.b32.xlu0 %v397, 19
  %v768 = vpop.permute.xlu0 %767
  %769 = vrot.lane.b32.xlu0 %v398, 19
  %v770 = vpop.permute.xlu0 %769
  %771 = vrot.lane.b32.xlu0 %v399, 19
  %v772 = vpop.permute.xlu0 %771
  %773 = vrot.lane.b32.xlu0 %v400, 19
  %v774 = vpop.permute.xlu0 %773
  %775 = vrot.lane.b32.xlu0 %v401, 19
  %v776 = vpop.permute.xlu0 %775
  %777 = vrot.lane.b32.xlu0 %v402, 19
  %v778 = vpop.permute.xlu0 %777
  %779 = vrot.lane.b32.xlu0 %v403, 19
  %v780 = vpop.permute.xlu0 %779
  %781 = vrot.lane.b32.xlu0 %v404, 19
  %v782 = vpop.permute.xlu0 %781
  %783 = vrot.lane.b32.xlu0 %v405, 19
  %v784 = vpop.permute.xlu0 %783
  %785 = vrot.lane.b32.xlu0 %v446, 19
  %v786 = vpop.permute.xlu0 %785
  %787 = vrot.lane.b32.xlu0 %v447, 19
  %v788 = vpop.permute.xlu0 %787
  %789 = vrot.lane.b32.xlu0 %v448, 19
  %v790 = vpop.permute.xlu0 %789
  %791 = vrot.lane.b32.xlu0 %v449, 19
  %v792 = vpop.permute.xlu0 %791
  %793 = vrot.lane.b32.xlu0 %v450, 19
  %v794 = vpop.permute.xlu0 %793
  %795 = vrot.lane.b32.xlu0 %v451, 19
  %v796 = vpop.permute.xlu0 %795
  %797 = vrot.lane.b32.xlu0 %v432, 19
  %v798 = vpop.permute.xlu0 %797
  %799 = vrot.lane.b32.xlu0 %v452, 19
  %v800 = vpop.permute.xlu0 %799
  %801 = vrot.lane.b32.xlu0 %v453, 19
  %v802 = vpop.permute.xlu0 %801
  %803 = vrot.lane.b32.xlu0 %v454, 19
  %v804 = vpop.permute.xlu0 %803
  %805 = vrot.lane.b32.xlu0 %v455, 19
  %v806 = vpop.permute.xlu0 %805
  %807 = vrot.lane.b32.xlu0 %v456, 19
  %v808 = vpop.permute.xlu0 %807
  %809 = vrot.lane.b32.xlu0 %v457, 19
  %v810 = vpop.permute.xlu0 %809
  %811 = vrot.lane.b32.xlu0 %v444, 19
  %v812 = vpop.permute.xlu0 %811
  %813 = vrot.lane.b32.xlu0 %v485, 19
  %v814 = vpop.permute.xlu0 %813
  %815 = vrot.lane.b32.xlu0 %v486, 19
  %v816 = vpop.permute.xlu0 %815
  %817 = vrot.lane.b32.xlu0 %v487, 19
  %v818 = vpop.permute.xlu0 %817
  %819 = vrot.lane.b32.xlu0 %v488, 19
  %v820 = vpop.permute.xlu0 %819
  %821 = vrot.lane.b32.xlu0 %v489, 19
  %v822 = vpop.permute.xlu0 %821
  %823 = vrot.lane.b32.xlu0 %v490, 19
  %v824 = vpop.permute.xlu0 %823
  %825 = vrot.lane.b32.xlu0 %v471, 19
  %v826 = vpop.permute.xlu0 %825
  %827 = vrot.lane.b32.xlu0 %v491, 19
  %v828 = vpop.permute.xlu0 %827
  %829 = vrot.lane.b32.xlu0 %v492, 19
  %v830 = vpop.permute.xlu0 %829
  %831 = vrot.lane.b32.xlu0 %v493, 19
  %v832 = vpop.permute.xlu0 %831
  %833 = vrot.lane.b32.xlu0 %v494, 19
  %v834 = vpop.permute.xlu0 %833
  %835 = vrot.lane.b32.xlu0 %v495, 19
  %v836 = vpop.permute.xlu0 %835
  %837 = vrot.lane.b32.xlu0 %v496, 19
  %v838 = vpop.permute.xlu0 %837
  %839 = vrot.lane.b32.xlu0 %v483, 19
  %v840 = vpop.permute.xlu0 %839
  %841 = vrot.lane.b32.xlu0 %v524, 19
  %v842 = vpop.permute.xlu0 %841
  %843 = vrot.lane.b32.xlu0 %v525, 19
  %v844 = vpop.permute.xlu0 %843
  %845 = vrot.lane.b32.xlu0 %v526, 19
  %v846 = vpop.permute.xlu0 %845
  %847 = vrot.lane.b32.xlu0 %v527, 19
  %v848 = vpop.permute.xlu0 %847
  %849 = vrot.lane.b32.xlu0 %v528, 19
  %v850 = vpop.permute.xlu0 %849
  %851 = vrot.lane.b32.xlu0 %v529, 19
  %v852 = vpop.permute.xlu0 %851
  %853 = vrot.lane.b32.xlu0 %v510, 19
  %v854 = vpop.permute.xlu0 %853
  %855 = vrot.lane.b32.xlu0 %v530, 19
  %v856 = vpop.permute.xlu0 %855
  %857 = vrot.lane.b32.xlu0 %v531, 19
  %v858 = vpop.permute.xlu0 %857
  %859 = vrot.lane.b32.xlu0 %v532, 19
  %v860 = vpop.permute.xlu0 %859
  %861 = vrot.lane.b32.xlu0 %v533, 19
  %v862 = vpop.permute.xlu0 %861
  %863 = vrot.lane.b32.xlu0 %v534, 19
  %v864 = vpop.permute.xlu0 %863
  %865 = vrot.lane.b32.xlu0 %v535, 19
  %v866 = vpop.permute.xlu0 %865
  %867 = vrot.lane.b32.xlu0 %v522, 19
  %v868 = vpop.permute.xlu0 %867
  %869 = vrot.lane.b32.xlu0 %v537, 19
  %v870 = vpop.permute.xlu0 %869
  %871 = vrot.lane.b32.xlu0 %v561, 19
  %v872 = vpop.permute.xlu0 %871
  %873 = vrot.lane.b32.xlu0 %v562, 19
  %v874 = vpop.permute.xlu0 %873
  %875 = vrot.lane.b32.xlu0 %v563, 19
  %v876 = vpop.permute.xlu0 %875
  %877 = vrot.lane.b32.xlu0 %v564, 19
  %v878 = vpop.permute.xlu0 %877
  %879 = vrot.lane.b32.xlu0 %v565, 19
  %v880 = vpop.permute.xlu0 %879
  %881 = vrot.lane.b32.xlu0 %v547, 19
  %v882 = vpop.permute.xlu0 %881
  %883 = vrot.lane.b32.xlu0 %v549, 19
  %v884 = vpop.permute.xlu0 %883
  %885 = vrot.lane.b32.xlu0 %v566, 19
  %v886 = vpop.permute.xlu0 %885
  %887 = vrot.lane.b32.xlu0 %v567, 19
  %v888 = vpop.permute.xlu0 %887
  %889 = vrot.lane.b32.xlu0 %v568, 19
  %v890 = vpop.permute.xlu0 %889
  %891 = vrot.lane.b32.xlu0 %v569, 19
  %v892 = vpop.permute.xlu0 %891
  %893 = vrot.lane.b32.xlu0 %v570, 19
  %v894 = vpop.permute.xlu0 %893
  %895 = vrot.lane.b32.xlu0 %v559, 19
  %v896 = vpop.permute.xlu0 %895
  %897 = vrot.lane.b32.xlu0 %v572, 19
  %v898 = vpop.permute.xlu0 %897
  %899 = vrot.lane.b32.xlu0 %v598, 19
  %v900 = vpop.permute.xlu0 %899
  %901 = vrot.lane.b32.xlu0 %v599, 19
  %v902 = vpop.permute.xlu0 %901
  %903 = vrot.lane.b32.xlu0 %v600, 19
  %v904 = vpop.permute.xlu0 %903
  %905 = vrot.lane.b32.xlu0 %v601, 19
  %v906 = vpop.permute.xlu0 %905
  %907 = vrot.lane.b32.xlu0 %v602, 19
  %v908 = vpop.permute.xlu0 %907
  %909 = vrot.lane.b32.xlu0 %v603, 19
  %v910 = vpop.permute.xlu0 %909
  %911 = vrot.lane.b32.xlu0 %v586, 19
  %v912 = vpop.permute.xlu0 %911
  %913 = vrot.lane.b32.xlu0 %v604, 19
  %v914 = vpop.permute.xlu0 %913
  %915 = vrot.lane.b32.xlu0 %v605, 19
  %v916 = vpop.permute.xlu0 %915
  %917 = vrot.lane.b32.xlu0 %v606, 19
  %v918 = vpop.permute.xlu0 %917
  %919 = vrot.lane.b32.xlu0 %v607, 19
  %v920 = vpop.permute.xlu0 %919
  %921 = vrot.lane.b32.xlu0 %v608, 19
  %v922 = vpop.permute.xlu0 %921
  %923 = vrot.lane.b32.xlu0 %v609, 19
  %v924 = vpop.permute.xlu0 %923
  %925 = vrot.lane.b32.xlu0 %v611, 19
  %v926 = vpop.permute.xlu0 %925
  %927 = vrot.lane.b32.xlu0 %v637, 19
  %v928 = vpop.permute.xlu0 %927
  %929 = vrot.lane.b32.xlu0 %v638, 19
  %v930 = vpop.permute.xlu0 %929
  %931 = vrot.lane.b32.xlu0 %v639, 19
  %v932 = vpop.permute.xlu0 %931
  %933 = vrot.lane.b32.xlu0 %v640, 19
  %v934 = vpop.permute.xlu0 %933
  %935 = vrot.lane.b32.xlu0 %v641, 19
  %v936 = vpop.permute.xlu0 %935
  %937 = vrot.lane.b32.xlu0 %v642, 19
  %v938 = vpop.permute.xlu0 %937
  %939 = vrot.lane.b32.xlu0 %v625, 19
  %v940 = vpop.permute.xlu0 %939
  %941 = vrot.lane.b32.xlu0 %v643, 19
  %v942 = vpop.permute.xlu0 %941
  %943 = vrot.lane.b32.xlu0 %v644, 19
  %v944 = vpop.permute.xlu0 %943
  %945 = vrot.lane.b32.xlu0 %v645, 19
  %v946 = vpop.permute.xlu0 %945
  %947 = vrot.lane.b32.xlu0 %v646, 19
  %v948 = vpop.permute.xlu0 %947
  %949 = vrot.lane.b32.xlu0 %v647, 19
  %v950 = vpop.permute.xlu0 %949
  %951 = vrot.lane.b32.xlu0 %v648, 19
  %v952 = vpop.permute.xlu0 %951
  %953 = vrot.lane.b32.xlu0 %v650, 19
  %v954 = vpop.permute.xlu0 %953
  %955 = vrot.lane.b32.xlu0 %v676, 19
  %v956 = vpop.permute.xlu0 %955
  %957 = vrot.lane.b32.xlu0 %v677, 19
  %v958 = vpop.permute.xlu0 %957
  %959 = vrot.lane.b32.xlu0 %v678, 19
  %v960 = vpop.permute.xlu0 %959
  %961 = vrot.lane.b32.xlu0 %v679, 19
  %v962 = vpop.permute.xlu0 %961
  %963 = vrot.lane.b32.xlu0 %v680, 19
  %v964 = vpop.permute.xlu0 %963
  %965 = vrot.lane.b32.xlu0 %v681, 19
  %v966 = vpop.permute.xlu0 %965
  %967 = vrot.lane.b32.xlu0 %v664, 19
  %v968 = vpop.permute.xlu0 %967
  %969 = vrot.lane.b32.xlu0 %v682, 19
  %v970 = vpop.permute.xlu0 %969
  %971 = vrot.lane.b32.xlu0 %v683, 19
  %v972 = vpop.permute.xlu0 %971
  %973 = vrot.lane.b32.xlu0 %v684, 19
  %v974 = vpop.permute.xlu0 %973
  %975 = vrot.lane.b32.xlu0 %v685, 19
  %v976 = vpop.permute.xlu0 %975
  %977 = vrot.lane.b32.xlu0 %v686, 19
  %v978 = vpop.permute.xlu0 %977
  %979 = vrot.lane.b32.xlu0 %v687, 19
  %v980 = vpop.permute.xlu0 %979
  %981 = vrot.lane.b32.xlu0 %v689, 19
  %v982 = vpop.permute.xlu0 %981
  %983 = vrot.lane.b32.xlu0 %v715, 19
  %v984 = vpop.permute.xlu0 %983
  %985 = vrot.lane.b32.xlu0 %v716, 19
  %v986 = vpop.permute.xlu0 %985
  %987 = vrot.lane.b32.xlu0 %v717, 19
  %v988 = vpop.permute.xlu0 %987
  %989 = vrot.lane.b32.xlu0 %v718, 19
  %v990 = vpop.permute.xlu0 %989
  %991 = vrot.lane.b32.xlu0 %v719, 19
  %v992 = vpop.permute.xlu0 %991
  %993 = vrot.lane.b32.xlu0 %v720, 19
  %v994 = vpop.permute.xlu0 %993
  %995 = vrot.lane.b32.xlu0 %v703, 19
  %v996 = vpop.permute.xlu0 %995
  %997 = vrot.lane.b32.xlu0 %v721, 19
  %v998 = vpop.permute.xlu0 %997
  %999 = vrot.lane.b32.xlu0 %v722, 19
  %v1000 = vpop.permute.xlu0 %999
  %1001 = vrot.lane.b32.xlu0 %v723, 19
  %v1002 = vpop.permute.xlu0 %1001
  %1003 = vrot.lane.b32.xlu0 %v724, 19
  %v1004 = vpop.permute.xlu0 %1003
  %1005 = vrot.lane.b32.xlu0 %v725, 19
  %v1006 = vpop.permute.xlu0 %1005
  %1007 = vrot.lane.b32.xlu0 %v726, 19
  %v1008 = vpop.permute.xlu0 %1007
  %vm1009 = vcmask 154624
  %v1010 = vsel %vm1009, %v760, %v762
  %v1011 = vsel %vm1009, %v762, %v764
  %v1012 = vsel %vm1009, %v764, %v766
  %v1013 = vsel %vm1009, %v766, %v768
  %v1014 = vsel %vm1009, %v768, %v770
  %v1015 = vsel %vm1009, %v770, %v772
  %v1016 = vsel %vm1009, %v760, %v774
  %v1017 = vsel %vm1009, %v774, %v776
  %v1018 = vsel %vm1009, %v776, %v778
  %v1019 = vsel %vm1009, %v778, %v780
  %v1020 = vsel %vm1009, %v780, %v782
  %v1021 = vsel %vm1009, %v782, %v784
  %v1022 = vsel %vm1009, %v786, %v788
  %v1023 = vsel %vm1009, %v788, %v790
  %v1024 = vsel %vm1009, %v790, %v792
  %v1025 = vsel %vm1009, %v792, %v794
  %v1026 = vsel %vm1009, %v794, %v796
  %v1027 = vsel %vm1009, %v796, %v798
  %v1028 = vsel %vm1009, %v800, %v802
  %v1029 = vsel %vm1009, %v802, %v804
  %v1030 = vsel %vm1009, %v804, %v806
  %v1031 = vsel %vm1009, %v806, %v808
  %v1032 = vsel %vm1009, %v808, %v810
  %v1033 = vsel %vm1009, %v810, %v812
  %v1034 = vsel %vm1009, %v814, %v816
  %v1035 = vsel %vm1009, %v816, %v818
  %v1036 = vsel %vm1009, %v818, %v820
  %v1037 = vsel %vm1009, %v820, %v822
  %v1038 = vsel %vm1009, %v822, %v824
  %v1039 = vsel %vm1009, %v824, %v826
  %v1040 = vsel %vm1009, %v828, %v830
  %v1041 = vsel %vm1009, %v830, %v832
  %v1042 = vsel %vm1009, %v832, %v834
  %v1043 = vsel %vm1009, %v834, %v836
  %v1044 = vsel %vm1009, %v836, %v838
  %v1045 = vsel %vm1009, %v838, %v840
  %v1046 = vsel %vm1009, %v842, %v844
  %v1047 = vsel %vm1009, %v844, %v846
  %v1048 = vsel %vm1009, %v846, %v848
  %v1049 = vsel %vm1009, %v848, %v850
  %v1050 = vsel %vm1009, %v850, %v852
  %v1051 = vsel %vm1009, %v852, %v854
  %v1052 = vsel %vm1009, %v856, %v858
  %v1053 = vsel %vm1009, %v858, %v860
  %v1054 = vsel %vm1009, %v860, %v862
  %v1055 = vsel %vm1009, %v862, %v864
  %v1056 = vsel %vm1009, %v864, %v866
  %v1057 = vsel %vm1009, %v866, %v868
  %v1058 = vsel %vm1009, %v870, %v872
  %v1059 = vsel %vm1009, %v872, %v874
  %v1060 = vsel %vm1009, %v874, %v876
  %v1061 = vsel %vm1009, %v876, %v878
  %v1062 = vsel %vm1009, %v878, %v880
  %v1063 = vsel %vm1009, %v880, %v882
  %v1064 = vsel %vm1009, %v884, %v886
  %v1065 = vsel %vm1009, %v886, %v888
  %v1066 = vsel %vm1009, %v888, %v890
  %v1067 = vsel %vm1009, %v890, %v892
  %v1068 = vsel %vm1009, %v892, %v894
  %v1069 = vsel %vm1009, %v894, %v896
  %v1070 = vsel %vm1009, %v898, %v900
  %v1071 = vsel %vm1009, %v900, %v902
  %v1072 = vsel %vm1009, %v902, %v904
  %v1073 = vsel %vm1009, %v904, %v906
  %v1074 = vsel %vm1009, %v906, %v908
  %v1075 = vsel %vm1009, %v908, %v910
  %v1076 = vsel %vm1009, %v912, %v914
  %v1077 = vsel %vm1009, %v914, %v916
  %v1078 = vsel %vm1009, %v916, %v918
  %v1079 = vsel %vm1009, %v918, %v920
  %v1080 = vsel %vm1009, %v920, %v922
  %v1081 = vsel %vm1009, %v922, %v924
  %v1082 = vsel %vm1009, %v926, %v928
  %v1083 = vsel %vm1009, %v928, %v930
  %v1084 = vsel %vm1009, %v930, %v932
  %v1085 = vsel %vm1009, %v932, %v934
  %v1086 = vsel %vm1009, %v934, %v936
  %v1087 = vsel %vm1009, %v936, %v938
  %v1088 = vsel %vm1009, %v940, %v942
  %v1089 = vsel %vm1009, %v942, %v944
  %v1090 = vsel %vm1009, %v944, %v946
  %v1091 = vsel %vm1009, %v946, %v948
  %v1092 = vsel %vm1009, %v948, %v950
  %v1093 = vsel %vm1009, %v950, %v952
  %v1094 = vsel %vm1009, %v954, %v956
  %v1095 = vsel %vm1009, %v956, %v958
  %v1096 = vsel %vm1009, %v958, %v960
  %v1097 = vsel %vm1009, %v960, %v962
  %v1098 = vsel %vm1009, %v962, %v964
  %v1099 = vsel %vm1009, %v964, %v966
  %v1100 = vsel %vm1009, %v968, %v970
  %v1101 = vsel %vm1009, %v970, %v972
  %v1102 = vsel %vm1009, %v972, %v974
  %v1103 = vsel %vm1009, %v974, %v976
  %v1104 = vsel %vm1009, %v976, %v978
  %v1105 = vsel %vm1009, %v978, %v980
  %v1106 = vsel %vm1009, %v982, %v984
  %v1107 = vsel %vm1009, %v984, %v986
  %v1108 = vsel %vm1009, %v986, %v988
  %v1109 = vsel %vm1009, %v988, %v990
  %v1110 = vsel %vm1009, %v990, %v992
  %v1111 = vsel %vm1009, %v992, %v994
  %v1112 = vsel %vm1009, %v996, %v998
  %v1113 = vsel %vm1009, %v998, %v1000
  %v1114 = vsel %vm1009, %v1000, %v1002
  %v1115 = vsel %vm1009, %v1002, %v1004
  %v1116 = vsel %vm1009, %v1004, %v1006
  %v1117 = vsel %vm1009, %v1006, %v1008
  %vm1226 = vcmask 130048
  %v1228 = vsel %vm1226, %v728, 0
  %v1231 = vsel %vm1226, %v730, 0
  %v1234 = vsel %vm1226, %v732, 0
  %v1237 = vsel %vm1226, %v734, 0
  %1239 = vmatprep.subr.mxu0 %v1101
  %1240 = vmatpush1.msra.mxu0 %v1100
  %1241 = vmatprep.subr.mxu0 %v1095
  %1242 = vmatpush1.msra.mxu0 %v1094
  %1243 = vmatprep.subr.mxu0 %v1089
  %1244 = vmatpush1.msra.mxu0 %v1088
  %1245 = vmatprep.subr.mxu0 %v1083
  %1246 = vmatpush1.msra.mxu0 %v1082
  %1247 = vmatprep.subr.mxu0 %v1077
  %1248 = vmatpush1.msra.mxu0 %v1076
  %1249 = vmatprep.subr.mxu0 %v1071
  %1250 = vmatpush1.msra.mxu0 %v1070
  %1251 = vmatprep.subr.mxu0 %v1065
  %1252 = vmatpush1.msra.mxu0 %v1064
  %1253 = vmatprep.subr.mxu0 %v1059
  %1254 = vmatpush1.msra.mxu0 %v1058
  %1255 = vmatprep.subr.mxu0 %v1053
  %1256 = vmatpush1.msra.mxu0 %v1052
  %1257 = vmatprep.subr.mxu0 %v1047
  %1258 = vmatpush1.msra.mxu0 %v1046
  %1259 = vmatprep.subr.mxu0 %v1041
  %1260 = vmatpush1.msra.mxu0 %v1040
  %1261 = vmatprep.subr.mxu0 %v1035
  %1262 = vmatpush1.msra.mxu0 %v1034
  %1263 = vmatprep.subr.mxu0 %v1029
  %1264 = vmatpush1.msra.mxu0 %v1028
  %1265 = vmatprep.subr.mxu0 %v1023
  %1266 = vmatpush1.msra.mxu0 %v1022
  %1267 = vmatprep.subr.mxu0 %v1017
  %1268 = vmatpush1.msra.mxu0 %v1016
  %1269 = vmatprep.subr.mxu0 %v1011
  %1270 = vmatpush1.msra.mxu0 %v1010
  %1271 = vmatprep.subr.mxu0 0.0
  %1272 = vmatpush2.msra.mxu0 0.0
  %1273 = vmatprep.subr.mxu0 0.0
  %1274 = vmatpush2.msra.mxu0 0.0
  %1275 = vmatprep.subr.mxu0 0.0
  %1276 = vmatpush2.msra.mxu0 0.0
  %1277 = vmatprep.subr.mxu0 0.0
  %1278 = vmatpush2.msra.mxu0 0.0
  %1279 = vmatprep.subr.mxu0 0.0
  %1280 = vmatpush2.msra.mxu0 0.0
  %1281 = vmatprep.subr.mxu0 0.0
  %1282 = vmatpush2.msra.mxu0 0.0
  %1283 = vmatprep.subr.mxu0 0.0
  %1284 = vmatpush2.msra.mxu0 0.0
  %1285 = vmatprep.subr.mxu0 0.0
  %1286 = vmatpush2.msra.mxu0 0.0
  %1287 = vmatprep.subr.mxu0 0.0
  %1288 = vmatpush2.msra.mxu0 0.0
  %1289 = vmatprep.subr.mxu0 0.0
  %1290 = vmatpush2.msra.mxu0 0.0
  %1291 = vmatprep.subr.mxu0 0.0
  %1292 = vmatpush2.msra.mxu0 0.0
  %1293 = vmatprep.subr.mxu0 0.0
  %1294 = vmatpush2.msra.mxu0 0.0
  %1295 = vmatprep.subr.mxu0 0.0
  %1296 = vmatpush2.msra.mxu0 0.0
  %1297 = vmatprep.subr.mxu0 0.0
  %1298 = vmatpush2.msra.mxu0 0.0
  %1299 = vmatprep.subr.mxu0 %v1113
  %1300 = vmatpush2.msra.mxu0 %v1112
  %1301 = vmatprep.subr.mxu0 %v1107
  %1302 = vmatpush2.msra.mxu0 %v1106
  %1303 = vmatprep.mubr.f32.mxu0 %v1228
  %1304 = vmatmul.mubr.f32.gmra.mxu0 %v727
  %v1305 = vpop.f32.mrf.mxu0
  %v1306 = vadd.f32 %v742, %v1305
  %v1307 = vpop.f32.mrf.mxu0
  %v1308 = vadd.f32 %v742, %v1307
  %1309 = vmatprep.mubr.f32.mxu0 %v1231
  %1310 = vmatmul.mubr.f32.gmra.mxu0 %v729
  %v1311 = vpop.f32.mrf.mxu0
  %v1312 = vadd.f32 %v747, %v1311
  %v1313 = vpop.f32.mrf.mxu0
  %v1314 = vadd.f32 %v747, %v1313
  %1315 = vmatprep.mubr.f32.mxu0 %v1234
  %1316 = vmatmul.mubr.f32.gmra.mxu0 %v731
  %v1317 = vpop.f32.mrf.mxu0
  %v1318 = vadd.f32 %v752, %v1317
  %v1319 = vpop.f32.mrf.mxu0
  %v1320 = vadd.f32 %v752, %v1319
  %1321 = vmatprep.mubr.f32.mxu0 %v1237
  %1322 = vmatmul.mubr.f32.gmra.mxu0 %v733
  %v1323 = vpop.f32.mrf.mxu0
  %v1324 = vadd.f32 %v757, %v1323
  %v1325 = vpop.f32.mrf.mxu0
  %v1326 = vadd.f32 %v757, %v1325
  %1327 = vdwg.mxu0
  %1328 = vmatprep.subr.mxu0 %v1103
  %1329 = vmatpush1.msra.mxu0 %v1102
  %1330 = vmatprep.subr.mxu0 %v1097
  %1331 = vmatpush1.msra.mxu0 %v1096
  %1332 = vmatprep.subr.mxu0 %v1091
  %1333 = vmatpush1.msra.mxu0 %v1090
  %1334 = vmatprep.subr.mxu0 %v1085
  %1335 = vmatpush1.msra.mxu0 %v1084
  %1336 = vmatprep.subr.mxu0 %v1079
  %1337 = vmatpush1.msra.mxu0 %v1078
  %1338 = vmatprep.subr.mxu0 %v1073
  %1339 = vmatpush1.msra.mxu0 %v1072
  %1340 = vmatprep.subr.mxu0 %v1067
  %1341 = vmatpush1.msra.mxu0 %v1066
  %1342 = vmatprep.subr.mxu0 %v1061
  %1343 = vmatpush1.msra.mxu0 %v1060
  %1344 = vmatprep.subr.mxu0 %v1055
  %1345 = vmatpush1.msra.mxu0 %v1054
  %1346 = vmatprep.subr.mxu0 %v1049
  %1347 = vmatpush1.msra.mxu0 %v1048
  %1348 = vmatprep.subr.mxu0 %v1043
  %1349 = vmatpush1.msra.mxu0 %v1042
  %1350 = vmatprep.subr.mxu0 %v1037
  %1351 = vmatpush1.msra.mxu0 %v1036
  %1352 = vmatprep.subr.mxu0 %v1031
  %1353 = vmatpush1.msra.mxu0 %v1030
  %1354 = vmatprep.subr.mxu0 %v1025
  %1355 = vmatpush1.msra.mxu0 %v1024
  %1356 = vmatprep.subr.mxu0 %v1019
  %1357 = vmatpush1.msra.mxu0 %v1018
  %1358 = vmatprep.subr.mxu0 %v1013
  %1359 = vmatpush1.msra.mxu0 %v1012
  %1360 = vmatprep.subr.mxu0 0.0
  %1361 = vmatpush2.msra.mxu0 0.0
  %1362 = vmatprep.subr.mxu0 0.0
  %1363 = vmatpush2.msra.mxu0 0.0
  %1364 = vmatprep.subr.mxu0 0.0
  %1365 = vmatpush2.msra.mxu0 0.0
  %1366 = vmatprep.subr.mxu0 0.0
  %1367 = vmatpush2.msra.mxu0 0.0
  %1368 = vmatprep.subr.mxu0 0.0
  %1369 = vmatpush2.msra.mxu0 0.0
  %1370 = vmatprep.subr.mxu0 0.0
  %1371 = vmatpush2.msra.mxu0 0.0
  %1372 = vmatprep.subr.mxu0 0.0
  %1373 = vmatpush2.msra.mxu0 0.0
  %1374 = vmatprep.subr.mxu0 0.0
  %1375 = vmatpush2.msra.mxu0 0.0
  %1376 = vmatprep.subr.mxu0 0.0
  %1377 = vmatpush2.msra.mxu0 0.0
  %1378 = vmatprep.subr.mxu0 0.0
  %1379 = vmatpush2.msra.mxu0 0.0
  %1380 = vmatprep.subr.mxu0 0.0
  %1381 = vmatpush2.msra.mxu0 0.0
  %1382 = vmatprep.subr.mxu0 0.0
  %1383 = vmatpush2.msra.mxu0 0.0
  %1384 = vmatprep.subr.mxu0 0.0
  %1385 = vmatpush2.msra.mxu0 0.0
  %1386 = vmatprep.subr.mxu0 0.0
  %1387 = vmatpush2.msra.mxu0 0.0
  %1388 = vmatprep.subr.mxu0 %v1115
  %1389 = vmatpush2.msra.mxu0 %v1114
  %1390 = vmatprep.subr.mxu0 %v1109
  %1391 = vmatpush2.msra.mxu0 %v1108
  %1392 = vmatprep.mubr.f32.mxu0 %v1228
  %1393 = vmatmul.mubr.f32.gmra.mxu0 %v727
  %v1394 = vpop.f32.mrf.mxu0
  %v1395 = vadd.f32 %v742, %v1394
  %v1396 = vpop.f32.mrf.mxu0
  %v1397 = vadd.f32 %v742, %v1396
  %1398 = vmatprep.mubr.f32.mxu0 %v1231
  %1399 = vmatmul.mubr.f32.gmra.mxu0 %v729
  %v1400 = vpop.f32.mrf.mxu0
  %v1401 = vadd.f32 %v747, %v1400
  %v1402 = vpop.f32.mrf.mxu0
  %v1403 = vadd.f32 %v747, %v1402
  %1404 = vmatprep.mubr.f32.mxu0 %v1234
  %1405 = vmatmul.mubr.f32.gmra.mxu0 %v731
  %v1406 = vpop.f32.mrf.mxu0
  %v1407 = vadd.f32 %v752, %v1406
  %v1408 = vpop.f32.mrf.mxu0
  %v1409 = vadd.f32 %v752, %v1408
  %1410 = vmatprep.mubr.f32.mxu0 %v1237
  %1411 = vmatmul.mubr.f32.gmra.mxu0 %v733
  %v1412 = vpop.f32.mrf.mxu0
  %v1413 = vadd.f32 %v757, %v1412
  %v1414 = vpop.f32.mrf.mxu0
  %v1415 = vadd.f32 %v757, %v1414
  %1416 = vdwg.mxu0
  %1417 = vmatprep.subr.mxu0 %v1105
  %1418 = vmatpush1.msra.mxu0 %v1104
  %1419 = vmatprep.subr.mxu0 %v1099
  %1420 = vmatpush1.msra.mxu0 %v1098
  %1421 = vmatprep.subr.mxu0 %v1093
  %1422 = vmatpush1.msra.mxu0 %v1092
  %1423 = vmatprep.subr.mxu0 %v1087
  %1424 = vmatpush1.msra.mxu0 %v1086
  %1425 = vmatprep.subr.mxu0 %v1081
  %1426 = vmatpush1.msra.mxu0 %v1080
  %1427 = vmatprep.subr.mxu0 %v1075
  %1428 = vmatpush1.msra.mxu0 %v1074
  %1429 = vmatprep.subr.mxu0 %v1069
  %1430 = vmatpush1.msra.mxu0 %v1068
  %1431 = vmatprep.subr.mxu0 %v1063
  %1432 = vmatpush1.msra.mxu0 %v1062
  %1433 = vmatprep.subr.mxu0 %v1057
  %1434 = vmatpush1.msra.mxu0 %v1056
  %1435 = vmatprep.subr.mxu0 %v1051
  %1436 = vmatpush1.msra.mxu0 %v1050
  %1437 = vmatprep.subr.mxu0 %v1045
  %1438 = vmatpush1.msra.mxu0 %v1044
  %1439 = vmatprep.subr.mxu0 %v1039
  %1440 = vmatpush1.msra.mxu0 %v1038
  %1441 = vmatprep.subr.mxu0 %v1033
  %1442 = vmatpush1.msra.mxu0 %v1032
  %1443 = vmatprep.subr.mxu0 %v1027
  %1444 = vmatpush1.msra.mxu0 %v1026
  %1445 = vmatprep.subr.mxu0 %v1021
  %1446 = vmatpush1.msra.mxu0 %v1020
  %1447 = vmatprep.subr.mxu0 %v1015
  %1448 = vmatpush1.msra.mxu0 %v1014
  %1449 = vmatprep.subr.mxu0 0.0
  %1450 = vmatpush2.msra.mxu0 0.0
  %1451 = vmatprep.subr.mxu0 0.0
  %1452 = vmatpush2.msra.mxu0 0.0
  %1453 = vmatprep.subr.mxu0 0.0
  %1454 = vmatpush2.msra.mxu0 0.0
  %1455 = vmatprep.subr.mxu0 0.0
  %1456 = vmatpush2.msra.mxu0 0.0
  %1457 = vmatprep.subr.mxu0 0.0
  %1458 = vmatpush2.msra.mxu0 0.0
  %1459 = vmatprep.subr.mxu0 0.0
  %1460 = vmatpush2.msra.mxu0 0.0
  %1461 = vmatprep.subr.mxu0 0.0
  %1462 = vmatpush2.msra.mxu0 0.0
  %1463 = vmatprep.subr.mxu0 0.0
  %1464 = vmatpush2.msra.mxu0 0.0
  %1465 = vmatprep.subr.mxu0 0.0
  %1466 = vmatpush2.msra.mxu0 0.0
  %1467 = vmatprep.subr.mxu0 0.0
  %1468 = vmatpush2.msra.mxu0 0.0
  %1469 = vmatprep.subr.mxu0 0.0
  %1470 = vmatpush2.msra.mxu0 0.0
  %1471 = vmatprep.subr.mxu0 0.0
  %1472 = vmatpush2.msra.mxu0 0.0
  %1473 = vmatprep.subr.mxu0 0.0
  %1474 = vmatpush2.msra.mxu0 0.0
  %1475 = vmatprep.subr.mxu0 0.0
  %1476 = vmatpush2.msra.mxu0 0.0
  %1477 = vmatprep.subr.mxu0 %v1117
  %1478 = vmatpush2.msra.mxu0 %v1116
  %1479 = vmatprep.subr.mxu0 %v1111
  %1480 = vmatpush2.msra.mxu0 %v1110
  %1481 = vmatprep.mubr.f32.mxu0 %v1228
  %1482 = vmatmul.mubr.f32.gmra.mxu0 %v727
  %v1483 = vpop.f32.mrf.mxu0
  %v1484 = vadd.f32 %v742, %v1483
  %v1485 = vpop.f32.mrf.mxu0
  %v1486 = vadd.f32 %v742, %v1485
  %1487 = vmatprep.mubr.f32.mxu0 %v1231
  %1488 = vmatmul.mubr.f32.gmra.mxu0 %v729
  %v1489 = vpop.f32.mrf.mxu0
  %v1490 = vadd.f32 %v747, %v1489
  %v1491 = vpop.f32.mrf.mxu0
  %v1492 = vadd.f32 %v747, %v1491
  %1493 = vmatprep.mubr.f32.mxu0 %v1234
  %1494 = vmatmul.mubr.f32.gmra.mxu0 %v731
  %v1495 = vpop.f32.mrf.mxu0
  %v1496 = vadd.f32 %v752, %v1495
  %v1497 = vpop.f32.mrf.mxu0
  %v1498 = vadd.f32 %v752, %v1497
  %1499 = vmatprep.mubr.f32.mxu0 %v1237
  %1500 = vmatmul.mubr.f32.gmra.mxu0 %v733
  %v1501 = vpop.f32.mrf.mxu0
  %v1502 = vadd.f32 %v757, %v1501
  %v1503 = vpop.f32.mrf.mxu0
  %v1504 = vadd.f32 %v757, %v1503
  %1505 = vdwg.mxu0
  %v1506 = vmax.f32 %v1306, 0.0
  %v1507 = vmax.f32 %v1308, 0.0
  %v1508 = vmax.f32 %v1395, 0.0
  %v1509 = vmax.f32 %v1397, 0.0
  %v1510 = vmax.f32 %v1484, 0.0
  %v1511 = vmax.f32 %v1486, 0.0
  %v1512 = vmax.f32 %v1312, 0.0
  %v1513 = vmax.f32 %v1314, 0.0
  %v1514 = vmax.f32 %v1401, 0.0
  %v1515 = vmax.f32 %v1403, 0.0
  %v1516 = vmax.f32 %v1490, 0.0
  %v1517 = vmax.f32 %v1492, 0.0
  %v1518 = vmax.f32 %v1318, 0.0
  %v1519 = vmax.f32 %v1320, 0.0
  %v1520 = vmax.f32 %v1407, 0.0
  %v1521 = vmax.f32 %v1409, 0.0
  %v1522 = vmax.f32 %v1496, 0.0
  %v1523 = vmax.f32 %v1498, 0.0
  %v1524 = vmax.f32 %v1324, 0.0
  %v1525 = vmax.f32 %v1326, 0.0
  %v1526 = vmax.f32 %v1413, 0.0
  %v1527 = vmax.f32 %v1415, 0.0
  %v1528 = vmax.f32 %v1502, 0.0
  %v1529 = vmax.f32 %v1504, 0.0
  %v1530 = vmul.f32 %v1506, %v367
  %v1531 = vmul.f32 %v1507, %v371
  %v1532 = vmul.f32 %v1508, %v375
  %v1533 = vmul.f32 %v1509, %v379
  %v1534 = vmul.f32 %v1510, %v383
  %v1535 = vmul.f32 %v1511, %v387
  %v1536 = vmul.f32 %v1512, %v367
  %v1537 = vmul.f32 %v1513, %v371
  %v1538 = vmul.f32 %v1514, %v375
  %v1539 = vmul.f32 %v1515, %v379
  %v1540 = vmul.f32 %v1516, %v383
  %v1541 = vmul.f32 %v1517, %v387
  %v1542 = vmul.f32 %v1518, %v367
  %v1543 = vmul.f32 %v1519, %v371
  %v1544 = vmul.f32 %v1520, %v375
  %v1545 = vmul.f32 %v1521, %v379
  %v1546 = vmul.f32 %v1522, %v383
  %v1547 = vmul.f32 %v1523, %v387
  %v1548 = vmul.f32 %v1524, %v367
  %v1549 = vmul.f32 %v1525, %v371
  %v1550 = vmul.f32 %v1526, %v375
  %v1551 = vmul.f32 %v1527, %v379
  %v1552 = vmul.f32 %v1528, %v383
  %v1553 = vmul.f32 %v1529, %v387
  %v1554 = vld [vmem:[%s6] sm:$0xff]
  %v1555 = vld [vmem:[%s6 + $0x8] sm:$0xff]
  %v1556 = vld [vmem:[%s6 + $0x10] sm:$0xff]
  %v1557 = vld [vmem:[%s6 + $0x18] sm:$0xff]
  %v1558 = vld [vmem:[%s7] sm:$0xff]
  %v1559 = vld [vmem:[%s7 + $0x8] sm:$0xff]
  %v1560 = vld [vmem:[%s7 + $0x10] sm:$0xff]
  %v1561 = vld [vmem:[%s7 + $0x18] sm:$0xff]
  %1563 = vset.pattern.permute.xlu0 0
  %1564 = vperm.xlu0 %1563, %v1558
  %v1565 = vpop.permute.xlu0 %1564
  %1568 = vset.pattern.permute.xlu0 0
  %1569 = vperm.xlu0 %1568, %v1559
  %v1570 = vpop.permute.xlu0 %1569
  %1573 = vset.pattern.permute.xlu0 0
  %1574 = vperm.xlu0 %1573, %v1560
  %v1575 = vpop.permute.xlu0 %1574
  %1578 = vset.pattern.permute.xlu0 0
  %1579 = vperm.xlu0 %1578, %v1561
  %v1580 = vpop.permute.xlu0 %1579
  %vm1582 = vcmask 261120
  %v1584 = vsel %vm1582, %v1554, 0
  %v1587 = vsel %vm1582, %v1555, 0
  %v1590 = vsel %vm1582, %v1556, 0
  %v1593 = vsel %vm1582, %v1557, 0
  %1595 = vmatprep.subr.mxu0 0.0
  %1596 = vmatpush1.msra.mxu0 0.0
  %1597 = vmatprep.subr.mxu0 0.0
  %1598 = vmatpush1.msra.mxu0 0.0
  %1599 = vmatprep.subr.mxu0 0.0
  %1600 = vmatpush1.msra.mxu0 0.0
  %1601 = vmatprep.subr.mxu0 0.0
  %1602 = vmatpush1.msra.mxu0 0.0
  %1603 = vmatprep.subr.mxu0 0.0
  %1604 = vmatpush1.msra.mxu0 0.0
  %1605 = vmatprep.subr.mxu0 0.0
  %1606 = vmatpush1.msra.mxu0 0.0
  %1607 = vmatprep.subr.mxu0 0.0
  %1608 = vmatpush1.msra.mxu0 0.0
  %1609 = vmatprep.subr.mxu0 0.0
  %1610 = vmatpush1.msra.mxu0 0.0
  %1611 = vmatprep.subr.mxu0 0.0
  %1612 = vmatpush1.msra.mxu0 0.0
  %1613 = vmatprep.subr.mxu0 0.0
  %1614 = vmatpush1.msra.mxu0 0.0
  %1615 = vmatprep.subr.mxu0 0.0
  %1616 = vmatpush1.msra.mxu0 0.0
  %1617 = vmatprep.subr.mxu0 0.0
  %1618 = vmatpush1.msra.mxu0 0.0
  %1619 = vmatprep.subr.mxu0 %v1549
  %1620 = vmatpush1.msra.mxu0 %v1548
  %1621 = vmatprep.subr.mxu0 %v1543
  %1622 = vmatpush1.msra.mxu0 %v1542
  %1623 = vmatprep.subr.mxu0 %v1537
  %1624 = vmatpush1.msra.mxu0 %v1536
  %1625 = vmatprep.subr.mxu0 %v1531
  %1626 = vmatpush1.msra.mxu0 %v1530
  %1627 = vmatprep.subr.mxu0 0.0
  %1628 = vmatpush2.msra.mxu0 0.0
  %1629 = vmatprep.subr.mxu0 0.0
  %1630 = vmatpush2.msra.mxu0 0.0
  %1631 = vmatprep.subr.mxu0 0.0
  %1632 = vmatpush2.msra.mxu0 0.0
  %1633 = vmatprep.subr.mxu0 0.0
  %1634 = vmatpush2.msra.mxu0 0.0
  %1635 = vmatprep.subr.mxu0 0.0
  %1636 = vmatpush2.msra.mxu0 0.0
  %1637 = vmatprep.subr.mxu0 0.0
  %1638 = vmatpush2.msra.mxu0 0.0
  %1639 = vmatprep.subr.mxu0 0.0
  %1640 = vmatpush2.msra.mxu0 0.0
  %1641 = vmatprep.subr.mxu0 0.0
  %1642 = vmatpush2.msra.mxu0 0.0
  %1643 = vmatprep.subr.mxu0 0.0
  %1644 = vmatpush2.msra.mxu0 0.0
  %1645 = vmatprep.subr.mxu0 0.0
  %1646 = vmatpush2.msra.mxu0 0.0
  %1647 = vmatprep.subr.mxu0 0.0
  %1648 = vmatpush2.msra.mxu0 0.0
  %1649 = vmatprep.subr.mxu0 0.0
  %1650 = vmatpush2.msra.mxu0 0.0
  %1651 = vmatprep.subr.mxu0 0.0
  %1652 = vmatpush2.msra.mxu0 0.0
  %1653 = vmatprep.subr.mxu0 0.0
  %1654 = vmatpush2.msra.mxu0 0.0
  %1655 = vmatprep.subr.mxu0 0.0
  %1656 = vmatpush2.msra.mxu0 0.0
  %1657 = vmatprep.subr.mxu0 0.0
  %1658 = vmatpush2.msra.mxu0 0.0
  %1659 = vmatprep.mubr.f32.mxu0 0.0
  %1660 = vmatmul.mubr.f32.gmra.mxu0 %v1584
  %v1661 = vpop.f32.mrf.mxu0
  %v1662 = vadd.f32 %v1565, %v1661
  %v1663 = vpop.f32.mrf.mxu0
  %v1664 = vadd.f32 %v1565, %v1663
  %1665 = vmatprep.mubr.f32.mxu0 0.0
  %1666 = vmatmul.mubr.f32.gmra.mxu0 %v1587
  %v1667 = vpop.f32.mrf.mxu0
  %v1668 = vadd.f32 %v1570, %v1667
  %v1669 = vpop.f32.mrf.mxu0
  %v1670 = vadd.f32 %v1570, %v1669
  %1671 = vmatprep.mubr.f32.mxu0 0.0
  %1672 = vmatmul.mubr.f32.gmra.mxu0 %v1590
  %v1673 = vpop.f32.mrf.mxu0
  %v1674 = vadd.f32 %v1575, %v1673
  %v1675 = vpop.f32.mrf.mxu0
  %v1676 = vadd.f32 %v1575, %v1675
  %1677 = vmatprep.mubr.f32.mxu0 0.0
  %1678 = vmatmul.mubr.f32.gmra.mxu0 %v1593
  %v1679 = vpop.f32.mrf.mxu0
  %v1680 = vadd.f32 %v1580, %v1679
  %v1681 = vpop.f32.mrf.mxu0
  %v1682 = vadd.f32 %v1580, %v1681
  %1683 = vdwg.mxu0
  %1684 = vmatprep.subr.mxu0 0.0
  %1685 = vmatpush1.msra.mxu0 0.0
  %1686 = vmatprep.subr.mxu0 0.0
  %1687 = vmatpush1.msra.mxu0 0.0
  %1688 = vmatprep.subr.mxu0 0.0
  %1689 = vmatpush1.msra.mxu0 0.0
  %1690 = vmatprep.subr.mxu0 0.0
  %1691 = vmatpush1.msra.mxu0 0.0
  %1692 = vmatprep.subr.mxu0 0.0
  %1693 = vmatpush1.msra.mxu0 0.0
  %1694 = vmatprep.subr.mxu0 0.0
  %1695 = vmatpush1.msra.mxu0 0.0
  %1696 = vmatprep.subr.mxu0 0.0
  %1697 = vmatpush1.msra.mxu0 0.0
  %1698 = vmatprep.subr.mxu0 0.0
  %1699 = vmatpush1.msra.mxu0 0.0
  %1700 = vmatprep.subr.mxu0 0.0
  %1701 = vmatpush1.msra.mxu0 0.0
  %1702 = vmatprep.subr.mxu0 0.0
  %1703 = vmatpush1.msra.mxu0 0.0
  %1704 = vmatprep.subr.mxu0 0.0
  %1705 = vmatpush1.msra.mxu0 0.0
  %1706 = vmatprep.subr.mxu0 0.0
  %1707 = vmatpush1.msra.mxu0 0.0
  %1708 = vmatprep.subr.mxu0 %v1551
  %1709 = vmatpush1.msra.mxu0 %v1550
  %1710 = vmatprep.subr.mxu0 %v1545
  %1711 = vmatpush1.msra.mxu0 %v1544
  %1712 = vmatprep.subr.mxu0 %v1539
  %1713 = vmatpush1.msra.mxu0 %v1538
  %1714 = vmatprep.subr.mxu0 %v1533
  %1715 = vmatpush1.msra.mxu0 %v1532
  %1716 = vmatprep.subr.mxu0 0.0
  %1717 = vmatpush2.msra.mxu0 0.0
  %1718 = vmatprep.subr.mxu0 0.0
  %1719 = vmatpush2.msra.mxu0 0.0
  %1720 = vmatprep.subr.mxu0 0.0
  %1721 = vmatpush2.msra.mxu0 0.0
  %1722 = vmatprep.subr.mxu0 0.0
  %1723 = vmatpush2.msra.mxu0 0.0
  %1724 = vmatprep.subr.mxu0 0.0
  %1725 = vmatpush2.msra.mxu0 0.0
  %1726 = vmatprep.subr.mxu0 0.0
  %1727 = vmatpush2.msra.mxu0 0.0
  %1728 = vmatprep.subr.mxu0 0.0
  %1729 = vmatpush2.msra.mxu0 0.0
  %1730 = vmatprep.subr.mxu0 0.0
  %1731 = vmatpush2.msra.mxu0 0.0
  %1732 = vmatprep.subr.mxu0 0.0
  %1733 = vmatpush2.msra.mxu0 0.0
  %1734 = vmatprep.subr.mxu0 0.0
  %1735 = vmatpush2.msra.mxu0 0.0
  %1736 = vmatprep.subr.mxu0 0.0
  %1737 = vmatpush2.msra.mxu0 0.0
  %1738 = vmatprep.subr.mxu0 0.0
  %1739 = vmatpush2.msra.mxu0 0.0
  %1740 = vmatprep.subr.mxu0 0.0
  %1741 = vmatpush2.msra.mxu0 0.0
  %1742 = vmatprep.subr.mxu0 0.0
  %1743 = vmatpush2.msra.mxu0 0.0
  %1744 = vmatprep.subr.mxu0 0.0
  %1745 = vmatpush2.msra.mxu0 0.0
  %1746 = vmatprep.subr.mxu0 0.0
  %1747 = vmatpush2.msra.mxu0 0.0
  %1748 = vmatprep.mubr.f32.mxu0 0.0
  %1749 = vmatmul.mubr.f32.gmra.mxu0 %v1584
  %v1750 = vpop.f32.mrf.mxu0
  %v1751 = vadd.f32 %v1565, %v1750
  %v1752 = vpop.f32.mrf.mxu0
  %v1753 = vadd.f32 %v1565, %v1752
  %1754 = vmatprep.mubr.f32.mxu0 0.0
  %1755 = vmatmul.mubr.f32.gmra.mxu0 %v1587
  %v1756 = vpop.f32.mrf.mxu0
  %v1757 = vadd.f32 %v1570, %v1756
  %v1758 = vpop.f32.mrf.mxu0
  %v1759 = vadd.f32 %v1570, %v1758
  %1760 = vmatprep.mubr.f32.mxu0 0.0
  %1761 = vmatmul.mubr.f32.gmra.mxu0 %v1590
  %v1762 = vpop.f32.mrf.mxu0
  %v1763 = vadd.f32 %v1575, %v1762
  %v1764 = vpop.f32.mrf.mxu0
  %v1765 = vadd.f32 %v1575, %v1764
  %1766 = vmatprep.mubr.f32.mxu0 0.0
  %1767 = vmatmul.mubr.f32.gmra.mxu0 %v1593
  %v1768 = vpop.f32.mrf.mxu0
  %v1769 = vadd.f32 %v1580, %v1768
  %v1770 = vpop.f32.mrf.mxu0
  %v1771 = vadd.f32 %v1580, %v1770
  %1772 = vdwg.mxu0
  %1773 = vmatprep.subr.mxu0 0.0
  %1774 = vmatpush1.msra.mxu0 0.0
  %1775 = vmatprep.subr.mxu0 0.0
  %1776 = vmatpush1.msra.mxu0 0.0
  %1777 = vmatprep.subr.mxu0 0.0
  %1778 = vmatpush1.msra.mxu0 0.0
  %1779 = vmatprep.subr.mxu0 0.0
  %1780 = vmatpush1.msra.mxu0 0.0
  %1781 = vmatprep.subr.mxu0 0.0
  %1782 = vmatpush1.msra.mxu0 0.0
  %1783 = vmatprep.subr.mxu0 0.0
  %1784 = vmatpush1.msra.mxu0 0.0
  %1785 = vmatprep.subr.mxu0 0.0
  %1786 = vmatpush1.msra.mxu0 0.0
  %1787 = vmatprep.subr.mxu0 0.0
  %1788 = vmatpush1.msra.mxu0 0.0
  %1789 = vmatprep.subr.mxu0 0.0
  %1790 = vmatpush1.msra.mxu0 0.0
  %1791 = vmatprep.subr.mxu0 0.0
  %1792 = vmatpush1.msra.mxu0 0.0
  %1793 = vmatprep.subr.mxu0 0.0
  %1794 = vmatpush1.msra.mxu0 0.0
  %1795 = vmatprep.subr.mxu0 0.0
  %1796 = vmatpush1.msra.mxu0 0.0
  %1797 = vmatprep.subr.mxu0 %v1553
  %1798 = vmatpush1.msra.mxu0 %v1552
  %1799 = vmatprep.subr.mxu0 %v1547
  %1800 = vmatpush1.msra.mxu0 %v1546
  %1801 = vmatprep.subr.mxu0 %v1541
  %1802 = vmatpush1.msra.mxu0 %v1540
  %1803 = vmatprep.subr.mxu0 %v1535
  %1804 = vmatpush1.msra.mxu0 %v1534
  %1805 = vmatprep.subr.mxu0 0.0
  %1806 = vmatpush2.msra.mxu0 0.0
  %1807 = vmatprep.subr.mxu0 0.0
  %1808 = vmatpush2.msra.mxu0 0.0
  %1809 = vmatprep.subr.mxu0 0.0
  %1810 = vmatpush2.msra.mxu0 0.0
  %1811 = vmatprep.subr.mxu0 0.0
  %1812 = vmatpush2.msra.mxu0 0.0
  %1813 = vmatprep.subr.mxu0 0.0
  %1814 = vmatpush2.msra.mxu0 0.0
  %1815 = vmatprep.subr.mxu0 0.0
  %1816 = vmatpush2.msra.mxu0 0.0
  %1817 = vmatprep.subr.mxu0 0.0
  %1818 = vmatpush2.msra.mxu0 0.0
  %1819 = vmatprep.subr.mxu0 0.0
  %1820 = vmatpush2.msra.mxu0 0.0
  %1821 = vmatprep.subr.mxu0 0.0
  %1822 = vmatpush2.msra.mxu0 0.0
  %1823 = vmatprep.subr.mxu0 0.0
  %1824 = vmatpush2.msra.mxu0 0.0
  %1825 = vmatprep.subr.mxu0 0.0
  %1826 = vmatpush2.msra.mxu0 0.0
  %1827 = vmatprep.subr.mxu0 0.0
  %1828 = vmatpush2.msra.mxu0 0.0
  %1829 = vmatprep.subr.mxu0 0.0
  %1830 = vmatpush2.msra.mxu0 0.0
  %1831 = vmatprep.subr.mxu0 0.0
  %1832 = vmatpush2.msra.mxu0 0.0
  %1833 = vmatprep.subr.mxu0 0.0
  %1834 = vmatpush2.msra.mxu0 0.0
  %1835 = vmatprep.subr.mxu0 0.0
  %1836 = vmatpush2.msra.mxu0 0.0
  %1837 = vmatprep.mubr.f32.mxu0 0.0
  %1838 = vmatmul.mubr.f32.gmra.mxu0 %v1584
  %v1839 = vpop.f32.mrf.mxu0
  %v1840 = vadd.f32 %v1565, %v1839
  %v1841 = vpop.f32.mrf.mxu0
  %v1842 = vadd.f32 %v1565, %v1841
  %1843 = vmatprep.mubr.f32.mxu0 0.0
  %1844 = vmatmul.mubr.f32.gmra.mxu0 %v1587
  %v1845 = vpop.f32.mrf.mxu0
  %v1846 = vadd.f32 %v1570, %v1845
  %v1847 = vpop.f32.mrf.mxu0
  %v1848 = vadd.f32 %v1570, %v1847
  %1849 = vmatprep.mubr.f32.mxu0 0.0
  %1850 = vmatmul.mubr.f32.gmra.mxu0 %v1590
  %v1851 = vpop.f32.mrf.mxu0
  %v1852 = vadd.f32 %v1575, %v1851
  %v1853 = vpop.f32.mrf.mxu0
  %v1854 = vadd.f32 %v1575, %v1853
  %1855 = vmatprep.mubr.f32.mxu0 0.0
  %1856 = vmatmul.mubr.f32.gmra.mxu0 %v1593
  %v1857 = vpop.f32.mrf.mxu0
  %v1858 = vadd.f32 %v1580, %v1857
  %v1859 = vpop.f32.mrf.mxu0
  %v1860 = vadd.f32 %v1580, %v1859
  %1861 = vdwg.mxu0
  %v1862 = vmax.f32 %v1662, 0.0
  %v1863 = vmax.f32 %v1664, 0.0
  %v1864 = vmax.f32 %v1751, 0.0
  %v1865 = vmax.f32 %v1753, 0.0
  %v1866 = vmax.f32 %v1840, 0.0
  %v1867 = vmax.f32 %v1842, 0.0
  %v1868 = vmax.f32 %v1668, 0.0
  %v1869 = vmax.f32 %v1670, 0.0
  %v1870 = vmax.f32 %v1757, 0.0
  %v1871 = vmax.f32 %v1759, 0.0
  %v1872 = vmax.f32 %v1846, 0.0
  %v1873 = vmax.f32 %v1848, 0.0
  %v1874 = vmax.f32 %v1674, 0.0
  %v1875 = vmax.f32 %v1676, 0.0
  %v1876 = vmax.f32 %v1763, 0.0
  %v1877 = vmax.f32 %v1765, 0.0
  %v1878 = vmax.f32 %v1852, 0.0
  %v1879 = vmax.f32 %v1854, 0.0
  %v1880 = vmax.f32 %v1680, 0.0
  %v1881 = vmax.f32 %v1682, 0.0
  %v1882 = vmax.f32 %v1769, 0.0
  %v1883 = vmax.f32 %v1771, 0.0
  %v1884 = vmax.f32 %v1858, 0.0
  %v1885 = vmax.f32 %v1860, 0.0
  %v1886 = vmul.f32 %v1862, %v367
  %v1887 = vmul.f32 %v1863, %v371
  %v1888 = vmul.f32 %v1864, %v375
  %v1889 = vmul.f32 %v1865, %v379
  %v1890 = vmul.f32 %v1866, %v383
  %v1891 = vmul.f32 %v1867, %v387
  %v1892 = vmul.f32 %v1868, %v367
  %v1893 = vmul.f32 %v1869, %v371
  %v1894 = vmul.f32 %v1870, %v375
  %v1895 = vmul.f32 %v1871, %v379
  %v1896 = vmul.f32 %v1872, %v383
  %v1897 = vmul.f32 %v1873, %v387
  %v1898 = vmul.f32 %v1874, %v367
  %v1899 = vmul.f32 %v1875, %v371
  %v1900 = vmul.f32 %v1876, %v375
  %v1901 = vmul.f32 %v1877, %v379
  %v1902 = vmul.f32 %v1878, %v383
  %v1903 = vmul.f32 %v1879, %v387
  %v1904 = vmul.f32 %v1880, %v367
  %v1905 = vmul.f32 %v1881, %v371
  %v1906 = vmul.f32 %v1882, %v375
  %v1907 = vmul.f32 %v1883, %v379
  %v1908 = vmul.f32 %v1884, %v383
  %v1909 = vmul.f32 %v1885, %v387
  %1916 = vrot.lane.b32.xlu0 %v1892, 127
  %v1917 = vpop.permute.xlu0 %1916
  %1918 = vrot.lane.b32.xlu0 %v1893, 127
  %v1919 = vpop.permute.xlu0 %1918
  %1920 = vrot.lane.b32.xlu0 %v1894, 127
  %v1921 = vpop.permute.xlu0 %1920
  %1922 = vrot.lane.b32.xlu0 %v1895, 127
  %v1923 = vpop.permute.xlu0 %1922
  %1924 = vrot.lane.b32.xlu0 %v1896, 127
  %v1925 = vpop.permute.xlu0 %1924
  %1926 = vrot.lane.b32.xlu0 %v1897, 127
  %v1927 = vpop.permute.xlu0 %1926
  %v1928 = vsel %vm445, %v420, %v1917
  %v1929 = vsel %vm445, %v1917, %v1919
  %v1930 = vsel %vm445, %v1919, %v1921
  %v1931 = vsel %vm445, %v1921, %v1923
  %v1932 = vsel %vm445, %v1923, %v1925
  %v1933 = vsel %vm445, %v1925, %v1927
  %1934 = vrot.lane.b32.xlu0 %v1892, 126
  %v1935 = vpop.permute.xlu0 %1934
  %1936 = vrot.lane.b32.xlu0 %v1893, 126
  %v1937 = vpop.permute.xlu0 %1936
  %1938 = vrot.lane.b32.xlu0 %v1894, 126
  %v1939 = vpop.permute.xlu0 %1938
  %1940 = vrot.lane.b32.xlu0 %v1895, 126
  %v1941 = vpop.permute.xlu0 %1940
  %1942 = vrot.lane.b32.xlu0 %v1896, 126
  %v1943 = vpop.permute.xlu0 %1942
  %1944 = vrot.lane.b32.xlu0 %v1897, 126
  %v1945 = vpop.permute.xlu0 %1944
  %v1946 = vsel %vm484, %v459, %v1935
  %v1947 = vsel %vm484, %v1935, %v1937
  %v1948 = vsel %vm484, %v1937, %v1939
  %v1949 = vsel %vm484, %v1939, %v1941
  %v1950 = vsel %vm484, %v1941, %v1943
  %v1951 = vsel %vm484, %v1943, %v1945
  %1952 = vrot.lane.b32.xlu0 %v1892, 110
  %v1953 = vpop.permute.xlu0 %1952
  %1954 = vrot.lane.b32.xlu0 %v1893, 110
  %v1955 = vpop.permute.xlu0 %1954
  %1956 = vrot.lane.b32.xlu0 %v1894, 110
  %v1957 = vpop.permute.xlu0 %1956
  %1958 = vrot.lane.b32.xlu0 %v1895, 110
  %v1959 = vpop.permute.xlu0 %1958
  %1960 = vrot.lane.b32.xlu0 %v1896, 110
  %v1961 = vpop.permute.xlu0 %1960
  %1962 = vrot.lane.b32.xlu0 %v1897, 110
  %v1963 = vpop.permute.xlu0 %1962
  %v1964 = vsel %vm523, %v498, %v1953
  %v1965 = vsel %vm523, %v1953, %v1955
  %v1966 = vsel %vm523, %v1955, %v1957
  %v1967 = vsel %vm523, %v1957, %v1959
  %v1968 = vsel %vm523, %v1959, %v1961
  %v1969 = vsel %vm523, %v1961, %v1963
  %1970 = vrot.lane.b32.xlu0 %v1892, 109
  %v1971 = vpop.permute.xlu0 %1970
  %1972 = vrot.lane.b32.xlu0 %v1893, 109
  %v1973 = vpop.permute.xlu0 %1972
  %1974 = vrot.lane.b32.xlu0 %v1894, 109
  %v1975 = vpop.permute.xlu0 %1974
  %1976 = vrot.lane.b32.xlu0 %v1895, 109
  %v1977 = vpop.permute.xlu0 %1976
  %1978 = vrot.lane.b32.xlu0 %v1896, 109
  %v1979 = vpop.permute.xlu0 %1978
  %1980 = vrot.lane.b32.xlu0 %v1897, 109
  %v1981 = vpop.permute.xlu0 %1980
  %v1982 = vsel %vm560, %v1971, %v1973
  %v1983 = vsel %vm560, %v1973, %v1975
  %v1984 = vsel %vm560, %v1975, %v1977
  %v1985 = vsel %vm560, %v1977, %v1979
  %v1986 = vsel %vm560, %v1979, %v1981
  %1987 = vrot.lane.b32.xlu0 %v1892, 108
  %v1988 = vpop.permute.xlu0 %1987
  %1989 = vrot.lane.b32.xlu0 %v1893, 108
  %v1990 = vpop.permute.xlu0 %1989
  %1991 = vrot.lane.b32.xlu0 %v1894, 108
  %v1992 = vpop.permute.xlu0 %1991
  %1993 = vrot.lane.b32.xlu0 %v1895, 108
  %v1994 = vpop.permute.xlu0 %1993
  %1995 = vrot.lane.b32.xlu0 %v1896, 108
  %v1996 = vpop.permute.xlu0 %1995
  %1997 = vrot.lane.b32.xlu0 %v1897, 108
  %v1998 = vpop.permute.xlu0 %1997
  %v1999 = vsel %vm597, %v1988, %v1990
  %v2000 = vsel %vm597, %v1990, %v1992
  %v2001 = vsel %vm597, %v1992, %v1994
  %v2002 = vsel %vm597, %v1994, %v1996
  %v2003 = vsel %vm597, %v1996, %v1998
  %v2004 = vsel %vm597, %v1998, %v584
  %2005 = vrot.lane.b32.xlu0 %v1892, 92
  %v2006 = vpop.permute.xlu0 %2005
  %2007 = vrot.lane.b32.xlu0 %v1893, 92
  %v2008 = vpop.permute.xlu0 %2007
  %2009 = vrot.lane.b32.xlu0 %v1894, 92
  %v2010 = vpop.permute.xlu0 %2009
  %2011 = vrot.lane.b32.xlu0 %v1895, 92
  %v2012 = vpop.permute.xlu0 %2011
  %2013 = vrot.lane.b32.xlu0 %v1896, 92
  %v2014 = vpop.permute.xlu0 %2013
  %2015 = vrot.lane.b32.xlu0 %v1897, 92
  %v2016 = vpop.permute.xlu0 %2015
  %v2017 = vsel %vm636, %v2006, %v2008
  %v2018 = vsel %vm636, %v2008, %v2010
  %v2019 = vsel %vm636, %v2010, %v2012
  %v2020 = vsel %vm636, %v2012, %v2014
  %v2021 = vsel %vm636, %v2014, %v2016
  %v2022 = vsel %vm636, %v2016, %v623
  %2023 = vrot.lane.b32.xlu0 %v1892, 91
  %v2024 = vpop.permute.xlu0 %2023
  %2025 = vrot.lane.b32.xlu0 %v1893, 91
  %v2026 = vpop.permute.xlu0 %2025
  %2027 = vrot.lane.b32.xlu0 %v1894, 91
  %v2028 = vpop.permute.xlu0 %2027
  %2029 = vrot.lane.b32.xlu0 %v1895, 91
  %v2030 = vpop.permute.xlu0 %2029
  %2031 = vrot.lane.b32.xlu0 %v1896, 91
  %v2032 = vpop.permute.xlu0 %2031
  %2033 = vrot.lane.b32.xlu0 %v1897, 91
  %v2034 = vpop.permute.xlu0 %2033
  %v2035 = vsel %vm675, %v2024, %v2026
  %v2036 = vsel %vm675, %v2026, %v2028
  %v2037 = vsel %vm675, %v2028, %v2030
  %v2038 = vsel %vm675, %v2030, %v2032
  %v2039 = vsel %vm675, %v2032, %v2034
  %v2040 = vsel %vm675, %v2034, %v662
  %2041 = vrot.lane.b32.xlu0 %v1892, 90
  %v2042 = vpop.permute.xlu0 %2041
  %2043 = vrot.lane.b32.xlu0 %v1893, 90
  %v2044 = vpop.permute.xlu0 %2043
  %2045 = vrot.lane.b32.xlu0 %v1894, 90
  %v2046 = vpop.permute.xlu0 %2045
  %2047 = vrot.lane.b32.xlu0 %v1895, 90
  %v2048 = vpop.permute.xlu0 %2047
  %2049 = vrot.lane.b32.xlu0 %v1896, 90
  %v2050 = vpop.permute.xlu0 %2049
  %2051 = vrot.lane.b32.xlu0 %v1897, 90
  %v2052 = vpop.permute.xlu0 %2051
  %v2053 = vsel %vm714, %v2042, %v2044
  %v2054 = vsel %vm714, %v2044, %v2046
  %v2055 = vsel %vm714, %v2046, %v2048
  %v2056 = vsel %vm714, %v2048, %v2050
  %v2057 = vsel %vm714, %v2050, %v2052
  %v2058 = vsel %vm714, %v2052, %v701
  %v2059 = vld [vmem:[%s8] sm:$0xff]
  %v2060 = vld [vmem:[%s9] sm:$0xff]
  %2062 = vset.pattern.permute.xlu0 0
  %2063 = vperm.xlu0 %2062, %v2060
  %v2064 = vpop.permute.xlu0 %2063
  %2066 = vrot.lane.b32.xlu0 %v1892, 19
  %v2067 = vpop.permute.xlu0 %2066
  %2068 = vrot.lane.b32.xlu0 %v1893, 19
  %v2069 = vpop.permute.xlu0 %2068
  %2070 = vrot.lane.b32.xlu0 %v1894, 19
  %v2071 = vpop.permute.xlu0 %2070
  %2072 = vrot.lane.b32.xlu0 %v1895, 19
  %v2073 = vpop.permute.xlu0 %2072
  %2074 = vrot.lane.b32.xlu0 %v1896, 19
  %v2075 = vpop.permute.xlu0 %2074
  %2076 = vrot.lane.b32.xlu0 %v1897, 19
  %v2077 = vpop.permute.xlu0 %2076
  %2078 = vrot.lane.b32.xlu0 %v1928, 19
  %v2079 = vpop.permute.xlu0 %2078
  %2080 = vrot.lane.b32.xlu0 %v1929, 19
  %v2081 = vpop.permute.xlu0 %2080
  %2082 = vrot.lane.b32.xlu0 %v1930, 19
  %v2083 = vpop.permute.xlu0 %2082
  %2084 = vrot.lane.b32.xlu0 %v1931, 19
  %v2085 = vpop.permute.xlu0 %2084
  %2086 = vrot.lane.b32.xlu0 %v1932, 19
  %v2087 = vpop.permute.xlu0 %2086
  %2088 = vrot.lane.b32.xlu0 %v1933, 19
  %v2089 = vpop.permute.xlu0 %2088
  %2090 = vrot.lane.b32.xlu0 %v1927, 19
  %v2091 = vpop.permute.xlu0 %2090
  %2092 = vrot.lane.b32.xlu0 %v1946, 19
  %v2093 = vpop.permute.xlu0 %2092
  %2094 = vrot.lane.b32.xlu0 %v1947, 19
  %v2095 = vpop.permute.xlu0 %2094
  %2096 = vrot.lane.b32.xlu0 %v1948, 19
  %v2097 = vpop.permute.xlu0 %2096
  %2098 = vrot.lane.b32.xlu0 %v1949, 19
  %v2099 = vpop.permute.xlu0 %2098
  %2100 = vrot.lane.b32.xlu0 %v1950, 19
  %v2101 = vpop.permute.xlu0 %2100
  %2102 = vrot.lane.b32.xlu0 %v1951, 19
  %v2103 = vpop.permute.xlu0 %2102
  %2104 = vrot.lane.b32.xlu0 %v1945, 19
  %v2105 = vpop.permute.xlu0 %2104
  %2106 = vrot.lane.b32.xlu0 %v1964, 19
  %v2107 = vpop.permute.xlu0 %2106
  %2108 = vrot.lane.b32.xlu0 %v1965, 19
  %v2109 = vpop.permute.xlu0 %2108
  %2110 = vrot.lane.b32.xlu0 %v1966, 19
  %v2111 = vpop.permute.xlu0 %2110
  %2112 = vrot.lane.b32.xlu0 %v1967, 19
  %v2113 = vpop.permute.xlu0 %2112
  %2114 = vrot.lane.b32.xlu0 %v1968, 19
  %v2115 = vpop.permute.xlu0 %2114
  %2116 = vrot.lane.b32.xlu0 %v1969, 19
  %v2117 = vpop.permute.xlu0 %2116
  %2118 = vrot.lane.b32.xlu0 %v1963, 19
  %v2119 = vpop.permute.xlu0 %2118
  %2120 = vrot.lane.b32.xlu0 %v1971, 19
  %v2121 = vpop.permute.xlu0 %2120
  %2122 = vrot.lane.b32.xlu0 %v1982, 19
  %v2123 = vpop.permute.xlu0 %2122
  %2124 = vrot.lane.b32.xlu0 %v1983, 19
  %v2125 = vpop.permute.xlu0 %2124
  %2126 = vrot.lane.b32.xlu0 %v1984, 19
  %v2127 = vpop.permute.xlu0 %2126
  %2128 = vrot.lane.b32.xlu0 %v1985, 19
  %v2129 = vpop.permute.xlu0 %2128
  %2130 = vrot.lane.b32.xlu0 %v1986, 19
  %v2131 = vpop.permute.xlu0 %2130
  %2132 = vrot.lane.b32.xlu0 %v1981, 19
  %v2133 = vpop.permute.xlu0 %2132
  %2134 = vrot.lane.b32.xlu0 %v1988, 19
  %v2135 = vpop.permute.xlu0 %2134
  %2136 = vrot.lane.b32.xlu0 %v1999, 19
  %v2137 = vpop.permute.xlu0 %2136
  %2138 = vrot.lane.b32.xlu0 %v2000, 19
  %v2139 = vpop.permute.xlu0 %2138
  %2140 = vrot.lane.b32.xlu0 %v2001, 19
  %v2141 = vpop.permute.xlu0 %2140
  %2142 = vrot.lane.b32.xlu0 %v2002, 19
  %v2143 = vpop.permute.xlu0 %2142
  %2144 = vrot.lane.b32.xlu0 %v2003, 19
  %v2145 = vpop.permute.xlu0 %2144
  %2146 = vrot.lane.b32.xlu0 %v2004, 19
  %v2147 = vpop.permute.xlu0 %2146
  %2148 = vrot.lane.b32.xlu0 %v2006, 19
  %v2149 = vpop.permute.xlu0 %2148
  %2150 = vrot.lane.b32.xlu0 %v2017, 19
  %v2151 = vpop.permute.xlu0 %2150
  %2152 = vrot.lane.b32.xlu0 %v2018, 19
  %v2153 = vpop.permute.xlu0 %2152
  %2154 = vrot.lane.b32.xlu0 %v2019, 19
  %v2155 = vpop.permute.xlu0 %2154
  %2156 = vrot.lane.b32.xlu0 %v2020, 19
  %v2157 = vpop.permute.xlu0 %2156
  %2158 = vrot.lane.b32.xlu0 %v2021, 19
  %v2159 = vpop.permute.xlu0 %2158
  %2160 = vrot.lane.b32.xlu0 %v2022, 19
  %v2161 = vpop.permute.xlu0 %2160
  %2162 = vrot.lane.b32.xlu0 %v2024, 19
  %v2163 = vpop.permute.xlu0 %2162
  %2164 = vrot.lane.b32.xlu0 %v2035, 19
  %v2165 = vpop.permute.xlu0 %2164
  %2166 = vrot.lane.b32.xlu0 %v2036, 19
  %v2167 = vpop.permute.xlu0 %2166
  %2168 = vrot.lane.b32.xlu0 %v2037, 19
  %v2169 = vpop.permute.xlu0 %2168
  %2170 = vrot.lane.b32.xlu0 %v2038, 19
  %v2171 = vpop.permute.xlu0 %2170
  %2172 = vrot.lane.b32.xlu0 %v2039, 19
  %v2173 = vpop.permute.xlu0 %2172
  %2174 = vrot.lane.b32.xlu0 %v2040, 19
  %v2175 = vpop.permute.xlu0 %2174
  %2176 = vrot.lane.b32.xlu0 %v2042, 19
  %v2177 = vpop.permute.xlu0 %2176
  %2178 = vrot.lane.b32.xlu0 %v2053, 19
  %v2179 = vpop.permute.xlu0 %2178
  %2180 = vrot.lane.b32.xlu0 %v2054, 19
  %v2181 = vpop.permute.xlu0 %2180
  %2182 = vrot.lane.b32.xlu0 %v2055, 19
  %v2183 = vpop.permute.xlu0 %2182
  %2184 = vrot.lane.b32.xlu0 %v2056, 19
  %v2185 = vpop.permute.xlu0 %2184
  %2186 = vrot.lane.b32.xlu0 %v2057, 19
  %v2187 = vpop.permute.xlu0 %2186
  %2188 = vrot.lane.b32.xlu0 %v2058, 19
  %v2189 = vpop.permute.xlu0 %2188
  %v2190 = vsel %vm1009, %v760, %v2067
  %v2191 = vsel %vm1009, %v2067, %v2069
  %v2192 = vsel %vm1009, %v2069, %v2071
  %v2193 = vsel %vm1009, %v2071, %v2073
  %v2194 = vsel %vm1009, %v2073, %v2075
  %v2195 = vsel %vm1009, %v2075, %v2077
  %v2196 = vsel %vm1009, %v2079, %v2081
  %v2197 = vsel %vm1009, %v2081, %v2083
  %v2198 = vsel %vm1009, %v2083, %v2085
  %v2199 = vsel %vm1009, %v2085, %v2087
  %v2200 = vsel %vm1009, %v2087, %v2089
  %v2201 = vsel %vm1009, %v2089, %v2091
  %v2202 = vsel %vm1009, %v2093, %v2095
  %v2203 = vsel %vm1009, %v2095, %v2097
  %v2204 = vsel %vm1009, %v2097, %v2099
  %v2205 = vsel %vm1009, %v2099, %v2101
  %v2206 = vsel %vm1009, %v2101, %v2103
  %v2207 = vsel %vm1009, %v2103, %v2105
  %v2208 = vsel %vm1009, %v2107, %v2109
  %v2209 = vsel %vm1009, %v2109, %v2111
  %v2210 = vsel %vm1009, %v2111, %v2113
  %v2211 = vsel %vm1009, %v2113, %v2115
  %v2212 = vsel %vm1009, %v2115, %v2117
  %v2213 = vsel %vm1009, %v2117, %v2119
  %v2214 = vsel %vm1009, %v2121, %v2123
  %v2215 = vsel %vm1009, %v2123, %v2125
  %v2216 = vsel %vm1009, %v2125, %v2127
  %v2217 = vsel %vm1009, %v2127, %v2129
  %v2218 = vsel %vm1009, %v2129, %v2131
  %v2219 = vsel %vm1009, %v2131, %v2133
  %v2220 = vsel %vm1009, %v2135, %v2137
  %v2221 = vsel %vm1009, %v2137, %v2139
  %v2222 = vsel %vm1009, %v2139, %v2141
  %v2223 = vsel %vm1009, %v2141, %v2143
  %v2224 = vsel %vm1009, %v2143, %v2145
  %v2225 = vsel %vm1009, %v2145, %v2147
  %v2226 = vsel %vm1009, %v2149, %v2151
  %v2227 = vsel %vm1009, %v2151, %v2153
  %v2228 = vsel %vm1009, %v2153, %v2155
  %v2229 = vsel %vm1009, %v2155, %v2157
  %v2230 = vsel %vm1009, %v2157, %v2159
  %v2231 = vsel %vm1009, %v2159, %v2161
  %v2232 = vsel %vm1009, %v2163, %v2165
  %v2233 = vsel %vm1009, %v2165, %v2167
  %v2234 = vsel %vm1009, %v2167, %v2169
  %v2235 = vsel %vm1009, %v2169, %v2171
  %v2236 = vsel %vm1009, %v2171, %v2173
  %v2237 = vsel %vm1009, %v2173, %v2175
  %v2238 = vsel %vm1009, %v2177, %v2179
  %v2239 = vsel %vm1009, %v2179, %v2181
  %v2240 = vsel %vm1009, %v2181, %v2183
  %v2241 = vsel %vm1009, %v2183, %v2185
  %v2242 = vsel %vm1009, %v2185, %v2187
  %v2243 = vsel %vm1009, %v2187, %v2189
  %vm2298 = vcmask 588800
  %v2300 = vsel %vm2298, %v2059, 0
  %2302 = vmatprep.subr.mxu0 0.0
  %2303 = vmatpush1.msra.mxu0 0.0
  %2304 = vmatprep.subr.mxu0 0.0
  %2305 = vmatpush1.msra.mxu0 0.0
  %2306 = vmatprep.subr.mxu0 0.0
  %2307 = vmatpush1.msra.mxu0 0.0
  %2308 = vmatprep.subr.mxu0 0.0
  %2309 = vmatpush1.msra.mxu0 0.0
  %2310 = vmatprep.subr.mxu0 0.0
  %2311 = vmatpush1.msra.mxu0 0.0
  %2312 = vmatprep.subr.mxu0 0.0
  %2313 = vmatpush1.msra.mxu0 0.0
  %2314 = vmatprep.subr.mxu0 0.0
  %2315 = vmatpush1.msra.mxu0 0.0
  %2316 = vmatprep.subr.mxu0 %v2239
  %2317 = vmatpush1.msra.mxu0 %v2238
  %2318 = vmatprep.subr.mxu0 %v2233
  %2319 = vmatpush1.msra.mxu0 %v2232
  %2320 = vmatprep.subr.mxu0 %v2227
  %2321 = vmatpush1.msra.mxu0 %v2226
  %2322 = vmatprep.subr.mxu0 %v2221
  %2323 = vmatpush1.msra.mxu0 %v2220
  %2324 = vmatprep.subr.mxu0 %v2215
  %2325 = vmatpush1.msra.mxu0 %v2214
  %2326 = vmatprep.subr.mxu0 %v2209
  %2327 = vmatpush1.msra.mxu0 %v2208
  %2328 = vmatprep.subr.mxu0 %v2203
  %2329 = vmatpush1.msra.mxu0 %v2202
  %2330 = vmatprep.subr.mxu0 %v2197
  %2331 = vmatpush1.msra.mxu0 %v2196
  %2332 = vmatprep.subr.mxu0 %v2191
  %2333 = vmatpush1.msra.mxu0 %v2190
  %2334 = vmatprep.subr.mxu0 0.0
  %2335 = vmatpush2.msra.mxu0 0.0
  %2336 = vmatprep.subr.mxu0 0.0
  %2337 = vmatpush2.msra.mxu0 0.0
  %2338 = vmatprep.subr.mxu0 0.0
  %2339 = vmatpush2.msra.mxu0 0.0
  %2340 = vmatprep.subr.mxu0 0.0
  %2341 = vmatpush2.msra.mxu0 0.0
  %2342 = vmatprep.subr.mxu0 0.0
  %2343 = vmatpush2.msra.mxu0 0.0
  %2344 = vmatprep.subr.mxu0 0.0
  %2345 = vmatpush2.msra.mxu0 0.0
  %2346 = vmatprep.subr.mxu0 0.0
  %2347 = vmatpush2.msra.mxu0 0.0
  %2348 = vmatprep.subr.mxu0 0.0
  %2349 = vmatpush2.msra.mxu0 0.0
  %2350 = vmatprep.subr.mxu0 0.0
  %2351 = vmatpush2.msra.mxu0 0.0
  %2352 = vmatprep.subr.mxu0 0.0
  %2353 = vmatpush2.msra.mxu0 0.0
  %2354 = vmatprep.subr.mxu0 0.0
  %2355 = vmatpush2.msra.mxu0 0.0
  %2356 = vmatprep.subr.mxu0 0.0
  %2357 = vmatpush2.msra.mxu0 0.0
  %2358 = vmatprep.subr.mxu0 0.0
  %2359 = vmatpush2.msra.mxu0 0.0
  %2360 = vmatprep.subr.mxu0 0.0
  %2361 = vmatpush2.msra.mxu0 0.0
  %2362 = vmatprep.subr.mxu0 0.0
  %2363 = vmatpush2.msra.mxu0 0.0
  %2364 = vmatprep.subr.mxu0 0.0
  %2365 = vmatpush2.msra.mxu0 0.0
  %2366 = vmatprep.mubr.f32.mxu0 0.0
  %2367 = vmatmul.mubr.f32.gmra.mxu0 %v2300
  %v2368 = vpop.f32.mrf.mxu0
  %v2369 = vadd.f32 %v2064, %v2368
  %v2370 = vpop.f32.mrf.mxu0
  %v2371 = vadd.f32 %v2064, %v2370
  %2372 = vdwg.mxu0
  %2373 = vmatprep.subr.mxu0 0.0
  %2374 = vmatpush1.msra.mxu0 0.0
  %2375 = vmatprep.subr.mxu0 0.0
  %2376 = vmatpush1.msra.mxu0 0.0
  %2377 = vmatprep.subr.mxu0 0.0
  %2378 = vmatpush1.msra.mxu0 0.0
  %2379 = vmatprep.subr.mxu0 0.0
  %2380 = vmatpush1.msra.mxu0 0.0
  %2381 = vmatprep.subr.mxu0 0.0
  %2382 = vmatpush1.msra.mxu0 0.0
  %2383 = vmatprep.subr.mxu0 0.0
  %2384 = vmatpush1.msra.mxu0 0.0
  %2385 = vmatprep.subr.mxu0 0.0
  %2386 = vmatpush1.msra.mxu0 0.0
  %2387 = vmatprep.subr.mxu0 %v2241
  %2388 = vmatpush1.msra.mxu0 %v2240
  %2389 = vmatprep.subr.mxu0 %v2235
  %2390 = vmatpush1.msra.mxu0 %v2234
  %2391 = vmatprep.subr.mxu0 %v2229
  %2392 = vmatpush1.msra.mxu0 %v2228
  %2393 = vmatprep.subr.mxu0 %v2223
  %2394 = vmatpush1.msra.mxu0 %v2222
  %2395 = vmatprep.subr.mxu0 %v2217
  %2396 = vmatpush1.msra.mxu0 %v2216
  %2397 = vmatprep.subr.mxu0 %v2211
  %2398 = vmatpush1.msra.mxu0 %v2210
  %2399 = vmatprep.subr.mxu0 %v2205
  %2400 = vmatpush1.msra.mxu0 %v2204
  %2401 = vmatprep.subr.mxu0 %v2199
  %2402 = vmatpush1.msra.mxu0 %v2198
  %2403 = vmatprep.subr.mxu0 %v2193
  %2404 = vmatpush1.msra.mxu0 %v2192
  %2405 = vmatprep.subr.mxu0 0.0
  %2406 = vmatpush2.msra.mxu0 0.0
  %2407 = vmatprep.subr.mxu0 0.0
  %2408 = vmatpush2.msra.mxu0 0.0
  %2409 = vmatprep.subr.mxu0 0.0
  %2410 = vmatpush2.msra.mxu0 0.0
  %2411 = vmatprep.subr.mxu0 0.0
  %2412 = vmatpush2.msra.mxu0 0.0
  %2413 = vmatprep.subr.mxu0 0.0
  %2414 = vmatpush2.msra.mxu0 0.0
  %2415 = vmatprep.subr.mxu0 0.0
  %2416 = vmatpush2.msra.mxu0 0.0
  %2417 = vmatprep.subr.mxu0 0.0
  %2418 = vmatpush2.msra.mxu0 0.0
  %2419 = vmatprep.subr.mxu0 0.0
  %2420 = vmatpush2.msra.mxu0 0.0
  %2421 = vmatprep.subr.mxu0 0.0
  %2422 = vmatpush2.msra.mxu0 0.0
  %2423 = vmatprep.subr.mxu0 0.0
  %2424 = vmatpush2.msra.mxu0 0.0
  %2425 = vmatprep.subr.mxu0 0.0
  %2426 = vmatpush2.msra.mxu0 0.0
  %2427 = vmatprep.subr.mxu0 0.0
  %2428 = vmatpush2.msra.mxu0 0.0
  %2429 = vmatprep.subr.mxu0 0.0
  %2430 = vmatpush2.msra.mxu0 0.0
  %2431 = vmatprep.subr.mxu0 0.0
  %2432 = vmatpush2.msra.mxu0 0.0
  %2433 = vmatprep.subr.mxu0 0.0
  %2434 = vmatpush2.msra.mxu0 0.0
  %2435 = vmatprep.subr.mxu0 0.0
  %2436 = vmatpush2.msra.mxu0 0.0
  %2437 = vmatprep.mubr.f32.mxu0 0.0
  %2438 = vmatmul.mubr.f32.gmra.mxu0 %v2300
  %v2439 = vpop.f32.mrf.mxu0
  %v2440 = vadd.f32 %v2064, %v2439
  %v2441 = vpop.f32.mrf.mxu0
  %v2442 = vadd.f32 %v2064, %v2441
  %2443 = vdwg.mxu0
  %2444 = vmatprep.subr.mxu0 0.0
  %2445 = vmatpush1.msra.mxu0 0.0
  %2446 = vmatprep.subr.mxu0 0.0
  %2447 = vmatpush1.msra.mxu0 0.0
  %2448 = vmatprep.subr.mxu0 0.0
  %2449 = vmatpush1.msra.mxu0 0.0
  %2450 = vmatprep.subr.mxu0 0.0
  %2451 = vmatpush1.msra.mxu0 0.0
  %2452 = vmatprep.subr.mxu0 0.0
  %2453 = vmatpush1.msra.mxu0 0.0
  %2454 = vmatprep.subr.mxu0 0.0
  %2455 = vmatpush1.msra.mxu0 0.0
  %2456 = vmatprep.subr.mxu0 0.0
  %2457 = vmatpush1.msra.mxu0 0.0
  %2458 = vmatprep.subr.mxu0 %v2243
  %2459 = vmatpush1.msra.mxu0 %v2242
  %2460 = vmatprep.subr.mxu0 %v2237
  %2461 = vmatpush1.msra.mxu0 %v2236
  %2462 = vmatprep.subr.mxu0 %v2231
  %2463 = vmatpush1.msra.mxu0 %v2230
  %2464 = vmatprep.subr.mxu0 %v2225
  %2465 = vmatpush1.msra.mxu0 %v2224
  %2466 = vmatprep.subr.mxu0 %v2219
  %2467 = vmatpush1.msra.mxu0 %v2218
  %2468 = vmatprep.subr.mxu0 %v2213
  %2469 = vmatpush1.msra.mxu0 %v2212
  %2470 = vmatprep.subr.mxu0 %v2207
  %2471 = vmatpush1.msra.mxu0 %v2206
  %2472 = vmatprep.subr.mxu0 %v2201
  %2473 = vmatpush1.msra.mxu0 %v2200
  %2474 = vmatprep.subr.mxu0 %v2195
  %2475 = vmatpush1.msra.mxu0 %v2194
  %2476 = vmatprep.subr.mxu0 0.0
  %2477 = vmatpush2.msra.mxu0 0.0
  %2478 = vmatprep.subr.mxu0 0.0
  %2479 = vmatpush2.msra.mxu0 0.0
  %2480 = vmatprep.subr.mxu0 0.0
  %2481 = vmatpush2.msra.mxu0 0.0
  %2482 = vmatprep.subr.mxu0 0.0
  %2483 = vmatpush2.msra.mxu0 0.0
  %2484 = vmatprep.subr.mxu0 0.0
  %2485 = vmatpush2.msra.mxu0 0.0
  %2486 = vmatprep.subr.mxu0 0.0
  %2487 = vmatpush2.msra.mxu0 0.0
  %2488 = vmatprep.subr.mxu0 0.0
  %2489 = vmatpush2.msra.mxu0 0.0
  %2490 = vmatprep.subr.mxu0 0.0
  %2491 = vmatpush2.msra.mxu0 0.0
  %2492 = vmatprep.subr.mxu0 0.0
  %2493 = vmatpush2.msra.mxu0 0.0
  %2494 = vmatprep.subr.mxu0 0.0
  %2495 = vmatpush2.msra.mxu0 0.0
  %2496 = vmatprep.subr.mxu0 0.0
  %2497 = vmatpush2.msra.mxu0 0.0
  %2498 = vmatprep.subr.mxu0 0.0
  %2499 = vmatpush2.msra.mxu0 0.0
  %2500 = vmatprep.subr.mxu0 0.0
  %2501 = vmatpush2.msra.mxu0 0.0
  %2502 = vmatprep.subr.mxu0 0.0
  %2503 = vmatpush2.msra.mxu0 0.0
  %2504 = vmatprep.subr.mxu0 0.0
  %2505 = vmatpush2.msra.mxu0 0.0
  %2506 = vmatprep.subr.mxu0 0.0
  %2507 = vmatpush2.msra.mxu0 0.0
  %2508 = vmatprep.mubr.f32.mxu0 0.0
  %2509 = vmatmul.mubr.f32.gmra.mxu0 %v2300
  %v2510 = vpop.f32.mrf.mxu0
  %v2511 = vadd.f32 %v2064, %v2510
  %v2512 = vpop.f32.mrf.mxu0
  %v2513 = vadd.f32 %v2064, %v2512
  %2514 = vdwg.mxu0
  %v2515 = vmax.f32 %v2369, 0.0
  %v2516 = vmax.f32 %v2371, 0.0
  %v2517 = vmax.f32 %v2440, 0.0
  %v2518 = vmax.f32 %v2442, 0.0
  %v2519 = vmax.f32 %v2511, 0.0
  %v2520 = vmax.f32 %v2513, 0.0
  %v2521 = vmul.f32 %v2515, %v367
  %v2522 = vmul.f32 %v2516, %v371
  %v2523 = vmul.f32 %v2517, %v375
  %v2524 = vmul.f32 %v2518, %v379
  %v2525 = vmul.f32 %v2519, %v383
  %v2526 = vmul.f32 %v2520, %v387
  %2533 = vrot.lane.b32.xlu0 %v2521, 127
  %v2534 = vpop.permute.xlu0 %2533
  %2535 = vrot.lane.b32.xlu0 %v2522, 127
  %v2536 = vpop.permute.xlu0 %2535
  %2537 = vrot.lane.b32.xlu0 %v2523, 127
  %v2538 = vpop.permute.xlu0 %2537
  %2539 = vrot.lane.b32.xlu0 %v2524, 127
  %v2540 = vpop.permute.xlu0 %2539
  %2541 = vrot.lane.b32.xlu0 %v2525, 127
  %v2542 = vpop.permute.xlu0 %2541
  %2543 = vrot.lane.b32.xlu0 %v2526, 127
  %v2544 = vpop.permute.xlu0 %2543
  %v2545 = vsel %vm445, %v420, %v2534
  %v2546 = vsel %vm445, %v2534, %v2536
  %v2547 = vsel %vm445, %v2536, %v2538
  %v2548 = vsel %vm445, %v2538, %v2540
  %v2549 = vsel %vm445, %v2540, %v2542
  %v2550 = vsel %vm445, %v2542, %v2544
  %2551 = vrot.lane.b32.xlu0 %v2521, 126
  %v2552 = vpop.permute.xlu0 %2551
  %2553 = vrot.lane.b32.xlu0 %v2522, 126
  %v2554 = vpop.permute.xlu0 %2553
  %2555 = vrot.lane.b32.xlu0 %v2523, 126
  %v2556 = vpop.permute.xlu0 %2555
  %2557 = vrot.lane.b32.xlu0 %v2524, 126
  %v2558 = vpop.permute.xlu0 %2557
  %2559 = vrot.lane.b32.xlu0 %v2525, 126
  %v2560 = vpop.permute.xlu0 %2559
  %2561 = vrot.lane.b32.xlu0 %v2526, 126
  %v2562 = vpop.permute.xlu0 %2561
  %v2563 = vsel %vm484, %v459, %v2552
  %v2564 = vsel %vm484, %v2552, %v2554
  %v2565 = vsel %vm484, %v2554, %v2556
  %v2566 = vsel %vm484, %v2556, %v2558
  %v2567 = vsel %vm484, %v2558, %v2560
  %v2568 = vsel %vm484, %v2560, %v2562
  %2569 = vrot.lane.b32.xlu0 %v2521, 110
  %v2570 = vpop.permute.xlu0 %2569
  %2571 = vrot.lane.b32.xlu0 %v2522, 110
  %v2572 = vpop.permute.xlu0 %2571
  %2573 = vrot.lane.b32.xlu0 %v2523, 110
  %v2574 = vpop.permute.xlu0 %2573
  %2575 = vrot.lane.b32.xlu0 %v2524, 110
  %v2576 = vpop.permute.xlu0 %2575
  %2577 = vrot.lane.b32.xlu0 %v2525, 110
  %v2578 = vpop.permute.xlu0 %2577
  %2579 = vrot.lane.b32.xlu0 %v2526, 110
  %v2580 = vpop.permute.xlu0 %2579
  %v2581 = vsel %vm523, %v498, %v2570
  %v2582 = vsel %vm523, %v2570, %v2572
  %v2583 = vsel %vm523, %v2572, %v2574
  %v2584 = vsel %vm523, %v2574, %v2576
  %v2585 = vsel %vm523, %v2576, %v2578
  %v2586 = vsel %vm523, %v2578, %v2580
  %2587 = vrot.lane.b32.xlu0 %v2521, 109
  %v2588 = vpop.permute.xlu0 %2587
  %2589 = vrot.lane.b32.xlu0 %v2522, 109
  %v2590 = vpop.permute.xlu0 %2589
  %2591 = vrot.lane.b32.xlu0 %v2523, 109
  %v2592 = vpop.permute.xlu0 %2591
  %2593 = vrot.lane.b32.xlu0 %v2524, 109
  %v2594 = vpop.permute.xlu0 %2593
  %2595 = vrot.lane.b32.xlu0 %v2525, 109
  %v2596 = vpop.permute.xlu0 %2595
  %2597 = vrot.lane.b32.xlu0 %v2526, 109
  %v2598 = vpop.permute.xlu0 %2597
  %v2599 = vsel %vm560, %v2588, %v2590
  %v2600 = vsel %vm560, %v2590, %v2592
  %v2601 = vsel %vm560, %v2592, %v2594
  %v2602 = vsel %vm560, %v2594, %v2596
  %v2603 = vsel %vm560, %v2596, %v2598
  %2604 = vrot.lane.b32.xlu0 %v2521, 108
  %v2605 = vpop.permute.xlu0 %2604
  %2606 = vrot.lane.b32.xlu0 %v2522, 108
  %v2607 = vpop.permute.xlu0 %2606
  %2608 = vrot.lane.b32.xlu0 %v2523, 108
  %v2609 = vpop.permute.xlu0 %2608
  %2610 = vrot.lane.b32.xlu0 %v2524, 108
  %v2611 = vpop.permute.xlu0 %2610
  %2612 = vrot.lane.b32.xlu0 %v2525, 108
  %v2613 = vpop.permute.xlu0 %2612
  %2614 = vrot.lane.b32.xlu0 %v2526, 108
  %v2615 = vpop.permute.xlu0 %2614
  %v2616 = vsel %vm597, %v2605, %v2607
  %v2617 = vsel %vm597, %v2607, %v2609
  %v2618 = vsel %vm597, %v2609, %v2611
  %v2619 = vsel %vm597, %v2611, %v2613
  %v2620 = vsel %vm597, %v2613, %v2615
  %v2621 = vsel %vm597, %v2615, %v584
  %2622 = vrot.lane.b32.xlu0 %v2521, 92
  %v2623 = vpop.permute.xlu0 %2622
  %2624 = vrot.lane.b32.xlu0 %v2522, 92
  %v2625 = vpop.permute.xlu0 %2624
  %2626 = vrot.lane.b32.xlu0 %v2523, 92
  %v2627 = vpop.permute.xlu0 %2626
  %2628 = vrot.lane.b32.xlu0 %v2524, 92
  %v2629 = vpop.permute.xlu0 %2628
  %2630 = vrot.lane.b32.xlu0 %v2525, 92
  %v2631 = vpop.permute.xlu0 %2630
  %2632 = vrot.lane.b32.xlu0 %v2526, 92
  %v2633 = vpop.permute.xlu0 %2632
  %v2634 = vsel %vm636, %v2623, %v2625
  %v2635 = vsel %vm636, %v2625, %v2627
  %v2636 = vsel %vm636, %v2627, %v2629
  %v2637 = vsel %vm636, %v2629, %v2631
  %v2638 = vsel %vm636, %v2631, %v2633
  %v2639 = vsel %vm636, %v2633, %v623
  %2640 = vrot.lane.b32.xlu0 %v2521, 91
  %v2641 = vpop.permute.xlu0 %2640
  %2642 = vrot.lane.b32.xlu0 %v2522, 91
  %v2643 = vpop.permute.xlu0 %2642
  %2644 = vrot.lane.b32.xlu0 %v2523, 91
  %v2645 = vpop.permute.xlu0 %2644
  %2646 = vrot.lane.b32.xlu0 %v2524, 91
  %v2647 = vpop.permute.xlu0 %2646
  %2648 = vrot.lane.b32.xlu0 %v2525, 91
  %v2649 = vpop.permute.xlu0 %2648
  %2650 = vrot.lane.b32.xlu0 %v2526, 91
  %v2651 = vpop.permute.xlu0 %2650
  %v2652 = vsel %vm675, %v2641, %v2643
  %v2653 = vsel %vm675, %v2643, %v2645
  %v2654 = vsel %vm675, %v2645, %v2647
  %v2655 = vsel %vm675, %v2647, %v2649
  %v2656 = vsel %vm675, %v2649, %v2651
  %v2657 = vsel %vm675, %v2651, %v662
  %2658 = vrot.lane.b32.xlu0 %v2521, 90
  %v2659 = vpop.permute.xlu0 %2658
  %2660 = vrot.lane.b32.xlu0 %v2522, 90
  %v2661 = vpop.permute.xlu0 %2660
  %2662 = vrot.lane.b32.xlu0 %v2523, 90
  %v2663 = vpop.permute.xlu0 %2662
  %2664 = vrot.lane.b32.xlu0 %v2524, 90
  %v2665 = vpop.permute.xlu0 %2664
  %2666 = vrot.lane.b32.xlu0 %v2525, 90
  %v2667 = vpop.permute.xlu0 %2666
  %2668 = vrot.lane.b32.xlu0 %v2526, 90
  %v2669 = vpop.permute.xlu0 %2668
  %v2670 = vsel %vm714, %v2659, %v2661
  %v2671 = vsel %vm714, %v2661, %v2663
  %v2672 = vsel %vm714, %v2663, %v2665
  %v2673 = vsel %vm714, %v2665, %v2667
  %v2674 = vsel %vm714, %v2667, %v2669
  %v2675 = vsel %vm714, %v2669, %v701
  %2676 = vrot.lane.b32.xlu0 %v2521, 19
  %v2677 = vpop.permute.xlu0 %2676
  %2678 = vrot.lane.b32.xlu0 %v2522, 19
  %v2679 = vpop.permute.xlu0 %2678
  %2680 = vrot.lane.b32.xlu0 %v2523, 19
  %v2681 = vpop.permute.xlu0 %2680
  %2682 = vrot.lane.b32.xlu0 %v2524, 19
  %v2683 = vpop.permute.xlu0 %2682
  %2684 = vrot.lane.b32.xlu0 %v2525, 19
  %v2685 = vpop.permute.xlu0 %2684
  %2686 = vrot.lane.b32.xlu0 %v2526, 19
  %v2687 = vpop.permute.xlu0 %2686
  %2688 = vrot.lane.b32.xlu0 %v2545, 19
  %v2689 = vpop.permute.xlu0 %2688
  %2690 = vrot.lane.b32.xlu0 %v2546, 19
  %v2691 = vpop.permute.xlu0 %2690
  %2692 = vrot.lane.b32.xlu0 %v2547, 19
  %v2693 = vpop.permute.xlu0 %2692
  %2694 = vrot.lane.b32.xlu0 %v2548, 19
  %v2695 = vpop.permute.xlu0 %2694
  %2696 = vrot.lane.b32.xlu0 %v2549, 19
  %v2697 = vpop.permute.xlu0 %2696
  %2698 = vrot.lane.b32.xlu0 %v2550, 19
  %v2699 = vpop.permute.xlu0 %2698
  %2700 = vrot.lane.b32.xlu0 %v2544, 19
  %v2701 = vpop.permute.xlu0 %2700
  %2702 = vrot.lane.b32.xlu0 %v2563, 19
  %v2703 = vpop.permute.xlu0 %2702
  %2704 = vrot.lane.b32.xlu0 %v2564, 19
  %v2705 = vpop.permute.xlu0 %2704
  %2706 = vrot.lane.b32.xlu0 %v2565, 19
  %v2707 = vpop.permute.xlu0 %2706
  %2708 = vrot.lane.b32.xlu0 %v2566, 19
  %v2709 = vpop.permute.xlu0 %2708
  %2710 = vrot.lane.b32.xlu0 %v2567, 19
  %v2711 = vpop.permute.xlu0 %2710
  %2712 = vrot.lane.b32.xlu0 %v2568, 19
  %v2713 = vpop.permute.xlu0 %2712
  %2714 = vrot.lane.b32.xlu0 %v2562, 19
  %v2715 = vpop.permute.xlu0 %2714
  %2716 = vrot.lane.b32.xlu0 %v2581, 19
  %v2717 = vpop.permute.xlu0 %2716
  %2718 = vrot.lane.b32.xlu0 %v2582, 19
  %v2719 = vpop.permute.xlu0 %2718
  %2720 = vrot.lane.b32.xlu0 %v2583, 19
  %v2721 = vpop.permute.xlu0 %2720
  %2722 = vrot.lane.b32.xlu0 %v2584, 19
  %v2723 = vpop.permute.xlu0 %2722
  %2724 = vrot.lane.b32.xlu0 %v2585, 19
  %v2725 = vpop.permute.xlu0 %2724
  %2726 = vrot.lane.b32.xlu0 %v2586, 19
  %v2727 = vpop.permute.xlu0 %2726
  %2728 = vrot.lane.b32.xlu0 %v2580, 19
  %v2729 = vpop.permute.xlu0 %2728
  %2730 = vrot.lane.b32.xlu0 %v2588, 19
  %v2731 = vpop.permute.xlu0 %2730
  %2732 = vrot.lane.b32.xlu0 %v2599, 19
  %v2733 = vpop.permute.xlu0 %2732
  %2734 = vrot.lane.b32.xlu0 %v2600, 19
  %v2735 = vpop.permute.xlu0 %2734
  %2736 = vrot.lane.b32.xlu0 %v2601, 19
  %v2737 = vpop.permute.xlu0 %2736
  %2738 = vrot.lane.b32.xlu0 %v2602, 19
  %v2739 = vpop.permute.xlu0 %2738
  %2740 = vrot.lane.b32.xlu0 %v2603, 19
  %v2741 = vpop.permute.xlu0 %2740
  %2742 = vrot.lane.b32.xlu0 %v2598, 19
  %v2743 = vpop.permute.xlu0 %2742
  %2744 = vrot.lane.b32.xlu0 %v2605, 19
  %v2745 = vpop.permute.xlu0 %2744
  %2746 = vrot.lane.b32.xlu0 %v2616, 19
  %v2747 = vpop.permute.xlu0 %2746
  %2748 = vrot.lane.b32.xlu0 %v2617, 19
  %v2749 = vpop.permute.xlu0 %2748
  %2750 = vrot.lane.b32.xlu0 %v2618, 19
  %v2751 = vpop.permute.xlu0 %2750
  %2752 = vrot.lane.b32.xlu0 %v2619, 19
  %v2753 = vpop.permute.xlu0 %2752
  %2754 = vrot.lane.b32.xlu0 %v2620, 19
  %v2755 = vpop.permute.xlu0 %2754
  %2756 = vrot.lane.b32.xlu0 %v2621, 19
  %v2757 = vpop.permute.xlu0 %2756
  %2758 = vrot.lane.b32.xlu0 %v2623, 19
  %v2759 = vpop.permute.xlu0 %2758
  %2760 = vrot.lane.b32.xlu0 %v2634, 19
  %v2761 = vpop.permute.xlu0 %2760
  %2762 = vrot.lane.b32.xlu0 %v2635, 19
  %v2763 = vpop.permute.xlu0 %2762
  %2764 = vrot.lane.b32.xlu0 %v2636, 19
  %v2765 = vpop.permute.xlu0 %2764
  %2766 = vrot.lane.b32.xlu0 %v2637, 19
  %v2767 = vpop.permute.xlu0 %2766
  %2768 = vrot.lane.b32.xlu0 %v2638, 19
  %v2769 = vpop.permute.xlu0 %2768
  %2770 = vrot.lane.b32.xlu0 %v2639, 19
  %v2771 = vpop.permute.xlu0 %2770
  %2772 = vrot.lane.b32.xlu0 %v2641, 19
  %v2773 = vpop.permute.xlu0 %2772
  %2774 = vrot.lane.b32.xlu0 %v2652, 19
  %v2775 = vpop.permute.xlu0 %2774
  %2776 = vrot.lane.b32.xlu0 %v2653, 19
  %v2777 = vpop.permute.xlu0 %2776
  %2778 = vrot.lane.b32.xlu0 %v2654, 19
  %v2779 = vpop.permute.xlu0 %2778
  %2780 = vrot.lane.b32.xlu0 %v2655, 19
  %v2781 = vpop.permute.xlu0 %2780
  %2782 = vrot.lane.b32.xlu0 %v2656, 19
  %v2783 = vpop.permute.xlu0 %2782
  %2784 = vrot.lane.b32.xlu0 %v2657, 19
  %v2785 = vpop.permute.xlu0 %2784
  %2786 = vrot.lane.b32.xlu0 %v2659, 19
  %v2787 = vpop.permute.xlu0 %2786
  %2788 = vrot.lane.b32.xlu0 %v2670, 19
  %v2789 = vpop.permute.xlu0 %2788
  %2790 = vrot.lane.b32.xlu0 %v2671, 19
  %v2791 = vpop.permute.xlu0 %2790
  %2792 = vrot.lane.b32.xlu0 %v2672, 19
  %v2793 = vpop.permute.xlu0 %2792
  %2794 = vrot.lane.b32.xlu0 %v2673, 19
  %v2795 = vpop.permute.xlu0 %2794
  %2796 = vrot.lane.b32.xlu0 %v2674, 19
  %v2797 = vpop.permute.xlu0 %2796
  %2798 = vrot.lane.b32.xlu0 %v2675, 19
  %v2799 = vpop.permute.xlu0 %2798
  %v2800 = vsel %vm1009, %v760, %v2677
  %v2801 = vsel %vm1009, %v2677, %v2679
  %v2802 = vsel %vm1009, %v2679, %v2681
  %v2803 = vsel %vm1009, %v2681, %v2683
  %v2804 = vsel %vm1009, %v2683, %v2685
  %v2805 = vsel %vm1009, %v2685, %v2687
  %v2806 = vsel %vm1009, %v2689, %v2691
  %v2807 = vsel %vm1009, %v2691, %v2693
  %v2808 = vsel %vm1009, %v2693, %v2695
  %v2809 = vsel %vm1009, %v2695, %v2697
  %v2810 = vsel %vm1009, %v2697, %v2699
  %v2811 = vsel %vm1009, %v2699, %v2701
  %v2812 = vsel %vm1009, %v2703, %v2705
  %v2813 = vsel %vm1009, %v2705, %v2707
  %v2814 = vsel %vm1009, %v2707, %v2709
  %v2815 = vsel %vm1009, %v2709, %v2711
  %v2816 = vsel %vm1009, %v2711, %v2713
  %v2817 = vsel %vm1009, %v2713, %v2715
  %v2818 = vsel %vm1009, %v2717, %v2719
  %v2819 = vsel %vm1009, %v2719, %v2721
  %v2820 = vsel %vm1009, %v2721, %v2723
  %v2821 = vsel %vm1009, %v2723, %v2725
  %v2822 = vsel %vm1009, %v2725, %v2727
  %v2823 = vsel %vm1009, %v2727, %v2729
  %v2824 = vsel %vm1009, %v2731, %v2733
  %v2825 = vsel %vm1009, %v2733, %v2735
  %v2826 = vsel %vm1009, %v2735, %v2737
  %v2827 = vsel %vm1009, %v2737, %v2739
  %v2828 = vsel %vm1009, %v2739, %v2741
  %v2829 = vsel %vm1009, %v2741, %v2743
  %v2830 = vsel %vm1009, %v2745, %v2747
  %v2831 = vsel %vm1009, %v2747, %v2749
  %v2832 = vsel %vm1009, %v2749, %v2751
  %v2833 = vsel %vm1009, %v2751, %v2753
  %v2834 = vsel %vm1009, %v2753, %v2755
  %v2835 = vsel %vm1009, %v2755, %v2757
  %v2836 = vsel %vm1009, %v2759, %v2761
  %v2837 = vsel %vm1009, %v2761, %v2763
  %v2838 = vsel %vm1009, %v2763, %v2765
  %v2839 = vsel %vm1009, %v2765, %v2767
  %v2840 = vsel %vm1009, %v2767, %v2769
  %v2841 = vsel %vm1009, %v2769, %v2771
  %v2842 = vsel %vm1009, %v2773, %v2775
  %v2843 = vsel %vm1009, %v2775, %v2777
  %v2844 = vsel %vm1009, %v2777, %v2779
  %v2845 = vsel %vm1009, %v2779, %v2781
  %v2846 = vsel %vm1009, %v2781, %v2783
  %v2847 = vsel %vm1009, %v2783, %v2785
  %v2848 = vsel %vm1009, %v2787, %v2789
  %v2849 = vsel %vm1009, %v2789, %v2791
  %v2850 = vsel %vm1009, %v2791, %v2793
  %v2851 = vsel %vm1009, %v2793, %v2795
  %v2852 = vsel %vm1009, %v2795, %v2797
  %v2853 = vsel %vm1009, %v2797, %v2799
  %2908 = vmatprep.subr.mxu0 0.0
  %2909 = vmatpush1.msra.mxu0 0.0
  %2910 = vmatprep.subr.mxu0 0.0
  %2911 = vmatpush1.msra.mxu0 0.0
  %2912 = vmatprep.subr.mxu0 0.0
  %2913 = vmatpush1.msra.mxu0 0.0
  %2914 = vmatprep.subr.mxu0 0.0
  %2915 = vmatpush1.msra.mxu0 0.0
  %2916 = vmatprep.subr.mxu0 0.0
  %2917 = vmatpush1.msra.mxu0 0.0
  %2918 = vmatprep.subr.mxu0 0.0
  %2919 = vmatpush1.msra.mxu0 0.0
  %2920 = vmatprep.subr.mxu0 0.0
  %2921 = vmatpush1.msra.mxu0 0.0
  %2922 = vmatprep.subr.mxu0 %v2849
  %2923 = vmatpush1.msra.mxu0 %v2848
  %2924 = vmatprep.subr.mxu0 %v2843
  %2925 = vmatpush1.msra.mxu0 %v2842
  %2926 = vmatprep.subr.mxu0 %v2837
  %2927 = vmatpush1.msra.mxu0 %v2836
  %2928 = vmatprep.subr.mxu0 %v2831
  %2929 = vmatpush1.msra.mxu0 %v2830
  %2930 = vmatprep.subr.mxu0 %v2825
  %2931 = vmatpush1.msra.mxu0 %v2824
  %2932 = vmatprep.subr.mxu0 %v2819
  %2933 = vmatpush1.msra.mxu0 %v2818
  %2934 = vmatprep.subr.mxu0 %v2813
  %2935 = vmatpush1.msra.mxu0 %v2812
  %2936 = vmatprep.subr.mxu0 %v2807
  %2937 = vmatpush1.msra.mxu0 %v2806
  %2938 = vmatprep.subr.mxu0 %v2801
  %2939 = vmatpush1.msra.mxu0 %v2800
  %2940 = vmatprep.subr.mxu0 0.0
  %2941 = vmatpush2.msra.mxu0 0.0
  %2942 = vmatprep.subr.mxu0 0.0
  %2943 = vmatpush2.msra.mxu0 0.0
  %2944 = vmatprep.subr.mxu0 0.0
  %2945 = vmatpush2.msra.mxu0 0.0
  %2946 = vmatprep.subr.mxu0 0.0
  %2947 = vmatpush2.msra.mxu0 0.0
  %2948 = vmatprep.subr.mxu0 0.0
  %2949 = vmatpush2.msra.mxu0 0.0
  %2950 = vmatprep.subr.mxu0 0.0
  %2951 = vmatpush2.msra.mxu0 0.0
  %2952 = vmatprep.subr.mxu0 0.0
  %2953 = vmatpush2.msra.mxu0 0.0
  %2954 = vmatprep.subr.mxu0 0.0
  %2955 = vmatpush2.msra.mxu0 0.0
  %2956 = vmatprep.subr.mxu0 0.0
  %2957 = vmatpush2.msra.mxu0 0.0
  %2958 = vmatprep.subr.mxu0 0.0
  %2959 = vmatpush2.msra.mxu0 0.0
  %2960 = vmatprep.subr.mxu0 0.0
  %2961 = vmatpush2.msra.mxu0 0.0
  %2962 = vmatprep.subr.mxu0 0.0
  %2963 = vmatpush2.msra.mxu0 0.0
  %2964 = vmatprep.subr.mxu0 0.0
  %2965 = vmatpush2.msra.mxu0 0.0
  %2966 = vmatprep.subr.mxu0 0.0
  %2967 = vmatpush2.msra.mxu0 0.0
  %2968 = vmatprep.subr.mxu0 0.0
  %2969 = vmatpush2.msra.mxu0 0.0
  %2970 = vmatprep.subr.mxu0 0.0
  %2971 = vmatpush2.msra.mxu0 0.0
  %2972 = vmatprep.mubr.f32.mxu0 0.0
  %2973 = vmatmul.mubr.f32.gmra.mxu0 %v2300
  %v2974 = vpop.f32.mrf.mxu0
  %v2975 = vadd.f32 %v2064, %v2974
  %v2976 = vpop.f32.mrf.mxu0
  %v2977 = vadd.f32 %v2064, %v2976
  %2978 = vdwg.mxu0
  %2979 = vmatprep.subr.mxu0 0.0
  %2980 = vmatpush1.msra.mxu0 0.0
  %2981 = vmatprep.subr.mxu0 0.0
  %2982 = vmatpush1.msra.mxu0 0.0
  %2983 = vmatprep.subr.mxu0 0.0
  %2984 = vmatpush1.msra.mxu0 0.0
  %2985 = vmatprep.subr.mxu0 0.0
  %2986 = vmatpush1.msra.mxu0 0.0
  %2987 = vmatprep.subr.mxu0 0.0
  %2988 = vmatpush1.msra.mxu0 0.0
  %2989 = vmatprep.subr.mxu0 0.0
  %2990 = vmatpush1.msra.mxu0 0.0
  %2991 = vmatprep.subr.mxu0 0.0
  %2992 = vmatpush1.msra.mxu0 0.0
  %2993 = vmatprep.subr.mxu0 %v2851
  %2994 = vmatpush1.msra.mxu0 %v2850
  %2995 = vmatprep.subr.mxu0 %v2845
  %2996 = vmatpush1.msra.mxu0 %v2844
  %2997 = vmatprep.subr.mxu0 %v2839
  %2998 = vmatpush1.msra.mxu0 %v2838
  %2999 = vmatprep.subr.mxu0 %v2833
  %3000 = vmatpush1.msra.mxu0 %v2832
  %3001 = vmatprep.subr.mxu0 %v2827
  %3002 = vmatpush1.msra.mxu0 %v2826
  %3003 = vmatprep.subr.mxu0 %v2821
  %3004 = vmatpush1.msra.mxu0 %v2820
  %3005 = vmatprep.subr.mxu0 %v2815
  %3006 = vmatpush1.msra.mxu0 %v2814
  %3007 = vmatprep.subr.mxu0 %v2809
  %3008 = vmatpush1.msra.mxu0 %v2808
  %3009 = vmatprep.subr.mxu0 %v2803
  %3010 = vmatpush1.msra.mxu0 %v2802
  %3011 = vmatprep.subr.mxu0 0.0
  %3012 = vmatpush2.msra.mxu0 0.0
  %3013 = vmatprep.subr.mxu0 0.0
  %3014 = vmatpush2.msra.mxu0 0.0
  %3015 = vmatprep.subr.mxu0 0.0
  %3016 = vmatpush2.msra.mxu0 0.0
  %3017 = vmatprep.subr.mxu0 0.0
  %3018 = vmatpush2.msra.mxu0 0.0
  %3019 = vmatprep.subr.mxu0 0.0
  %3020 = vmatpush2.msra.mxu0 0.0
  %3021 = vmatprep.subr.mxu0 0.0
  %3022 = vmatpush2.msra.mxu0 0.0
  %3023 = vmatprep.subr.mxu0 0.0
  %3024 = vmatpush2.msra.mxu0 0.0
  %3025 = vmatprep.subr.mxu0 0.0
  %3026 = vmatpush2.msra.mxu0 0.0
  %3027 = vmatprep.subr.mxu0 0.0
  %3028 = vmatpush2.msra.mxu0 0.0
  %3029 = vmatprep.subr.mxu0 0.0
  %3030 = vmatpush2.msra.mxu0 0.0
  %3031 = vmatprep.subr.mxu0 0.0
  %3032 = vmatpush2.msra.mxu0 0.0
  %3033 = vmatprep.subr.mxu0 0.0
  %3034 = vmatpush2.msra.mxu0 0.0
  %3035 = vmatprep.subr.mxu0 0.0
  %3036 = vmatpush2.msra.mxu0 0.0
  %3037 = vmatprep.subr.mxu0 0.0
  %3038 = vmatpush2.msra.mxu0 0.0
  %3039 = vmatprep.subr.mxu0 0.0
  %3040 = vmatpush2.msra.mxu0 0.0
  %3041 = vmatprep.subr.mxu0 0.0
  %3042 = vmatpush2.msra.mxu0 0.0
  %3043 = vmatprep.mubr.f32.mxu0 0.0
  %3044 = vmatmul.mubr.f32.gmra.mxu0 %v2300
  %v3045 = vpop.f32.mrf.mxu0
  %v3046 = vadd.f32 %v2064, %v3045
  %v3047 = vpop.f32.mrf.mxu0
  %v3048 = vadd.f32 %v2064, %v3047
  %3049 = vdwg.mxu0
  %3050 = vmatprep.subr.mxu0 0.0
  %3051 = vmatpush1.msra.mxu0 0.0
  %3052 = vmatprep.subr.mxu0 0.0
  %3053 = vmatpush1.msra.mxu0 0.0
  %3054 = vmatprep.subr.mxu0 0.0
  %3055 = vmatpush1.msra.mxu0 0.0
  %3056 = vmatprep.subr.mxu0 0.0
  %3057 = vmatpush1.msra.mxu0 0.0
  %3058 = vmatprep.subr.mxu0 0.0
  %3059 = vmatpush1.msra.mxu0 0.0
  %3060 = vmatprep.subr.mxu0 0.0
  %3061 = vmatpush1.msra.mxu0 0.0
  %3062 = vmatprep.subr.mxu0 0.0
  %3063 = vmatpush1.msra.mxu0 0.0
  %3064 = vmatprep.subr.mxu0 %v2853
  %3065 = vmatpush1.msra.mxu0 %v2852
  %3066 = vmatprep.subr.mxu0 %v2847
  %3067 = vmatpush1.msra.mxu0 %v2846
  %3068 = vmatprep.subr.mxu0 %v2841
  %3069 = vmatpush1.msra.mxu0 %v2840
  %3070 = vmatprep.subr.mxu0 %v2835
  %3071 = vmatpush1.msra.mxu0 %v2834
  %3072 = vmatprep.subr.mxu0 %v2829
  %3073 = vmatpush1.msra.mxu0 %v2828
  %3074 = vmatprep.subr.mxu0 %v2823
  %3075 = vmatpush1.msra.mxu0 %v2822
  %3076 = vmatprep.subr.mxu0 %v2817
  %3077 = vmatpush1.msra.mxu0 %v2816
  %3078 = vmatprep.subr.mxu0 %v2811
  %3079 = vmatpush1.msra.mxu0 %v2810
  %3080 = vmatprep.subr.mxu0 %v2805
  %3081 = vmatpush1.msra.mxu0 %v2804
  %3082 = vmatprep.subr.mxu0 0.0
  %3083 = vmatpush2.msra.mxu0 0.0
  %3084 = vmatprep.subr.mxu0 0.0
  %3085 = vmatpush2.msra.mxu0 0.0
  %3086 = vmatprep.subr.mxu0 0.0
  %3087 = vmatpush2.msra.mxu0 0.0
  %3088 = vmatprep.subr.mxu0 0.0
  %3089 = vmatpush2.msra.mxu0 0.0
  %3090 = vmatprep.subr.mxu0 0.0
  %3091 = vmatpush2.msra.mxu0 0.0
  %3092 = vmatprep.subr.mxu0 0.0
  %3093 = vmatpush2.msra.mxu0 0.0
  %3094 = vmatprep.subr.mxu0 0.0
  %3095 = vmatpush2.msra.mxu0 0.0
  %3096 = vmatprep.subr.mxu0 0.0
  %3097 = vmatpush2.msra.mxu0 0.0
  %3098 = vmatprep.subr.mxu0 0.0
  %3099 = vmatpush2.msra.mxu0 0.0
  %3100 = vmatprep.subr.mxu0 0.0
  %3101 = vmatpush2.msra.mxu0 0.0
  %3102 = vmatprep.subr.mxu0 0.0
  %3103 = vmatpush2.msra.mxu0 0.0
  %3104 = vmatprep.subr.mxu0 0.0
  %3105 = vmatpush2.msra.mxu0 0.0
  %3106 = vmatprep.subr.mxu0 0.0
  %3107 = vmatpush2.msra.mxu0 0.0
  %3108 = vmatprep.subr.mxu0 0.0
  %3109 = vmatpush2.msra.mxu0 0.0
  %3110 = vmatprep.subr.mxu0 0.0
  %3111 = vmatpush2.msra.mxu0 0.0
  %3112 = vmatprep.subr.mxu0 0.0
  %3113 = vmatpush2.msra.mxu0 0.0
  %3114 = vmatprep.mubr.f32.mxu0 0.0
  %3115 = vmatmul.mubr.f32.gmra.mxu0 %v2300
  %v3116 = vpop.f32.mrf.mxu0
  %v3117 = vadd.f32 %v2064, %v3116
  %v3118 = vpop.f32.mrf.mxu0
  %v3119 = vadd.f32 %v2064, %v3118
  %3120 = vdwg.mxu0
  %v3121 = vmax.f32 %v2975, 0.0
  %v3122 = vmax.f32 %v2977, 0.0
  %v3123 = vmax.f32 %v3046, 0.0
  %v3124 = vmax.f32 %v3048, 0.0
  %v3125 = vmax.f32 %v3117, 0.0
  %v3126 = vmax.f32 %v3119, 0.0
  %v3127 = vmul.f32 %v3121, %v367
  %v3128 = vmul.f32 %v3122, %v371
  %v3129 = vmul.f32 %v3123, %v375
  %v3130 = vmul.f32 %v3124, %v379
  %v3131 = vmul.f32 %v3125, %v383
  %v3132 = vmul.f32 %v3126, %v387
  %v3133 = vadd.f32 %v3127, %v1898
  %v3134 = vadd.f32 %v3128, %v1899
  %v3135 = vadd.f32 %v3129, %v1900
  %v3136 = vadd.f32 %v3130, %v1901
  %v3137 = vadd.f32 %v3131, %v1902
  %v3138 = vadd.f32 %v3132, %v1903
  %3145 = vrot.lane.b32.xlu0 %v3133, 127
  %v3146 = vpop.permute.xlu0 %3145
  %3147 = vrot.lane.b32.xlu0 %v3134, 127
  %v3148 = vpop.permute.xlu0 %3147
  %3149 = vrot.lane.b32.xlu0 %v3135, 127
  %v3150 = vpop.permute.xlu0 %3149
  %3151 = vrot.lane.b32.xlu0 %v3136, 127
  %v3152 = vpop.permute.xlu0 %3151
  %3153 = vrot.lane.b32.xlu0 %v3137, 127
  %v3154 = vpop.permute.xlu0 %3153
  %3155 = vrot.lane.b32.xlu0 %v3138, 127
  %v3156 = vpop.permute.xlu0 %3155
  %v3157 = vsel %vm445, %v420, %v3146
  %v3158 = vsel %vm445, %v3146, %v3148
  %v3159 = vsel %vm445, %v3148, %v3150
  %v3160 = vsel %vm445, %v3150, %v3152
  %v3161 = vsel %vm445, %v3152, %v3154
  %v3162 = vsel %vm445, %v3154, %v3156
  %3163 = vrot.lane.b32.xlu0 %v3133, 126
  %v3164 = vpop.permute.xlu0 %3163
  %3165 = vrot.lane.b32.xlu0 %v3134, 126
  %v3166 = vpop.permute.xlu0 %3165
  %3167 = vrot.lane.b32.xlu0 %v3135, 126
  %v3168 = vpop.permute.xlu0 %3167
  %3169 = vrot.lane.b32.xlu0 %v3136, 126
  %v3170 = vpop.permute.xlu0 %3169
  %3171 = vrot.lane.b32.xlu0 %v3137, 126
  %v3172 = vpop.permute.xlu0 %3171
  %3173 = vrot.lane.b32.xlu0 %v3138, 126
  %v3174 = vpop.permute.xlu0 %3173
  %v3175 = vsel %vm484, %v459, %v3164
  %v3176 = vsel %vm484, %v3164, %v3166
  %v3177 = vsel %vm484, %v3166, %v3168
  %v3178 = vsel %vm484, %v3168, %v3170
  %v3179 = vsel %vm484, %v3170, %v3172
  %v3180 = vsel %vm484, %v3172, %v3174
  %3181 = vrot.lane.b32.xlu0 %v3133, 110
  %v3182 = vpop.permute.xlu0 %3181
  %3183 = vrot.lane.b32.xlu0 %v3134, 110
  %v3184 = vpop.permute.xlu0 %3183
  %3185 = vrot.lane.b32.xlu0 %v3135, 110
  %v3186 = vpop.permute.xlu0 %3185
  %3187 = vrot.lane.b32.xlu0 %v3136, 110
  %v3188 = vpop.permute.xlu0 %3187
  %3189 = vrot.lane.b32.xlu0 %v3137, 110
  %v3190 = vpop.permute.xlu0 %3189
  %3191 = vrot.lane.b32.xlu0 %v3138, 110
  %v3192 = vpop.permute.xlu0 %3191
  %v3193 = vsel %vm523, %v498, %v3182
  %v3194 = vsel %vm523, %v3182, %v3184
  %v3195 = vsel %vm523, %v3184, %v3186
  %v3196 = vsel %vm523, %v3186, %v3188
  %v3197 = vsel %vm523, %v3188, %v3190
  %v3198 = vsel %vm523, %v3190, %v3192
  %3199 = vrot.lane.b32.xlu0 %v3133, 109
  %v3200 = vpop.permute.xlu0 %3199
  %3201 = vrot.lane.b32.xlu0 %v3134, 109
  %v3202 = vpop.permute.xlu0 %3201
  %3203 = vrot.lane.b32.xlu0 %v3135, 109
  %v3204 = vpop.permute.xlu0 %3203
  %3205 = vrot.lane.b32.xlu0 %v3136, 109
  %v3206 = vpop.permute.xlu0 %3205
  %3207 = vrot.lane.b32.xlu0 %v3137, 109
  %v3208 = vpop.permute.xlu0 %3207
  %3209 = vrot.lane.b32.xlu0 %v3138, 109
  %v3210 = vpop.permute.xlu0 %3209
  %v3211 = vsel %vm560, %v3200, %v3202
  %v3212 = vsel %vm560, %v3202, %v3204
  %v3213 = vsel %vm560, %v3204, %v3206
  %v3214 = vsel %vm560, %v3206, %v3208
  %v3215 = vsel %vm560, %v3208, %v3210
  %3216 = vrot.lane.b32.xlu0 %v3133, 108
  %v3217 = vpop.permute.xlu0 %3216
  %3218 = vrot.lane.b32.xlu0 %v3134, 108
  %v3219 = vpop.permute.xlu0 %3218
  %3220 = vrot.lane.b32.xlu0 %v3135, 108
  %v3221 = vpop.permute.xlu0 %3220
  %3222 = vrot.lane.b32.xlu0 %v3136, 108
  %v3223 = vpop.permute.xlu0 %3222
  %3224 = vrot.lane.b32.xlu0 %v3137, 108
  %v3225 = vpop.permute.xlu0 %3224
  %3226 = vrot.lane.b32.xlu0 %v3138, 108
  %v3227 = vpop.permute.xlu0 %3226
  %v3228 = vsel %vm597, %v3217, %v3219
  %v3229 = vsel %vm597, %v3219, %v3221
  %v3230 = vsel %vm597, %v3221, %v3223
  %v3231 = vsel %vm597, %v3223, %v3225
  %v3232 = vsel %vm597, %v3225, %v3227
  %v3233 = vsel %vm597, %v3227, %v584
  %3234 = vrot.lane.b32.xlu0 %v3133, 92
  %v3235 = vpop.permute.xlu0 %3234
  %3236 = vrot.lane.b32.xlu0 %v3134, 92
  %v3237 = vpop.permute.xlu0 %3236
  %3238 = vrot.lane.b32.xlu0 %v3135, 92
  %v3239 = vpop.permute.xlu0 %3238
  %3240 = vrot.lane.b32.xlu0 %v3136, 92
  %v3241 = vpop.permute.xlu0 %3240
  %3242 = vrot.lane.b32.xlu0 %v3137, 92
  %v3243 = vpop.permute.xlu0 %3242
  %3244 = vrot.lane.b32.xlu0 %v3138, 92
  %v3245 = vpop.permute.xlu0 %3244
  %v3246 = vsel %vm636, %v3235, %v3237
  %v3247 = vsel %vm636, %v3237, %v3239
  %v3248 = vsel %vm636, %v3239, %v3241
  %v3249 = vsel %vm636, %v3241, %v3243
  %v3250 = vsel %vm636, %v3243, %v3245
  %v3251 = vsel %vm636, %v3245, %v623
  %3252 = vrot.lane.b32.xlu0 %v3133, 91
  %v3253 = vpop.permute.xlu0 %3252
  %3254 = vrot.lane.b32.xlu0 %v3134, 91
  %v3255 = vpop.permute.xlu0 %3254
  %3256 = vrot.lane.b32.xlu0 %v3135, 91
  %v3257 = vpop.permute.xlu0 %3256
  %3258 = vrot.lane.b32.xlu0 %v3136, 91
  %v3259 = vpop.permute.xlu0 %3258
  %3260 = vrot.lane.b32.xlu0 %v3137, 91
  %v3261 = vpop.permute.xlu0 %3260
  %3262 = vrot.lane.b32.xlu0 %v3138, 91
  %v3263 = vpop.permute.xlu0 %3262
  %v3264 = vsel %vm675, %v3253, %v3255
  %v3265 = vsel %vm675, %v3255, %v3257
  %v3266 = vsel %vm675, %v3257, %v3259
  %v3267 = vsel %vm675, %v3259, %v3261
  %v3268 = vsel %vm675, %v3261, %v3263
  %v3269 = vsel %vm675, %v3263, %v662
  %3270 = vrot.lane.b32.xlu0 %v3133, 90
  %v3271 = vpop.permute.xlu0 %3270
  %3272 = vrot.lane.b32.xlu0 %v3134, 90
  %v3273 = vpop.permute.xlu0 %3272
  %3274 = vrot.lane.b32.xlu0 %v3135, 90
  %v3275 = vpop.permute.xlu0 %3274
  %3276 = vrot.lane.b32.xlu0 %v3136, 90
  %v3277 = vpop.permute.xlu0 %3276
  %3278 = vrot.lane.b32.xlu0 %v3137, 90
  %v3279 = vpop.permute.xlu0 %3278
  %3280 = vrot.lane.b32.xlu0 %v3138, 90
  %v3281 = vpop.permute.xlu0 %3280
  %v3282 = vsel %vm714, %v3271, %v3273
  %v3283 = vsel %vm714, %v3273, %v3275
  %v3284 = vsel %vm714, %v3275, %v3277
  %v3285 = vsel %vm714, %v3277, %v3279
  %v3286 = vsel %vm714, %v3279, %v3281
  %v3287 = vsel %vm714, %v3281, %v701
  %3288 = vrot.lane.b32.xlu0 %v3133, 19
  %v3289 = vpop.permute.xlu0 %3288
  %3290 = vrot.lane.b32.xlu0 %v3134, 19
  %v3291 = vpop.permute.xlu0 %3290
  %3292 = vrot.lane.b32.xlu0 %v3135, 19
  %v3293 = vpop.permute.xlu0 %3292
  %3294 = vrot.lane.b32.xlu0 %v3136, 19
  %v3295 = vpop.permute.xlu0 %3294
  %3296 = vrot.lane.b32.xlu0 %v3137, 19
  %v3297 = vpop.permute.xlu0 %3296
  %3298 = vrot.lane.b32.xlu0 %v3138, 19
  %v3299 = vpop.permute.xlu0 %3298
  %3300 = vrot.lane.b32.xlu0 %v3157, 19
  %v3301 = vpop.permute.xlu0 %3300
  %3302 = vrot.lane.b32.xlu0 %v3158, 19
  %v3303 = vpop.permute.xlu0 %3302
  %3304 = vrot.lane.b32.xlu0 %v3159, 19
  %v3305 = vpop.permute.xlu0 %3304
  %3306 = vrot.lane.b32.xlu0 %v3160, 19
  %v3307 = vpop.permute.xlu0 %3306
  %3308 = vrot.lane.b32.xlu0 %v3161, 19
  %v3309 = vpop.permute.xlu0 %3308
  %3310 = vrot.lane.b32.xlu0 %v3162, 19
  %v3311 = vpop.permute.xlu0 %3310
  %3312 = vrot.lane.b32.xlu0 %v3156, 19
  %v3313 = vpop.permute.xlu0 %3312
  %3314 = vrot.lane.b32.xlu0 %v3175, 19
  %v3315 = vpop.permute.xlu0 %3314
  %3316 = vrot.lane.b32.xlu0 %v3176, 19
  %v3317 = vpop.permute.xlu0 %3316
  %3318 = vrot.lane.b32.xlu0 %v3177, 19
  %v3319 = vpop.permute.xlu0 %3318
  %3320 = vrot.lane.b32.xlu0 %v3178, 19
  %v3321 = vpop.permute.xlu0 %3320
  %3322 = vrot.lane.b32.xlu0 %v3179, 19
  %v3323 = vpop.permute.xlu0 %3322
  %3324 = vrot.lane.b32.xlu0 %v3180, 19
  %v3325 = vpop.permute.xlu0 %3324
  %3326 = vrot.lane.b32.xlu0 %v3174, 19
  %v3327 = vpop.permute.xlu0 %3326
  %3328 = vrot.lane.b32.xlu0 %v3193, 19
  %v3329 = vpop.permute.xlu0 %3328
  %3330 = vrot.lane.b32.xlu0 %v3194, 19
  %v3331 = vpop.permute.xlu0 %3330
  %3332 = vrot.lane.b32.xlu0 %v3195, 19
  %v3333 = vpop.permute.xlu0 %3332
  %3334 = vrot.lane.b32.xlu0 %v3196, 19
  %v3335 = vpop.permute.xlu0 %3334
  %3336 = vrot.lane.b32.xlu0 %v3197, 19
  %v3337 = vpop.permute.xlu0 %3336
  %3338 = vrot.lane.b32.xlu0 %v3198, 19
  %v3339 = vpop.permute.xlu0 %3338
  %3340 = vrot.lane.b32.xlu0 %v3192, 19
  %v3341 = vpop.permute.xlu0 %3340
  %3342 = vrot.lane.b32.xlu0 %v3200, 19
  %v3343 = vpop.permute.xlu0 %3342
  %3344 = vrot.lane.b32.xlu0 %v3211, 19
  %v3345 = vpop.permute.xlu0 %3344
  %3346 = vrot.lane.b32.xlu0 %v3212, 19
  %v3347 = vpop.permute.xlu0 %3346
  %3348 = vrot.lane.b32.xlu0 %v3213, 19
  %v3349 = vpop.permute.xlu0 %3348
  %3350 = vrot.lane.b32.xlu0 %v3214, 19
  %v3351 = vpop.permute.xlu0 %3350
  %3352 = vrot.lane.b32.xlu0 %v3215, 19
  %v3353 = vpop.permute.xlu0 %3352
  %3354 = vrot.lane.b32.xlu0 %v3210, 19
  %v3355 = vpop.permute.xlu0 %3354
  %3356 = vrot.lane.b32.xlu0 %v3217, 19
  %v3357 = vpop.permute.xlu0 %3356
  %3358 = vrot.lane.b32.xlu0 %v3228, 19
  %v3359 = vpop.permute.xlu0 %3358
  %3360 = vrot.lane.b32.xlu0 %v3229, 19
  %v3361 = vpop.permute.xlu0 %3360
  %3362 = vrot.lane.b32.xlu0 %v3230, 19
  %v3363 = vpop.permute.xlu0 %3362
  %3364 = vrot.lane.b32.xlu0 %v3231, 19
  %v3365 = vpop.permute.xlu0 %3364
  %3366 = vrot.lane.b32.xlu0 %v3232, 19
  %v3367 = vpop.permute.xlu0 %3366
  %3368 = vrot.lane.b32.xlu0 %v3233, 19
  %v3369 = vpop.permute.xlu0 %3368
  %3370 = vrot.lane.b32.xlu0 %v3235, 19
  %v3371 = vpop.permute.xlu0 %3370
  %3372 = vrot.lane.b32.xlu0 %v3246, 19
  %v3373 = vpop.permute.xlu0 %3372
  %3374 = vrot.lane.b32.xlu0 %v3247, 19
  %v3375 = vpop.permute.xlu0 %3374
  %3376 = vrot.lane.b32.xlu0 %v3248, 19
  %v3377 = vpop.permute.xlu0 %3376
  %3378 = vrot.lane.b32.xlu0 %v3249, 19
  %v3379 = vpop.permute.xlu0 %3378
  %3380 = vrot.lane.b32.xlu0 %v3250, 19
  %v3381 = vpop.permute.xlu0 %3380
  %3382 = vrot.lane.b32.xlu0 %v3251, 19
  %v3383 = vpop.permute.xlu0 %3382
  %3384 = vrot.lane.b32.xlu0 %v3253, 19
  %v3385 = vpop.permute.xlu0 %3384
  %3386 = vrot.lane.b32.xlu0 %v3264, 19
  %v3387 = vpop.permute.xlu0 %3386
  %3388 = vrot.lane.b32.xlu0 %v3265, 19
  %v3389 = vpop.permute.xlu0 %3388
  %3390 = vrot.lane.b32.xlu0 %v3266, 19
  %v3391 = vpop.permute.xlu0 %3390
  %3392 = vrot.lane.b32.xlu0 %v3267, 19
  %v3393 = vpop.permute.xlu0 %3392
  %3394 = vrot.lane.b32.xlu0 %v3268, 19
  %v3395 = vpop.permute.xlu0 %3394
  %3396 = vrot.lane.b32.xlu0 %v3269, 19
  %v3397 = vpop.permute.xlu0 %3396
  %3398 = vrot.lane.b32.xlu0 %v3271, 19
  %v3399 = vpop.permute.xlu0 %3398
  %3400 = vrot.lane.b32.xlu0 %v3282, 19
  %v3401 = vpop.permute.xlu0 %3400
  %3402 = vrot.lane.b32.xlu0 %v3283, 19
  %v3403 = vpop.permute.xlu0 %3402
  %3404 = vrot.lane.b32.xlu0 %v3284, 19
  %v3405 = vpop.permute.xlu0 %3404
  %3406 = vrot.lane.b32.xlu0 %v3285, 19
  %v3407 = vpop.permute.xlu0 %3406
  %3408 = vrot.lane.b32.xlu0 %v3286, 19
  %v3409 = vpop.permute.xlu0 %3408
  %3410 = vrot.lane.b32.xlu0 %v3287, 19
  %v3411 = vpop.permute.xlu0 %3410
  %v3412 = vsel %vm1009, %v760, %v3289
  %v3413 = vsel %vm1009, %v3289, %v3291
  %v3414 = vsel %vm1009, %v3291, %v3293
  %v3415 = vsel %vm1009, %v3293, %v3295
  %v3416 = vsel %vm1009, %v3295, %v3297
  %v3417 = vsel %vm1009, %v3297, %v3299
  %v3418 = vsel %vm1009, %v3301, %v3303
  %v3419 = vsel %vm1009, %v3303, %v3305
  %v3420 = vsel %vm1009, %v3305, %v3307
  %v3421 = vsel %vm1009, %v3307, %v3309
  %v3422 = vsel %vm1009, %v3309, %v3311
  %v3423 = vsel %vm1009, %v3311, %v3313
  %v3424 = vsel %vm1009, %v3315, %v3317
  %v3425 = vsel %vm1009, %v3317, %v3319
  %v3426 = vsel %vm1009, %v3319, %v3321
  %v3427 = vsel %vm1009, %v3321, %v3323
  %v3428 = vsel %vm1009, %v3323, %v3325
  %v3429 = vsel %vm1009, %v3325, %v3327
  %v3430 = vsel %vm1009, %v3329, %v3331
  %v3431 = vsel %vm1009, %v3331, %v3333
  %v3432 = vsel %vm1009, %v3333, %v3335
  %v3433 = vsel %vm1009, %v3335, %v3337
  %v3434 = vsel %vm1009, %v3337, %v3339
  %v3435 = vsel %vm1009, %v3339, %v3341
  %v3436 = vsel %vm1009, %v3343, %v3345
  %v3437 = vsel %vm1009, %v3345, %v3347
  %v3438 = vsel %vm1009, %v3347, %v3349
  %v3439 = vsel %vm1009, %v3349, %v3351
  %v3440 = vsel %vm1009, %v3351, %v3353
  %v3441 = vsel %vm1009, %v3353, %v3355
  %v3442 = vsel %vm1009, %v3357, %v3359
  %v3443 = vsel %vm1009, %v3359, %v3361
  %v3444 = vsel %vm1009, %v3361, %v3363
  %v3445 = vsel %vm1009, %v3363, %v3365
  %v3446 = vsel %vm1009, %v3365, %v3367
  %v3447 = vsel %vm1009, %v3367, %v3369
  %v3448 = vsel %vm1009, %v3371, %v3373
  %v3449 = vsel %vm1009, %v3373, %v3375
  %v3450 = vsel %vm1009, %v3375, %v3377
  %v3451 = vsel %vm1009, %v3377, %v3379
  %v3452 = vsel %vm1009, %v3379, %v3381
  %v3453 = vsel %vm1009, %v3381, %v3383
  %v3454 = vsel %vm1009, %v3385, %v3387
  %v3455 = vsel %vm1009, %v3387, %v3389
  %v3456 = vsel %vm1009, %v3389, %v3391
  %v3457 = vsel %vm1009, %v3391, %v3393
  %v3458 = vsel %vm1009, %v3393, %v3395
  %v3459 = vsel %vm1009, %v3395, %v3397
  %v3460 = vsel %vm1009, %v3399, %v3401
  %v3461 = vsel %vm1009, %v3401, %v3403
  %v3462 = vsel %vm1009, %v3403, %v3405
  %v3463 = vsel %vm1009, %v3405, %v3407
  %v3464 = vsel %vm1009, %v3407, %v3409
  %v3465 = vsel %vm1009, %v3409, %v3411
  %3520 = vmatprep.subr.mxu0 0.0
  %3521 = vmatpush1.msra.mxu0 0.0
  %3522 = vmatprep.subr.mxu0 0.0
  %3523 = vmatpush1.msra.mxu0 0.0
  %3524 = vmatprep.subr.mxu0 0.0
  %3525 = vmatpush1.msra.mxu0 0.0
  %3526 = vmatprep.subr.mxu0 0.0
  %3527 = vmatpush1.msra.mxu0 0.0
  %3528 = vmatprep.subr.mxu0 0.0
  %3529 = vmatpush1.msra.mxu0 0.0
  %3530 = vmatprep.subr.mxu0 0.0
  %3531 = vmatpush1.msra.mxu0 0.0
  %3532 = vmatprep.subr.mxu0 0.0
  %3533 = vmatpush1.msra.mxu0 0.0
  %3534 = vmatprep.subr.mxu0 %v3461
  %3535 = vmatpush1.msra.mxu0 %v3460
  %3536 = vmatprep.subr.mxu0 %v3455
  %3537 = vmatpush1.msra.mxu0 %v3454
  %3538 = vmatprep.subr.mxu0 %v3449
  %3539 = vmatpush1.msra.mxu0 %v3448
  %3540 = vmatprep.subr.mxu0 %v3443
  %3541 = vmatpush1.msra.mxu0 %v3442
  %3542 = vmatprep.subr.mxu0 %v3437
  %3543 = vmatpush1.msra.mxu0 %v3436
  %3544 = vmatprep.subr.mxu0 %v3431
  %3545 = vmatpush1.msra.mxu0 %v3430
  %3546 = vmatprep.subr.mxu0 %v3425
  %3547 = vmatpush1.msra.mxu0 %v3424
  %3548 = vmatprep.subr.mxu0 %v3419
  %3549 = vmatpush1.msra.mxu0 %v3418
  %3550 = vmatprep.subr.mxu0 %v3413
  %3551 = vmatpush1.msra.mxu0 %v3412
  %3552 = vmatprep.subr.mxu0 0.0
  %3553 = vmatpush2.msra.mxu0 0.0
  %3554 = vmatprep.subr.mxu0 0.0
  %3555 = vmatpush2.msra.mxu0 0.0
  %3556 = vmatprep.subr.mxu0 0.0
  %3557 = vmatpush2.msra.mxu0 0.0
  %3558 = vmatprep.subr.mxu0 0.0
  %3559 = vmatpush2.msra.mxu0 0.0
  %3560 = vmatprep.subr.mxu0 0.0
  %3561 = vmatpush2.msra.mxu0 0.0
  %3562 = vmatprep.subr.mxu0 0.0
  %3563 = vmatpush2.msra.mxu0 0.0
  %3564 = vmatprep.subr.mxu0 0.0
  %3565 = vmatpush2.msra.mxu0 0.0
  %3566 = vmatprep.subr.mxu0 0.0
  %3567 = vmatpush2.msra.mxu0 0.0
  %3568 = vmatprep.subr.mxu0 0.0
  %3569 = vmatpush2.msra.mxu0 0.0
  %3570 = vmatprep.subr.mxu0 0.0
  %3571 = vmatpush2.msra.mxu0 0.0
  %3572 = vmatprep.subr.mxu0 0.0
  %3573 = vmatpush2.msra.mxu0 0.0
  %3574 = vmatprep.subr.mxu0 0.0
  %3575 = vmatpush2.msra.mxu0 0.0
  %3576 = vmatprep.subr.mxu0 0.0
  %3577 = vmatpush2.msra.mxu0 0.0
  %3578 = vmatprep.subr.mxu0 0.0
  %3579 = vmatpush2.msra.mxu0 0.0
  %3580 = vmatprep.subr.mxu0 0.0
  %3581 = vmatpush2.msra.mxu0 0.0
  %3582 = vmatprep.subr.mxu0 0.0
  %3583 = vmatpush2.msra.mxu0 0.0
  %3584 = vmatprep.mubr.f32.mxu0 0.0
  %3585 = vmatmul.mubr.f32.gmra.mxu0 %v2300
  %v3586 = vpop.f32.mrf.mxu0
  %v3587 = vadd.f32 %v2064, %v3586
  %v3588 = vpop.f32.mrf.mxu0
  %v3589 = vadd.f32 %v2064, %v3588
  %3590 = vdwg.mxu0
  %3591 = vmatprep.subr.mxu0 0.0
  %3592 = vmatpush1.msra.mxu0 0.0
  %3593 = vmatprep.subr.mxu0 0.0
  %3594 = vmatpush1.msra.mxu0 0.0
  %3595 = vmatprep.subr.mxu0 0.0
  %3596 = vmatpush1.msra.mxu0 0.0
  %3597 = vmatprep.subr.mxu0 0.0
  %3598 = vmatpush1.msra.mxu0 0.0
  %3599 = vmatprep.subr.mxu0 0.0
  %3600 = vmatpush1.msra.mxu0 0.0
  %3601 = vmatprep.subr.mxu0 0.0
  %3602 = vmatpush1.msra.mxu0 0.0
  %3603 = vmatprep.subr.mxu0 0.0
  %3604 = vmatpush1.msra.mxu0 0.0
  %3605 = vmatprep.subr.mxu0 %v3463
  %3606 = vmatpush1.msra.mxu0 %v3462
  %3607 = vmatprep.subr.mxu0 %v3457
  %3608 = vmatpush1.msra.mxu0 %v3456
  %3609 = vmatprep.subr.mxu0 %v3451
  %3610 = vmatpush1.msra.mxu0 %v3450
  %3611 = vmatprep.subr.mxu0 %v3445
  %3612 = vmatpush1.msra.mxu0 %v3444
  %3613 = vmatprep.subr.mxu0 %v3439
  %3614 = vmatpush1.msra.mxu0 %v3438
  %3615 = vmatprep.subr.mxu0 %v3433
  %3616 = vmatpush1.msra.mxu0 %v3432
  %3617 = vmatprep.subr.mxu0 %v3427
  %3618 = vmatpush1.msra.mxu0 %v3426
  %3619 = vmatprep.subr.mxu0 %v3421
  %3620 = vmatpush1.msra.mxu0 %v3420
  %3621 = vmatprep.subr.mxu0 %v3415
  %3622 = vmatpush1.msra.mxu0 %v3414
  %3623 = vmatprep.subr.mxu0 0.0
  %3624 = vmatpush2.msra.mxu0 0.0
  %3625 = vmatprep.subr.mxu0 0.0
  %3626 = vmatpush2.msra.mxu0 0.0
  %3627 = vmatprep.subr.mxu0 0.0
  %3628 = vmatpush2.msra.mxu0 0.0
  %3629 = vmatprep.subr.mxu0 0.0
  %3630 = vmatpush2.msra.mxu0 0.0
  %3631 = vmatprep.subr.mxu0 0.0
  %3632 = vmatpush2.msra.mxu0 0.0
  %3633 = vmatprep.subr.mxu0 0.0
  %3634 = vmatpush2.msra.mxu0 0.0
  %3635 = vmatprep.subr.mxu0 0.0
  %3636 = vmatpush2.msra.mxu0 0.0
  %3637 = vmatprep.subr.mxu0 0.0
  %3638 = vmatpush2.msra.mxu0 0.0
  %3639 = vmatprep.subr.mxu0 0.0
  %3640 = vmatpush2.msra.mxu0 0.0
  %3641 = vmatprep.subr.mxu0 0.0
  %3642 = vmatpush2.msra.mxu0 0.0
  %3643 = vmatprep.subr.mxu0 0.0
  %3644 = vmatpush2.msra.mxu0 0.0
  %3645 = vmatprep.subr.mxu0 0.0
  %3646 = vmatpush2.msra.mxu0 0.0
  %3647 = vmatprep.subr.mxu0 0.0
  %3648 = vmatpush2.msra.mxu0 0.0
  %3649 = vmatprep.subr.mxu0 0.0
  %3650 = vmatpush2.msra.mxu0 0.0
  %3651 = vmatprep.subr.mxu0 0.0
  %3652 = vmatpush2.msra.mxu0 0.0
  %3653 = vmatprep.subr.mxu0 0.0
  %3654 = vmatpush2.msra.mxu0 0.0
  %3655 = vmatprep.mubr.f32.mxu0 0.0
  %3656 = vmatmul.mubr.f32.gmra.mxu0 %v2300
  %v3657 = vpop.f32.mrf.mxu0
  %v3658 = vadd.f32 %v2064, %v3657
  %v3659 = vpop.f32.mrf.mxu0
  %v3660 = vadd.f32 %v2064, %v3659
  %3661 = vdwg.mxu0
  %3662 = vmatprep.subr.mxu0 0.0
  %3663 = vmatpush1.msra.mxu0 0.0
  %3664 = vmatprep.subr.mxu0 0.0
  %3665 = vmatpush1.msra.mxu0 0.0
  %3666 = vmatprep.subr.mxu0 0.0
  %3667 = vmatpush1.msra.mxu0 0.0
  %3668 = vmatprep.subr.mxu0 0.0
  %3669 = vmatpush1.msra.mxu0 0.0
  %3670 = vmatprep.subr.mxu0 0.0
  %3671 = vmatpush1.msra.mxu0 0.0
  %3672 = vmatprep.subr.mxu0 0.0
  %3673 = vmatpush1.msra.mxu0 0.0
  %3674 = vmatprep.subr.mxu0 0.0
  %3675 = vmatpush1.msra.mxu0 0.0
  %3676 = vmatprep.subr.mxu0 %v3465
  %3677 = vmatpush1.msra.mxu0 %v3464
  %3678 = vmatprep.subr.mxu0 %v3459
  %3679 = vmatpush1.msra.mxu0 %v3458
  %3680 = vmatprep.subr.mxu0 %v3453
  %3681 = vmatpush1.msra.mxu0 %v3452
  %3682 = vmatprep.subr.mxu0 %v3447
  %3683 = vmatpush1.msra.mxu0 %v3446
  %3684 = vmatprep.subr.mxu0 %v3441
  %3685 = vmatpush1.msra.mxu0 %v3440
  %3686 = vmatprep.subr.mxu0 %v3435
  %3687 = vmatpush1.msra.mxu0 %v3434
  %3688 = vmatprep.subr.mxu0 %v3429
  %3689 = vmatpush1.msra.mxu0 %v3428
  %3690 = vmatprep.subr.mxu0 %v3423
  %3691 = vmatpush1.msra.mxu0 %v3422
  %3692 = vmatprep.subr.mxu0 %v3417
  %3693 = vmatpush1.msra.mxu0 %v3416
  %3694 = vmatprep.subr.mxu0 0.0
  %3695 = vmatpush2.msra.mxu0 0.0
  %3696 = vmatprep.subr.mxu0 0.0
  %3697 = vmatpush2.msra.mxu0 0.0
  %3698 = vmatprep.subr.mxu0 0.0
  %3699 = vmatpush2.msra.mxu0 0.0
  %3700 = vmatprep.subr.mxu0 0.0
  %3701 = vmatpush2.msra.mxu0 0.0
  %3702 = vmatprep.subr.mxu0 0.0
  %3703 = vmatpush2.msra.mxu0 0.0
  %3704 = vmatprep.subr.mxu0 0.0
  %3705 = vmatpush2.msra.mxu0 0.0
  %3706 = vmatprep.subr.mxu0 0.0
  %3707 = vmatpush2.msra.mxu0 0.0
  %3708 = vmatprep.subr.mxu0 0.0
  %3709 = vmatpush2.msra.mxu0 0.0
  %3710 = vmatprep.subr.mxu0 0.0
  %3711 = vmatpush2.msra.mxu0 0.0
  %3712 = vmatprep.subr.mxu0 0.0
  %3713 = vmatpush2.msra.mxu0 0.0
  %3714 = vmatprep.subr.mxu0 0.0
  %3715 = vmatpush2.msra.mxu0 0.0
  %3716 = vmatprep.subr.mxu0 0.0
  %3717 = vmatpush2.msra.mxu0 0.0
  %3718 = vmatprep.subr.mxu0 0.0
  %3719 = vmatpush2.msra.mxu0 0.0
  %3720 = vmatprep.subr.mxu0 0.0
  %3721 = vmatpush2.msra.mxu0 0.0
  %3722 = vmatprep.subr.mxu0 0.0
  %3723 = vmatpush2.msra.mxu0 0.0
  %3724 = vmatprep.subr.mxu0 0.0
  %3725 = vmatpush2.msra.mxu0 0.0
  %3726 = vmatprep.mubr.f32.mxu0 0.0
  %3727 = vmatmul.mubr.f32.gmra.mxu0 %v2300
  %v3728 = vpop.f32.mrf.mxu0
  %v3729 = vadd.f32 %v2064, %v3728
  %v3730 = vpop.f32.mrf.mxu0
  %v3731 = vadd.f32 %v2064, %v3730
  %3732 = vdwg.mxu0
  %v3733 = vmax.f32 %v3587, 0.0
  %v3734 = vmax.f32 %v3589, 0.0
  %v3735 = vmax.f32 %v3658, 0.0
  %v3736 = vmax.f32 %v3660, 0.0
  %v3737 = vmax.f32 %v3729, 0.0
  %v3738 = vmax.f32 %v3731, 0.0
  %v3739 = vmul.f32 %v3733, %v367
  %v3740 = vmul.f32 %v3734, %v371
  %v3741 = vmul.f32 %v3735, %v375
  %v3742 = vmul.f32 %v3736, %v379
  %v3743 = vmul.f32 %v3737, %v383
  %v3744 = vmul.f32 %v3738, %v387
  %3751 = vrot.lane.b32.xlu0 %v3739, 127
  %v3752 = vpop.permute.xlu0 %3751
  %3753 = vrot.lane.b32.xlu0 %v3740, 127
  %v3754 = vpop.permute.xlu0 %3753
  %3755 = vrot.lane.b32.xlu0 %v3741, 127
  %v3756 = vpop.permute.xlu0 %3755
  %3757 = vrot.lane.b32.xlu0 %v3742, 127
  %v3758 = vpop.permute.xlu0 %3757
  %3759 = vrot.lane.b32.xlu0 %v3743, 127
  %v3760 = vpop.permute.xlu0 %3759
  %3761 = vrot.lane.b32.xlu0 %v3744, 127
  %v3762 = vpop.permute.xlu0 %3761
  %v3763 = vsel %vm445, %v420, %v3752
  %v3764 = vsel %vm445, %v3752, %v3754
  %v3765 = vsel %vm445, %v3754, %v3756
  %v3766 = vsel %vm445, %v3756, %v3758
  %v3767 = vsel %vm445, %v3758, %v3760
  %v3768 = vsel %vm445, %v3760, %v3762
  %3769 = vrot.lane.b32.xlu0 %v3739, 126
  %v3770 = vpop.permute.xlu0 %3769
  %3771 = vrot.lane.b32.xlu0 %v3740, 126
  %v3772 = vpop.permute.xlu0 %3771
  %3773 = vrot.lane.b32.xlu0 %v3741, 126
  %v3774 = vpop.permute.xlu0 %3773
  %3775 = vrot.lane.b32.xlu0 %v3742, 126
  %v3776 = vpop.permute.xlu0 %3775
  %3777 = vrot.lane.b32.xlu0 %v3743, 126
  %v3778 = vpop.permute.xlu0 %3777
  %3779 = vrot.lane.b32.xlu0 %v3744, 126
  %v3780 = vpop.permute.xlu0 %3779
  %v3781 = vsel %vm484, %v459, %v3770
  %v3782 = vsel %vm484, %v3770, %v3772
  %v3783 = vsel %vm484, %v3772, %v3774
  %v3784 = vsel %vm484, %v3774, %v3776
  %v3785 = vsel %vm484, %v3776, %v3778
  %v3786 = vsel %vm484, %v3778, %v3780
  %3787 = vrot.lane.b32.xlu0 %v3739, 110
  %v3788 = vpop.permute.xlu0 %3787
  %3789 = vrot.lane.b32.xlu0 %v3740, 110
  %v3790 = vpop.permute.xlu0 %3789
  %3791 = vrot.lane.b32.xlu0 %v3741, 110
  %v3792 = vpop.permute.xlu0 %3791
  %3793 = vrot.lane.b32.xlu0 %v3742, 110
  %v3794 = vpop.permute.xlu0 %3793
  %3795 = vrot.lane.b32.xlu0 %v3743, 110
  %v3796 = vpop.permute.xlu0 %3795
  %3797 = vrot.lane.b32.xlu0 %v3744, 110
  %v3798 = vpop.permute.xlu0 %3797
  %v3799 = vsel %vm523, %v498, %v3788
  %v3800 = vsel %vm523, %v3788, %v3790
  %v3801 = vsel %vm523, %v3790, %v3792
  %v3802 = vsel %vm523, %v3792, %v3794
  %v3803 = vsel %vm523, %v3794, %v3796
  %v3804 = vsel %vm523, %v3796, %v3798
  %3805 = vrot.lane.b32.xlu0 %v3739, 109
  %v3806 = vpop.permute.xlu0 %3805
  %3807 = vrot.lane.b32.xlu0 %v3740, 109
  %v3808 = vpop.permute.xlu0 %3807
  %3809 = vrot.lane.b32.xlu0 %v3741, 109
  %v3810 = vpop.permute.xlu0 %3809
  %3811 = vrot.lane.b32.xlu0 %v3742, 109
  %v3812 = vpop.permute.xlu0 %3811
  %3813 = vrot.lane.b32.xlu0 %v3743, 109
  %v3814 = vpop.permute.xlu0 %3813
  %3815 = vrot.lane.b32.xlu0 %v3744, 109
  %v3816 = vpop.permute.xlu0 %3815
  %v3817 = vsel %vm560, %v3806, %v3808
  %v3818 = vsel %vm560, %v3808, %v3810
  %v3819 = vsel %vm560, %v3810, %v3812
  %v3820 = vsel %vm560, %v3812, %v3814
  %v3821 = vsel %vm560, %v3814, %v3816
  %3822 = vrot.lane.b32.xlu0 %v3739, 108
  %v3823 = vpop.permute.xlu0 %3822
  %3824 = vrot.lane.b32.xlu0 %v3740, 108
  %v3825 = vpop.permute.xlu0 %3824
  %3826 = vrot.lane.b32.xlu0 %v3741, 108
  %v3827 = vpop.permute.xlu0 %3826
  %3828 = vrot.lane.b32.xlu0 %v3742, 108
  %v3829 = vpop.permute.xlu0 %3828
  %3830 = vrot.lane.b32.xlu0 %v3743, 108
  %v3831 = vpop.permute.xlu0 %3830
  %3832 = vrot.lane.b32.xlu0 %v3744, 108
  %v3833 = vpop.permute.xlu0 %3832
  %v3834 = vsel %vm597, %v3823, %v3825
  %v3835 = vsel %vm597, %v3825, %v3827
  %v3836 = vsel %vm597, %v3827, %v3829
  %v3837 = vsel %vm597, %v3829, %v3831
  %v3838 = vsel %vm597, %v3831, %v3833
  %v3839 = vsel %vm597, %v3833, %v584
  %3840 = vrot.lane.b32.xlu0 %v3739, 92
  %v3841 = vpop.permute.xlu0 %3840
  %3842 = vrot.lane.b32.xlu0 %v3740, 92
  %v3843 = vpop.permute.xlu0 %3842
  %3844 = vrot.lane.b32.xlu0 %v3741, 92
  %v3845 = vpop.permute.xlu0 %3844
  %3846 = vrot.lane.b32.xlu0 %v3742, 92
  %v3847 = vpop.permute.xlu0 %3846
  %3848 = vrot.lane.b32.xlu0 %v3743, 92
  %v3849 = vpop.permute.xlu0 %3848
  %3850 = vrot.lane.b32.xlu0 %v3744, 92
  %v3851 = vpop.permute.xlu0 %3850
  %v3852 = vsel %vm636, %v3841, %v3843
  %v3853 = vsel %vm636, %v3843, %v3845
  %v3854 = vsel %vm636, %v3845, %v3847
  %v3855 = vsel %vm636, %v3847, %v3849
  %v3856 = vsel %vm636, %v3849, %v3851
  %v3857 = vsel %vm636, %v3851, %v623
  %3858 = vrot.lane.b32.xlu0 %v3739, 91
  %v3859 = vpop.permute.xlu0 %3858
  %3860 = vrot.lane.b32.xlu0 %v3740, 91
  %v3861 = vpop.permute.xlu0 %3860
  %3862 = vrot.lane.b32.xlu0 %v3741, 91
  %v3863 = vpop.permute.xlu0 %3862
  %3864 = vrot.lane.b32.xlu0 %v3742, 91
  %v3865 = vpop.permute.xlu0 %3864
  %3866 = vrot.lane.b32.xlu0 %v3743, 91
  %v3867 = vpop.permute.xlu0 %3866
  %3868 = vrot.lane.b32.xlu0 %v3744, 91
  %v3869 = vpop.permute.xlu0 %3868
  %v3870 = vsel %vm675, %v3859, %v3861
  %v3871 = vsel %vm675, %v3861, %v3863
  %v3872 = vsel %vm675, %v3863, %v3865
  %v3873 = vsel %vm675, %v3865, %v3867
  %v3874 = vsel %vm675, %v3867, %v3869
  %v3875 = vsel %vm675, %v3869, %v662
  %3876 = vrot.lane.b32.xlu0 %v3739, 90
  %v3877 = vpop.permute.xlu0 %3876
  %3878 = vrot.lane.b32.xlu0 %v3740, 90
  %v3879 = vpop.permute.xlu0 %3878
  %3880 = vrot.lane.b32.xlu0 %v3741, 90
  %v3881 = vpop.permute.xlu0 %3880
  %3882 = vrot.lane.b32.xlu0 %v3742, 90
  %v3883 = vpop.permute.xlu0 %3882
  %3884 = vrot.lane.b32.xlu0 %v3743, 90
  %v3885 = vpop.permute.xlu0 %3884
  %3886 = vrot.lane.b32.xlu0 %v3744, 90
  %v3887 = vpop.permute.xlu0 %3886
  %v3888 = vsel %vm714, %v3877, %v3879
  %v3889 = vsel %vm714, %v3879, %v3881
  %v3890 = vsel %vm714, %v3881, %v3883
  %v3891 = vsel %vm714, %v3883, %v3885
  %v3892 = vsel %vm714, %v3885, %v3887
  %v3893 = vsel %vm714, %v3887, %v701
  %3894 = vrot.lane.b32.xlu0 %v3739, 19
  %v3895 = vpop.permute.xlu0 %3894
  %3896 = vrot.lane.b32.xlu0 %v3740, 19
  %v3897 = vpop.permute.xlu0 %3896
  %3898 = vrot.lane.b32.xlu0 %v3741, 19
  %v3899 = vpop.permute.xlu0 %3898
  %3900 = vrot.lane.b32.xlu0 %v3742, 19
  %v3901 = vpop.permute.xlu0 %3900
  %3902 = vrot.lane.b32.xlu0 %v3743, 19
  %v3903 = vpop.permute.xlu0 %3902
  %3904 = vrot.lane.b32.xlu0 %v3744, 19
  %v3905 = vpop.permute.xlu0 %3904
  %3906 = vrot.lane.b32.xlu0 %v3763, 19
  %v3907 = vpop.permute.xlu0 %3906
  %3908 = vrot.lane.b32.xlu0 %v3764, 19
  %v3909 = vpop.permute.xlu0 %3908
  %3910 = vrot.lane.b32.xlu0 %v3765, 19
  %v3911 = vpop.permute.xlu0 %3910
  %3912 = vrot.lane.b32.xlu0 %v3766, 19
  %v3913 = vpop.permute.xlu0 %3912
  %3914 = vrot.lane.b32.xlu0 %v3767, 19
  %v3915 = vpop.permute.xlu0 %3914
  %3916 = vrot.lane.b32.xlu0 %v3768, 19
  %v3917 = vpop.permute.xlu0 %3916
  %3918 = vrot.lane.b32.xlu0 %v3762, 19
  %v3919 = vpop.permute.xlu0 %3918
  %3920 = vrot.lane.b32.xlu0 %v3781, 19
  %v3921 = vpop.permute.xlu0 %3920
  %3922 = vrot.lane.b32.xlu0 %v3782, 19
  %v3923 = vpop.permute.xlu0 %3922
  %3924 = vrot.lane.b32.xlu0 %v3783, 19
  %v3925 = vpop.permute.xlu0 %3924
  %3926 = vrot.lane.b32.xlu0 %v3784, 19
  %v3927 = vpop.permute.xlu0 %3926
  %3928 = vrot.lane.b32.xlu0 %v3785, 19
  %v3929 = vpop.permute.xlu0 %3928
  %3930 = vrot.lane.b32.xlu0 %v3786, 19
  %v3931 = vpop.permute.xlu0 %3930
  %3932 = vrot.lane.b32.xlu0 %v3780, 19
  %v3933 = vpop.permute.xlu0 %3932
  %3934 = vrot.lane.b32.xlu0 %v3799, 19
  %v3935 = vpop.permute.xlu0 %3934
  %3936 = vrot.lane.b32.xlu0 %v3800, 19
  %v3937 = vpop.permute.xlu0 %3936
  %3938 = vrot.lane.b32.xlu0 %v3801, 19
  %v3939 = vpop.permute.xlu0 %3938
  %3940 = vrot.lane.b32.xlu0 %v3802, 19
  %v3941 = vpop.permute.xlu0 %3940
  %3942 = vrot.lane.b32.xlu0 %v3803, 19
  %v3943 = vpop.permute.xlu0 %3942
  %3944 = vrot.lane.b32.xlu0 %v3804, 19
  %v3945 = vpop.permute.xlu0 %3944
  %3946 = vrot.lane.b32.xlu0 %v3798, 19
  %v3947 = vpop.permute.xlu0 %3946
  %3948 = vrot.lane.b32.xlu0 %v3806, 19
  %v3949 = vpop.permute.xlu0 %3948
  %3950 = vrot.lane.b32.xlu0 %v3817, 19
  %v3951 = vpop.permute.xlu0 %3950
  %3952 = vrot.lane.b32.xlu0 %v3818, 19
  %v3953 = vpop.permute.xlu0 %3952
  %3954 = vrot.lane.b32.xlu0 %v3819, 19
  %v3955 = vpop.permute.xlu0 %3954
  %3956 = vrot.lane.b32.xlu0 %v3820, 19
  %v3957 = vpop.permute.xlu0 %3956
  %3958 = vrot.lane.b32.xlu0 %v3821, 19
  %v3959 = vpop.permute.xlu0 %3958
  %3960 = vrot.lane.b32.xlu0 %v3816, 19
  %v3961 = vpop.permute.xlu0 %3960
  %3962 = vrot.lane.b32.xlu0 %v3823, 19
  %v3963 = vpop.permute.xlu0 %3962
  %3964 = vrot.lane.b32.xlu0 %v3834, 19
  %v3965 = vpop.permute.xlu0 %3964
  %3966 = vrot.lane.b32.xlu0 %v3835, 19
  %v3967 = vpop.permute.xlu0 %3966
  %3968 = vrot.lane.b32.xlu0 %v3836, 19
  %v3969 = vpop.permute.xlu0 %3968
  %3970 = vrot.lane.b32.xlu0 %v3837, 19
  %v3971 = vpop.permute.xlu0 %3970
  %3972 = vrot.lane.b32.xlu0 %v3838, 19
  %v3973 = vpop.permute.xlu0 %3972
  %3974 = vrot.lane.b32.xlu0 %v3839, 19
  %v3975 = vpop.permute.xlu0 %3974
  %3976 = vrot.lane.b32.xlu0 %v3841, 19
  %v3977 = vpop.permute.xlu0 %3976
  %3978 = vrot.lane.b32.xlu0 %v3852, 19
  %v3979 = vpop.permute.xlu0 %3978
  %3980 = vrot.lane.b32.xlu0 %v3853, 19
  %v3981 = vpop.permute.xlu0 %3980
  %3982 = vrot.lane.b32.xlu0 %v3854, 19
  %v3983 = vpop.permute.xlu0 %3982
  %3984 = vrot.lane.b32.xlu0 %v3855, 19
  %v3985 = vpop.permute.xlu0 %3984
  %3986 = vrot.lane.b32.xlu0 %v3856, 19
  %v3987 = vpop.permute.xlu0 %3986
  %3988 = vrot.lane.b32.xlu0 %v3857, 19
  %v3989 = vpop.permute.xlu0 %3988
  %3990 = vrot.lane.b32.xlu0 %v3859, 19
  %v3991 = vpop.permute.xlu0 %3990
  %3992 = vrot.lane.b32.xlu0 %v3870, 19
  %v3993 = vpop.permute.xlu0 %3992
  %3994 = vrot.lane.b32.xlu0 %v3871, 19
  %v3995 = vpop.permute.xlu0 %3994
  %3996 = vrot.lane.b32.xlu0 %v3872, 19
  %v3997 = vpop.permute.xlu0 %3996
  %3998 = vrot.lane.b32.xlu0 %v3873, 19
  %v3999 = vpop.permute.xlu0 %3998
  %4000 = vrot.lane.b32.xlu0 %v3874, 19
  %v4001 = vpop.permute.xlu0 %4000
  %4002 = vrot.lane.b32.xlu0 %v3875, 19
  %v4003 = vpop.permute.xlu0 %4002
  %4004 = vrot.lane.b32.xlu0 %v3877, 19
  %v4005 = vpop.permute.xlu0 %4004
  %4006 = vrot.lane.b32.xlu0 %v3888, 19
  %v4007 = vpop.permute.xlu0 %4006
  %4008 = vrot.lane.b32.xlu0 %v3889, 19
  %v4009 = vpop.permute.xlu0 %4008
  %4010 = vrot.lane.b32.xlu0 %v3890, 19
  %v4011 = vpop.permute.xlu0 %4010
  %4012 = vrot.lane.b32.xlu0 %v3891, 19
  %v4013 = vpop.permute.xlu0 %4012
  %4014 = vrot.lane.b32.xlu0 %v3892, 19
  %v4015 = vpop.permute.xlu0 %4014
  %4016 = vrot.lane.b32.xlu0 %v3893, 19
  %v4017 = vpop.permute.xlu0 %4016
  %v4018 = vsel %vm1009, %v760, %v3895
  %v4019 = vsel %vm1009, %v3895, %v3897
  %v4020 = vsel %vm1009, %v3897, %v3899
  %v4021 = vsel %vm1009, %v3899, %v3901
  %v4022 = vsel %vm1009, %v3901, %v3903
  %v4023 = vsel %vm1009, %v3903, %v3905
  %v4024 = vsel %vm1009, %v3907, %v3909
  %v4025 = vsel %vm1009, %v3909, %v3911
  %v4026 = vsel %vm1009, %v3911, %v3913
  %v4027 = vsel %vm1009, %v3913, %v3915
  %v4028 = vsel %vm1009, %v3915, %v3917
  %v4029 = vsel %vm1009, %v3917, %v3919
  %v4030 = vsel %vm1009, %v3921, %v3923
  %v4031 = vsel %vm1009, %v3923, %v3925
  %v4032 = vsel %vm1009, %v3925, %v3927
  %v4033 = vsel %vm1009, %v3927, %v3929
  %v4034 = vsel %vm1009, %v3929, %v3931
  %v4035 = vsel %vm1009, %v3931, %v3933
  %v4036 = vsel %vm1009, %v3935, %v3937
  %v4037 = vsel %vm1009, %v3937, %v3939
  %v4038 = vsel %vm1009, %v3939, %v3941
  %v4039 = vsel %vm1009, %v3941, %v3943
  %v4040 = vsel %vm1009, %v3943, %v3945
  %v4041 = vsel %vm1009, %v3945, %v3947
  %v4042 = vsel %vm1009, %v3949, %v3951
  %v4043 = vsel %vm1009, %v3951, %v3953
  %v4044 = vsel %vm1009, %v3953, %v3955
  %v4045 = vsel %vm1009, %v3955, %v3957
  %v4046 = vsel %vm1009, %v3957, %v3959
  %v4047 = vsel %vm1009, %v3959, %v3961
  %v4048 = vsel %vm1009, %v3963, %v3965
  %v4049 = vsel %vm1009, %v3965, %v3967
  %v4050 = vsel %vm1009, %v3967, %v3969
  %v4051 = vsel %vm1009, %v3969, %v3971
  %v4052 = vsel %vm1009, %v3971, %v3973
  %v4053 = vsel %vm1009, %v3973, %v3975
  %v4054 = vsel %vm1009, %v3977, %v3979
  %v4055 = vsel %vm1009, %v3979, %v3981
  %v4056 = vsel %vm1009, %v3981, %v3983
  %v4057 = vsel %vm1009, %v3983, %v3985
  %v4058 = vsel %vm1009, %v3985, %v3987
  %v4059 = vsel %vm1009, %v3987, %v3989
  %v4060 = vsel %vm1009, %v3991, %v3993
  %v4061 = vsel %vm1009, %v3993, %v3995
  %v4062 = vsel %vm1009, %v3995, %v3997
  %v4063 = vsel %vm1009, %v3997, %v3999
  %v4064 = vsel %vm1009, %v3999, %v4001
  %v4065 = vsel %vm1009, %v4001, %v4003
  %v4066 = vsel %vm1009, %v4005, %v4007
  %v4067 = vsel %vm1009, %v4007, %v4009
  %v4068 = vsel %vm1009, %v4009, %v4011
  %v4069 = vsel %vm1009, %v4011, %v4013
  %v4070 = vsel %vm1009, %v4013, %v4015
  %v4071 = vsel %vm1009, %v4015, %v4017
  %4126 = vmatprep.subr.mxu0 0.0
  %4127 = vmatpush1.msra.mxu0 0.0
  %4128 = vmatprep.subr.mxu0 0.0
  %4129 = vmatpush1.msra.mxu0 0.0
  %4130 = vmatprep.subr.mxu0 0.0
  %4131 = vmatpush1.msra.mxu0 0.0
  %4132 = vmatprep.subr.mxu0 0.0
  %4133 = vmatpush1.msra.mxu0 0.0
  %4134 = vmatprep.subr.mxu0 0.0
  %4135 = vmatpush1.msra.mxu0 0.0
  %4136 = vmatprep.subr.mxu0 0.0
  %4137 = vmatpush1.msra.mxu0 0.0
  %4138 = vmatprep.subr.mxu0 0.0
  %4139 = vmatpush1.msra.mxu0 0.0
  %4140 = vmatprep.subr.mxu0 %v4067
  %4141 = vmatpush1.msra.mxu0 %v4066
  %4142 = vmatprep.subr.mxu0 %v4061
  %4143 = vmatpush1.msra.mxu0 %v4060
  %4144 = vmatprep.subr.mxu0 %v4055
  %4145 = vmatpush1.msra.mxu0 %v4054
  %4146 = vmatprep.subr.mxu0 %v4049
  %4147 = vmatpush1.msra.mxu0 %v4048
  %4148 = vmatprep.subr.mxu0 %v4043
  %4149 = vmatpush1.msra.mxu0 %v4042
  %4150 = vmatprep.subr.mxu0 %v4037
  %4151 = vmatpush1.msra.mxu0 %v4036
  %4152 = vmatprep.subr.mxu0 %v4031
  %4153 = vmatpush1.msra.mxu0 %v4030
  %4154 = vmatprep.subr.mxu0 %v4025
  %4155 = vmatpush1.msra.mxu0 %v4024
  %4156 = vmatprep.subr.mxu0 %v4019
  %4157 = vmatpush1.msra.mxu0 %v4018
  %4158 = vmatprep.subr.mxu0 0.0
  %4159 = vmatpush2.msra.mxu0 0.0
  %4160 = vmatprep.subr.mxu0 0.0
  %4161 = vmatpush2.msra.mxu0 0.0
  %4162 = vmatprep.subr.mxu0 0.0
  %4163 = vmatpush2.msra.mxu0 0.0
  %4164 = vmatprep.subr.mxu0 0.0
  %4165 = vmatpush2.msra.mxu0 0.0
  %4166 = vmatprep.subr.mxu0 0.0
  %4167 = vmatpush2.msra.mxu0 0.0
  %4168 = vmatprep.subr.mxu0 0.0
  %4169 = vmatpush2.msra.mxu0 0.0
  %4170 = vmatprep.subr.mxu0 0.0
  %4171 = vmatpush2.msra.mxu0 0.0
  %4172 = vmatprep.subr.mxu0 0.0
  %4173 = vmatpush2.msra.mxu0 0.0
  %4174 = vmatprep.subr.mxu0 0.0
  %4175 = vmatpush2.msra.mxu0 0.0
  %4176 = vmatprep.subr.mxu0 0.0
  %4177 = vmatpush2.msra.mxu0 0.0
  %4178 = vmatprep.subr.mxu0 0.0
  %4179 = vmatpush2.msra.mxu0 0.0
  %4180 = vmatprep.subr.mxu0 0.0
  %4181 = vmatpush2.msra.mxu0 0.0
  %4182 = vmatprep.subr.mxu0 0.0
  %4183 = vmatpush2.msra.mxu0 0.0
  %4184 = vmatprep.subr.mxu0 0.0
  %4185 = vmatpush2.msra.mxu0 0.0
  %4186 = vmatprep.subr.mxu0 0.0
  %4187 = vmatpush2.msra.mxu0 0.0
  %4188 = vmatprep.subr.mxu0 0.0
  %4189 = vmatpush2.msra.mxu0 0.0
  %4190 = vmatprep.mubr.f32.mxu0 0.0
  %4191 = vmatmul.mubr.f32.gmra.mxu0 %v2300
  %v4192 = vpop.f32.mrf.mxu0
  %v4193 = vadd.f32 %v2064, %v4192
  %v4194 = vpop.f32.mrf.mxu0
  %v4195 = vadd.f32 %v2064, %v4194
  %4196 = vdwg.mxu0
  %4197 = vmatprep.subr.mxu0 0.0
  %4198 = vmatpush1.msra.mxu0 0.0
  %4199 = vmatprep.subr.mxu0 0.0
  %4200 = vmatpush1.msra.mxu0 0.0
  %4201 = vmatprep.subr.mxu0 0.0
  %4202 = vmatpush1.msra.mxu0 0.0
  %4203 = vmatprep.subr.mxu0 0.0
  %4204 = vmatpush1.msra.mxu0 0.0
  %4205 = vmatprep.subr.mxu0 0.0
  %4206 = vmatpush1.msra.mxu0 0.0
  %4207 = vmatprep.subr.mxu0 0.0
  %4208 = vmatpush1.msra.mxu0 0.0
  %4209 = vmatprep.subr.mxu0 0.0
  %4210 = vmatpush1.msra.mxu0 0.0
  %4211 = vmatprep.subr.mxu0 %v4069
  %4212 = vmatpush1.msra.mxu0 %v4068
  %4213 = vmatprep.subr.mxu0 %v4063
  %4214 = vmatpush1.msra.mxu0 %v4062
  %4215 = vmatprep.subr.mxu0 %v4057
  %4216 = vmatpush1.msra.mxu0 %v4056
  %4217 = vmatprep.subr.mxu0 %v4051
  %4218 = vmatpush1.msra.mxu0 %v4050
  %4219 = vmatprep.subr.mxu0 %v4045
  %4220 = vmatpush1.msra.mxu0 %v4044
  %4221 = vmatprep.subr.mxu0 %v4039
  %4222 = vmatpush1.msra.mxu0 %v4038
  %4223 = vmatprep.subr.mxu0 %v4033
  %4224 = vmatpush1.msra.mxu0 %v4032
  %4225 = vmatprep.subr.mxu0 %v4027
  %4226 = vmatpush1.msra.mxu0 %v4026
  %4227 = vmatprep.subr.mxu0 %v4021
  %4228 = vmatpush1.msra.mxu0 %v4020
  %4229 = vmatprep.subr.mxu0 0.0
  %4230 = vmatpush2.msra.mxu0 0.0
  %4231 = vmatprep.subr.mxu0 0.0
  %4232 = vmatpush2.msra.mxu0 0.0
  %4233 = vmatprep.subr.mxu0 0.0
  %4234 = vmatpush2.msra.mxu0 0.0
  %4235 = vmatprep.subr.mxu0 0.0
  %4236 = vmatpush2.msra.mxu0 0.0
  %4237 = vmatprep.subr.mxu0 0.0
  %4238 = vmatpush2.msra.mxu0 0.0
  %4239 = vmatprep.subr.mxu0 0.0
  %4240 = vmatpush2.msra.mxu0 0.0
  %4241 = vmatprep.subr.mxu0 0.0
  %4242 = vmatpush2.msra.mxu0 0.0
  %4243 = vmatprep.subr.mxu0 0.0
  %4244 = vmatpush2.msra.mxu0 0.0
  %4245 = vmatprep.subr.mxu0 0.0
  %4246 = vmatpush2.msra.mxu0 0.0
  %4247 = vmatprep.subr.mxu0 0.0
  %4248 = vmatpush2.msra.mxu0 0.0
  %4249 = vmatprep.subr.mxu0 0.0
  %4250 = vmatpush2.msra.mxu0 0.0
  %4251 = vmatprep.subr.mxu0 0.0
  %4252 = vmatpush2.msra.mxu0 0.0
  %4253 = vmatprep.subr.mxu0 0.0
  %4254 = vmatpush2.msra.mxu0 0.0
  %4255 = vmatprep.subr.mxu0 0.0
  %4256 = vmatpush2.msra.mxu0 0.0
  %4257 = vmatprep.subr.mxu0 0.0
  %4258 = vmatpush2.msra.mxu0 0.0
  %4259 = vmatprep.subr.mxu0 0.0
  %4260 = vmatpush2.msra.mxu0 0.0
  %4261 = vmatprep.mubr.f32.mxu0 0.0
  %4262 = vmatmul.mubr.f32.gmra.mxu0 %v2300
  %v4263 = vpop.f32.mrf.mxu0
  %v4264 = vadd.f32 %v2064, %v4263
  %v4265 = vpop.f32.mrf.mxu0
  %v4266 = vadd.f32 %v2064, %v4265
  %4267 = vdwg.mxu0
  %4268 = vmatprep.subr.mxu0 0.0
  %4269 = vmatpush1.msra.mxu0 0.0
  %4270 = vmatprep.subr.mxu0 0.0
  %4271 = vmatpush1.msra.mxu0 0.0
  %4272 = vmatprep.subr.mxu0 0.0
  %4273 = vmatpush1.msra.mxu0 0.0
  %4274 = vmatprep.subr.mxu0 0.0
  %4275 = vmatpush1.msra.mxu0 0.0
  %4276 = vmatprep.subr.mxu0 0.0
  %4277 = vmatpush1.msra.mxu0 0.0
  %4278 = vmatprep.subr.mxu0 0.0
  %4279 = vmatpush1.msra.mxu0 0.0
  %4280 = vmatprep.subr.mxu0 0.0
  %4281 = vmatpush1.msra.mxu0 0.0
  %4282 = vmatprep.subr.mxu0 %v4071
  %4283 = vmatpush1.msra.mxu0 %v4070
  %4284 = vmatprep.subr.mxu0 %v4065
  %4285 = vmatpush1.msra.mxu0 %v4064
  %4286 = vmatprep.subr.mxu0 %v4059
  %4287 = vmatpush1.msra.mxu0 %v4058
  %4288 = vmatprep.subr.mxu0 %v4053
  %4289 = vmatpush1.msra.mxu0 %v4052
  %4290 = vmatprep.subr.mxu0 %v4047
  %4291 = vmatpush1.msra.mxu0 %v4046
  %4292 = vmatprep.subr.mxu0 %v4041
  %4293 = vmatpush1.msra.mxu0 %v4040
  %4294 = vmatprep.subr.mxu0 %v4035
  %4295 = vmatpush1.msra.mxu0 %v4034
  %4296 = vmatprep.subr.mxu0 %v4029
  %4297 = vmatpush1.msra.mxu0 %v4028
  %4298 = vmatprep.subr.mxu0 %v4023
  %4299 = vmatpush1.msra.mxu0 %v4022
  %4300 = vmatprep.subr.mxu0 0.0
  %4301 = vmatpush2.msra.mxu0 0.0
  %4302 = vmatprep.subr.mxu0 0.0
  %4303 = vmatpush2.msra.mxu0 0.0
  %4304 = vmatprep.subr.mxu0 0.0
  %4305 = vmatpush2.msra.mxu0 0.0
  %4306 = vmatprep.subr.mxu0 0.0
  %4307 = vmatpush2.msra.mxu0 0.0
  %4308 = vmatprep.subr.mxu0 0.0
  %4309 = vmatpush2.msra.mxu0 0.0
  %4310 = vmatprep.subr.mxu0 0.0
  %4311 = vmatpush2.msra.mxu0 0.0
  %4312 = vmatprep.subr.mxu0 0.0
  %4313 = vmatpush2.msra.mxu0 0.0
  %4314 = vmatprep.subr.mxu0 0.0
  %4315 = vmatpush2.msra.mxu0 0.0
  %4316 = vmatprep.subr.mxu0 0.0
  %4317 = vmatpush2.msra.mxu0 0.0
  %4318 = vmatprep.subr.mxu0 0.0
  %4319 = vmatpush2.msra.mxu0 0.0
  %4320 = vmatprep.subr.mxu0 0.0
  %4321 = vmatpush2.msra.mxu0 0.0
  %4322 = vmatprep.subr.mxu0 0.0
  %4323 = vmatpush2.msra.mxu0 0.0
  %4324 = vmatprep.subr.mxu0 0.0
  %4325 = vmatpush2.msra.mxu0 0.0
  %4326 = vmatprep.subr.mxu0 0.0
  %4327 = vmatpush2.msra.mxu0 0.0
  %4328 = vmatprep.subr.mxu0 0.0
  %4329 = vmatpush2.msra.mxu0 0.0
  %4330 = vmatprep.subr.mxu0 0.0
  %4331 = vmatpush2.msra.mxu0 0.0
  %4332 = vmatprep.mubr.f32.mxu0 0.0
  %4333 = vmatmul.mubr.f32.gmra.mxu0 %v2300
  %v4334 = vpop.f32.mrf.mxu0
  %v4335 = vadd.f32 %v2064, %v4334
  %v4336 = vpop.f32.mrf.mxu0
  %v4337 = vadd.f32 %v2064, %v4336
  %4338 = vdwg.mxu0
  %v4339 = vmax.f32 %v4193, 0.0
  %v4340 = vmax.f32 %v4195, 0.0
  %v4341 = vmax.f32 %v4264, 0.0
  %v4342 = vmax.f32 %v4266, 0.0
  %v4343 = vmax.f32 %v4335, 0.0
  %v4344 = vmax.f32 %v4337, 0.0
  %v4345 = vmul.f32 %v4339, %v367
  %v4346 = vmul.f32 %v4340, %v371
  %v4347 = vmul.f32 %v4341, %v375
  %v4348 = vmul.f32 %v4342, %v379
  %v4349 = vmul.f32 %v4343, %v383
  %v4350 = vmul.f32 %v4344, %v387
  %v4351 = vadd.f32 %v4345, %v1904
  %v4352 = vadd.f32 %v4346, %v1905
  %v4353 = vadd.f32 %v4347, %v1906
  %v4354 = vadd.f32 %v4348, %v1907
  %v4355 = vadd.f32 %v4349, %v1908
  %v4356 = vadd.f32 %v4350, %v1909
  %4363 = vrot.lane.b32.xlu0 %v4351, 127
  %v4364 = vpop.permute.xlu0 %4363
  %4365 = vrot.lane.b32.xlu0 %v4352, 127
  %v4366 = vpop.permute.xlu0 %4365
  %4367 = vrot.lane.b32.xlu0 %v4353, 127
  %v4368 = vpop.permute.xlu0 %4367
  %4369 = vrot.lane.b32.xlu0 %v4354, 127
  %v4370 = vpop.permute.xlu0 %4369
  %4371 = vrot.lane.b32.xlu0 %v4355, 127
  %v4372 = vpop.permute.xlu0 %4371
  %4373 = vrot.lane.b32.xlu0 %v4356, 127
  %v4374 = vpop.permute.xlu0 %4373
  %v4375 = vsel %vm445, %v420, %v4364
  %v4376 = vsel %vm445, %v4364, %v4366
  %v4377 = vsel %vm445, %v4366, %v4368
  %v4378 = vsel %vm445, %v4368, %v4370
  %v4379 = vsel %vm445, %v4370, %v4372
  %v4380 = vsel %vm445, %v4372, %v4374
  %4381 = vrot.lane.b32.xlu0 %v4351, 126
  %v4382 = vpop.permute.xlu0 %4381
  %4383 = vrot.lane.b32.xlu0 %v4352, 126
  %v4384 = vpop.permute.xlu0 %4383
  %4385 = vrot.lane.b32.xlu0 %v4353, 126
  %v4386 = vpop.permute.xlu0 %4385
  %4387 = vrot.lane.b32.xlu0 %v4354, 126
  %v4388 = vpop.permute.xlu0 %4387
  %4389 = vrot.lane.b32.xlu0 %v4355, 126
  %v4390 = vpop.permute.xlu0 %4389
  %4391 = vrot.lane.b32.xlu0 %v4356, 126
  %v4392 = vpop.permute.xlu0 %4391
  %v4393 = vsel %vm484, %v459, %v4382
  %v4394 = vsel %vm484, %v4382, %v4384
  %v4395 = vsel %vm484, %v4384, %v4386
  %v4396 = vsel %vm484, %v4386, %v4388
  %v4397 = vsel %vm484, %v4388, %v4390
  %v4398 = vsel %vm484, %v4390, %v4392
  %4399 = vrot.lane.b32.xlu0 %v4351, 110
  %v4400 = vpop.permute.xlu0 %4399
  %4401 = vrot.lane.b32.xlu0 %v4352, 110
  %v4402 = vpop.permute.xlu0 %4401
  %4403 = vrot.lane.b32.xlu0 %v4353, 110
  %v4404 = vpop.permute.xlu0 %4403
  %4405 = vrot.lane.b32.xlu0 %v4354, 110
  %v4406 = vpop.permute.xlu0 %4405
  %4407 = vrot.lane.b32.xlu0 %v4355, 110
  %v4408 = vpop.permute.xlu0 %4407
  %4409 = vrot.lane.b32.xlu0 %v4356, 110
  %v4410 = vpop.permute.xlu0 %4409
  %v4411 = vsel %vm523, %v498, %v4400
  %v4412 = vsel %vm523, %v4400, %v4402
  %v4413 = vsel %vm523, %v4402, %v4404
  %v4414 = vsel %vm523, %v4404, %v4406
  %v4415 = vsel %vm523, %v4406, %v4408
  %v4416 = vsel %vm523, %v4408, %v4410
  %4417 = vrot.lane.b32.xlu0 %v4351, 109
  %v4418 = vpop.permute.xlu0 %4417
  %4419 = vrot.lane.b32.xlu0 %v4352, 109
  %v4420 = vpop.permute.xlu0 %4419
  %4421 = vrot.lane.b32.xlu0 %v4353, 109
  %v4422 = vpop.permute.xlu0 %4421
  %4423 = vrot.lane.b32.xlu0 %v4354, 109
  %v4424 = vpop.permute.xlu0 %4423
  %4425 = vrot.lane.b32.xlu0 %v4355, 109
  %v4426 = vpop.permute.xlu0 %4425
  %4427 = vrot.lane.b32.xlu0 %v4356, 109
  %v4428 = vpop.permute.xlu0 %4427
  %v4429 = vsel %vm560, %v4418, %v4420
  %v4430 = vsel %vm560, %v4420, %v4422
  %v4431 = vsel %vm560, %v4422, %v4424
  %v4432 = vsel %vm560, %v4424, %v4426
  %v4433 = vsel %vm560, %v4426, %v4428
  %4434 = vrot.lane.b32.xlu0 %v4351, 108
  %v4435 = vpop.permute.xlu0 %4434
  %4436 = vrot.lane.b32.xlu0 %v4352, 108
  %v4437 = vpop.permute.xlu0 %4436
  %4438 = vrot.lane.b32.xlu0 %v4353, 108
  %v4439 = vpop.permute.xlu0 %4438
  %4440 = vrot.lane.b32.xlu0 %v4354, 108
  %v4441 = vpop.permute.xlu0 %4440
  %4442 = vrot.lane.b32.xlu0 %v4355, 108
  %v4443 = vpop.permute.xlu0 %4442
  %4444 = vrot.lane.b32.xlu0 %v4356, 108
  %v4445 = vpop.permute.xlu0 %4444
  %v4446 = vsel %vm597, %v4435, %v4437
  %v4447 = vsel %vm597, %v4437, %v4439
  %v4448 = vsel %vm597, %v4439, %v4441
  %v4449 = vsel %vm597, %v4441, %v4443
  %v4450 = vsel %vm597, %v4443, %v4445
  %v4451 = vsel %vm597, %v4445, %v584
  %4452 = vrot.lane.b32.xlu0 %v4351, 92
  %v4453 = vpop.permute.xlu0 %4452
  %4454 = vrot.lane.b32.xlu0 %v4352, 92
  %v4455 = vpop.permute.xlu0 %4454
  %4456 = vrot.lane.b32.xlu0 %v4353, 92
  %v4457 = vpop.permute.xlu0 %4456
  %4458 = vrot.lane.b32.xlu0 %v4354, 92
  %v4459 = vpop.permute.xlu0 %4458
  %4460 = vrot.lane.b32.xlu0 %v4355, 92
  %v4461 = vpop.permute.xlu0 %4460
  %4462 = vrot.lane.b32.xlu0 %v4356, 92
  %v4463 = vpop.permute.xlu0 %4462
  %v4464 = vsel %vm636, %v4453, %v4455
  %v4465 = vsel %vm636, %v4455, %v4457
  %v4466 = vsel %vm636, %v4457, %v4459
  %v4467 = vsel %vm636, %v4459, %v4461
  %v4468 = vsel %vm636, %v4461, %v4463
  %v4469 = vsel %vm636, %v4463, %v623
  %4470 = vrot.lane.b32.xlu0 %v4351, 91
  %v4471 = vpop.permute.xlu0 %4470
  %4472 = vrot.lane.b32.xlu0 %v4352, 91
  %v4473 = vpop.permute.xlu0 %4472
  %4474 = vrot.lane.b32.xlu0 %v4353, 91
  %v4475 = vpop.permute.xlu0 %4474
  %4476 = vrot.lane.b32.xlu0 %v4354, 91
  %v4477 = vpop.permute.xlu0 %4476
  %4478 = vrot.lane.b32.xlu0 %v4355, 91
  %v4479 = vpop.permute.xlu0 %4478
  %4480 = vrot.lane.b32.xlu0 %v4356, 91
  %v4481 = vpop.permute.xlu0 %4480
  %v4482 = vsel %vm675, %v4471, %v4473
  %v4483 = vsel %vm675, %v4473, %v4475
  %v4484 = vsel %vm675, %v4475, %v4477
  %v4485 = vsel %vm675, %v4477, %v4479
  %v4486 = vsel %vm675, %v4479, %v4481
  %v4487 = vsel %vm675, %v4481, %v662
  %4488 = vrot.lane.b32.xlu0 %v4351, 90
  %v4489 = vpop.permute.xlu0 %4488
  %4490 = vrot.lane.b32.xlu0 %v4352, 90
  %v4491 = vpop.permute.xlu0 %4490
  %4492 = vrot.lane.b32.xlu0 %v4353, 90
  %v4493 = vpop.permute.xlu0 %4492
  %4494 = vrot.lane.b32.xlu0 %v4354, 90
  %v4495 = vpop.permute.xlu0 %4494
  %4496 = vrot.lane.b32.xlu0 %v4355, 90
  %v4497 = vpop.permute.xlu0 %4496
  %4498 = vrot.lane.b32.xlu0 %v4356, 90
  %v4499 = vpop.permute.xlu0 %4498
  %v4500 = vsel %vm714, %v4489, %v4491
  %v4501 = vsel %vm714, %v4491, %v4493
  %v4502 = vsel %vm714, %v4493, %v4495
  %v4503 = vsel %vm714, %v4495, %v4497
  %v4504 = vsel %vm714, %v4497, %v4499
  %v4505 = vsel %vm714, %v4499, %v701
  %4506 = vrot.lane.b32.xlu0 %v4351, 19
  %v4507 = vpop.permute.xlu0 %4506
  %4508 = vrot.lane.b32.xlu0 %v4352, 19
  %v4509 = vpop.permute.xlu0 %4508
  %4510 = vrot.lane.b32.xlu0 %v4353, 19
  %v4511 = vpop.permute.xlu0 %4510
  %4512 = vrot.lane.b32.xlu0 %v4354, 19
  %v4513 = vpop.permute.xlu0 %4512
  %4514 = vrot.lane.b32.xlu0 %v4355, 19
  %v4515 = vpop.permute.xlu0 %4514
  %4516 = vrot.lane.b32.xlu0 %v4356, 19
  %v4517 = vpop.permute.xlu0 %4516
  %4518 = vrot.lane.b32.xlu0 %v4375, 19
  %v4519 = vpop.permute.xlu0 %4518
  %4520 = vrot.lane.b32.xlu0 %v4376, 19
  %v4521 = vpop.permute.xlu0 %4520
  %4522 = vrot.lane.b32.xlu0 %v4377, 19
  %v4523 = vpop.permute.xlu0 %4522
  %4524 = vrot.lane.b32.xlu0 %v4378, 19
  %v4525 = vpop.permute.xlu0 %4524
  %4526 = vrot.lane.b32.xlu0 %v4379, 19
  %v4527 = vpop.permute.xlu0 %4526
  %4528 = vrot.lane.b32.xlu0 %v4380, 19
  %v4529 = vpop.permute.xlu0 %4528
  %4530 = vrot.lane.b32.xlu0 %v4374, 19
  %v4531 = vpop.permute.xlu0 %4530
  %4532 = vrot.lane.b32.xlu0 %v4393, 19
  %v4533 = vpop.permute.xlu0 %4532
  %4534 = vrot.lane.b32.xlu0 %v4394, 19
  %v4535 = vpop.permute.xlu0 %4534
  %4536 = vrot.lane.b32.xlu0 %v4395, 19
  %v4537 = vpop.permute.xlu0 %4536
  %4538 = vrot.lane.b32.xlu0 %v4396, 19
  %v4539 = vpop.permute.xlu0 %4538
  %4540 = vrot.lane.b32.xlu0 %v4397, 19
  %v4541 = vpop.permute.xlu0 %4540
  %4542 = vrot.lane.b32.xlu0 %v4398, 19
  %v4543 = vpop.permute.xlu0 %4542
  %4544 = vrot.lane.b32.xlu0 %v4392, 19
  %v4545 = vpop.permute.xlu0 %4544
  %4546 = vrot.lane.b32.xlu0 %v4411, 19
  %v4547 = vpop.permute.xlu0 %4546
  %4548 = vrot.lane.b32.xlu0 %v4412, 19
  %v4549 = vpop.permute.xlu0 %4548
  %4550 = vrot.lane.b32.xlu0 %v4413, 19
  %v4551 = vpop.permute.xlu0 %4550
  %4552 = vrot.lane.b32.xlu0 %v4414, 19
  %v4553 = vpop.permute.xlu0 %4552
  %4554 = vrot.lane.b32.xlu0 %v4415, 19
  %v4555 = vpop.permute.xlu0 %4554
  %4556 = vrot.lane.b32.xlu0 %v4416, 19
  %v4557 = vpop.permute.xlu0 %4556
  %4558 = vrot.lane.b32.xlu0 %v4410, 19
  %v4559 = vpop.permute.xlu0 %4558
  %4560 = vrot.lane.b32.xlu0 %v4418, 19
  %v4561 = vpop.permute.xlu0 %4560
  %4562 = vrot.lane.b32.xlu0 %v4429, 19
  %v4563 = vpop.permute.xlu0 %4562
  %4564 = vrot.lane.b32.xlu0 %v4430, 19
  %v4565 = vpop.permute.xlu0 %4564
  %4566 = vrot.lane.b32.xlu0 %v4431, 19
  %v4567 = vpop.permute.xlu0 %4566
  %4568 = vrot.lane.b32.xlu0 %v4432, 19
  %v4569 = vpop.permute.xlu0 %4568
  %4570 = vrot.lane.b32.xlu0 %v4433, 19
  %v4571 = vpop.permute.xlu0 %4570
  %4572 = vrot.lane.b32.xlu0 %v4428, 19
  %v4573 = vpop.permute.xlu0 %4572
  %4574 = vrot.lane.b32.xlu0 %v4435, 19
  %v4575 = vpop.permute.xlu0 %4574
  %4576 = vrot.lane.b32.xlu0 %v4446, 19
  %v4577 = vpop.permute.xlu0 %4576
  %4578 = vrot.lane.b32.xlu0 %v4447, 19
  %v4579 = vpop.permute.xlu0 %4578
  %4580 = vrot.lane.b32.xlu0 %v4448, 19
  %v4581 = vpop.permute.xlu0 %4580
  %4582 = vrot.lane.b32.xlu0 %v4449, 19
  %v4583 = vpop.permute.xlu0 %4582
  %4584 = vrot.lane.b32.xlu0 %v4450, 19
  %v4585 = vpop.permute.xlu0 %4584
  %4586 = vrot.lane.b32.xlu0 %v4451, 19
  %v4587 = vpop.permute.xlu0 %4586
  %4588 = vrot.lane.b32.xlu0 %v4453, 19
  %v4589 = vpop.permute.xlu0 %4588
  %4590 = vrot.lane.b32.xlu0 %v4464, 19
  %v4591 = vpop.permute.xlu0 %4590
  %4592 = vrot.lane.b32.xlu0 %v4465, 19
  %v4593 = vpop.permute.xlu0 %4592
  %4594 = vrot.lane.b32.xlu0 %v4466, 19
  %v4595 = vpop.permute.xlu0 %4594
  %4596 = vrot.lane.b32.xlu0 %v4467, 19
  %v4597 = vpop.permute.xlu0 %4596
  %4598 = vrot.lane.b32.xlu0 %v4468, 19
  %v4599 = vpop.permute.xlu0 %4598
  %4600 = vrot.lane.b32.xlu0 %v4469, 19
  %v4601 = vpop.permute.xlu0 %4600
  %4602 = vrot.lane.b32.xlu0 %v4471, 19
  %v4603 = vpop.permute.xlu0 %4602
  %4604 = vrot.lane.b32.xlu0 %v4482, 19
  %v4605 = vpop.permute.xlu0 %4604
  %4606 = vrot.lane.b32.xlu0 %v4483, 19
  %v4607 = vpop.permute.xlu0 %4606
  %4608 = vrot.lane.b32.xlu0 %v4484, 19
  %v4609 = vpop.permute.xlu0 %4608
  %4610 = vrot.lane.b32.xlu0 %v4485, 19
  %v4611 = vpop.permute.xlu0 %4610
  %4612 = vrot.lane.b32.xlu0 %v4486, 19
  %v4613 = vpop.permute.xlu0 %4612
  %4614 = vrot.lane.b32.xlu0 %v4487, 19
  %v4615 = vpop.permute.xlu0 %4614
  %4616 = vrot.lane.b32.xlu0 %v4489, 19
  %v4617 = vpop.permute.xlu0 %4616
  %4618 = vrot.lane.b32.xlu0 %v4500, 19
  %v4619 = vpop.permute.xlu0 %4618
  %4620 = vrot.lane.b32.xlu0 %v4501, 19
  %v4621 = vpop.permute.xlu0 %4620
  %4622 = vrot.lane.b32.xlu0 %v4502, 19
  %v4623 = vpop.permute.xlu0 %4622
  %4624 = vrot.lane.b32.xlu0 %v4503, 19
  %v4625 = vpop.permute.xlu0 %4624
  %4626 = vrot.lane.b32.xlu0 %v4504, 19
  %v4627 = vpop.permute.xlu0 %4626
  %4628 = vrot.lane.b32.xlu0 %v4505, 19
  %v4629 = vpop.permute.xlu0 %4628
  %v4630 = vsel %vm1009, %v760, %v4507
  %v4631 = vsel %vm1009, %v4507, %v4509
  %v4632 = vsel %vm1009, %v4509, %v4511
  %v4633 = vsel %vm1009, %v4511, %v4513
  %v4634 = vsel %vm1009, %v4513, %v4515
  %v4635 = vsel %vm1009, %v4515, %v4517
  %v4636 = vsel %vm1009, %v4519, %v4521
  %v4637 = vsel %vm1009, %v4521, %v4523
  %v4638 = vsel %vm1009, %v4523, %v4525
  %v4639 = vsel %vm1009, %v4525, %v4527
  %v4640 = vsel %vm1009, %v4527, %v4529
  %v4641 = vsel %vm1009, %v4529, %v4531
  %v4642 = vsel %vm1009, %v4533, %v4535
  %v4643 = vsel %vm1009, %v4535, %v4537
  %v4644 = vsel %vm1009, %v4537, %v4539
  %v4645 = vsel %vm1009, %v4539, %v4541
  %v4646 = vsel %vm1009, %v4541, %v4543
  %v4647 = vsel %vm1009, %v4543, %v4545
  %v4648 = vsel %vm1009, %v4547, %v4549
  %v4649 = vsel %vm1009, %v4549, %v4551
  %v4650 = vsel %vm1009, %v4551, %v4553
  %v4651 = vsel %vm1009, %v4553, %v4555
  %v4652 = vsel %vm1009, %v4555, %v4557
  %v4653 = vsel %vm1009, %v4557, %v4559
  %v4654 = vsel %vm1009, %v4561, %v4563
  %v4655 = vsel %vm1009, %v4563, %v4565
  %v4656 = vsel %vm1009, %v4565, %v4567
  %v4657 = vsel %vm1009, %v4567, %v4569
  %v4658 = vsel %vm1009, %v4569, %v4571
  %v4659 = vsel %vm1009, %v4571, %v4573
  %v4660 = vsel %vm1009, %v4575, %v4577
  %v4661 = vsel %vm1009, %v4577, %v4579
  %v4662 = vsel %vm1009, %v4579, %v4581
  %v4663 = vsel %vm1009, %v4581, %v4583
  %v4664 = vsel %vm1009, %v4583, %v4585
  %v4665 = vsel %vm1009, %v4585, %v4587
  %v4666 = vsel %vm1009, %v4589, %v4591
  %v4667 = vsel %vm1009, %v4591, %v4593
  %v4668 = vsel %vm1009, %v4593, %v4595
  %v4669 = vsel %vm1009, %v4595, %v4597
  %v4670 = vsel %vm1009, %v4597, %v4599
  %v4671 = vsel %vm1009, %v4599, %v4601
  %v4672 = vsel %vm1009, %v4603, %v4605
  %v4673 = vsel %vm1009, %v4605, %v4607
  %v4674 = vsel %vm1009, %v4607, %v4609
  %v4675 = vsel %vm1009, %v4609, %v4611
  %v4676 = vsel %vm1009, %v4611, %v4613
  %v4677 = vsel %vm1009, %v4613, %v4615
  %v4678 = vsel %vm1009, %v4617, %v4619
  %v4679 = vsel %vm1009, %v4619, %v4621
  %v4680 = vsel %vm1009, %v4621, %v4623
  %v4681 = vsel %vm1009, %v4623, %v4625
  %v4682 = vsel %vm1009, %v4625, %v4627
  %v4683 = vsel %vm1009, %v4627, %v4629
  %4738 = vmatprep.subr.mxu0 0.0
  %4739 = vmatpush1.msra.mxu0 0.0
  %4740 = vmatprep.subr.mxu0 0.0
  %4741 = vmatpush1.msra.mxu0 0.0
  %4742 = vmatprep.subr.mxu0 0.0
  %4743 = vmatpush1.msra.mxu0 0.0
  %4744 = vmatprep.subr.mxu0 0.0
  %4745 = vmatpush1.msra.mxu0 0.0
  %4746 = vmatprep.subr.mxu0 0.0
  %4747 = vmatpush1.msra.mxu0 0.0
  %4748 = vmatprep.subr.mxu0 0.0
  %4749 = vmatpush1.msra.mxu0 0.0
  %4750 = vmatprep.subr.mxu0 0.0
  %4751 = vmatpush1.msra.mxu0 0.0
  %4752 = vmatprep.subr.mxu0 %v4679
  %4753 = vmatpush1.msra.mxu0 %v4678
  %4754 = vmatprep.subr.mxu0 %v4673
  %4755 = vmatpush1.msra.mxu0 %v4672
  %4756 = vmatprep.subr.mxu0 %v4667
  %4757 = vmatpush1.msra.mxu0 %v4666
  %4758 = vmatprep.subr.mxu0 %v4661
  %4759 = vmatpush1.msra.mxu0 %v4660
  %4760 = vmatprep.subr.mxu0 %v4655
  %4761 = vmatpush1.msra.mxu0 %v4654
  %4762 = vmatprep.subr.mxu0 %v4649
  %4763 = vmatpush1.msra.mxu0 %v4648
  %4764 = vmatprep.subr.mxu0 %v4643
  %4765 = vmatpush1.msra.mxu0 %v4642
  %4766 = vmatprep.subr.mxu0 %v4637
  %4767 = vmatpush1.msra.mxu0 %v4636
  %4768 = vmatprep.subr.mxu0 %v4631
  %4769 = vmatpush1.msra.mxu0 %v4630
  %4770 = vmatprep.subr.mxu0 0.0
  %4771 = vmatpush2.msra.mxu0 0.0
  %4772 = vmatprep.subr.mxu0 0.0
  %4773 = vmatpush2.msra.mxu0 0.0
  %4774 = vmatprep.subr.mxu0 0.0
  %4775 = vmatpush2.msra.mxu0 0.0
  %4776 = vmatprep.subr.mxu0 0.0
  %4777 = vmatpush2.msra.mxu0 0.0
  %4778 = vmatprep.subr.mxu0 0.0
  %4779 = vmatpush2.msra.mxu0 0.0
  %4780 = vmatprep.subr.mxu0 0.0
  %4781 = vmatpush2.msra.mxu0 0.0
  %4782 = vmatprep.subr.mxu0 0.0
  %4783 = vmatpush2.msra.mxu0 0.0
  %4784 = vmatprep.subr.mxu0 0.0
  %4785 = vmatpush2.msra.mxu0 0.0
  %4786 = vmatprep.subr.mxu0 0.0
  %4787 = vmatpush2.msra.mxu0 0.0
  %4788 = vmatprep.subr.mxu0 0.0
  %4789 = vmatpush2.msra.mxu0 0.0
  %4790 = vmatprep.subr.mxu0 0.0
  %4791 = vmatpush2.msra.mxu0 0.0
  %4792 = vmatprep.subr.mxu0 0.0
  %4793 = vmatpush2.msra.mxu0 0.0
  %4794 = vmatprep.subr.mxu0 0.0
  %4795 = vmatpush2.msra.mxu0 0.0
  %4796 = vmatprep.subr.mxu0 0.0
  %4797 = vmatpush2.msra.mxu0 0.0
  %4798 = vmatprep.subr.mxu0 0.0
  %4799 = vmatpush2.msra.mxu0 0.0
  %4800 = vmatprep.subr.mxu0 0.0
  %4801 = vmatpush2.msra.mxu0 0.0
  %4802 = vmatprep.mubr.f32.mxu0 0.0
  %4803 = vmatmul.mubr.f32.gmra.mxu0 %v2300
  %v4804 = vpop.f32.mrf.mxu0
  %v4805 = vadd.f32 %v2064, %v4804
  %v4806 = vpop.f32.mrf.mxu0
  %v4807 = vadd.f32 %v2064, %v4806
  %4808 = vdwg.mxu0
  %4809 = vmatprep.subr.mxu0 0.0
  %4810 = vmatpush1.msra.mxu0 0.0
  %4811 = vmatprep.subr.mxu0 0.0
  %4812 = vmatpush1.msra.mxu0 0.0
  %4813 = vmatprep.subr.mxu0 0.0
  %4814 = vmatpush1.msra.mxu0 0.0
  %4815 = vmatprep.subr.mxu0 0.0
  %4816 = vmatpush1.msra.mxu0 0.0
  %4817 = vmatprep.subr.mxu0 0.0
  %4818 = vmatpush1.msra.mxu0 0.0
  %4819 = vmatprep.subr.mxu0 0.0
  %4820 = vmatpush1.msra.mxu0 0.0
  %4821 = vmatprep.subr.mxu0 0.0
  %4822 = vmatpush1.msra.mxu0 0.0
  %4823 = vmatprep.subr.mxu0 %v4681
  %4824 = vmatpush1.msra.mxu0 %v4680
  %4825 = vmatprep.subr.mxu0 %v4675
  %4826 = vmatpush1.msra.mxu0 %v4674
  %4827 = vmatprep.subr.mxu0 %v4669
  %4828 = vmatpush1.msra.mxu0 %v4668
  %4829 = vmatprep.subr.mxu0 %v4663
  %4830 = vmatpush1.msra.mxu0 %v4662
  %4831 = vmatprep.subr.mxu0 %v4657
  %4832 = vmatpush1.msra.mxu0 %v4656
  %4833 = vmatprep.subr.mxu0 %v4651
  %4834 = vmatpush1.msra.mxu0 %v4650
  %4835 = vmatprep.subr.mxu0 %v4645
  %4836 = vmatpush1.msra.mxu0 %v4644
  %4837 = vmatprep.subr.mxu0 %v4639
  %4838 = vmatpush1.msra.mxu0 %v4638
  %4839 = vmatprep.subr.mxu0 %v4633
  %4840 = vmatpush1.msra.mxu0 %v4632
  %4841 = vmatprep.subr.mxu0 0.0
  %4842 = vmatpush2.msra.mxu0 0.0
  %4843 = vmatprep.subr.mxu0 0.0
  %4844 = vmatpush2.msra.mxu0 0.0
  %4845 = vmatprep.subr.mxu0 0.0
  %4846 = vmatpush2.msra.mxu0 0.0
  %4847 = vmatprep.subr.mxu0 0.0
  %4848 = vmatpush2.msra.mxu0 0.0
  %4849 = vmatprep.subr.mxu0 0.0
  %4850 = vmatpush2.msra.mxu0 0.0
  %4851 = vmatprep.subr.mxu0 0.0
  %4852 = vmatpush2.msra.mxu0 0.0
  %4853 = vmatprep.subr.mxu0 0.0
  %4854 = vmatpush2.msra.mxu0 0.0
  %4855 = vmatprep.subr.mxu0 0.0
  %4856 = vmatpush2.msra.mxu0 0.0
  %4857 = vmatprep.subr.mxu0 0.0
  %4858 = vmatpush2.msra.mxu0 0.0
  %4859 = vmatprep.subr.mxu0 0.0
  %4860 = vmatpush2.msra.mxu0 0.0
  %4861 = vmatprep.subr.mxu0 0.0
  %4862 = vmatpush2.msra.mxu0 0.0
  %4863 = vmatprep.subr.mxu0 0.0
  %4864 = vmatpush2.msra.mxu0 0.0
  %4865 = vmatprep.subr.mxu0 0.0
  %4866 = vmatpush2.msra.mxu0 0.0
  %4867 = vmatprep.subr.mxu0 0.0
  %4868 = vmatpush2.msra.mxu0 0.0
  %4869 = vmatprep.subr.mxu0 0.0
  %4870 = vmatpush2.msra.mxu0 0.0
  %4871 = vmatprep.subr.mxu0 0.0
  %4872 = vmatpush2.msra.mxu0 0.0
  %4873 = vmatprep.mubr.f32.mxu0 0.0
  %4874 = vmatmul.mubr.f32.gmra.mxu0 %v2300
  %v4875 = vpop.f32.mrf.mxu0
  %v4876 = vadd.f32 %v2064, %v4875
  %v4877 = vpop.f32.mrf.mxu0
  %v4878 = vadd.f32 %v2064, %v4877
  %4879 = vdwg.mxu0
  %4880 = vmatprep.subr.mxu0 0.0
  %4881 = vmatpush1.msra.mxu0 0.0
  %4882 = vmatprep.subr.mxu0 0.0
  %4883 = vmatpush1.msra.mxu0 0.0
  %4884 = vmatprep.subr.mxu0 0.0
  %4885 = vmatpush1.msra.mxu0 0.0
  %4886 = vmatprep.subr.mxu0 0.0
  %4887 = vmatpush1.msra.mxu0 0.0
  %4888 = vmatprep.subr.mxu0 0.0
  %4889 = vmatpush1.msra.mxu0 0.0
  %4890 = vmatprep.subr.mxu0 0.0
  %4891 = vmatpush1.msra.mxu0 0.0
  %4892 = vmatprep.subr.mxu0 0.0
  %4893 = vmatpush1.msra.mxu0 0.0
  %4894 = vmatprep.subr.mxu0 %v4683
  %4895 = vmatpush1.msra.mxu0 %v4682
  %4896 = vmatprep.subr.mxu0 %v4677
  %4897 = vmatpush1.msra.mxu0 %v4676
  %4898 = vmatprep.subr.mxu0 %v4671
  %4899 = vmatpush1.msra.mxu0 %v4670
  %4900 = vmatprep.subr.mxu0 %v4665
  %4901 = vmatpush1.msra.mxu0 %v4664
  %4902 = vmatprep.subr.mxu0 %v4659
  %4903 = vmatpush1.msra.mxu0 %v4658
  %4904 = vmatprep.subr.mxu0 %v4653
  %4905 = vmatpush1.msra.mxu0 %v4652
  %4906 = vmatprep.subr.mxu0 %v4647
  %4907 = vmatpush1.msra.mxu0 %v4646
  %4908 = vmatprep.subr.mxu0 %v4641
  %4909 = vmatpush1.msra.mxu0 %v4640
  %4910 = vmatprep.subr.mxu0 %v4635
  %4911 = vmatpush1.msra.mxu0 %v4634
  %4912 = vmatprep.subr.mxu0 0.0
  %4913 = vmatpush2.msra.mxu0 0.0
  %4914 = vmatprep.subr.mxu0 0.0
  %4915 = vmatpush2.msra.mxu0 0.0
  %4916 = vmatprep.subr.mxu0 0.0
  %4917 = vmatpush2.msra.mxu0 0.0
  %4918 = vmatprep.subr.mxu0 0.0
  %4919 = vmatpush2.msra.mxu0 0.0
  %4920 = vmatprep.subr.mxu0 0.0
  %4921 = vmatpush2.msra.mxu0 0.0
  %4922 = vmatprep.subr.mxu0 0.0
  %4923 = vmatpush2.msra.mxu0 0.0
  %4924 = vmatprep.subr.mxu0 0.0
  %4925 = vmatpush2.msra.mxu0 0.0
  %4926 = vmatprep.subr.mxu0 0.0
  %4927 = vmatpush2.msra.mxu0 0.0
  %4928 = vmatprep.subr.mxu0 0.0
  %4929 = vmatpush2.msra.mxu0 0.0
  %4930 = vmatprep.subr.mxu0 0.0
  %4931 = vmatpush2.msra.mxu0 0.0
  %4932 = vmatprep.subr.mxu0 0.0
  %4933 = vmatpush2.msra.mxu0 0.0
  %4934 = vmatprep.subr.mxu0 0.0
  %4935 = vmatpush2.msra.mxu0 0.0
  %4936 = vmatprep.subr.mxu0 0.0
  %4937 = vmatpush2.msra.mxu0 0.0
  %4938 = vmatprep.subr.mxu0 0.0
  %4939 = vmatpush2.msra.mxu0 0.0
  %4940 = vmatprep.subr.mxu0 0.0
  %4941 = vmatpush2.msra.mxu0 0.0
  %4942 = vmatprep.subr.mxu0 0.0
  %4943 = vmatpush2.msra.mxu0 0.0
  %4944 = vmatprep.mubr.f32.mxu0 0.0
  %4945 = vmatmul.mubr.f32.gmra.mxu0 %v2300
  %v4946 = vpop.f32.mrf.mxu0
  %v4947 = vadd.f32 %v2064, %v4946
  %v4948 = vpop.f32.mrf.mxu0
  %v4949 = vadd.f32 %v2064, %v4948
  %4950 = vdwg.mxu0
  %v4951 = vmax.f32 %v4805, 0.0
  %v4952 = vmax.f32 %v4807, 0.0
  %v4953 = vmax.f32 %v4876, 0.0
  %v4954 = vmax.f32 %v4878, 0.0
  %v4955 = vmax.f32 %v4947, 0.0
  %v4956 = vmax.f32 %v4949, 0.0
  %v4957 = vmul.f32 %v4951, %v367
  %v4958 = vmul.f32 %v4952, %v371
  %v4959 = vmul.f32 %v4953, %v375
  %v4960 = vmul.f32 %v4954, %v379
  %v4961 = vmul.f32 %v4955, %v383
  %v4962 = vmul.f32 %v4956, %v387
  %4969 = vrot.lane.b32.xlu0 %v4957, 127
  %v4970 = vpop.permute.xlu0 %4969
  %4971 = vrot.lane.b32.xlu0 %v4958, 127
  %v4972 = vpop.permute.xlu0 %4971
  %4973 = vrot.lane.b32.xlu0 %v4959, 127
  %v4974 = vpop.permute.xlu0 %4973
  %4975 = vrot.lane.b32.xlu0 %v4960, 127
  %v4976 = vpop.permute.xlu0 %4975
  %4977 = vrot.lane.b32.xlu0 %v4961, 127
  %v4978 = vpop.permute.xlu0 %4977
  %4979 = vrot.lane.b32.xlu0 %v4962, 127
  %v4980 = vpop.permute.xlu0 %4979
  %v4981 = vsel %vm445, %v420, %v4970
  %v4982 = vsel %vm445, %v4970, %v4972
  %v4983 = vsel %vm445, %v4972, %v4974
  %v4984 = vsel %vm445, %v4974, %v4976
  %v4985 = vsel %vm445, %v4976, %v4978
  %v4986 = vsel %vm445, %v4978, %v4980
  %4987 = vrot.lane.b32.xlu0 %v4957, 126
  %v4988 = vpop.permute.xlu0 %4987
  %4989 = vrot.lane.b32.xlu0 %v4958, 126
  %v4990 = vpop.permute.xlu0 %4989
  %4991 = vrot.lane.b32.xlu0 %v4959, 126
  %v4992 = vpop.permute.xlu0 %4991
  %4993 = vrot.lane.b32.xlu0 %v4960, 126
  %v4994 = vpop.permute.xlu0 %4993
  %4995 = vrot.lane.b32.xlu0 %v4961, 126
  %v4996 = vpop.permute.xlu0 %4995
  %4997 = vrot.lane.b32.xlu0 %v4962, 126
  %v4998 = vpop.permute.xlu0 %4997
  %v4999 = vsel %vm484, %v459, %v4988
  %v5000 = vsel %vm484, %v4988, %v4990
  %v5001 = vsel %vm484, %v4990, %v4992
  %v5002 = vsel %vm484, %v4992, %v4994
  %v5003 = vsel %vm484, %v4994, %v4996
  %v5004 = vsel %vm484, %v4996, %v4998
  %5005 = vrot.lane.b32.xlu0 %v4957, 110
  %v5006 = vpop.permute.xlu0 %5005
  %5007 = vrot.lane.b32.xlu0 %v4958, 110
  %v5008 = vpop.permute.xlu0 %5007
  %5009 = vrot.lane.b32.xlu0 %v4959, 110
  %v5010 = vpop.permute.xlu0 %5009
  %5011 = vrot.lane.b32.xlu0 %v4960, 110
  %v5012 = vpop.permute.xlu0 %5011
  %5013 = vrot.lane.b32.xlu0 %v4961, 110
  %v5014 = vpop.permute.xlu0 %5013
  %5015 = vrot.lane.b32.xlu0 %v4962, 110
  %v5016 = vpop.permute.xlu0 %5015
  %v5017 = vsel %vm523, %v498, %v5006
  %v5018 = vsel %vm523, %v5006, %v5008
  %v5019 = vsel %vm523, %v5008, %v5010
  %v5020 = vsel %vm523, %v5010, %v5012
  %v5021 = vsel %vm523, %v5012, %v5014
  %v5022 = vsel %vm523, %v5014, %v5016
  %5023 = vrot.lane.b32.xlu0 %v4957, 109
  %v5024 = vpop.permute.xlu0 %5023
  %5025 = vrot.lane.b32.xlu0 %v4958, 109
  %v5026 = vpop.permute.xlu0 %5025
  %5027 = vrot.lane.b32.xlu0 %v4959, 109
  %v5028 = vpop.permute.xlu0 %5027
  %5029 = vrot.lane.b32.xlu0 %v4960, 109
  %v5030 = vpop.permute.xlu0 %5029
  %5031 = vrot.lane.b32.xlu0 %v4961, 109
  %v5032 = vpop.permute.xlu0 %5031
  %5033 = vrot.lane.b32.xlu0 %v4962, 109
  %v5034 = vpop.permute.xlu0 %5033
  %v5035 = vsel %vm560, %v5024, %v5026
  %v5036 = vsel %vm560, %v5026, %v5028
  %v5037 = vsel %vm560, %v5028, %v5030
  %v5038 = vsel %vm560, %v5030, %v5032
  %v5039 = vsel %vm560, %v5032, %v5034
  %5040 = vrot.lane.b32.xlu0 %v4957, 108
  %v5041 = vpop.permute.xlu0 %5040
  %5042 = vrot.lane.b32.xlu0 %v4958, 108
  %v5043 = vpop.permute.xlu0 %5042
  %5044 = vrot.lane.b32.xlu0 %v4959, 108
  %v5045 = vpop.permute.xlu0 %5044
  %5046 = vrot.lane.b32.xlu0 %v4960, 108
  %v5047 = vpop.permute.xlu0 %5046
  %5048 = vrot.lane.b32.xlu0 %v4961, 108
  %v5049 = vpop.permute.xlu0 %5048
  %5050 = vrot.lane.b32.xlu0 %v4962, 108
  %v5051 = vpop.permute.xlu0 %5050
  %v5052 = vsel %vm597, %v5041, %v5043
  %v5053 = vsel %vm597, %v5043, %v5045
  %v5054 = vsel %vm597, %v5045, %v5047
  %v5055 = vsel %vm597, %v5047, %v5049
  %v5056 = vsel %vm597, %v5049, %v5051
  %v5057 = vsel %vm597, %v5051, %v584
  %5058 = vrot.lane.b32.xlu0 %v4957, 92
  %v5059 = vpop.permute.xlu0 %5058
  %5060 = vrot.lane.b32.xlu0 %v4958, 92
  %v5061 = vpop.permute.xlu0 %5060
  %5062 = vrot.lane.b32.xlu0 %v4959, 92
  %v5063 = vpop.permute.xlu0 %5062
  %5064 = vrot.lane.b32.xlu0 %v4960, 92
  %v5065 = vpop.permute.xlu0 %5064
  %5066 = vrot.lane.b32.xlu0 %v4961, 92
  %v5067 = vpop.permute.xlu0 %5066
  %5068 = vrot.lane.b32.xlu0 %v4962, 92
  %v5069 = vpop.permute.xlu0 %5068
  %v5070 = vsel %vm636, %v5059, %v5061
  %v5071 = vsel %vm636, %v5061, %v5063
  %v5072 = vsel %vm636, %v5063, %v5065
  %v5073 = vsel %vm636, %v5065, %v5067
  %v5074 = vsel %vm636, %v5067, %v5069
  %v5075 = vsel %vm636, %v5069, %v623
  %5076 = vrot.lane.b32.xlu0 %v4957, 91
  %v5077 = vpop.permute.xlu0 %5076
  %5078 = vrot.lane.b32.xlu0 %v4958, 91
  %v5079 = vpop.permute.xlu0 %5078
  %5080 = vrot.lane.b32.xlu0 %v4959, 91
  %v5081 = vpop.permute.xlu0 %5080
  %5082 = vrot.lane.b32.xlu0 %v4960, 91
  %v5083 = vpop.permute.xlu0 %5082
  %5084 = vrot.lane.b32.xlu0 %v4961, 91
  %v5085 = vpop.permute.xlu0 %5084
  %5086 = vrot.lane.b32.xlu0 %v4962, 91
  %v5087 = vpop.permute.xlu0 %5086
  %v5088 = vsel %vm675, %v5077, %v5079
  %v5089 = vsel %vm675, %v5079, %v5081
  %v5090 = vsel %vm675, %v5081, %v5083
  %v5091 = vsel %vm675, %v5083, %v5085
  %v5092 = vsel %vm675, %v5085, %v5087
  %v5093 = vsel %vm675, %v5087, %v662
  %5094 = vrot.lane.b32.xlu0 %v4957, 90
  %v5095 = vpop.permute.xlu0 %5094
  %5096 = vrot.lane.b32.xlu0 %v4958, 90
  %v5097 = vpop.permute.xlu0 %5096
  %5098 = vrot.lane.b32.xlu0 %v4959, 90
  %v5099 = vpop.permute.xlu0 %5098
  %5100 = vrot.lane.b32.xlu0 %v4960, 90
  %v5101 = vpop.permute.xlu0 %5100
  %5102 = vrot.lane.b32.xlu0 %v4961, 90
  %v5103 = vpop.permute.xlu0 %5102
  %5104 = vrot.lane.b32.xlu0 %v4962, 90
  %v5105 = vpop.permute.xlu0 %5104
  %v5106 = vsel %vm714, %v5095, %v5097
  %v5107 = vsel %vm714, %v5097, %v5099
  %v5108 = vsel %vm714, %v5099, %v5101
  %v5109 = vsel %vm714, %v5101, %v5103
  %v5110 = vsel %vm714, %v5103, %v5105
  %v5111 = vsel %vm714, %v5105, %v701
  %5112 = vrot.lane.b32.xlu0 %v4957, 19
  %v5113 = vpop.permute.xlu0 %5112
  %5114 = vrot.lane.b32.xlu0 %v4958, 19
  %v5115 = vpop.permute.xlu0 %5114
  %5116 = vrot.lane.b32.xlu0 %v4959, 19
  %v5117 = vpop.permute.xlu0 %5116
  %5118 = vrot.lane.b32.xlu0 %v4960, 19
  %v5119 = vpop.permute.xlu0 %5118
  %5120 = vrot.lane.b32.xlu0 %v4961, 19
  %v5121 = vpop.permute.xlu0 %5120
  %5122 = vrot.lane.b32.xlu0 %v4962, 19
  %v5123 = vpop.permute.xlu0 %5122
  %5124 = vrot.lane.b32.xlu0 %v4981, 19
  %v5125 = vpop.permute.xlu0 %5124
  %5126 = vrot.lane.b32.xlu0 %v4982, 19
  %v5127 = vpop.permute.xlu0 %5126
  %5128 = vrot.lane.b32.xlu0 %v4983, 19
  %v5129 = vpop.permute.xlu0 %5128
  %5130 = vrot.lane.b32.xlu0 %v4984, 19
  %v5131 = vpop.permute.xlu0 %5130
  %5132 = vrot.lane.b32.xlu0 %v4985, 19
  %v5133 = vpop.permute.xlu0 %5132
  %5134 = vrot.lane.b32.xlu0 %v4986, 19
  %v5135 = vpop.permute.xlu0 %5134
  %5136 = vrot.lane.b32.xlu0 %v4980, 19
  %v5137 = vpop.permute.xlu0 %5136
  %5138 = vrot.lane.b32.xlu0 %v4999, 19
  %v5139 = vpop.permute.xlu0 %5138
  %5140 = vrot.lane.b32.xlu0 %v5000, 19
  %v5141 = vpop.permute.xlu0 %5140
  %5142 = vrot.lane.b32.xlu0 %v5001, 19
  %v5143 = vpop.permute.xlu0 %5142
  %5144 = vrot.lane.b32.xlu0 %v5002, 19
  %v5145 = vpop.permute.xlu0 %5144
  %5146 = vrot.lane.b32.xlu0 %v5003, 19
  %v5147 = vpop.permute.xlu0 %5146
  %5148 = vrot.lane.b32.xlu0 %v5004, 19
  %v5149 = vpop.permute.xlu0 %5148
  %5150 = vrot.lane.b32.xlu0 %v4998, 19
  %v5151 = vpop.permute.xlu0 %5150
  %5152 = vrot.lane.b32.xlu0 %v5017, 19
  %v5153 = vpop.permute.xlu0 %5152
  %5154 = vrot.lane.b32.xlu0 %v5018, 19
  %v5155 = vpop.permute.xlu0 %5154
  %5156 = vrot.lane.b32.xlu0 %v5019, 19
  %v5157 = vpop.permute.xlu0 %5156
  %5158 = vrot.lane.b32.xlu0 %v5020, 19
  %v5159 = vpop.permute.xlu0 %5158
  %5160 = vrot.lane.b32.xlu0 %v5021, 19
  %v5161 = vpop.permute.xlu0 %5160
  %5162 = vrot.lane.b32.xlu0 %v5022, 19
  %v5163 = vpop.permute.xlu0 %5162
  %5164 = vrot.lane.b32.xlu0 %v5016, 19
  %v5165 = vpop.permute.xlu0 %5164
  %5166 = vrot.lane.b32.xlu0 %v5024, 19
  %v5167 = vpop.permute.xlu0 %5166
  %5168 = vrot.lane.b32.xlu0 %v5035, 19
  %v5169 = vpop.permute.xlu0 %5168
  %5170 = vrot.lane.b32.xlu0 %v5036, 19
  %v5171 = vpop.permute.xlu0 %5170
  %5172 = vrot.lane.b32.xlu0 %v5037, 19
  %v5173 = vpop.permute.xlu0 %5172
  %5174 = vrot.lane.b32.xlu0 %v5038, 19
  %v5175 = vpop.permute.xlu0 %5174
  %5176 = vrot.lane.b32.xlu0 %v5039, 19
  %v5177 = vpop.permute.xlu0 %5176
  %5178 = vrot.lane.b32.xlu0 %v5034, 19
  %v5179 = vpop.permute.xlu0 %5178
  %5180 = vrot.lane.b32.xlu0 %v5041, 19
  %v5181 = vpop.permute.xlu0 %5180
  %5182 = vrot.lane.b32.xlu0 %v5052, 19
  %v5183 = vpop.permute.xlu0 %5182
  %5184 = vrot.lane.b32.xlu0 %v5053, 19
  %v5185 = vpop.permute.xlu0 %5184
  %5186 = vrot.lane.b32.xlu0 %v5054, 19
  %v5187 = vpop.permute.xlu0 %5186
  %5188 = vrot.lane.b32.xlu0 %v5055, 19
  %v5189 = vpop.permute.xlu0 %5188
  %5190 = vrot.lane.b32.xlu0 %v5056, 19
  %v5191 = vpop.permute.xlu0 %5190
  %5192 = vrot.lane.b32.xlu0 %v5057, 19
  %v5193 = vpop.permute.xlu0 %5192
  %5194 = vrot.lane.b32.xlu0 %v5059, 19
  %v5195 = vpop.permute.xlu0 %5194
  %5196 = vrot.lane.b32.xlu0 %v5070, 19
  %v5197 = vpop.permute.xlu0 %5196
  %5198 = vrot.lane.b32.xlu0 %v5071, 19
  %v5199 = vpop.permute.xlu0 %5198
  %5200 = vrot.lane.b32.xlu0 %v5072, 19
  %v5201 = vpop.permute.xlu0 %5200
  %5202 = vrot.lane.b32.xlu0 %v5073, 19
  %v5203 = vpop.permute.xlu0 %5202
  %5204 = vrot.lane.b32.xlu0 %v5074, 19
  %v5205 = vpop.permute.xlu0 %5204
  %5206 = vrot.lane.b32.xlu0 %v5075, 19
  %v5207 = vpop.permute.xlu0 %5206
  %5208 = vrot.lane.b32.xlu0 %v5077, 19
  %v5209 = vpop.permute.xlu0 %5208
  %5210 = vrot.lane.b32.xlu0 %v5088, 19
  %v5211 = vpop.permute.xlu0 %5210
  %5212 = vrot.lane.b32.xlu0 %v5089, 19
  %v5213 = vpop.permute.xlu0 %5212
  %5214 = vrot.lane.b32.xlu0 %v5090, 19
  %v5215 = vpop.permute.xlu0 %5214
  %5216 = vrot.lane.b32.xlu0 %v5091, 19
  %v5217 = vpop.permute.xlu0 %5216
  %5218 = vrot.lane.b32.xlu0 %v5092, 19
  %v5219 = vpop.permute.xlu0 %5218
  %5220 = vrot.lane.b32.xlu0 %v5093, 19
  %v5221 = vpop.permute.xlu0 %5220
  %5222 = vrot.lane.b32.xlu0 %v5095, 19
  %v5223 = vpop.permute.xlu0 %5222
  %5224 = vrot.lane.b32.xlu0 %v5106, 19
  %v5225 = vpop.permute.xlu0 %5224
  %5226 = vrot.lane.b32.xlu0 %v5107, 19
  %v5227 = vpop.permute.xlu0 %5226
  %5228 = vrot.lane.b32.xlu0 %v5108, 19
  %v5229 = vpop.permute.xlu0 %5228
  %5230 = vrot.lane.b32.xlu0 %v5109, 19
  %v5231 = vpop.permute.xlu0 %5230
  %5232 = vrot.lane.b32.xlu0 %v5110, 19
  %v5233 = vpop.permute.xlu0 %5232
  %5234 = vrot.lane.b32.xlu0 %v5111, 19
  %v5235 = vpop.permute.xlu0 %5234
  %v5236 = vsel %vm1009, %v760, %v5113
  %v5237 = vsel %vm1009, %v5113, %v5115
  %v5238 = vsel %vm1009, %v5115, %v5117
  %v5239 = vsel %vm1009, %v5117, %v5119
  %v5240 = vsel %vm1009, %v5119, %v5121
  %v5241 = vsel %vm1009, %v5121, %v5123
  %v5242 = vsel %vm1009, %v5125, %v5127
  %v5243 = vsel %vm1009, %v5127, %v5129
  %v5244 = vsel %vm1009, %v5129, %v5131
  %v5245 = vsel %vm1009, %v5131, %v5133
  %v5246 = vsel %vm1009, %v5133, %v5135
  %v5247 = vsel %vm1009, %v5135, %v5137
  %v5248 = vsel %vm1009, %v5139, %v5141
  %v5249 = vsel %vm1009, %v5141, %v5143
  %v5250 = vsel %vm1009, %v5143, %v5145
  %v5251 = vsel %vm1009, %v5145, %v5147
  %v5252 = vsel %vm1009, %v5147, %v5149
  %v5253 = vsel %vm1009, %v5149, %v5151
  %v5254 = vsel %vm1009, %v5153, %v5155
  %v5255 = vsel %vm1009, %v5155, %v5157
  %v5256 = vsel %vm1009, %v5157, %v5159
  %v5257 = vsel %vm1009, %v5159, %v5161
  %v5258 = vsel %vm1009, %v5161, %v5163
  %v5259 = vsel %vm1009, %v5163, %v5165
  %v5260 = vsel %vm1009, %v5167, %v5169
  %v5261 = vsel %vm1009, %v5169, %v5171
  %v5262 = vsel %vm1009, %v5171, %v5173
  %v5263 = vsel %vm1009, %v5173, %v5175
  %v5264 = vsel %vm1009, %v5175, %v5177
  %v5265 = vsel %vm1009, %v5177, %v5179
  %v5266 = vsel %vm1009, %v5181, %v5183
  %v5267 = vsel %vm1009, %v5183, %v5185
  %v5268 = vsel %vm1009, %v5185, %v5187
  %v5269 = vsel %vm1009, %v5187, %v5189
  %v5270 = vsel %vm1009, %v5189, %v5191
  %v5271 = vsel %vm1009, %v5191, %v5193
  %v5272 = vsel %vm1009, %v5195, %v5197
  %v5273 = vsel %vm1009, %v5197, %v5199
  %v5274 = vsel %vm1009, %v5199, %v5201
  %v5275 = vsel %vm1009, %v5201, %v5203
  %v5276 = vsel %vm1009, %v5203, %v5205
  %v5277 = vsel %vm1009, %v5205, %v5207
  %v5278 = vsel %vm1009, %v5209, %v5211
  %v5279 = vsel %vm1009, %v5211, %v5213
  %v5280 = vsel %vm1009, %v5213, %v5215
  %v5281 = vsel %vm1009, %v5215, %v5217
  %v5282 = vsel %vm1009, %v5217, %v5219
  %v5283 = vsel %vm1009, %v5219, %v5221
  %v5284 = vsel %vm1009, %v5223, %v5225
  %v5285 = vsel %vm1009, %v5225, %v5227
  %v5286 = vsel %vm1009, %v5227, %v5229
  %v5287 = vsel %vm1009, %v5229, %v5231
  %v5288 = vsel %vm1009, %v5231, %v5233
  %v5289 = vsel %vm1009, %v5233, %v5235
  %5344 = vmatprep.subr.mxu0 0.0
  %5345 = vmatpush1.msra.mxu0 0.0
  %5346 = vmatprep.subr.mxu0 0.0
  %5347 = vmatpush1.msra.mxu0 0.0
  %5348 = vmatprep.subr.mxu0 0.0
  %5349 = vmatpush1.msra.mxu0 0.0
  %5350 = vmatprep.subr.mxu0 0.0
  %5351 = vmatpush1.msra.mxu0 0.0
  %5352 = vmatprep.subr.mxu0 0.0
  %5353 = vmatpush1.msra.mxu0 0.0
  %5354 = vmatprep.subr.mxu0 0.0
  %5355 = vmatpush1.msra.mxu0 0.0
  %5356 = vmatprep.subr.mxu0 0.0
  %5357 = vmatpush1.msra.mxu0 0.0
  %5358 = vmatprep.subr.mxu0 %v5285
  %5359 = vmatpush1.msra.mxu0 %v5284
  %5360 = vmatprep.subr.mxu0 %v5279
  %5361 = vmatpush1.msra.mxu0 %v5278
  %5362 = vmatprep.subr.mxu0 %v5273
  %5363 = vmatpush1.msra.mxu0 %v5272
  %5364 = vmatprep.subr.mxu0 %v5267
  %5365 = vmatpush1.msra.mxu0 %v5266
  %5366 = vmatprep.subr.mxu0 %v5261
  %5367 = vmatpush1.msra.mxu0 %v5260
  %5368 = vmatprep.subr.mxu0 %v5255
  %5369 = vmatpush1.msra.mxu0 %v5254
  %5370 = vmatprep.subr.mxu0 %v5249
  %5371 = vmatpush1.msra.mxu0 %v5248
  %5372 = vmatprep.subr.mxu0 %v5243
  %5373 = vmatpush1.msra.mxu0 %v5242
  %5374 = vmatprep.subr.mxu0 %v5237
  %5375 = vmatpush1.msra.mxu0 %v5236
  %5376 = vmatprep.subr.mxu0 0.0
  %5377 = vmatpush2.msra.mxu0 0.0
  %5378 = vmatprep.subr.mxu0 0.0
  %5379 = vmatpush2.msra.mxu0 0.0
  %5380 = vmatprep.subr.mxu0 0.0
  %5381 = vmatpush2.msra.mxu0 0.0
  %5382 = vmatprep.subr.mxu0 0.0
  %5383 = vmatpush2.msra.mxu0 0.0
  %5384 = vmatprep.subr.mxu0 0.0
  %5385 = vmatpush2.msra.mxu0 0.0
  %5386 = vmatprep.subr.mxu0 0.0
  %5387 = vmatpush2.msra.mxu0 0.0
  %5388 = vmatprep.subr.mxu0 0.0
  %5389 = vmatpush2.msra.mxu0 0.0
  %5390 = vmatprep.subr.mxu0 0.0
  %5391 = vmatpush2.msra.mxu0 0.0
  %5392 = vmatprep.subr.mxu0 0.0
  %5393 = vmatpush2.msra.mxu0 0.0
  %5394 = vmatprep.subr.mxu0 0.0
  %5395 = vmatpush2.msra.mxu0 0.0
  %5396 = vmatprep.subr.mxu0 0.0
  %5397 = vmatpush2.msra.mxu0 0.0
  %5398 = vmatprep.subr.mxu0 0.0
  %5399 = vmatpush2.msra.mxu0 0.0
  %5400 = vmatprep.subr.mxu0 0.0
  %5401 = vmatpush2.msra.mxu0 0.0
  %5402 = vmatprep.subr.mxu0 0.0
  %5403 = vmatpush2.msra.mxu0 0.0
  %5404 = vmatprep.subr.mxu0 0.0
  %5405 = vmatpush2.msra.mxu0 0.0
  %5406 = vmatprep.subr.mxu0 0.0
  %5407 = vmatpush2.msra.mxu0 0.0
  %5408 = vmatprep.mubr.f32.mxu0 0.0
  %5409 = vmatmul.mubr.f32.gmra.mxu0 %v2300
  %v5410 = vpop.f32.mrf.mxu0
  %v5411 = vadd.f32 %v2064, %v5410
  %v5412 = vpop.f32.mrf.mxu0
  %v5413 = vadd.f32 %v2064, %v5412
  %5414 = vdwg.mxu0
  %5415 = vmatprep.subr.mxu0 0.0
  %5416 = vmatpush1.msra.mxu0 0.0
  %5417 = vmatprep.subr.mxu0 0.0
  %5418 = vmatpush1.msra.mxu0 0.0
  %5419 = vmatprep.subr.mxu0 0.0
  %5420 = vmatpush1.msra.mxu0 0.0
  %5421 = vmatprep.subr.mxu0 0.0
  %5422 = vmatpush1.msra.mxu0 0.0
  %5423 = vmatprep.subr.mxu0 0.0
  %5424 = vmatpush1.msra.mxu0 0.0
  %5425 = vmatprep.subr.mxu0 0.0
  %5426 = vmatpush1.msra.mxu0 0.0
  %5427 = vmatprep.subr.mxu0 0.0
  %5428 = vmatpush1.msra.mxu0 0.0
  %5429 = vmatprep.subr.mxu0 %v5287
  %5430 = vmatpush1.msra.mxu0 %v5286
  %5431 = vmatprep.subr.mxu0 %v5281
  %5432 = vmatpush1.msra.mxu0 %v5280
  %5433 = vmatprep.subr.mxu0 %v5275
  %5434 = vmatpush1.msra.mxu0 %v5274
  %5435 = vmatprep.subr.mxu0 %v5269
  %5436 = vmatpush1.msra.mxu0 %v5268
  %5437 = vmatprep.subr.mxu0 %v5263
  %5438 = vmatpush1.msra.mxu0 %v5262
  %5439 = vmatprep.subr.mxu0 %v5257
  %5440 = vmatpush1.msra.mxu0 %v5256
  %5441 = vmatprep.subr.mxu0 %v5251
  %5442 = vmatpush1.msra.mxu0 %v5250
  %5443 = vmatprep.subr.mxu0 %v5245
  %5444 = vmatpush1.msra.mxu0 %v5244
  %5445 = vmatprep.subr.mxu0 %v5239
  %5446 = vmatpush1.msra.mxu0 %v5238
  %5447 = vmatprep.subr.mxu0 0.0
  %5448 = vmatpush2.msra.mxu0 0.0
  %5449 = vmatprep.subr.mxu0 0.0
  %5450 = vmatpush2.msra.mxu0 0.0
  %5451 = vmatprep.subr.mxu0 0.0
  %5452 = vmatpush2.msra.mxu0 0.0
  %5453 = vmatprep.subr.mxu0 0.0
  %5454 = vmatpush2.msra.mxu0 0.0
  %5455 = vmatprep.subr.mxu0 0.0
  %5456 = vmatpush2.msra.mxu0 0.0
  %5457 = vmatprep.subr.mxu0 0.0
  %5458 = vmatpush2.msra.mxu0 0.0
  %5459 = vmatprep.subr.mxu0 0.0
  %5460 = vmatpush2.msra.mxu0 0.0
  %5461 = vmatprep.subr.mxu0 0.0
  %5462 = vmatpush2.msra.mxu0 0.0
  %5463 = vmatprep.subr.mxu0 0.0
  %5464 = vmatpush2.msra.mxu0 0.0
  %5465 = vmatprep.subr.mxu0 0.0
  %5466 = vmatpush2.msra.mxu0 0.0
  %5467 = vmatprep.subr.mxu0 0.0
  %5468 = vmatpush2.msra.mxu0 0.0
  %5469 = vmatprep.subr.mxu0 0.0
  %5470 = vmatpush2.msra.mxu0 0.0
  %5471 = vmatprep.subr.mxu0 0.0
  %5472 = vmatpush2.msra.mxu0 0.0
  %5473 = vmatprep.subr.mxu0 0.0
  %5474 = vmatpush2.msra.mxu0 0.0
  %5475 = vmatprep.subr.mxu0 0.0
  %5476 = vmatpush2.msra.mxu0 0.0
  %5477 = vmatprep.subr.mxu0 0.0
  %5478 = vmatpush2.msra.mxu0 0.0
  %5479 = vmatprep.mubr.f32.mxu0 0.0
  %5480 = vmatmul.mubr.f32.gmra.mxu0 %v2300
  %v5481 = vpop.f32.mrf.mxu0
  %v5482 = vadd.f32 %v2064, %v5481
  %v5483 = vpop.f32.mrf.mxu0
  %v5484 = vadd.f32 %v2064, %v5483
  %5485 = vdwg.mxu0
  %5486 = vmatprep.subr.mxu0 0.0
  %5487 = vmatpush1.msra.mxu0 0.0
  %5488 = vmatprep.subr.mxu0 0.0
  %5489 = vmatpush1.msra.mxu0 0.0
  %5490 = vmatprep.subr.mxu0 0.0
  %5491 = vmatpush1.msra.mxu0 0.0
  %5492 = vmatprep.subr.mxu0 0.0
  %5493 = vmatpush1.msra.mxu0 0.0
  %5494 = vmatprep.subr.mxu0 0.0
  %5495 = vmatpush1.msra.mxu0 0.0
  %5496 = vmatprep.subr.mxu0 0.0
  %5497 = vmatpush1.msra.mxu0 0.0
  %5498 = vmatprep.subr.mxu0 0.0
  %5499 = vmatpush1.msra.mxu0 0.0
  %5500 = vmatprep.subr.mxu0 %v5289
  %5501 = vmatpush1.msra.mxu0 %v5288
  %5502 = vmatprep.subr.mxu0 %v5283
  %5503 = vmatpush1.msra.mxu0 %v5282
  %5504 = vmatprep.subr.mxu0 %v5277
  %5505 = vmatpush1.msra.mxu0 %v5276
  %5506 = vmatprep.subr.mxu0 %v5271
  %5507 = vmatpush1.msra.mxu0 %v5270
  %5508 = vmatprep.subr.mxu0 %v5265
  %5509 = vmatpush1.msra.mxu0 %v5264
  %5510 = vmatprep.subr.mxu0 %v5259
  %5511 = vmatpush1.msra.mxu0 %v5258
  %5512 = vmatprep.subr.mxu0 %v5253
  %5513 = vmatpush1.msra.mxu0 %v5252
  %5514 = vmatprep.subr.mxu0 %v5247
  %5515 = vmatpush1.msra.mxu0 %v5246
  %5516 = vmatprep.subr.mxu0 %v5241
  %5517 = vmatpush1.msra.mxu0 %v5240
  %5518 = vmatprep.subr.mxu0 0.0
  %5519 = vmatpush2.msra.mxu0 0.0
  %5520 = vmatprep.subr.mxu0 0.0
  %5521 = vmatpush2.msra.mxu0 0.0
  %5522 = vmatprep.subr.mxu0 0.0
  %5523 = vmatpush2.msra.mxu0 0.0
  %5524 = vmatprep.subr.mxu0 0.0
  %5525 = vmatpush2.msra.mxu0 0.0
  %5526 = vmatprep.subr.mxu0 0.0
  %5527 = vmatpush2.msra.mxu0 0.0
  %5528 = vmatprep.subr.mxu0 0.0
  %5529 = vmatpush2.msra.mxu0 0.0
  %5530 = vmatprep.subr.mxu0 0.0
  %5531 = vmatpush2.msra.mxu0 0.0
  %5532 = vmatprep.subr.mxu0 0.0
  %5533 = vmatpush2.msra.mxu0 0.0
  %5534 = vmatprep.subr.mxu0 0.0
  %5535 = vmatpush2.msra.mxu0 0.0
  %5536 = vmatprep.subr.mxu0 0.0
  %5537 = vmatpush2.msra.mxu0 0.0
  %5538 = vmatprep.subr.mxu0 0.0
  %5539 = vmatpush2.msra.mxu0 0.0
  %5540 = vmatprep.subr.mxu0 0.0
  %5541 = vmatpush2.msra.mxu0 0.0
  %5542 = vmatprep.subr.mxu0 0.0
  %5543 = vmatpush2.msra.mxu0 0.0
  %5544 = vmatprep.subr.mxu0 0.0
  %5545 = vmatpush2.msra.mxu0 0.0
  %5546 = vmatprep.subr.mxu0 0.0
  %5547 = vmatpush2.msra.mxu0 0.0
  %5548 = vmatprep.subr.mxu0 0.0
  %5549 = vmatpush2.msra.mxu0 0.0
  %5550 = vmatprep.mubr.f32.mxu0 0.0
  %5551 = vmatmul.mubr.f32.gmra.mxu0 %v2300
  %v5552 = vpop.f32.mrf.mxu0
  %v5553 = vadd.f32 %v2064, %v5552
  %v5554 = vpop.f32.mrf.mxu0
  %v5555 = vadd.f32 %v2064, %v5554
  %5556 = vdwg.mxu0
  %v5557 = vmax.f32 %v5411, 0.0
  %v5558 = vmax.f32 %v5413, 0.0
  %v5559 = vmax.f32 %v5482, 0.0
  %v5560 = vmax.f32 %v5484, 0.0
  %v5561 = vmax.f32 %v5553, 0.0
  %v5562 = vmax.f32 %v5555, 0.0
  %v5563 = vmul.f32 %v5557, %v367
  %v5564 = vmul.f32 %v5558, %v371
  %v5565 = vmul.f32 %v5559, %v375
  %v5566 = vmul.f32 %v5560, %v379
  %v5567 = vmul.f32 %v5561, %v383
  %v5568 = vmul.f32 %v5562, %v387
  %v5569 = vld [vmem:[%s10] sm:$0xff]
  %v5570 = vld [vmem:[%s10 + $0x8] sm:$0xff]
  %v5571 = vld [vmem:[%s10 + $0x10] sm:$0xff]
  %v5572 = vld [vmem:[%s10 + $0x18] sm:$0xff]
  %v5573 = vld [vmem:[%s11] sm:$0xff]
  %v5574 = vld [vmem:[%s11 + $0x8] sm:$0xff]
  %v5575 = vld [vmem:[%s11 + $0x10] sm:$0xff]
  %v5576 = vld [vmem:[%s11 + $0x18] sm:$0xff]
  %5578 = vset.pattern.permute.xlu0 0
  %5579 = vperm.xlu0 %5578, %v5573
  %v5580 = vpop.permute.xlu0 %5579
  %5583 = vset.pattern.permute.xlu0 0
  %5584 = vperm.xlu0 %5583, %v5574
  %v5585 = vpop.permute.xlu0 %5584
  %5588 = vset.pattern.permute.xlu0 0
  %5589 = vperm.xlu0 %5588, %v5575
  %v5590 = vpop.permute.xlu0 %5589
  %5593 = vset.pattern.permute.xlu0 0
  %5594 = vperm.xlu0 %5593, %v5576
  %v5595 = vpop.permute.xlu0 %5594
  %v5598 = vsel %vm1582, %v5569, 0
  %v5601 = vsel %vm1582, %v5570, 0
  %v5604 = vsel %vm1582, %v5571, 0
  %v5607 = vsel %vm1582, %v5572, 0
  %5609 = vmatprep.subr.mxu0 0.0
  %5610 = vmatpush1.msra.mxu0 0.0
  %5611 = vmatprep.subr.mxu0 0.0
  %5612 = vmatpush1.msra.mxu0 0.0
  %5613 = vmatprep.subr.mxu0 0.0
  %5614 = vmatpush1.msra.mxu0 0.0
  %5615 = vmatprep.subr.mxu0 0.0
  %5616 = vmatpush1.msra.mxu0 0.0
  %5617 = vmatprep.subr.mxu0 0.0
  %5618 = vmatpush1.msra.mxu0 0.0
  %5619 = vmatprep.subr.mxu0 0.0
  %5620 = vmatpush1.msra.mxu0 0.0
  %5621 = vmatprep.subr.mxu0 0.0
  %5622 = vmatpush1.msra.mxu0 0.0
  %5623 = vmatprep.subr.mxu0 0.0
  %5624 = vmatpush1.msra.mxu0 0.0
  %5625 = vmatprep.subr.mxu0 0.0
  %5626 = vmatpush1.msra.mxu0 0.0
  %5627 = vmatprep.subr.mxu0 0.0
  %5628 = vmatpush1.msra.mxu0 0.0
  %5629 = vmatprep.subr.mxu0 0.0
  %5630 = vmatpush1.msra.mxu0 0.0
  %5631 = vmatprep.subr.mxu0 0.0
  %5632 = vmatpush1.msra.mxu0 0.0
  %5633 = vmatprep.subr.mxu0 %v5564
  %5634 = vmatpush1.msra.mxu0 %v5563
  %5635 = vmatprep.subr.mxu0 %v4346
  %5636 = vmatpush1.msra.mxu0 %v4345
  %5637 = vmatprep.subr.mxu0 %v3128
  %5638 = vmatpush1.msra.mxu0 %v3127
  %5639 = vmatprep.subr.mxu0 %v1887
  %5640 = vmatpush1.msra.mxu0 %v1886
  %5641 = vmatprep.subr.mxu0 0.0
  %5642 = vmatpush2.msra.mxu0 0.0
  %5643 = vmatprep.subr.mxu0 0.0
  %5644 = vmatpush2.msra.mxu0 0.0
  %5645 = vmatprep.subr.mxu0 0.0
  %5646 = vmatpush2.msra.mxu0 0.0
  %5647 = vmatprep.subr.mxu0 0.0
  %5648 = vmatpush2.msra.mxu0 0.0
  %5649 = vmatprep.subr.mxu0 0.0
  %5650 = vmatpush2.msra.mxu0 0.0
  %5651 = vmatprep.subr.mxu0 0.0
  %5652 = vmatpush2.msra.mxu0 0.0
  %5653 = vmatprep.subr.mxu0 0.0
  %5654 = vmatpush2.msra.mxu0 0.0
  %5655 = vmatprep.subr.mxu0 0.0
  %5656 = vmatpush2.msra.mxu0 0.0
  %5657 = vmatprep.subr.mxu0 0.0
  %5658 = vmatpush2.msra.mxu0 0.0
  %5659 = vmatprep.subr.mxu0 0.0
  %5660 = vmatpush2.msra.mxu0 0.0
  %5661 = vmatprep.subr.mxu0 0.0
  %5662 = vmatpush2.msra.mxu0 0.0
  %5663 = vmatprep.subr.mxu0 0.0
  %5664 = vmatpush2.msra.mxu0 0.0
  %5665 = vmatprep.subr.mxu0 0.0
  %5666 = vmatpush2.msra.mxu0 0.0
  %5667 = vmatprep.subr.mxu0 0.0
  %5668 = vmatpush2.msra.mxu0 0.0
  %5669 = vmatprep.subr.mxu0 0.0
  %5670 = vmatpush2.msra.mxu0 0.0
  %5671 = vmatprep.subr.mxu0 0.0
  %5672 = vmatpush2.msra.mxu0 0.0
  %5673 = vmatprep.mubr.f32.mxu0 0.0
  %5674 = vmatmul.mubr.f32.gmra.mxu0 %v5598
  %v5675 = vpop.f32.mrf.mxu0
  %v5676 = vadd.f32 %v5580, %v5675
  %v5677 = vpop.f32.mrf.mxu0
  %v5678 = vadd.f32 %v5580, %v5677
  %5679 = vmatprep.mubr.f32.mxu0 0.0
  %5680 = vmatmul.mubr.f32.gmra.mxu0 %v5601
  %v5681 = vpop.f32.mrf.mxu0
  %v5682 = vadd.f32 %v5585, %v5681
  %v5683 = vpop.f32.mrf.mxu0
  %v5684 = vadd.f32 %v5585, %v5683
  %5685 = vmatprep.mubr.f32.mxu0 0.0
  %5686 = vmatmul.mubr.f32.gmra.mxu0 %v5604
  %v5687 = vpop.f32.mrf.mxu0
  %v5688 = vadd.f32 %v5590, %v5687
  %v5689 = vpop.f32.mrf.mxu0
  %v5690 = vadd.f32 %v5590, %v5689
  %5691 = vmatprep.mubr.f32.mxu0 0.0
  %5692 = vmatmul.mubr.f32.gmra.mxu0 %v5607
  %v5693 = vpop.f32.mrf.mxu0
  %v5694 = vadd.f32 %v5595, %v5693
  %v5695 = vpop.f32.mrf.mxu0
  %v5696 = vadd.f32 %v5595, %v5695
  %5697 = vdwg.mxu0
  %5698 = vmatprep.subr.mxu0 0.0
  %5699 = vmatpush1.msra.mxu0 0.0
  %5700 = vmatprep.subr.mxu0 0.0
  %5701 = vmatpush1.msra.mxu0 0.0
  %5702 = vmatprep.subr.mxu0 0.0
  %5703 = vmatpush1.msra.mxu0 0.0
  %5704 = vmatprep.subr.mxu0 0.0
  %5705 = vmatpush1.msra.mxu0 0.0
  %5706 = vmatprep.subr.mxu0 0.0
  %5707 = vmatpush1.msra.mxu0 0.0
  %5708 = vmatprep.subr.mxu0 0.0
  %5709 = vmatpush1.msra.mxu0 0.0
  %5710 = vmatprep.subr.mxu0 0.0
  %5711 = vmatpush1.msra.mxu0 0.0
  %5712 = vmatprep.subr.mxu0 0.0
  %5713 = vmatpush1.msra.mxu0 0.0
  %5714 = vmatprep.subr.mxu0 0.0
  %5715 = vmatpush1.msra.mxu0 0.0
  %5716 = vmatprep.subr.mxu0 0.0
  %5717 = vmatpush1.msra.mxu0 0.0
  %5718 = vmatprep.subr.mxu0 0.0
  %5719 = vmatpush1.msra.mxu0 0.0
  %5720 = vmatprep.subr.mxu0 0.0
  %5721 = vmatpush1.msra.mxu0 0.0
  %5722 = vmatprep.subr.mxu0 %v5566
  %5723 = vmatpush1.msra.mxu0 %v5565
  %5724 = vmatprep.subr.mxu0 %v4348
  %5725 = vmatpush1.msra.mxu0 %v4347
  %5726 = vmatprep.subr.mxu0 %v3130
  %5727 = vmatpush1.msra.mxu0 %v3129
  %5728 = vmatprep.subr.mxu0 %v1889
  %5729 = vmatpush1.msra.mxu0 %v1888
  %5730 = vmatprep.subr.mxu0 0.0
  %5731 = vmatpush2.msra.mxu0 0.0
  %5732 = vmatprep.subr.mxu0 0.0
  %5733 = vmatpush2.msra.mxu0 0.0
  %5734 = vmatprep.subr.mxu0 0.0
  %5735 = vmatpush2.msra.mxu0 0.0
  %5736 = vmatprep.subr.mxu0 0.0
  %5737 = vmatpush2.msra.mxu0 0.0
  %5738 = vmatprep.subr.mxu0 0.0
  %5739 = vmatpush2.msra.mxu0 0.0
  %5740 = vmatprep.subr.mxu0 0.0
  %5741 = vmatpush2.msra.mxu0 0.0
  %5742 = vmatprep.subr.mxu0 0.0
  %5743 = vmatpush2.msra.mxu0 0.0
  %5744 = vmatprep.subr.mxu0 0.0
  %5745 = vmatpush2.msra.mxu0 0.0
  %5746 = vmatprep.subr.mxu0 0.0
  %5747 = vmatpush2.msra.mxu0 0.0
  %5748 = vmatprep.subr.mxu0 0.0
  %5749 = vmatpush2.msra.mxu0 0.0
  %5750 = vmatprep.subr.mxu0 0.0
  %5751 = vmatpush2.msra.mxu0 0.0
  %5752 = vmatprep.subr.mxu0 0.0
  %5753 = vmatpush2.msra.mxu0 0.0
  %5754 = vmatprep.subr.mxu0 0.0
  %5755 = vmatpush2.msra.mxu0 0.0
  %5756 = vmatprep.subr.mxu0 0.0
  %5757 = vmatpush2.msra.mxu0 0.0
  %5758 = vmatprep.subr.mxu0 0.0
  %5759 = vmatpush2.msra.mxu0 0.0
  %5760 = vmatprep.subr.mxu0 0.0
  %5761 = vmatpush2.msra.mxu0 0.0
  %5762 = vmatprep.mubr.f32.mxu0 0.0
  %5763 = vmatmul.mubr.f32.gmra.mxu0 %v5598
  %v5764 = vpop.f32.mrf.mxu0
  %v5765 = vadd.f32 %v5580, %v5764
  %v5766 = vpop.f32.mrf.mxu0
  %v5767 = vadd.f32 %v5580, %v5766
  %5768 = vmatprep.mubr.f32.mxu0 0.0
  %5769 = vmatmul.mubr.f32.gmra.mxu0 %v5601
  %v5770 = vpop.f32.mrf.mxu0
  %v5771 = vadd.f32 %v5585, %v5770
  %v5772 = vpop.f32.mrf.mxu0
  %v5773 = vadd.f32 %v5585, %v5772
  %5774 = vmatprep.mubr.f32.mxu0 0.0
  %5775 = vmatmul.mubr.f32.gmra.mxu0 %v5604
  %v5776 = vpop.f32.mrf.mxu0
  %v5777 = vadd.f32 %v5590, %v5776
  %v5778 = vpop.f32.mrf.mxu0
  %v5779 = vadd.f32 %v5590, %v5778
  %5780 = vmatprep.mubr.f32.mxu0 0.0
  %5781 = vmatmul.mubr.f32.gmra.mxu0 %v5607
  %v5782 = vpop.f32.mrf.mxu0
  %v5783 = vadd.f32 %v5595, %v5782
  %v5784 = vpop.f32.mrf.mxu0
  %v5785 = vadd.f32 %v5595, %v5784
  %5786 = vdwg.mxu0
  %5787 = vmatprep.subr.mxu0 0.0
  %5788 = vmatpush1.msra.mxu0 0.0
  %5789 = vmatprep.subr.mxu0 0.0
  %5790 = vmatpush1.msra.mxu0 0.0
  %5791 = vmatprep.subr.mxu0 0.0
  %5792 = vmatpush1.msra.mxu0 0.0
  %5793 = vmatprep.subr.mxu0 0.0
  %5794 = vmatpush1.msra.mxu0 0.0
  %5795 = vmatprep.subr.mxu0 0.0
  %5796 = vmatpush1.msra.mxu0 0.0
  %5797 = vmatprep.subr.mxu0 0.0
  %5798 = vmatpush1.msra.mxu0 0.0
  %5799 = vmatprep.subr.mxu0 0.0
  %5800 = vmatpush1.msra.mxu0 0.0
  %5801 = vmatprep.subr.mxu0 0.0
  %5802 = vmatpush1.msra.mxu0 0.0
  %5803 = vmatprep.subr.mxu0 0.0
  %5804 = vmatpush1.msra.mxu0 0.0
  %5805 = vmatprep.subr.mxu0 0.0
  %5806 = vmatpush1.msra.mxu0 0.0
  %5807 = vmatprep.subr.mxu0 0.0
  %5808 = vmatpush1.msra.mxu0 0.0
  %5809 = vmatprep.subr.mxu0 0.0
  %5810 = vmatpush1.msra.mxu0 0.0
  %5811 = vmatprep.subr.mxu0 %v5568
  %5812 = vmatpush1.msra.mxu0 %v5567
  %5813 = vmatprep.subr.mxu0 %v4350
  %5814 = vmatpush1.msra.mxu0 %v4349
  %5815 = vmatprep.subr.mxu0 %v3132
  %5816 = vmatpush1.msra.mxu0 %v3131
  %5817 = vmatprep.subr.mxu0 %v1891
  %5818 = vmatpush1.msra.mxu0 %v1890
  %5819 = vmatprep.subr.mxu0 0.0
  %5820 = vmatpush2.msra.mxu0 0.0
  %5821 = vmatprep.subr.mxu0 0.0
  %5822 = vmatpush2.msra.mxu0 0.0
  %5823 = vmatprep.subr.mxu0 0.0
  %5824 = vmatpush2.msra.mxu0 0.0
  %5825 = vmatprep.subr.mxu0 0.0
  %5826 = vmatpush2.msra.mxu0 0.0
  %5827 = vmatprep.subr.mxu0 0.0
  %5828 = vmatpush2.msra.mxu0 0.0
  %5829 = vmatprep.subr.mxu0 0.0
  %5830 = vmatpush2.msra.mxu0 0.0
  %5831 = vmatprep.subr.mxu0 0.0
  %5832 = vmatpush2.msra.mxu0 0.0
  %5833 = vmatprep.subr.mxu0 0.0
  %5834 = vmatpush2.msra.mxu0 0.0
  %5835 = vmatprep.subr.mxu0 0.0
  %5836 = vmatpush2.msra.mxu0 0.0
  %5837 = vmatprep.subr.mxu0 0.0
  %5838 = vmatpush2.msra.mxu0 0.0
  %5839 = vmatprep.subr.mxu0 0.0
  %5840 = vmatpush2.msra.mxu0 0.0
  %5841 = vmatprep.subr.mxu0 0.0
  %5842 = vmatpush2.msra.mxu0 0.0
  %5843 = vmatprep.subr.mxu0 0.0
  %5844 = vmatpush2.msra.mxu0 0.0
  %5845 = vmatprep.subr.mxu0 0.0
  %5846 = vmatpush2.msra.mxu0 0.0
  %5847 = vmatprep.subr.mxu0 0.0
  %5848 = vmatpush2.msra.mxu0 0.0
  %5849 = vmatprep.subr.mxu0 0.0
  %5850 = vmatpush2.msra.mxu0 0.0
  %5851 = vmatprep.mubr.f32.mxu0 0.0
  %5852 = vmatmul.mubr.f32.gmra.mxu0 %v5598
  %v5853 = vpop.f32.mrf.mxu0
  %v5854 = vadd.f32 %v5580, %v5853
  %v5855 = vpop.f32.mrf.mxu0
  %v5856 = vadd.f32 %v5580, %v5855
  %5857 = vmatprep.mubr.f32.mxu0 0.0
  %5858 = vmatmul.mubr.f32.gmra.mxu0 %v5601
  %v5859 = vpop.f32.mrf.mxu0
  %v5860 = vadd.f32 %v5585, %v5859
  %v5861 = vpop.f32.mrf.mxu0
  %v5862 = vadd.f32 %v5585, %v5861
  %5863 = vmatprep.mubr.f32.mxu0 0.0
  %5864 = vmatmul.mubr.f32.gmra.mxu0 %v5604
  %v5865 = vpop.f32.mrf.mxu0
  %v5866 = vadd.f32 %v5590, %v5865
  %v5867 = vpop.f32.mrf.mxu0
  %v5868 = vadd.f32 %v5590, %v5867
  %5869 = vmatprep.mubr.f32.mxu0 0.0
  %5870 = vmatmul.mubr.f32.gmra.mxu0 %v5607
  %v5871 = vpop.f32.mrf.mxu0
  %v5872 = vadd.f32 %v5595, %v5871
  %v5873 = vpop.f32.mrf.mxu0
  %v5874 = vadd.f32 %v5595, %v5873
  %5875 = vdwg.mxu0
  %v5876 = vmax.f32 %v5676, 0.0
  %v5877 = vmax.f32 %v5678, 0.0
  %v5878 = vmax.f32 %v5765, 0.0
  %v5879 = vmax.f32 %v5767, 0.0
  %v5880 = vmax.f32 %v5854, 0.0
  %v5881 = vmax.f32 %v5856, 0.0
  %v5882 = vmax.f32 %v5682, 0.0
  %v5883 = vmax.f32 %v5684, 0.0
  %v5884 = vmax.f32 %v5771, 0.0
  %v5885 = vmax.f32 %v5773, 0.0
  %v5886 = vmax.f32 %v5860, 0.0
  %v5887 = vmax.f32 %v5862, 0.0
  %v5888 = vmax.f32 %v5688, 0.0
  %v5889 = vmax.f32 %v5690, 0.0
  %v5890 = vmax.f32 %v5777, 0.0
  %v5891 = vmax.f32 %v5779, 0.0
  %v5892 = vmax.f32 %v5866, 0.0
  %v5893 = vmax.f32 %v5868, 0.0
  %v5894 = vmax.f32 %v5694, 0.0
  %v5895 = vmax.f32 %v5696, 0.0
  %v5896 = vmax.f32 %v5783, 0.0
  %v5897 = vmax.f32 %v5785, 0.0
  %v5898 = vmax.f32 %v5872, 0.0
  %v5899 = vmax.f32 %v5874, 0.0
  %v5900 = vmul.f32 %v5876, %v367
  %v5901 = vmul.f32 %v5877, %v371
  %v5902 = vmul.f32 %v5878, %v375
  %v5903 = vmul.f32 %v5879, %v379
  %v5904 = vmul.f32 %v5880, %v383
  %v5905 = vmul.f32 %v5881, %v387
  %v5906 = vmul.f32 %v5882, %v367
  %v5907 = vmul.f32 %v5883, %v371
  %v5908 = vmul.f32 %v5884, %v375
  %v5909 = vmul.f32 %v5885, %v379
  %v5910 = vmul.f32 %v5886, %v383
  %v5911 = vmul.f32 %v5887, %v387
  %v5912 = vmul.f32 %v5888, %v367
  %v5913 = vmul.f32 %v5889, %v371
  %v5914 = vmul.f32 %v5890, %v375
  %v5915 = vmul.f32 %v5891, %v379
  %v5916 = vmul.f32 %v5892, %v383
  %v5917 = vmul.f32 %v5893, %v387
  %v5918 = vmul.f32 %v5894, %v367
  %v5919 = vmul.f32 %v5895, %v371
  %v5920 = vmul.f32 %v5896, %v375
  %v5921 = vmul.f32 %v5897, %v379
  %v5922 = vmul.f32 %v5898, %v383
  %v5923 = vmul.f32 %v5899, %v387
  %v5924 = vadd.f32 %v1530, %v5900
  %v5925 = vadd.f32 %v1531, %v5901
  %v5926 = vadd.f32 %v1532, %v5902
  %v5927 = vadd.f32 %v1533, %v5903
  %v5928 = vadd.f32 %v1534, %v5904
  %v5929 = vadd.f32 %v1535, %v5905
  %v5930 = vadd.f32 %v1536, %v5906
  %v5931 = vadd.f32 %v1537, %v5907
  %v5932 = vadd.f32 %v1538, %v5908
  %v5933 = vadd.f32 %v1539, %v5909
  %v5934 = vadd.f32 %v1540, %v5910
  %v5935 = vadd.f32 %v1541, %v5911
  %v5936 = vadd.f32 %v1542, %v5912
  %v5937 = vadd.f32 %v1543, %v5913
  %v5938 = vadd.f32 %v1544, %v5914
  %v5939 = vadd.f32 %v1545, %v5915
  %v5940 = vadd.f32 %v1546, %v5916
  %v5941 = vadd.f32 %v1547, %v5917
  %v5942 = vadd.f32 %v1548, %v5918
  %v5943 = vadd.f32 %v1549, %v5919
  %v5944 = vadd.f32 %v1550, %v5920
  %v5945 = vadd.f32 %v1551, %v5921
  %v5946 = vadd.f32 %v1552, %v5922
  %v5947 = vadd.f32 %v1553, %v5923
  %v5948 = vand.u32 2147483647, %v5924
  %v5949 = vand.u32 2147483647, %v5925
  %v5950 = vand.u32 2147483647, %v5926
  %v5951 = vand.u32 2147483647, %v5930
  %v5952 = vand.u32 2147483647, %v5931
  %v5953 = vand.u32 2147483647, %v5932
  %v5954 = vand.u32 2147483647, %v5936
  %v5955 = vand.u32 2147483647, %v5937
  %v5956 = vand.u32 2147483647, %v5938
  %v5957 = vand.u32 2147483647, %v5942
  %v5958 = vand.u32 2147483647, %v5943
  %v5959 = vand.u32 2147483647, %v5944
  %v5960 = vadd.f32 %v5948, %v5951
  %v5961 = vadd.f32 %v5960, %v5954
  %v5962 = vadd.f32 %v5961, %v5957
  %v5963 = vrot.slane %v5962, 4
  %v5964 = vadd.f32 %v5962, %v5963
  %v5965 = vrot.slane %v5964, 2
  %v5966 = vadd.f32 %v5964, %v5965
  %v5967 = vrot.slane %v5966, 1
  %v5968 = vadd.f32 %v5966, %v5967
  %v5969 = vadd.f32 %v5949, %v5952
  %v5970 = vadd.f32 %v5969, %v5955
  %v5971 = vadd.f32 %v5970, %v5958
  %v5972 = vrot.slane %v5971, 4
  %v5973 = vadd.f32 %v5971, %v5972
  %v5974 = vrot.slane %v5973, 2
  %v5975 = vadd.f32 %v5973, %v5974
  %v5976 = vrot.slane %v5975, 1
  %v5977 = vadd.f32 %v5975, %v5976
  %v5978 = vadd.f32 %v5950, %v5953
  %v5979 = vadd.f32 %v5978, %v5956
  %v5980 = vadd.f32 %v5979, %v5959
  %v5981 = vrot.slane %v5980, 4
  %v5982 = vadd.f32 %v5980, %v5981
  %v5983 = vrot.slane %v5982, 2
  %v5984 = vadd.f32 %v5982, %v5983
  %v5985 = vrot.slane %v5984, 1
  %v5986 = vadd.f32 %v5984, %v5985
  %v5987 = vand.u32 2147483647, %v5927
  %v5988 = vand.u32 2147483647, %v5928
  %v5989 = vand.u32 2147483647, %v5929
  %v5990 = vand.u32 2147483647, %v5933
  %v5991 = vand.u32 2147483647, %v5934
  %v5992 = vand.u32 2147483647, %v5935
  %v5993 = vand.u32 2147483647, %v5939
  %v5994 = vand.u32 2147483647, %v5940
  %v5995 = vand.u32 2147483647, %v5941
  %v5996 = vand.u32 2147483647, %v5945
  %v5997 = vand.u32 2147483647, %v5946
  %v5998 = vand.u32 2147483647, %v5947
  %v5999 = vadd.f32 %v5987, %v5990
  %v6000 = vadd.f32 %v5999, %v5993
  %v6001 = vadd.f32 %v6000, %v5996
  %v6002 = vrot.slane %v6001, 4
  %v6003 = vadd.f32 %v6001, %v6002
  %v6004 = vrot.slane %v6003, 2
  %v6005 = vadd.f32 %v6003, %v6004
  %v6006 = vrot.slane %v6005, 1
  %v6007 = vadd.f32 %v6005, %v6006
  %v6008 = vadd.f32 %v5988, %v5991
  %v6009 = vadd.f32 %v6008, %v5994
  %v6010 = vadd.f32 %v6009, %v5997
  %v6011 = vrot.slane %v6010, 4
  %v6012 = vadd.f32 %v6010, %v6011
  %v6013 = vrot.slane %v6012, 2
  %v6014 = vadd.f32 %v6012, %v6013
  %v6015 = vrot.slane %v6014, 1
  %v6016 = vadd.f32 %v6014, %v6015
  %v6017 = vadd.f32 %v5989, %v5992
  %v6018 = vadd.f32 %v6017, %v5995
  %v6019 = vadd.f32 %v6018, %v5998
  %v6020 = vrot.slane %v6019, 4
  %v6021 = vadd.f32 %v6019, %v6020
  %v6022 = vrot.slane %v6021, 2
  %v6023 = vadd.f32 %v6021, %v6022
  %v6024 = vrot.slane %v6023, 1
  %v6025 = vadd.f32 %v6023, %v6024
  %v6026 = vmul.f32 %v5968, %v5924
  %v6027 = vmul.f32 %v5977, %v5925
  %v6028 = vmul.f32 %v5986, %v5926
  %v6029 = vmul.f32 %v5968, %v5930
  %v6030 = vmul.f32 %v5977, %v5931
  %v6031 = vmul.f32 %v5986, %v5932
  %v6032 = vmul.f32 %v5968, %v5936
  %v6033 = vmul.f32 %v5977, %v5937
  %v6034 = vmul.f32 %v5986, %v5938
  %v6035 = vmul.f32 %v5968, %v5942
  %v6036 = vmul.f32 %v5977, %v5943
  %v6037 = vmul.f32 %v5986, %v5944
  %v6038 = vmul.f32 %v6007, %v5927
  %v6039 = vmul.f32 %v6016, %v5928
  %v6040 = vmul.f32 %v6025, %v5929
  %v6041 = vmul.f32 %v6007, %v5933
  %v6042 = vmul.f32 %v6016, %v5934
  %v6043 = vmul.f32 %v6025, %v5935
  %v6044 = vmul.f32 %v6007, %v5939
  %v6045 = vmul.f32 %v6016, %v5940
  %v6046 = vmul.f32 %v6025, %v5941
  %v6047 = vmul.f32 %v6007, %v5945
  %v6048 = vmul.f32 %v6016, %v5946
  %v6049 = vmul.f32 %v6025, %v5947
  %v6050 = vadd.f32 %v6026, %v6038
  %v6051 = vadd.f32 %v6027, %v6039
  %v6052 = vadd.f32 %v6028, %v6040
  %v6053 = vadd.f32 %v6029, %v6041
  %v6054 = vadd.f32 %v6030, %v6042
  %v6055 = vadd.f32 %v6031, %v6043
  %v6056 = vadd.f32 %v6032, %v6044
  %v6057 = vadd.f32 %v6033, %v6045
  %v6058 = vadd.f32 %v6034, %v6046
  %v6059 = vadd.f32 %v6035, %v6047
  %v6060 = vadd.f32 %v6036, %v6048
  %v6061 = vadd.f32 %v6037, %v6049
  %v6062 = vadd.f32 %v5968, %v6007
  %v6063 = vadd.f32 %v5977, %v6016
  %v6064 = vadd.f32 %v5986, %v6025
  %v6065 = vadd.f32 %v6062, 1e-12
  %v6066 = vadd.f32 %v6063, 1e-12
  %v6067 = vadd.f32 %v6064, 1e-12
  %v6068 = vrcp.pop %v6065
  %v6069 = vmul.f32 %v6050, %v6068
  %v6070 = vrcp.pop %v6066
  %v6071 = vmul.f32 %v6051, %v6070
  %v6072 = vrcp.pop %v6067
  %v6073 = vmul.f32 %v6052, %v6072
  %v6074 = vmul.f32 %v6053, %v6068
  %v6075 = vmul.f32 %v6054, %v6070
  %v6076 = vmul.f32 %v6055, %v6072
  %v6077 = vmul.f32 %v6056, %v6068
  %v6078 = vmul.f32 %v6057, %v6070
  %v6079 = vmul.f32 %v6058, %v6072
  %v6080 = vmul.f32 %v6059, %v6068
  %v6081 = vmul.f32 %v6060, %v6070
  %v6082 = vmul.f32 %v6061, %v6072
  %6095 = vrot.lane.b32.xlu0 %v6069, 127
  %v6096 = vpop.permute.xlu0 %6095
  %6097 = vrot.lane.b32.xlu0 %v6071, 127
  %v6098 = vpop.permute.xlu0 %6097
  %6099 = vrot.lane.b32.xlu0 %v6073, 127
  %v6100 = vpop.permute.xlu0 %6099
  %6101 = vrot.lane.b32.xlu0 %v6074, 127
  %v6102 = vpop.permute.xlu0 %6101
  %6103 = vrot.lane.b32.xlu0 %v6075, 127
  %v6104 = vpop.permute.xlu0 %6103
  %6105 = vrot.lane.b32.xlu0 %v6076, 127
  %v6106 = vpop.permute.xlu0 %6105
  %6107 = vrot.lane.b32.xlu0 %v6077, 127
  %v6108 = vpop.permute.xlu0 %6107
  %6109 = vrot.lane.b32.xlu0 %v6078, 127
  %v6110 = vpop.permute.xlu0 %6109
  %6111 = vrot.lane.b32.xlu0 %v6079, 127
  %v6112 = vpop.permute.xlu0 %6111
  %6113 = vrot.lane.b32.xlu0 %v6080, 127
  %v6114 = vpop.permute.xlu0 %6113
  %6115 = vrot.lane.b32.xlu0 %v6081, 127
  %v6116 = vpop.permute.xlu0 %6115
  %6117 = vrot.lane.b32.xlu0 %v6082, 127
  %v6118 = vpop.permute.xlu0 %6117
  %v6119 = vsel %vm445, %v420, %v6096
  %v6120 = vsel %vm445, %v6096, %v6098
  %v6121 = vsel %vm445, %v6098, %v6100
  %v6122 = vsel %vm445, %v420, %v6102
  %v6123 = vsel %vm445, %v6102, %v6104
  %v6124 = vsel %vm445, %v6104, %v6106
  %v6125 = vsel %vm445, %v420, %v6108
  %v6126 = vsel %vm445, %v6108, %v6110
  %v6127 = vsel %vm445, %v6110, %v6112
  %v6128 = vsel %vm445, %v420, %v6114
  %v6129 = vsel %vm445, %v6114, %v6116
  %v6130 = vsel %vm445, %v6116, %v6118
  %6131 = vrot.lane.b32.xlu0 %v6069, 126
  %v6132 = vpop.permute.xlu0 %6131
  %6133 = vrot.lane.b32.xlu0 %v6071, 126
  %v6134 = vpop.permute.xlu0 %6133
  %6135 = vrot.lane.b32.xlu0 %v6073, 126
  %v6136 = vpop.permute.xlu0 %6135
  %6137 = vrot.lane.b32.xlu0 %v6074, 126
  %v6138 = vpop.permute.xlu0 %6137
  %6139 = vrot.lane.b32.xlu0 %v6075, 126
  %v6140 = vpop.permute.xlu0 %6139
  %6141 = vrot.lane.b32.xlu0 %v6076, 126
  %v6142 = vpop.permute.xlu0 %6141
  %6143 = vrot.lane.b32.xlu0 %v6077, 126
  %v6144 = vpop.permute.xlu0 %6143
  %6145 = vrot.lane.b32.xlu0 %v6078, 126
  %v6146 = vpop.permute.xlu0 %6145
  %6147 = vrot.lane.b32.xlu0 %v6079, 126
  %v6148 = vpop.permute.xlu0 %6147
  %6149 = vrot.lane.b32.xlu0 %v6080, 126
  %v6150 = vpop.permute.xlu0 %6149
  %6151 = vrot.lane.b32.xlu0 %v6081, 126
  %v6152 = vpop.permute.xlu0 %6151
  %6153 = vrot.lane.b32.xlu0 %v6082, 126
  %v6154 = vpop.permute.xlu0 %6153
  %v6155 = vsel %vm484, %v459, %v6132
  %v6156 = vsel %vm484, %v6132, %v6134
  %v6157 = vsel %vm484, %v6134, %v6136
  %v6158 = vsel %vm484, %v459, %v6138
  %v6159 = vsel %vm484, %v6138, %v6140
  %v6160 = vsel %vm484, %v6140, %v6142
  %v6161 = vsel %vm484, %v459, %v6144
  %v6162 = vsel %vm484, %v6144, %v6146
  %v6163 = vsel %vm484, %v6146, %v6148
  %v6164 = vsel %vm484, %v459, %v6150
  %v6165 = vsel %vm484, %v6150, %v6152
  %v6166 = vsel %vm484, %v6152, %v6154
  %6167 = vrot.lane.b32.xlu0 %v6069, 110
  %v6168 = vpop.permute.xlu0 %6167
  %6169 = vrot.lane.b32.xlu0 %v6071, 110
  %v6170 = vpop.permute.xlu0 %6169
  %6171 = vrot.lane.b32.xlu0 %v6073, 110
  %v6172 = vpop.permute.xlu0 %6171
  %6173 = vrot.lane.b32.xlu0 %v6074, 110
  %v6174 = vpop.permute.xlu0 %6173
  %6175 = vrot.lane.b32.xlu0 %v6075, 110
  %v6176 = vpop.permute.xlu0 %6175
  %6177 = vrot.lane.b32.xlu0 %v6076, 110
  %v6178 = vpop.permute.xlu0 %6177
  %6179 = vrot.lane.b32.xlu0 %v6077, 110
  %v6180 = vpop.permute.xlu0 %6179
  %6181 = vrot.lane.b32.xlu0 %v6078, 110
  %v6182 = vpop.permute.xlu0 %6181
  %6183 = vrot.lane.b32.xlu0 %v6079, 110
  %v6184 = vpop.permute.xlu0 %6183
  %6185 = vrot.lane.b32.xlu0 %v6080, 110
  %v6186 = vpop.permute.xlu0 %6185
  %6187 = vrot.lane.b32.xlu0 %v6081, 110
  %v6188 = vpop.permute.xlu0 %6187
  %6189 = vrot.lane.b32.xlu0 %v6082, 110
  %v6190 = vpop.permute.xlu0 %6189
  %v6191 = vsel %vm523, %v498, %v6168
  %v6192 = vsel %vm523, %v6168, %v6170
  %v6193 = vsel %vm523, %v6170, %v6172
  %v6194 = vsel %vm523, %v498, %v6174
  %v6195 = vsel %vm523, %v6174, %v6176
  %v6196 = vsel %vm523, %v6176, %v6178
  %v6197 = vsel %vm523, %v498, %v6180
  %v6198 = vsel %vm523, %v6180, %v6182
  %v6199 = vsel %vm523, %v6182, %v6184
  %v6200 = vsel %vm523, %v498, %v6186
  %v6201 = vsel %vm523, %v6186, %v6188
  %v6202 = vsel %vm523, %v6188, %v6190
  %6203 = vrot.lane.b32.xlu0 %v6069, 109
  %v6204 = vpop.permute.xlu0 %6203
  %6205 = vrot.lane.b32.xlu0 %v6071, 109
  %v6206 = vpop.permute.xlu0 %6205
  %6207 = vrot.lane.b32.xlu0 %v6073, 109
  %v6208 = vpop.permute.xlu0 %6207
  %6209 = vrot.lane.b32.xlu0 %v6074, 109
  %v6210 = vpop.permute.xlu0 %6209
  %6211 = vrot.lane.b32.xlu0 %v6075, 109
  %v6212 = vpop.permute.xlu0 %6211
  %6213 = vrot.lane.b32.xlu0 %v6076, 109
  %v6214 = vpop.permute.xlu0 %6213
  %6215 = vrot.lane.b32.xlu0 %v6077, 109
  %v6216 = vpop.permute.xlu0 %6215
  %6217 = vrot.lane.b32.xlu0 %v6078, 109
  %v6218 = vpop.permute.xlu0 %6217
  %6219 = vrot.lane.b32.xlu0 %v6079, 109
  %v6220 = vpop.permute.xlu0 %6219
  %6221 = vrot.lane.b32.xlu0 %v6080, 109
  %v6222 = vpop.permute.xlu0 %6221
  %6223 = vrot.lane.b32.xlu0 %v6081, 109
  %v6224 = vpop.permute.xlu0 %6223
  %6225 = vrot.lane.b32.xlu0 %v6082, 109
  %v6226 = vpop.permute.xlu0 %6225
  %v6227 = vsel %vm560, %v6204, %v6206
  %v6228 = vsel %vm560, %v6206, %v6208
  %v6229 = vsel %vm560, %v6210, %v6212
  %v6230 = vsel %vm560, %v6212, %v6214
  %v6231 = vsel %vm560, %v6216, %v6218
  %v6232 = vsel %vm560, %v6218, %v6220
  %v6233 = vsel %vm560, %v6222, %v6224
  %v6234 = vsel %vm560, %v6224, %v6226
  %6235 = vrot.lane.b32.xlu0 %v6069, 108
  %v6236 = vpop.permute.xlu0 %6235
  %6237 = vrot.lane.b32.xlu0 %v6071, 108
  %v6238 = vpop.permute.xlu0 %6237
  %6239 = vrot.lane.b32.xlu0 %v6073, 108
  %v6240 = vpop.permute.xlu0 %6239
  %6241 = vrot.lane.b32.xlu0 %v6074, 108
  %v6242 = vpop.permute.xlu0 %6241
  %6243 = vrot.lane.b32.xlu0 %v6075, 108
  %v6244 = vpop.permute.xlu0 %6243
  %6245 = vrot.lane.b32.xlu0 %v6076, 108
  %v6246 = vpop.permute.xlu0 %6245
  %6247 = vrot.lane.b32.xlu0 %v6077, 108
  %v6248 = vpop.permute.xlu0 %6247
  %6249 = vrot.lane.b32.xlu0 %v6078, 108
  %v6250 = vpop.permute.xlu0 %6249
  %6251 = vrot.lane.b32.xlu0 %v6079, 108
  %v6252 = vpop.permute.xlu0 %6251
  %6253 = vrot.lane.b32.xlu0 %v6080, 108
  %v6254 = vpop.permute.xlu0 %6253
  %6255 = vrot.lane.b32.xlu0 %v6081, 108
  %v6256 = vpop.permute.xlu0 %6255
  %6257 = vrot.lane.b32.xlu0 %v6082, 108
  %v6258 = vpop.permute.xlu0 %6257
  %v6259 = vsel %vm597, %v6236, %v6238
  %v6260 = vsel %vm597, %v6238, %v6240
  %v6261 = vsel %vm597, %v6240, %v584
  %v6262 = vsel %vm597, %v6242, %v6244
  %v6263 = vsel %vm597, %v6244, %v6246
  %v6264 = vsel %vm597, %v6246, %v584
  %v6265 = vsel %vm597, %v6248, %v6250
  %v6266 = vsel %vm597, %v6250, %v6252
  %v6267 = vsel %vm597, %v6252, %v584
  %v6268 = vsel %vm597, %v6254, %v6256
  %v6269 = vsel %vm597, %v6256, %v6258
  %v6270 = vsel %vm597, %v6258, %v584
  %6271 = vrot.lane.b32.xlu0 %v6069, 92
  %v6272 = vpop.permute.xlu0 %6271
  %6273 = vrot.lane.b32.xlu0 %v6071, 92
  %v6274 = vpop.permute.xlu0 %6273
  %6275 = vrot.lane.b32.xlu0 %v6073, 92
  %v6276 = vpop.permute.xlu0 %6275
  %6277 = vrot.lane.b32.xlu0 %v6074, 92
  %v6278 = vpop.permute.xlu0 %6277
  %6279 = vrot.lane.b32.xlu0 %v6075, 92
  %v6280 = vpop.permute.xlu0 %6279
  %6281 = vrot.lane.b32.xlu0 %v6076, 92
  %v6282 = vpop.permute.xlu0 %6281
  %6283 = vrot.lane.b32.xlu0 %v6077, 92
  %v6284 = vpop.permute.xlu0 %6283
  %6285 = vrot.lane.b32.xlu0 %v6078, 92
  %v6286 = vpop.permute.xlu0 %6285
  %6287 = vrot.lane.b32.xlu0 %v6079, 92
  %v6288 = vpop.permute.xlu0 %6287
  %6289 = vrot.lane.b32.xlu0 %v6080, 92
  %v6290 = vpop.permute.xlu0 %6289
  %6291 = vrot.lane.b32.xlu0 %v6081, 92
  %v6292 = vpop.permute.xlu0 %6291
  %6293 = vrot.lane.b32.xlu0 %v6082, 92
  %v6294 = vpop.permute.xlu0 %6293
  %v6295 = vsel %vm636, %v6272, %v6274
  %v6296 = vsel %vm636, %v6274, %v6276
  %v6297 = vsel %vm636, %v6276, %v623
  %v6298 = vsel %vm636, %v6278, %v6280
  %v6299 = vsel %vm636, %v6280, %v6282
  %v6300 = vsel %vm636, %v6282, %v623
  %v6301 = vsel %vm636, %v6284, %v6286
  %v6302 = vsel %vm636, %v6286, %v6288
  %v6303 = vsel %vm636, %v6288, %v623
  %v6304 = vsel %vm636, %v6290, %v6292
  %v6305 = vsel %vm636, %v6292, %v6294
  %v6306 = vsel %vm636, %v6294, %v623
  %6307 = vrot.lane.b32.xlu0 %v6069, 91
  %v6308 = vpop.permute.xlu0 %6307
  %6309 = vrot.lane.b32.xlu0 %v6071, 91
  %v6310 = vpop.permute.xlu0 %6309
  %6311 = vrot.lane.b32.xlu0 %v6073, 91
  %v6312 = vpop.permute.xlu0 %6311
  %6313 = vrot.lane.b32.xlu0 %v6074, 91
  %v6314 = vpop.permute.xlu0 %6313
  %6315 = vrot.lane.b32.xlu0 %v6075, 91
  %v6316 = vpop.permute.xlu0 %6315
  %6317 = vrot.lane.b32.xlu0 %v6076, 91
  %v6318 = vpop.permute.xlu0 %6317
  %6319 = vrot.lane.b32.xlu0 %v6077, 91
  %v6320 = vpop.permute.xlu0 %6319
  %6321 = vrot.lane.b32.xlu0 %v6078, 91
  %v6322 = vpop.permute.xlu0 %6321
  %6323 = vrot.lane.b32.xlu0 %v6079, 91
  %v6324 = vpop.permute.xlu0 %6323
  %6325 = vrot.lane.b32.xlu0 %v6080, 91
  %v6326 = vpop.permute.xlu0 %6325
  %6327 = vrot.lane.b32.xlu0 %v6081, 91
  %v6328 = vpop.permute.xlu0 %6327
  %6329 = vrot.lane.b32.xlu0 %v6082, 91
  %v6330 = vpop.permute.xlu0 %6329
  %v6331 = vsel %vm675, %v6308, %v6310
  %v6332 = vsel %vm675, %v6310, %v6312
  %v6333 = vsel %vm675, %v6312, %v662
  %v6334 = vsel %vm675, %v6314, %v6316
  %v6335 = vsel %vm675, %v6316, %v6318
  %v6336 = vsel %vm675, %v6318, %v662
  %v6337 = vsel %vm675, %v6320, %v6322
  %v6338 = vsel %vm675, %v6322, %v6324
  %v6339 = vsel %vm675, %v6324, %v662
  %v6340 = vsel %vm675, %v6326, %v6328
  %v6341 = vsel %vm675, %v6328, %v6330
  %v6342 = vsel %vm675, %v6330, %v662
  %6343 = vrot.lane.b32.xlu0 %v6069, 90
  %v6344 = vpop.permute.xlu0 %6343
  %6345 = vrot.lane.b32.xlu0 %v6071, 90
  %v6346 = vpop.permute.xlu0 %6345
  %6347 = vrot.lane.b32.xlu0 %v6073, 90
  %v6348 = vpop.permute.xlu0 %6347
  %6349 = vrot.lane.b32.xlu0 %v6074, 90
  %v6350 = vpop.permute.xlu0 %6349
  %6351 = vrot.lane.b32.xlu0 %v6075, 90
  %v6352 = vpop.permute.xlu0 %6351
  %6353 = vrot.lane.b32.xlu0 %v6076, 90
  %v6354 = vpop.permute.xlu0 %6353
  %6355 = vrot.lane.b32.xlu0 %v6077, 90
  %v6356 = vpop.permute.xlu0 %6355
  %6357 = vrot.lane.b32.xlu0 %v6078, 90
  %v6358 = vpop.permute.xlu0 %6357
  %6359 = vrot.lane.b32.xlu0 %v6079, 90
  %v6360 = vpop.permute.xlu0 %6359
  %6361 = vrot.lane.b32.xlu0 %v6080, 90
  %v6362 = vpop.permute.xlu0 %6361
  %6363 = vrot.lane.b32.xlu0 %v6081, 90
  %v6364 = vpop.permute.xlu0 %6363
  %6365 = vrot.lane.b32.xlu0 %v6082, 90
  %v6366 = vpop.permute.xlu0 %6365
  %v6367 = vsel %vm714, %v6344, %v6346
  %v6368 = vsel %vm714, %v6346, %v6348
  %v6369 = vsel %vm714, %v6348, %v701
  %v6370 = vsel %vm714, %v6350, %v6352
  %v6371 = vsel %vm714, %v6352, %v6354
  %v6372 = vsel %vm714, %v6354, %v701
  %v6373 = vsel %vm714, %v6356, %v6358
  %v6374 = vsel %vm714, %v6358, %v6360
  %v6375 = vsel %vm714, %v6360, %v701
  %v6376 = vsel %vm714, %v6362, %v6364
  %v6377 = vsel %vm714, %v6364, %v6366
  %v6378 = vsel %vm714, %v6366, %v701
  %v6379 = vld [vmem:[%s12] sm:$0xff]
  %v6380 = vld [vmem:[%s12 + $0x8] sm:$0xff]
  %v6381 = vld [vmem:[%s12 + $0x10] sm:$0xff]
  %v6382 = vld [vmem:[%s12 + $0x18] sm:$0xff]
  %v6383 = vld [vmem:[%s12 + $0x20] sm:$0xff]
  %v6384 = vld [vmem:[%s12 + $0x28] sm:$0xff]
  %v6385 = vld [vmem:[%s12 + $0x30] sm:$0xff]
  %v6386 = vld [vmem:[%s12 + $0x38] sm:$0xff]
  %v6387 = vld [vmem:[%s12 + $0x40] sm:$0xff]
  %v6388 = vld [vmem:[%s12 + $0x48] sm:$0xff]
  %v6389 = vld [vmem:[%s12 + $0x50] sm:$0xff]
  %v6390 = vld [vmem:[%s12 + $0x58] sm:$0xff]
  %v6391 = vld [vmem:[%s13] sm:$0xff]
  %v6392 = vld [vmem:[%s13 + $0x8] sm:$0xff]
  %v6393 = vld [vmem:[%s13 + $0x10] sm:$0xff]
  %v6394 = vld [vmem:[%s13 + $0x18] sm:$0xff]
  %6396 = vset.pattern.permute.xlu0 0
  %6397 = vperm.xlu0 %6396, %v6391
  %v6398 = vpop.permute.xlu0 %6397
  %6401 = vset.pattern.permute.xlu0 0
  %6402 = vperm.xlu0 %6401, %v6392
  %v6403 = vpop.permute.xlu0 %6402
  %6406 = vset.pattern.permute.xlu0 0
  %6407 = vperm.xlu0 %6406, %v6393
  %v6408 = vpop.permute.xlu0 %6407
  %6411 = vset.pattern.permute.xlu0 0
  %6412 = vperm.xlu0 %6411, %v6394
  %v6413 = vpop.permute.xlu0 %6412
  %6415 = vrot.lane.b32.xlu0 %v6069, 19
  %v6416 = vpop.permute.xlu0 %6415
  %6417 = vrot.lane.b32.xlu0 %v6071, 19
  %v6418 = vpop.permute.xlu0 %6417
  %6419 = vrot.lane.b32.xlu0 %v6073, 19
  %v6420 = vpop.permute.xlu0 %6419
  %6421 = vrot.lane.b32.xlu0 %v6074, 19
  %v6422 = vpop.permute.xlu0 %6421
  %6423 = vrot.lane.b32.xlu0 %v6075, 19
  %v6424 = vpop.permute.xlu0 %6423
  %6425 = vrot.lane.b32.xlu0 %v6076, 19
  %v6426 = vpop.permute.xlu0 %6425
  %6427 = vrot.lane.b32.xlu0 %v6077, 19
  %v6428 = vpop.permute.xlu0 %6427
  %6429 = vrot.lane.b32.xlu0 %v6078, 19
  %v6430 = vpop.permute.xlu0 %6429
  %6431 = vrot.lane.b32.xlu0 %v6079, 19
  %v6432 = vpop.permute.xlu0 %6431
  %6433 = vrot.lane.b32.xlu0 %v6080, 19
  %v6434 = vpop.permute.xlu0 %6433
  %6435 = vrot.lane.b32.xlu0 %v6081, 19
  %v6436 = vpop.permute.xlu0 %6435
  %6437 = vrot.lane.b32.xlu0 %v6082, 19
  %v6438 = vpop.permute.xlu0 %6437
  %6439 = vrot.lane.b32.xlu0 %v6119, 19
  %v6440 = vpop.permute.xlu0 %6439
  %6441 = vrot.lane.b32.xlu0 %v6120, 19
  %v6442 = vpop.permute.xlu0 %6441
  %6443 = vrot.lane.b32.xlu0 %v6121, 19
  %v6444 = vpop.permute.xlu0 %6443
  %6445 = vrot.lane.b32.xlu0 %v6100, 19
  %v6446 = vpop.permute.xlu0 %6445
  %6447 = vrot.lane.b32.xlu0 %v6122, 19
  %v6448 = vpop.permute.xlu0 %6447
  %6449 = vrot.lane.b32.xlu0 %v6123, 19
  %v6450 = vpop.permute.xlu0 %6449
  %6451 = vrot.lane.b32.xlu0 %v6124, 19
  %v6452 = vpop.permute.xlu0 %6451
  %6453 = vrot.lane.b32.xlu0 %v6106, 19
  %v6454 = vpop.permute.xlu0 %6453
  %6455 = vrot.lane.b32.xlu0 %v6125, 19
  %v6456 = vpop.permute.xlu0 %6455
  %6457 = vrot.lane.b32.xlu0 %v6126, 19
  %v6458 = vpop.permute.xlu0 %6457
  %6459 = vrot.lane.b32.xlu0 %v6127, 19
  %v6460 = vpop.permute.xlu0 %6459
  %6461 = vrot.lane.b32.xlu0 %v6112, 19
  %v6462 = vpop.permute.xlu0 %6461
  %6463 = vrot.lane.b32.xlu0 %v6128, 19
  %v6464 = vpop.permute.xlu0 %6463
  %6465 = vrot.lane.b32.xlu0 %v6129, 19
  %v6466 = vpop.permute.xlu0 %6465
  %6467 = vrot.lane.b32.xlu0 %v6130, 19
  %v6468 = vpop.permute.xlu0 %6467
  %6469 = vrot.lane.b32.xlu0 %v6118, 19
  %v6470 = vpop.permute.xlu0 %6469
  %6471 = vrot.lane.b32.xlu0 %v6155, 19
  %v6472 = vpop.permute.xlu0 %6471
  %6473 = vrot.lane.b32.xlu0 %v6156, 19
  %v6474 = vpop.permute.xlu0 %6473
  %6475 = vrot.lane.b32.xlu0 %v6157, 19
  %v6476 = vpop.permute.xlu0 %6475
  %6477 = vrot.lane.b32.xlu0 %v6136, 19
  %v6478 = vpop.permute.xlu0 %6477
  %6479 = vrot.lane.b32.xlu0 %v6158, 19
  %v6480 = vpop.permute.xlu0 %6479
  %6481 = vrot.lane.b32.xlu0 %v6159, 19
  %v6482 = vpop.permute.xlu0 %6481
  %6483 = vrot.lane.b32.xlu0 %v6160, 19
  %v6484 = vpop.permute.xlu0 %6483
  %6485 = vrot.lane.b32.xlu0 %v6142, 19
  %v6486 = vpop.permute.xlu0 %6485
  %6487 = vrot.lane.b32.xlu0 %v6161, 19
  %v6488 = vpop.permute.xlu0 %6487
  %6489 = vrot.lane.b32.xlu0 %v6162, 19
  %v6490 = vpop.permute.xlu0 %6489
  %6491 = vrot.lane.b32.xlu0 %v6163, 19
  %v6492 = vpop.permute.xlu0 %6491
  %6493 = vrot.lane.b32.xlu0 %v6148, 19
  %v6494 = vpop.permute.xlu0 %6493
  %6495 = vrot.lane.b32.xlu0 %v6164, 19
  %v6496 = vpop.permute.xlu0 %6495
  %6497 = vrot.lane.b32.xlu0 %v6165, 19
  %v6498 = vpop.permute.xlu0 %6497
  %6499 = vrot.lane.b32.xlu0 %v6166, 19
  %v6500 = vpop.permute.xlu0 %6499
  %6501 = vrot.lane.b32.xlu0 %v6154, 19
  %v6502 = vpop.permute.xlu0 %6501
  %6503 = vrot.lane.b32.xlu0 %v6191, 19
  %v6504 = vpop.permute.xlu0 %6503
  %6505 = vrot.lane.b32.xlu0 %v6192, 19
  %v6506 = vpop.permute.xlu0 %6505
  %6507 = vrot.lane.b32.xlu0 %v6193, 19
  %v6508 = vpop.permute.xlu0 %6507
  %6509 = vrot.lane.b32.xlu0 %v6172, 19
  %v6510 = vpop.permute.xlu0 %6509
  %6511 = vrot.lane.b32.xlu0 %v6194, 19
  %v6512 = vpop.permute.xlu0 %6511
  %6513 = vrot.lane.b32.xlu0 %v6195, 19
  %v6514 = vpop.permute.xlu0 %6513
  %6515 = vrot.lane.b32.xlu0 %v6196, 19
  %v6516 = vpop.permute.xlu0 %6515
  %6517 = vrot.lane.b32.xlu0 %v6178, 19
  %v6518 = vpop.permute.xlu0 %6517
  %6519 = vrot.lane.b32.xlu0 %v6197, 19
  %v6520 = vpop.permute.xlu0 %6519
  %6521 = vrot.lane.b32.xlu0 %v6198, 19
  %v6522 = vpop.permute.xlu0 %6521
  %6523 = vrot.lane.b32.xlu0 %v6199, 19
  %v6524 = vpop.permute.xlu0 %6523
  %6525 = vrot.lane.b32.xlu0 %v6184, 19
  %v6526 = vpop.permute.xlu0 %6525
  %6527 = vrot.lane.b32.xlu0 %v6200, 19
  %v6528 = vpop.permute.xlu0 %6527
  %6529 = vrot.lane.b32.xlu0 %v6201, 19
  %v6530 = vpop.permute.xlu0 %6529
  %6531 = vrot.lane.b32.xlu0 %v6202, 19
  %v6532 = vpop.permute.xlu0 %6531
  %6533 = vrot.lane.b32.xlu0 %v6190, 19
  %v6534 = vpop.permute.xlu0 %6533
  %6535 = vrot.lane.b32.xlu0 %v6204, 19
  %v6536 = vpop.permute.xlu0 %6535
  %6537 = vrot.lane.b32.xlu0 %v6227, 19
  %v6538 = vpop.permute.xlu0 %6537
  %6539 = vrot.lane.b32.xlu0 %v6228, 19
  %v6540 = vpop.permute.xlu0 %6539
  %6541 = vrot.lane.b32.xlu0 %v6208, 19
  %v6542 = vpop.permute.xlu0 %6541
  %6543 = vrot.lane.b32.xlu0 %v6210, 19
  %v6544 = vpop.permute.xlu0 %6543
  %6545 = vrot.lane.b32.xlu0 %v6229, 19
  %v6546 = vpop.permute.xlu0 %6545
  %6547 = vrot.lane.b32.xlu0 %v6230, 19
  %v6548 = vpop.permute.xlu0 %6547
  %6549 = vrot.lane.b32.xlu0 %v6214, 19
  %v6550 = vpop.permute.xlu0 %6549
  %6551 = vrot.lane.b32.xlu0 %v6216, 19
  %v6552 = vpop.permute.xlu0 %6551
  %6553 = vrot.lane.b32.xlu0 %v6231, 19
  %v6554 = vpop.permute.xlu0 %6553
  %6555 = vrot.lane.b32.xlu0 %v6232, 19
  %v6556 = vpop.permute.xlu0 %6555
  %6557 = vrot.lane.b32.xlu0 %v6220, 19
  %v6558 = vpop.permute.xlu0 %6557
  %6559 = vrot.lane.b32.xlu0 %v6222, 19
  %v6560 = vpop.permute.xlu0 %6559
  %6561 = vrot.lane.b32.xlu0 %v6233, 19
  %v6562 = vpop.permute.xlu0 %6561
  %6563 = vrot.lane.b32.xlu0 %v6234, 19
  %v6564 = vpop.permute.xlu0 %6563
  %6565 = vrot.lane.b32.xlu0 %v6226, 19
  %v6566 = vpop.permute.xlu0 %6565
  %6567 = vrot.lane.b32.xlu0 %v6236, 19
  %v6568 = vpop.permute.xlu0 %6567
  %6569 = vrot.lane.b32.xlu0 %v6259, 19
  %v6570 = vpop.permute.xlu0 %6569
  %6571 = vrot.lane.b32.xlu0 %v6260, 19
  %v6572 = vpop.permute.xlu0 %6571
  %6573 = vrot.lane.b32.xlu0 %v6261, 19
  %v6574 = vpop.permute.xlu0 %6573
  %6575 = vrot.lane.b32.xlu0 %v6242, 19
  %v6576 = vpop.permute.xlu0 %6575
  %6577 = vrot.lane.b32.xlu0 %v6262, 19
  %v6578 = vpop.permute.xlu0 %6577
  %6579 = vrot.lane.b32.xlu0 %v6263, 19
  %v6580 = vpop.permute.xlu0 %6579
  %6581 = vrot.lane.b32.xlu0 %v6264, 19
  %v6582 = vpop.permute.xlu0 %6581
  %6583 = vrot.lane.b32.xlu0 %v6248, 19
  %v6584 = vpop.permute.xlu0 %6583
  %6585 = vrot.lane.b32.xlu0 %v6265, 19
  %v6586 = vpop.permute.xlu0 %6585
  %6587 = vrot.lane.b32.xlu0 %v6266, 19
  %v6588 = vpop.permute.xlu0 %6587
  %6589 = vrot.lane.b32.xlu0 %v6267, 19
  %v6590 = vpop.permute.xlu0 %6589
  %6591 = vrot.lane.b32.xlu0 %v6254, 19
  %v6592 = vpop.permute.xlu0 %6591
  %6593 = vrot.lane.b32.xlu0 %v6268, 19
  %v6594 = vpop.permute.xlu0 %6593
  %6595 = vrot.lane.b32.xlu0 %v6269, 19
  %v6596 = vpop.permute.xlu0 %6595
  %6597 = vrot.lane.b32.xlu0 %v6270, 19
  %v6598 = vpop.permute.xlu0 %6597
  %6599 = vrot.lane.b32.xlu0 %v6272, 19
  %v6600 = vpop.permute.xlu0 %6599
  %6601 = vrot.lane.b32.xlu0 %v6295, 19
  %v6602 = vpop.permute.xlu0 %6601
  %6603 = vrot.lane.b32.xlu0 %v6296, 19
  %v6604 = vpop.permute.xlu0 %6603
  %6605 = vrot.lane.b32.xlu0 %v6297, 19
  %v6606 = vpop.permute.xlu0 %6605
  %6607 = vrot.lane.b32.xlu0 %v6278, 19
  %v6608 = vpop.permute.xlu0 %6607
  %6609 = vrot.lane.b32.xlu0 %v6298, 19
  %v6610 = vpop.permute.xlu0 %6609
  %6611 = vrot.lane.b32.xlu0 %v6299, 19
  %v6612 = vpop.permute.xlu0 %6611
  %6613 = vrot.lane.b32.xlu0 %v6300, 19
  %v6614 = vpop.permute.xlu0 %6613
  %6615 = vrot.lane.b32.xlu0 %v6284, 19
  %v6616 = vpop.permute.xlu0 %6615
  %6617 = vrot.lane.b32.xlu0 %v6301, 19
  %v6618 = vpop.permute.xlu0 %6617
  %6619 = vrot.lane.b32.xlu0 %v6302, 19
  %v6620 = vpop.permute.xlu0 %6619
  %6621 = vrot.lane.b32.xlu0 %v6303, 19
  %v6622 = vpop.permute.xlu0 %6621
  %6623 = vrot.lane.b32.xlu0 %v6290, 19
  %v6624 = vpop.permute.xlu0 %6623
  %6625 = vrot.lane.b32.xlu0 %v6304, 19
  %v6626 = vpop.permute.xlu0 %6625
  %6627 = vrot.lane.b32.xlu0 %v6305, 19
  %v6628 = vpop.permute.xlu0 %6627
  %6629 = vrot.lane.b32.xlu0 %v6306, 19
  %v6630 = vpop.permute.xlu0 %6629
  %6631 = vrot.lane.b32.xlu0 %v6308, 19
  %v6632 = vpop.permute.xlu0 %6631
  %6633 = vrot.lane.b32.xlu0 %v6331, 19
  %v6634 = vpop.permute.xlu0 %6633
  %6635 = vrot.lane.b32.xlu0 %v6332, 19
  %v6636 = vpop.permute.xlu0 %6635
  %6637 = vrot.lane.b32.xlu0 %v6333, 19
  %v6638 = vpop.permute.xlu0 %6637
  %6639 = vrot.lane.b32.xlu0 %v6314, 19
  %v6640 = vpop.permute.xlu0 %6639
  %6641 = vrot.lane.b32.xlu0 %v6334, 19
  %v6642 = vpop.permute.xlu0 %6641
  %6643 = vrot.lane.b32.xlu0 %v6335, 19
  %v6644 = vpop.permute.xlu0 %6643
  %6645 = vrot.lane.b32.xlu0 %v6336, 19
  %v6646 = vpop.permute.xlu0 %6645
  %6647 = vrot.lane.b32.xlu0 %v6320, 19
  %v6648 = vpop.permute.xlu0 %6647
  %6649 = vrot.lane.b32.xlu0 %v6337, 19
  %v6650 = vpop.permute.xlu0 %6649
  %6651 = vrot.lane.b32.xlu0 %v6338, 19
  %v6652 = vpop.permute.xlu0 %6651
  %6653 = vrot.lane.b32.xlu0 %v6339, 19
  %v6654 = vpop.permute.xlu0 %6653
  %6655 = vrot.lane.b32.xlu0 %v6326, 19
  %v6656 = vpop.permute.xlu0 %6655
  %6657 = vrot.lane.b32.xlu0 %v6340, 19
  %v6658 = vpop.permute.xlu0 %6657
  %6659 = vrot.lane.b32.xlu0 %v6341, 19
  %v6660 = vpop.permute.xlu0 %6659
  %6661 = vrot.lane.b32.xlu0 %v6342, 19
  %v6662 = vpop.permute.xlu0 %6661
  %6663 = vrot.lane.b32.xlu0 %v6344, 19
  %v6664 = vpop.permute.xlu0 %6663
  %6665 = vrot.lane.b32.xlu0 %v6367, 19
  %v6666 = vpop.permute.xlu0 %6665
  %6667 = vrot.lane.b32.xlu0 %v6368, 19
  %v6668 = vpop.permute.xlu0 %6667
  %6669 = vrot.lane.b32.xlu0 %v6369, 19
  %v6670 = vpop.permute.xlu0 %6669
  %6671 = vrot.lane.b32.xlu0 %v6350, 19
  %v6672 = vpop.permute.xlu0 %6671
  %6673 = vrot.lane.b32.xlu0 %v6370, 19
  %v6674 = vpop.permute.xlu0 %6673
  %6675 = vrot.lane.b32.xlu0 %v6371, 19
  %v6676 = vpop.permute.xlu0 %6675
  %6677 = vrot.lane.b32.xlu0 %v6372, 19
  %v6678 = vpop.permute.xlu0 %6677
  %6679 = vrot.lane.b32.xlu0 %v6356, 19
  %v6680 = vpop.permute.xlu0 %6679
  %6681 = vrot.lane.b32.xlu0 %v6373, 19
  %v6682 = vpop.permute.xlu0 %6681
  %6683 = vrot.lane.b32.xlu0 %v6374, 19
  %v6684 = vpop.permute.xlu0 %6683
  %6685 = vrot.lane.b32.xlu0 %v6375, 19
  %v6686 = vpop.permute.xlu0 %6685
  %6687 = vrot.lane.b32.xlu0 %v6362, 19
  %v6688 = vpop.permute.xlu0 %6687
  %6689 = vrot.lane.b32.xlu0 %v6376, 19
  %v6690 = vpop.permute.xlu0 %6689
  %6691 = vrot.lane.b32.xlu0 %v6377, 19
  %v6692 = vpop.permute.xlu0 %6691
  %6693 = vrot.lane.b32.xlu0 %v6378, 19
  %v6694 = vpop.permute.xlu0 %6693
  %v6695 = vsel %vm1009, %v760, %v6416
  %v6696 = vsel %vm1009, %v6416, %v6418
  %v6697 = vsel %vm1009, %v6418, %v6420
  %v6698 = vsel %vm1009, %v760, %v6422
  %v6699 = vsel %vm1009, %v6422, %v6424
  %v6700 = vsel %vm1009, %v6424, %v6426
  %v6701 = vsel %vm1009, %v760, %v6428
  %v6702 = vsel %vm1009, %v6428, %v6430
  %v6703 = vsel %vm1009, %v6430, %v6432
  %v6704 = vsel %vm1009, %v760, %v6434
  %v6705 = vsel %vm1009, %v6434, %v6436
  %v6706 = vsel %vm1009, %v6436, %v6438
  %v6707 = vsel %vm1009, %v6440, %v6442
  %v6708 = vsel %vm1009, %v6442, %v6444
  %v6709 = vsel %vm1009, %v6444, %v6446
  %v6710 = vsel %vm1009, %v6448, %v6450
  %v6711 = vsel %vm1009, %v6450, %v6452
  %v6712 = vsel %vm1009, %v6452, %v6454
  %v6713 = vsel %vm1009, %v6456, %v6458
  %v6714 = vsel %vm1009, %v6458, %v6460
  %v6715 = vsel %vm1009, %v6460, %v6462
  %v6716 = vsel %vm1009, %v6464, %v6466
  %v6717 = vsel %vm1009, %v6466, %v6468
  %v6718 = vsel %vm1009, %v6468, %v6470
  %v6719 = vsel %vm1009, %v6472, %v6474
  %v6720 = vsel %vm1009, %v6474, %v6476
  %v6721 = vsel %vm1009, %v6476, %v6478
  %v6722 = vsel %vm1009, %v6480, %v6482
  %v6723 = vsel %vm1009, %v6482, %v6484
  %v6724 = vsel %vm1009, %v6484, %v6486
  %v6725 = vsel %vm1009, %v6488, %v6490
  %v6726 = vsel %vm1009, %v6490, %v6492
  %v6727 = vsel %vm1009, %v6492, %v6494
  %v6728 = vsel %vm1009, %v6496, %v6498
  %v6729 = vsel %vm1009, %v6498, %v6500
  %v6730 = vsel %vm1009, %v6500, %v6502
  %v6731 = vsel %vm1009, %v6504, %v6506
  %v6732 = vsel %vm1009, %v6506, %v6508
  %v6733 = vsel %vm1009, %v6508, %v6510
  %v6734 = vsel %vm1009, %v6512, %v6514
  %v6735 = vsel %vm1009, %v6514, %v6516
  %v6736 = vsel %vm1009, %v6516, %v6518
  %v6737 = vsel %vm1009, %v6520, %v6522
  %v6738 = vsel %vm1009, %v6522, %v6524
  %v6739 = vsel %vm1009, %v6524, %v6526
  %v6740 = vsel %vm1009, %v6528, %v6530
  %v6741 = vsel %vm1009, %v6530, %v6532
  %v6742 = vsel %vm1009, %v6532, %v6534
  %v6743 = vsel %vm1009, %v6536, %v6538
  %v6744 = vsel %vm1009, %v6538, %v6540
  %v6745 = vsel %vm1009, %v6540, %v6542
  %v6746 = vsel %vm1009, %v6544, %v6546
  %v6747 = vsel %vm1009, %v6546, %v6548
  %v6748 = vsel %vm1009, %v6548, %v6550
  %v6749 = vsel %vm1009, %v6552, %v6554
  %v6750 = vsel %vm1009, %v6554, %v6556
  %v6751 = vsel %vm1009, %v6556, %v6558
  %v6752 = vsel %vm1009, %v6560, %v6562
  %v6753 = vsel %vm1009, %v6562, %v6564
  %v6754 = vsel %vm1009, %v6564, %v6566
  %v6755 = vsel %vm1009, %v6568, %v6570
  %v6756 = vsel %vm1009, %v6570, %v6572
  %v6757 = vsel %vm1009, %v6572, %v6574
  %v6758 = vsel %vm1009, %v6576, %v6578
  %v6759 = vsel %vm1009, %v6578, %v6580
  %v6760 = vsel %vm1009, %v6580, %v6582
  %v6761 = vsel %vm1009, %v6584, %v6586
  %v6762 = vsel %vm1009, %v6586, %v6588
  %v6763 = vsel %vm1009, %v6588, %v6590
  %v6764 = vsel %vm1009, %v6592, %v6594
  %v6765 = vsel %vm1009, %v6594, %v6596
  %v6766 = vsel %vm1009, %v6596, %v6598
  %v6767 = vsel %vm1009, %v6600, %v6602
  %v6768 = vsel %vm1009, %v6602, %v6604
  %v6769 = vsel %vm1009, %v6604, %v6606
  %v6770 = vsel %vm1009, %v6608, %v6610
  %v6771 = vsel %vm1009, %v6610, %v6612
  %v6772 = vsel %vm1009, %v6612, %v6614
  %v6773 = vsel %vm1009, %v6616, %v6618
  %v6774 = vsel %vm1009, %v6618, %v6620
  %v6775 = vsel %vm1009, %v6620, %v6622
  %v6776 = vsel %vm1009, %v6624, %v6626
  %v6777 = vsel %vm1009, %v6626, %v6628
  %v6778 = vsel %vm1009, %v6628, %v6630
  %v6779 = vsel %vm1009, %v6632, %v6634
  %v6780 = vsel %vm1009, %v6634, %v6636
  %v6781 = vsel %vm1009, %v6636, %v6638
  %v6782 = vsel %vm1009, %v6640, %v6642
  %v6783 = vsel %vm1009, %v6642, %v6644
  %v6784 = vsel %vm1009, %v6644, %v6646
  %v6785 = vsel %vm1009, %v6648, %v6650
  %v6786 = vsel %vm1009, %v6650, %v6652
  %v6787 = vsel %vm1009, %v6652, %v6654
  %v6788 = vsel %vm1009, %v6656, %v6658
  %v6789 = vsel %vm1009, %v6658, %v6660
  %v6790 = vsel %vm1009, %v6660, %v6662
  %v6791 = vsel %vm1009, %v6664, %v6666
  %v6792 = vsel %vm1009, %v6666, %v6668
  %v6793 = vsel %vm1009, %v6668, %v6670
  %v6794 = vsel %vm1009, %v6672, %v6674
  %v6795 = vsel %vm1009, %v6674, %v6676
  %v6796 = vsel %vm1009, %v6676, %v6678
  %v6797 = vsel %vm1009, %v6680, %v6682
  %v6798 = vsel %vm1009, %v6682, %v6684
  %v6799 = vsel %vm1009, %v6684, %v6686
  %v6800 = vsel %vm1009, %v6688, %v6690
  %v6801 = vsel %vm1009, %v6690, %v6692
  %v6802 = vsel %vm1009, %v6692, %v6694
  %v6912 = vsel %vm1582, %v6381, 0
  %v6915 = vsel %vm1582, %v6384, 0
  %v6918 = vsel %vm1582, %v6387, 0
  %v6921 = vsel %vm1582, %v6390, 0
  %6923 = vmatprep.subr.mxu0 %v6741
  %6924 = vmatpush1.msra.mxu0 %v6740
  %6925 = vmatprep.subr.mxu0 %v6738
  %6926 = vmatpush1.msra.mxu0 %v6737
  %6927 = vmatprep.subr.mxu0 %v6735
  %6928 = vmatpush1.msra.mxu0 %v6734
  %6929 = vmatprep.subr.mxu0 %v6732
  %6930 = vmatpush1.msra.mxu0 %v6731
  %6931 = vmatprep.subr.mxu0 %v6729
  %6932 = vmatpush1.msra.mxu0 %v6728
  %6933 = vmatprep.subr.mxu0 %v6726
  %6934 = vmatpush1.msra.mxu0 %v6725
  %6935 = vmatprep.subr.mxu0 %v6723
  %6936 = vmatpush1.msra.mxu0 %v6722
  %6937 = vmatprep.subr.mxu0 %v6720
  %6938 = vmatpush1.msra.mxu0 %v6719
  %6939 = vmatprep.subr.mxu0 %v6717
  %6940 = vmatpush1.msra.mxu0 %v6716
  %6941 = vmatprep.subr.mxu0 %v6714
  %6942 = vmatpush1.msra.mxu0 %v6713
  %6943 = vmatprep.subr.mxu0 %v6711
  %6944 = vmatpush1.msra.mxu0 %v6710
  %6945 = vmatprep.subr.mxu0 %v6708
  %6946 = vmatpush1.msra.mxu0 %v6707
  %6947 = vmatprep.subr.mxu0 %v6705
  %6948 = vmatpush1.msra.mxu0 %v6704
  %6949 = vmatprep.subr.mxu0 %v6702
  %6950 = vmatpush1.msra.mxu0 %v6701
  %6951 = vmatprep.subr.mxu0 %v6699
  %6952 = vmatpush1.msra.mxu0 %v6698
  %6953 = vmatprep.subr.mxu0 %v6696
  %6954 = vmatpush1.msra.mxu0 %v6695
  %6955 = vmatprep.subr.mxu0 %v6789
  %6956 = vmatpush2.msra.mxu0 %v6788
  %6957 = vmatprep.subr.mxu0 %v6786
  %6958 = vmatpush2.msra.mxu0 %v6785
  %6959 = vmatprep.subr.mxu0 %v6783
  %6960 = vmatpush2.msra.mxu0 %v6782
  %6961 = vmatprep.subr.mxu0 %v6780
  %6962 = vmatpush2.msra.mxu0 %v6779
  %6963 = vmatprep.subr.mxu0 %v6777
  %6964 = vmatpush2.msra.mxu0 %v6776
  %6965 = vmatprep.subr.mxu0 %v6774
  %6966 = vmatpush2.msra.mxu0 %v6773
  %6967 = vmatprep.subr.mxu0 %v6771
  %6968 = vmatpush2.msra.mxu0 %v6770
  %6969 = vmatprep.subr.mxu0 %v6768
  %6970 = vmatpush2.msra.mxu0 %v6767
  %6971 = vmatprep.subr.mxu0 %v6765
  %6972 = vmatpush2.msra.mxu0 %v6764
  %6973 = vmatprep.subr.mxu0 %v6762
  %6974 = vmatpush2.msra.mxu0 %v6761
  %6975 = vmatprep.subr.mxu0 %v6759
  %6976 = vmatpush2.msra.mxu0 %v6758
  %6977 = vmatprep.subr.mxu0 %v6756
  %6978 = vmatpush2.msra.mxu0 %v6755
  %6979 = vmatprep.subr.mxu0 %v6753
  %6980 = vmatpush2.msra.mxu0 %v6752
  %6981 = vmatprep.subr.mxu0 %v6750
  %6982 = vmatpush2.msra.mxu0 %v6749
  %6983 = vmatprep.subr.mxu0 %v6747
  %6984 = vmatpush2.msra.mxu0 %v6746
  %6985 = vmatprep.subr.mxu0 %v6744
  %6986 = vmatpush2.msra.mxu0 %v6743
  %6987 = vmatprep.mubr.f32.mxu0 %v6380
  %6988 = vmatmul.mubr.f32.gmra.mxu0 %v6379
  %v6989 = vpop.f32.mrf.mxu0
  %v6990 = vadd.f32 %v6398, %v6989
  %v6991 = vpop.f32.mrf.mxu0
  %v6992 = vadd.f32 %v6398, %v6991
  %6993 = vmatprep.mubr.f32.mxu0 %v6383
  %6994 = vmatmul.mubr.f32.gmra.mxu0 %v6382
  %v6995 = vpop.f32.mrf.mxu0
  %v6996 = vadd.f32 %v6403, %v6995
  %v6997 = vpop.f32.mrf.mxu0
  %v6998 = vadd.f32 %v6403, %v6997
  %6999 = vmatprep.mubr.f32.mxu0 %v6386
  %7000 = vmatmul.mubr.f32.gmra.mxu0 %v6385
  %v7001 = vpop.f32.mrf.mxu0
  %v7002 = vadd.f32 %v6408, %v7001
  %v7003 = vpop.f32.mrf.mxu0
  %v7004 = vadd.f32 %v6408, %v7003
  %7005 = vmatprep.mubr.f32.mxu0 %v6389
  %7006 = vmatmul.mubr.f32.gmra.mxu0 %v6388
  %v7007 = vpop.f32.mrf.mxu0
  %v7008 = vadd.f32 %v6413, %v7007
  %v7009 = vpop.f32.mrf.mxu0
  %v7010 = vadd.f32 %v6413, %v7009
  %7011 = vdwg.mxu0
  %7012 = vmatprep.subr.mxu0 0.0
  %7013 = vmatpush1.msra.mxu0 0.0
  %7014 = vmatprep.subr.mxu0 0.0
  %7015 = vmatpush1.msra.mxu0 0.0
  %7016 = vmatprep.subr.mxu0 0.0
  %7017 = vmatpush1.msra.mxu0 0.0
  %7018 = vmatprep.subr.mxu0 0.0
  %7019 = vmatpush1.msra.mxu0 0.0
  %7020 = vmatprep.subr.mxu0 0.0
  %7021 = vmatpush1.msra.mxu0 0.0
  %7022 = vmatprep.subr.mxu0 0.0
  %7023 = vmatpush1.msra.mxu0 0.0
  %7024 = vmatprep.subr.mxu0 0.0
  %7025 = vmatpush1.msra.mxu0 0.0
  %7026 = vmatprep.subr.mxu0 0.0
  %7027 = vmatpush1.msra.mxu0 0.0
  %7028 = vmatprep.subr.mxu0 0.0
  %7029 = vmatpush1.msra.mxu0 0.0
  %7030 = vmatprep.subr.mxu0 0.0
  %7031 = vmatpush1.msra.mxu0 0.0
  %7032 = vmatprep.subr.mxu0 0.0
  %7033 = vmatpush1.msra.mxu0 0.0
  %7034 = vmatprep.subr.mxu0 0.0
  %7035 = vmatpush1.msra.mxu0 0.0
  %7036 = vmatprep.subr.mxu0 %v6801
  %7037 = vmatpush1.msra.mxu0 %v6800
  %7038 = vmatprep.subr.mxu0 %v6798
  %7039 = vmatpush1.msra.mxu0 %v6797
  %7040 = vmatprep.subr.mxu0 %v6795
  %7041 = vmatpush1.msra.mxu0 %v6794
  %7042 = vmatprep.subr.mxu0 %v6792
  %7043 = vmatpush1.msra.mxu0 %v6791
  %7044 = vmatprep.subr.mxu0 0.0
  %7045 = vmatpush2.msra.mxu0 0.0
  %7046 = vmatprep.subr.mxu0 0.0
  %7047 = vmatpush2.msra.mxu0 0.0
  %7048 = vmatprep.subr.mxu0 0.0
  %7049 = vmatpush2.msra.mxu0 0.0
  %7050 = vmatprep.subr.mxu0 0.0
  %7051 = vmatpush2.msra.mxu0 0.0
  %7052 = vmatprep.subr.mxu0 0.0
  %7053 = vmatpush2.msra.mxu0 0.0
  %7054 = vmatprep.subr.mxu0 0.0
  %7055 = vmatpush2.msra.mxu0 0.0
  %7056 = vmatprep.subr.mxu0 0.0
  %7057 = vmatpush2.msra.mxu0 0.0
  %7058 = vmatprep.subr.mxu0 0.0
  %7059 = vmatpush2.msra.mxu0 0.0
  %7060 = vmatprep.subr.mxu0 0.0
  %7061 = vmatpush2.msra.mxu0 0.0
  %7062 = vmatprep.subr.mxu0 0.0
  %7063 = vmatpush2.msra.mxu0 0.0
  %7064 = vmatprep.subr.mxu0 0.0
  %7065 = vmatpush2.msra.mxu0 0.0
  %7066 = vmatprep.subr.mxu0 0.0
  %7067 = vmatpush2.msra.mxu0 0.0
  %7068 = vmatprep.subr.mxu0 0.0
  %7069 = vmatpush2.msra.mxu0 0.0
  %7070 = vmatprep.subr.mxu0 0.0
  %7071 = vmatpush2.msra.mxu0 0.0
  %7072 = vmatprep.subr.mxu0 0.0
  %7073 = vmatpush2.msra.mxu0 0.0
  %7074 = vmatprep.subr.mxu0 0.0
  %7075 = vmatpush2.msra.mxu0 0.0
  %7076 = vmatprep.mubr.f32.mxu0 0.0
  %7077 = vmatmul.mubr.f32.gmra.mxu0 %v6912
  %v7078 = vpop.f32.mrf.mxu0
  %v7079 = vadd.f32 %v6990, %v7078
  %v7080 = vpop.f32.mrf.mxu0
  %v7081 = vadd.f32 %v6992, %v7080
  %7082 = vmatprep.mubr.f32.mxu0 0.0
  %7083 = vmatmul.mubr.f32.gmra.mxu0 %v6915
  %v7084 = vpop.f32.mrf.mxu0
  %v7085 = vadd.f32 %v6996, %v7084
  %v7086 = vpop.f32.mrf.mxu0
  %v7087 = vadd.f32 %v6998, %v7086
  %7088 = vmatprep.mubr.f32.mxu0 0.0
  %7089 = vmatmul.mubr.f32.gmra.mxu0 %v6918
  %v7090 = vpop.f32.mrf.mxu0
  %v7091 = vadd.f32 %v7002, %v7090
  %v7092 = vpop.f32.mrf.mxu0
  %v7093 = vadd.f32 %v7004, %v7092
  %7094 = vmatprep.mubr.f32.mxu0 0.0
  %7095 = vmatmul.mubr.f32.gmra.mxu0 %v6921
  %v7096 = vpop.f32.mrf.mxu0
  %v7097 = vadd.f32 %v7008, %v7096
  %v7098 = vpop.f32.mrf.mxu0
  %v7099 = vadd.f32 %v7010, %v7098
  %7100 = vdwg.mxu0
  %7101 = vmatprep.subr.mxu0 0.0
  %7102 = vmatpush1.msra.mxu0 %v6742
  %7103 = vmatprep.subr.mxu0 0.0
  %7104 = vmatpush1.msra.mxu0 %v6739
  %7105 = vmatprep.subr.mxu0 0.0
  %7106 = vmatpush1.msra.mxu0 %v6736
  %7107 = vmatprep.subr.mxu0 0.0
  %7108 = vmatpush1.msra.mxu0 %v6733
  %7109 = vmatprep.subr.mxu0 0.0
  %7110 = vmatpush1.msra.mxu0 %v6730
  %7111 = vmatprep.subr.mxu0 0.0
  %7112 = vmatpush1.msra.mxu0 %v6727
  %7113 = vmatprep.subr.mxu0 0.0
  %7114 = vmatpush1.msra.mxu0 %v6724
  %7115 = vmatprep.subr.mxu0 0.0
  %7116 = vmatpush1.msra.mxu0 %v6721
  %7117 = vmatprep.subr.mxu0 0.0
  %7118 = vmatpush1.msra.mxu0 %v6718
  %7119 = vmatprep.subr.mxu0 0.0
  %7120 = vmatpush1.msra.mxu0 %v6715
  %7121 = vmatprep.subr.mxu0 0.0
  %7122 = vmatpush1.msra.mxu0 %v6712
  %7123 = vmatprep.subr.mxu0 0.0
  %7124 = vmatpush1.msra.mxu0 %v6709
  %7125 = vmatprep.subr.mxu0 0.0
  %7126 = vmatpush1.msra.mxu0 %v6706
  %7127 = vmatprep.subr.mxu0 0.0
  %7128 = vmatpush1.msra.mxu0 %v6703
  %7129 = vmatprep.subr.mxu0 0.0
  %7130 = vmatpush1.msra.mxu0 %v6700
  %7131 = vmatprep.subr.mxu0 0.0
  %7132 = vmatpush1.msra.mxu0 %v6697
  %7133 = vmatprep.subr.mxu0 0.0
  %7134 = vmatpush2.msra.mxu0 %v6790
  %7135 = vmatprep.subr.mxu0 0.0
  %7136 = vmatpush2.msra.mxu0 %v6787
  %7137 = vmatprep.subr.mxu0 0.0
  %7138 = vmatpush2.msra.mxu0 %v6784
  %7139 = vmatprep.subr.mxu0 0.0
  %7140 = vmatpush2.msra.mxu0 %v6781
  %7141 = vmatprep.subr.mxu0 0.0
  %7142 = vmatpush2.msra.mxu0 %v6778
  %7143 = vmatprep.subr.mxu0 0.0
  %7144 = vmatpush2.msra.mxu0 %v6775
  %7145 = vmatprep.subr.mxu0 0.0
  %7146 = vmatpush2.msra.mxu0 %v6772
  %7147 = vmatprep.subr.mxu0 0.0
  %7148 = vmatpush2.msra.mxu0 %v6769
  %7149 = vmatprep.subr.mxu0 0.0
  %7150 = vmatpush2.msra.mxu0 %v6766
  %7151 = vmatprep.subr.mxu0 0.0
  %7152 = vmatpush2.msra.mxu0 %v6763
  %7153 = vmatprep.subr.mxu0 0.0
  %7154 = vmatpush2.msra.mxu0 %v6760
  %7155 = vmatprep.subr.mxu0 0.0
  %7156 = vmatpush2.msra.mxu0 %v6757
  %7157 = vmatprep.subr.mxu0 0.0
  %7158 = vmatpush2.msra.mxu0 %v6754
  %7159 = vmatprep.subr.mxu0 0.0
  %7160 = vmatpush2.msra.mxu0 %v6751
  %7161 = vmatprep.subr.mxu0 0.0
  %7162 = vmatpush2.msra.mxu0 %v6748
  %7163 = vmatprep.subr.mxu0 0.0
  %7164 = vmatpush2.msra.mxu0 %v6745
  %7165 = vmatprep.mubr.f32.mxu0 %v6380
  %7166 = vmatmul.mubr.f32.gmra.mxu0 %v6379
  %v7167 = vpop.f32.mrf.mxu0
  %v7168 = vadd.f32 %v6398, %v7167
  %v7169 = vpop.f32.mrf.mxu0
  %7170 = vmatprep.mubr.f32.mxu0 %v6383
  %7171 = vmatmul.mubr.f32.gmra.mxu0 %v6382
  %v7172 = vpop.f32.mrf.mxu0
  %v7173 = vadd.f32 %v6403, %v7172
  %v7174 = vpop.f32.mrf.mxu0
  %7175 = vmatprep.mubr.f32.mxu0 %v6386
  %7176 = vmatmul.mubr.f32.gmra.mxu0 %v6385
  %v7177 = vpop.f32.mrf.mxu0
  %v7178 = vadd.f32 %v6408, %v7177
  %v7179 = vpop.f32.mrf.mxu0
  %7180 = vmatprep.mubr.f32.mxu0 %v6389
  %7181 = vmatmul.mubr.f32.gmra.mxu0 %v6388
  %v7182 = vpop.f32.mrf.mxu0
  %v7183 = vadd.f32 %v6413, %v7182
  %v7184 = vpop.f32.mrf.mxu0
  %7185 = vdwg.mxu0
  %7186 = vmatprep.subr.mxu0 0.0
  %7187 = vmatpush1.msra.mxu0 0.0
  %7188 = vmatprep.subr.mxu0 0.0
  %7189 = vmatpush1.msra.mxu0 0.0
  %7190 = vmatprep.subr.mxu0 0.0
  %7191 = vmatpush1.msra.mxu0 0.0
  %7192 = vmatprep.subr.mxu0 0.0
  %7193 = vmatpush1.msra.mxu0 0.0
  %7194 = vmatprep.subr.mxu0 0.0
  %7195 = vmatpush1.msra.mxu0 0.0
  %7196 = vmatprep.subr.mxu0 0.0
  %7197 = vmatpush1.msra.mxu0 0.0
  %7198 = vmatprep.subr.mxu0 0.0
  %7199 = vmatpush1.msra.mxu0 0.0
  %7200 = vmatprep.subr.mxu0 0.0
  %7201 = vmatpush1.msra.mxu0 0.0
  %7202 = vmatprep.subr.mxu0 0.0
  %7203 = vmatpush1.msra.mxu0 0.0
  %7204 = vmatprep.subr.mxu0 0.0
  %7205 = vmatpush1.msra.mxu0 0.0
  %7206 = vmatprep.subr.mxu0 0.0
  %7207 = vmatpush1.msra.mxu0 0.0
  %7208 = vmatprep.subr.mxu0 0.0
  %7209 = vmatpush1.msra.mxu0 0.0
  %7210 = vmatprep.subr.mxu0 0.0
  %7211 = vmatpush1.msra.mxu0 %v6802
  %7212 = vmatprep.subr.mxu0 0.0
  %7213 = vmatpush1.msra.mxu0 %v6799
  %7214 = vmatprep.subr.mxu0 0.0
  %7215 = vmatpush1.msra.mxu0 %v6796
  %7216 = vmatprep.subr.mxu0 0.0
  %7217 = vmatpush1.msra.mxu0 %v6793
  %7218 = vmatprep.subr.mxu0 0.0
  %7219 = vmatpush2.msra.mxu0 0.0
  %7220 = vmatprep.subr.mxu0 0.0
  %7221 = vmatpush2.msra.mxu0 0.0
  %7222 = vmatprep.subr.mxu0 0.0
  %7223 = vmatpush2.msra.mxu0 0.0
  %7224 = vmatprep.subr.mxu0 0.0
  %7225 = vmatpush2.msra.mxu0 0.0
  %7226 = vmatprep.subr.mxu0 0.0
  %7227 = vmatpush2.msra.mxu0 0.0
  %7228 = vmatprep.subr.mxu0 0.0
  %7229 = vmatpush2.msra.mxu0 0.0
  %7230 = vmatprep.subr.mxu0 0.0
  %7231 = vmatpush2.msra.mxu0 0.0
  %7232 = vmatprep.subr.mxu0 0.0
  %7233 = vmatpush2.msra.mxu0 0.0
  %7234 = vmatprep.subr.mxu0 0.0
  %7235 = vmatpush2.msra.mxu0 0.0
  %7236 = vmatprep.subr.mxu0 0.0
  %7237 = vmatpush2.msra.mxu0 0.0
  %7238 = vmatprep.subr.mxu0 0.0
  %7239 = vmatpush2.msra.mxu0 0.0
  %7240 = vmatprep.subr.mxu0 0.0
  %7241 = vmatpush2.msra.mxu0 0.0
  %7242 = vmatprep.subr.mxu0 0.0
  %7243 = vmatpush2.msra.mxu0 0.0
  %7244 = vmatprep.subr.mxu0 0.0
  %7245 = vmatpush2.msra.mxu0 0.0
  %7246 = vmatprep.subr.mxu0 0.0
  %7247 = vmatpush2.msra.mxu0 0.0
  %7248 = vmatprep.subr.mxu0 0.0
  %7249 = vmatpush2.msra.mxu0 0.0
  %7250 = vmatprep.mubr.f32.mxu0 0.0
  %7251 = vmatmul.mubr.f32.gmra.mxu0 %v6912
  %v7252 = vpop.f32.mrf.mxu0
  %v7253 = vadd.f32 %v7168, %v7252
  %v7254 = vpop.f32.mrf.mxu0
  %7255 = vmatprep.mubr.f32.mxu0 0.0
  %7256 = vmatmul.mubr.f32.gmra.mxu0 %v6915
  %v7257 = vpop.f32.mrf.mxu0
  %v7258 = vadd.f32 %v7173, %v7257
  %v7259 = vpop.f32.mrf.mxu0
  %7260 = vmatprep.mubr.f32.mxu0 0.0
  %7261 = vmatmul.mubr.f32.gmra.mxu0 %v6918
  %v7262 = vpop.f32.mrf.mxu0
  %v7263 = vadd.f32 %v7178, %v7262
  %v7264 = vpop.f32.mrf.mxu0
  %7265 = vmatprep.mubr.f32.mxu0 0.0
  %7266 = vmatmul.mubr.f32.gmra.mxu0 %v6921
  %v7267 = vpop.f32.mrf.mxu0
  %v7268 = vadd.f32 %v7183, %v7267
  %v7269 = vpop.f32.mrf.mxu0
  %7270 = vdwg.mxu0
  %v7271 = vmax.f32 %v7079, 0.0
  %v7272 = vmax.f32 %v7081, 0.0
  %v7273 = vmax.f32 %v7253, 0.0
  %v7274 = vmax.f32 %v7085, 0.0
  %v7275 = vmax.f32 %v7087, 0.0
  %v7276 = vmax.f32 %v7258, 0.0
  %v7277 = vmax.f32 %v7091, 0.0
  %v7278 = vmax.f32 %v7093, 0.0
  %v7279 = vmax.f32 %v7263, 0.0
  %v7280 = vmax.f32 %v7097, 0.0
  %v7281 = vmax.f32 %v7099, 0.0
  %v7282 = vmax.f32 %v7268, 0.0
  %v7283 = vmul.f32 %v7271, %v367
  %v7284 = vmul.f32 %v7272, %v371
  %v7285 = vmul.f32 %v7273, %v375
  %v7286 = vmul.f32 %v7274, %v367
  %v7287 = vmul.f32 %v7275, %v371
  %v7288 = vmul.f32 %v7276, %v375
  %v7289 = vmul.f32 %v7277, %v367
  %v7290 = vmul.f32 %v7278, %v371
  %v7291 = vmul.f32 %v7279, %v375
  %v7292 = vmul.f32 %v7280, %v367
  %v7293 = vmul.f32 %v7281, %v371
  %v7294 = vmul.f32 %v7282, %v375
  %7307 = vrot.lane.b32.xlu0 %v7283, 127
  %v7308 = vpop.permute.xlu0 %7307
  %7309 = vrot.lane.b32.xlu0 %v7284, 127
  %v7310 = vpop.permute.xlu0 %7309
  %7311 = vrot.lane.b32.xlu0 %v7285, 127
  %v7312 = vpop.permute.xlu0 %7311
  %7313 = vrot.lane.b32.xlu0 %v7286, 127
  %v7314 = vpop.permute.xlu0 %7313
  %7315 = vrot.lane.b32.xlu0 %v7287, 127
  %v7316 = vpop.permute.xlu0 %7315
  %7317 = vrot.lane.b32.xlu0 %v7288, 127
  %v7318 = vpop.permute.xlu0 %7317
  %7319 = vrot.lane.b32.xlu0 %v7289, 127
  %v7320 = vpop.permute.xlu0 %7319
  %7321 = vrot.lane.b32.xlu0 %v7290, 127
  %v7322 = vpop.permute.xlu0 %7321
  %7323 = vrot.lane.b32.xlu0 %v7291, 127
  %v7324 = vpop.permute.xlu0 %7323
  %7325 = vrot.lane.b32.xlu0 %v7292, 127
  %v7326 = vpop.permute.xlu0 %7325
  %7327 = vrot.lane.b32.xlu0 %v7293, 127
  %v7328 = vpop.permute.xlu0 %7327
  %7329 = vrot.lane.b32.xlu0 %v7294, 127
  %v7330 = vpop.permute.xlu0 %7329
  %v7331 = vsel %vm445, %v420, %v7308
  %v7332 = vsel %vm445, %v7308, %v7310
  %v7333 = vsel %vm445, %v7310, %v7312
  %v7334 = vsel %vm445, %v420, %v7314
  %v7335 = vsel %vm445, %v7314, %v7316
  %v7336 = vsel %vm445, %v7316, %v7318
  %v7337 = vsel %vm445, %v420, %v7320
  %v7338 = vsel %vm445, %v7320, %v7322
  %v7339 = vsel %vm445, %v7322, %v7324
  %v7340 = vsel %vm445, %v420, %v7326
  %v7341 = vsel %vm445, %v7326, %v7328
  %v7342 = vsel %vm445, %v7328, %v7330
  %7343 = vrot.lane.b32.xlu0 %v7283, 126
  %v7344 = vpop.permute.xlu0 %7343
  %7345 = vrot.lane.b32.xlu0 %v7284, 126
  %v7346 = vpop.permute.xlu0 %7345
  %7347 = vrot.lane.b32.xlu0 %v7285, 126
  %v7348 = vpop.permute.xlu0 %7347
  %7349 = vrot.lane.b32.xlu0 %v7286, 126
  %v7350 = vpop.permute.xlu0 %7349
  %7351 = vrot.lane.b32.xlu0 %v7287, 126
  %v7352 = vpop.permute.xlu0 %7351
  %7353 = vrot.lane.b32.xlu0 %v7288, 126
  %v7354 = vpop.permute.xlu0 %7353
  %7355 = vrot.lane.b32.xlu0 %v7289, 126
  %v7356 = vpop.permute.xlu0 %7355
  %7357 = vrot.lane.b32.xlu0 %v7290, 126
  %v7358 = vpop.permute.xlu0 %7357
  %7359 = vrot.lane.b32.xlu0 %v7291, 126
  %v7360 = vpop.permute.xlu0 %7359
  %7361 = vrot.lane.b32.xlu0 %v7292, 126
  %v7362 = vpop.permute.xlu0 %7361
  %7363 = vrot.lane.b32.xlu0 %v7293, 126
  %v7364 = vpop.permute.xlu0 %7363
  %7365 = vrot.lane.b32.xlu0 %v7294, 126
  %v7366 = vpop.permute.xlu0 %7365
  %v7367 = vsel %vm484, %v459, %v7344
  %v7368 = vsel %vm484, %v7344, %v7346
  %v7369 = vsel %vm484, %v7346, %v7348
  %v7370 = vsel %vm484, %v459, %v7350
  %v7371 = vsel %vm484, %v7350, %v7352
  %v7372 = vsel %vm484, %v7352, %v7354
  %v7373 = vsel %vm484, %v459, %v7356
  %v7374 = vsel %vm484, %v7356, %v7358
  %v7375 = vsel %vm484, %v7358, %v7360
  %v7376 = vsel %vm484, %v459, %v7362
  %v7377 = vsel %vm484, %v7362, %v7364
  %v7378 = vsel %vm484, %v7364, %v7366
  %7379 = vrot.lane.b32.xlu0 %v7283, 110
  %v7380 = vpop.permute.xlu0 %7379
  %7381 = vrot.lane.b32.xlu0 %v7284, 110
  %v7382 = vpop.permute.xlu0 %7381
  %7383 = vrot.lane.b32.xlu0 %v7285, 110
  %v7384 = vpop.permute.xlu0 %7383
  %7385 = vrot.lane.b32.xlu0 %v7286, 110
  %v7386 = vpop.permute.xlu0 %7385
  %7387 = vrot.lane.b32.xlu0 %v7287, 110
  %v7388 = vpop.permute.xlu0 %7387
  %7389 = vrot.lane.b32.xlu0 %v7288, 110
  %v7390 = vpop.permute.xlu0 %7389
  %7391 = vrot.lane.b32.xlu0 %v7289, 110
  %v7392 = vpop.permute.xlu0 %7391
  %7393 = vrot.lane.b32.xlu0 %v7290, 110
  %v7394 = vpop.permute.xlu0 %7393
  %7395 = vrot.lane.b32.xlu0 %v7291, 110
  %v7396 = vpop.permute.xlu0 %7395
  %7397 = vrot.lane.b32.xlu0 %v7292, 110
  %v7398 = vpop.permute.xlu0 %7397
  %7399 = vrot.lane.b32.xlu0 %v7293, 110
  %v7400 = vpop.permute.xlu0 %7399
  %7401 = vrot.lane.b32.xlu0 %v7294, 110
  %v7402 = vpop.permute.xlu0 %7401
  %v7403 = vsel %vm523, %v498, %v7380
  %v7404 = vsel %vm523, %v7380, %v7382
  %v7405 = vsel %vm523, %v7382, %v7384
  %v7406 = vsel %vm523, %v498, %v7386
  %v7407 = vsel %vm523, %v7386, %v7388
  %v7408 = vsel %vm523, %v7388, %v7390
  %v7409 = vsel %vm523, %v498, %v7392
  %v7410 = vsel %vm523, %v7392, %v7394
  %v7411 = vsel %vm523, %v7394, %v7396
  %v7412 = vsel %vm523, %v498, %v7398
  %v7413 = vsel %vm523, %v7398, %v7400
  %v7414 = vsel %vm523, %v7400, %v7402
  %7415 = vrot.lane.b32.xlu0 %v7283, 109
  %v7416 = vpop.permute.xlu0 %7415
  %7417 = vrot.lane.b32.xlu0 %v7284, 109
  %v7418 = vpop.permute.xlu0 %7417
  %7419 = vrot.lane.b32.xlu0 %v7285, 109
  %v7420 = vpop.permute.xlu0 %7419
  %7421 = vrot.lane.b32.xlu0 %v7286, 109
  %v7422 = vpop.permute.xlu0 %7421
  %7423 = vrot.lane.b32.xlu0 %v7287, 109
  %v7424 = vpop.permute.xlu0 %7423
  %7425 = vrot.lane.b32.xlu0 %v7288, 109
  %v7426 = vpop.permute.xlu0 %7425
  %7427 = vrot.lane.b32.xlu0 %v7289, 109
  %v7428 = vpop.permute.xlu0 %7427
  %7429 = vrot.lane.b32.xlu0 %v7290, 109
  %v7430 = vpop.permute.xlu0 %7429
  %7431 = vrot.lane.b32.xlu0 %v7291, 109
  %v7432 = vpop.permute.xlu0 %7431
  %7433 = vrot.lane.b32.xlu0 %v7292, 109
  %v7434 = vpop.permute.xlu0 %7433
  %7435 = vrot.lane.b32.xlu0 %v7293, 109
  %v7436 = vpop.permute.xlu0 %7435
  %7437 = vrot.lane.b32.xlu0 %v7294, 109
  %v7438 = vpop.permute.xlu0 %7437
  %v7439 = vsel %vm560, %v7416, %v7418
  %v7440 = vsel %vm560, %v7418, %v7420
  %v7441 = vsel %vm560, %v7422, %v7424
  %v7442 = vsel %vm560, %v7424, %v7426
  %v7443 = vsel %vm560, %v7428, %v7430
  %v7444 = vsel %vm560, %v7430, %v7432
  %v7445 = vsel %vm560, %v7434, %v7436
  %v7446 = vsel %vm560, %v7436, %v7438
  %7447 = vrot.lane.b32.xlu0 %v7283, 108
  %v7448 = vpop.permute.xlu0 %7447
  %7449 = vrot.lane.b32.xlu0 %v7284, 108
  %v7450 = vpop.permute.xlu0 %7449
  %7451 = vrot.lane.b32.xlu0 %v7285, 108
  %v7452 = vpop.permute.xlu0 %7451
  %7453 = vrot.lane.b32.xlu0 %v7286, 108
  %v7454 = vpop.permute.xlu0 %7453
  %7455 = vrot.lane.b32.xlu0 %v7287, 108
  %v7456 = vpop.permute.xlu0 %7455
  %7457 = vrot.lane.b32.xlu0 %v7288, 108
  %v7458 = vpop.permute.xlu0 %7457
  %7459 = vrot.lane.b32.xlu0 %v7289, 108
  %v7460 = vpop.permute.xlu0 %7459
  %7461 = vrot.lane.b32.xlu0 %v7290, 108
  %v7462 = vpop.permute.xlu0 %7461
  %7463 = vrot.lane.b32.xlu0 %v7291, 108
  %v7464 = vpop.permute.xlu0 %7463
  %7465 = vrot.lane.b32.xlu0 %v7292, 108
  %v7466 = vpop.permute.xlu0 %7465
  %7467 = vrot.lane.b32.xlu0 %v7293, 108
  %v7468 = vpop.permute.xlu0 %7467
  %7469 = vrot.lane.b32.xlu0 %v7294, 108
  %v7470 = vpop.permute.xlu0 %7469
  %v7471 = vsel %vm597, %v7448, %v7450
  %v7472 = vsel %vm597, %v7450, %v7452
  %v7473 = vsel %vm597, %v7452, %v584
  %v7474 = vsel %vm597, %v7454, %v7456
  %v7475 = vsel %vm597, %v7456, %v7458
  %v7476 = vsel %vm597, %v7458, %v584
  %v7477 = vsel %vm597, %v7460, %v7462
  %v7478 = vsel %vm597, %v7462, %v7464
  %v7479 = vsel %vm597, %v7464, %v584
  %v7480 = vsel %vm597, %v7466, %v7468
  %v7481 = vsel %vm597, %v7468, %v7470
  %v7482 = vsel %vm597, %v7470, %v584
  %7483 = vrot.lane.b32.xlu0 %v7283, 92
  %v7484 = vpop.permute.xlu0 %7483
  %7485 = vrot.lane.b32.xlu0 %v7284, 92
  %v7486 = vpop.permute.xlu0 %7485
  %7487 = vrot.lane.b32.xlu0 %v7285, 92
  %v7488 = vpop.permute.xlu0 %7487
  %7489 = vrot.lane.b32.xlu0 %v7286, 92
  %v7490 = vpop.permute.xlu0 %7489
  %7491 = vrot.lane.b32.xlu0 %v7287, 92
  %v7492 = vpop.permute.xlu0 %7491
  %7493 = vrot.lane.b32.xlu0 %v7288, 92
  %v7494 = vpop.permute.xlu0 %7493
  %7495 = vrot.lane.b32.xlu0 %v7289, 92
  %v7496 = vpop.permute.xlu0 %7495
  %7497 = vrot.lane.b32.xlu0 %v7290, 92
  %v7498 = vpop.permute.xlu0 %7497
  %7499 = vrot.lane.b32.xlu0 %v7291, 92
  %v7500 = vpop.permute.xlu0 %7499
  %7501 = vrot.lane.b32.xlu0 %v7292, 92
  %v7502 = vpop.permute.xlu0 %7501
  %7503 = vrot.lane.b32.xlu0 %v7293, 92
  %v7504 = vpop.permute.xlu0 %7503
  %7505 = vrot.lane.b32.xlu0 %v7294, 92
  %v7506 = vpop.permute.xlu0 %7505
  %v7507 = vsel %vm636, %v7484, %v7486
  %v7508 = vsel %vm636, %v7486, %v7488
  %v7509 = vsel %vm636, %v7488, %v623
  %v7510 = vsel %vm636, %v7490, %v7492
  %v7511 = vsel %vm636, %v7492, %v7494
  %v7512 = vsel %vm636, %v7494, %v623
  %v7513 = vsel %vm636, %v7496, %v7498
  %v7514 = vsel %vm636, %v7498, %v7500
  %v7515 = vsel %vm636, %v7500, %v623
  %v7516 = vsel %vm636, %v7502, %v7504
  %v7517 = vsel %vm636, %v7504, %v7506
  %v7518 = vsel %vm636, %v7506, %v623
  %7519 = vrot.lane.b32.xlu0 %v7283, 91
  %v7520 = vpop.permute.xlu0 %7519
  %7521 = vrot.lane.b32.xlu0 %v7284, 91
  %v7522 = vpop.permute.xlu0 %7521
  %7523 = vrot.lane.b32.xlu0 %v7285, 91
  %v7524 = vpop.permute.xlu0 %7523
  %7525 = vrot.lane.b32.xlu0 %v7286, 91
  %v7526 = vpop.permute.xlu0 %7525
  %7527 = vrot.lane.b32.xlu0 %v7287, 91
  %v7528 = vpop.permute.xlu0 %7527
  %7529 = vrot.lane.b32.xlu0 %v7288, 91
  %v7530 = vpop.permute.xlu0 %7529
  %7531 = vrot.lane.b32.xlu0 %v7289, 91
  %v7532 = vpop.permute.xlu0 %7531
  %7533 = vrot.lane.b32.xlu0 %v7290, 91
  %v7534 = vpop.permute.xlu0 %7533
  %7535 = vrot.lane.b32.xlu0 %v7291, 91
  %v7536 = vpop.permute.xlu0 %7535
  %7537 = vrot.lane.b32.xlu0 %v7292, 91
  %v7538 = vpop.permute.xlu0 %7537
  %7539 = vrot.lane.b32.xlu0 %v7293, 91
  %v7540 = vpop.permute.xlu0 %7539
  %7541 = vrot.lane.b32.xlu0 %v7294, 91
  %v7542 = vpop.permute.xlu0 %7541
  %v7543 = vsel %vm675, %v7520, %v7522
  %v7544 = vsel %vm675, %v7522, %v7524
  %v7545 = vsel %vm675, %v7524, %v662
  %v7546 = vsel %vm675, %v7526, %v7528
  %v7547 = vsel %vm675, %v7528, %v7530
  %v7548 = vsel %vm675, %v7530, %v662
  %v7549 = vsel %vm675, %v7532, %v7534
  %v7550 = vsel %vm675, %v7534, %v7536
  %v7551 = vsel %vm675, %v7536, %v662
  %v7552 = vsel %vm675, %v7538, %v7540
  %v7553 = vsel %vm675, %v7540, %v7542
  %v7554 = vsel %vm675, %v7542, %v662
  %7555 = vrot.lane.b32.xlu0 %v7283, 90
  %v7556 = vpop.permute.xlu0 %7555
  %7557 = vrot.lane.b32.xlu0 %v7284, 90
  %v7558 = vpop.permute.xlu0 %7557
  %7559 = vrot.lane.b32.xlu0 %v7285, 90
  %v7560 = vpop.permute.xlu0 %7559
  %7561 = vrot.lane.b32.xlu0 %v7286, 90
  %v7562 = vpop.permute.xlu0 %7561
  %7563 = vrot.lane.b32.xlu0 %v7287, 90
  %v7564 = vpop.permute.xlu0 %7563
  %7565 = vrot.lane.b32.xlu0 %v7288, 90
  %v7566 = vpop.permute.xlu0 %7565
  %7567 = vrot.lane.b32.xlu0 %v7289, 90
  %v7568 = vpop.permute.xlu0 %7567
  %7569 = vrot.lane.b32.xlu0 %v7290, 90
  %v7570 = vpop.permute.xlu0 %7569
  %7571 = vrot.lane.b32.xlu0 %v7291, 90
  %v7572 = vpop.permute.xlu0 %7571
  %7573 = vrot.lane.b32.xlu0 %v7292, 90
  %v7574 = vpop.permute.xlu0 %7573
  %7575 = vrot.lane.b32.xlu0 %v7293, 90
  %v7576 = vpop.permute.xlu0 %7575
  %7577 = vrot.lane.b32.xlu0 %v7294, 90
  %v7578 = vpop.permute.xlu0 %7577
  %v7579 = vsel %vm714, %v7556, %v7558
  %v7580 = vsel %vm714, %v7558, %v7560
  %v7581 = vsel %vm714, %v7560, %v701
  %v7582 = vsel %vm714, %v7562, %v7564
  %v7583 = vsel %vm714, %v7564, %v7566
  %v7584 = vsel %vm714, %v7566, %v701
  %v7585 = vsel %vm714, %v7568, %v7570
  %v7586 = vsel %vm714, %v7570, %v7572
  %v7587 = vsel %vm714, %v7572, %v701
  %v7588 = vsel %vm714, %v7574, %v7576
  %v7589 = vsel %vm714, %v7576, %v7578
  %v7590 = vsel %vm714, %v7578, %v701
  %v7591 = vld [vmem:[%s14] sm:$0xff]
  %v7592 = vld [vmem:[%s14 + $0x8] sm:$0xff]
  %v7593 = vld [vmem:[%s14 + $0x10] sm:$0xff]
  %v7594 = vld [vmem:[%s14 + $0x18] sm:$0xff]
  %v7595 = vld [vmem:[%s14 + $0x20] sm:$0xff]
  %v7596 = vld [vmem:[%s14 + $0x28] sm:$0xff]
  %v7597 = vld [vmem:[%s15] sm:$0xff]
  %v7598 = vld [vmem:[%s15 + $0x8] sm:$0xff]
  %7600 = vset.pattern.permute.xlu0 0
  %7601 = vperm.xlu0 %7600, %v7597
  %v7602 = vpop.permute.xlu0 %7601
  %7605 = vset.pattern.permute.xlu0 0
  %7606 = vperm.xlu0 %7605, %v7598
  %v7607 = vpop.permute.xlu0 %7606
  %7609 = vrot.lane.b32.xlu0 %v7283, 19
  %v7610 = vpop.permute.xlu0 %7609
  %7611 = vrot.lane.b32.xlu0 %v7284, 19
  %v7612 = vpop.permute.xlu0 %7611
  %7613 = vrot.lane.b32.xlu0 %v7285, 19
  %v7614 = vpop.permute.xlu0 %7613
  %7615 = vrot.lane.b32.xlu0 %v7286, 19
  %v7616 = vpop.permute.xlu0 %7615
  %7617 = vrot.lane.b32.xlu0 %v7287, 19
  %v7618 = vpop.permute.xlu0 %7617
  %7619 = vrot.lane.b32.xlu0 %v7288, 19
  %v7620 = vpop.permute.xlu0 %7619
  %7621 = vrot.lane.b32.xlu0 %v7289, 19
  %v7622 = vpop.permute.xlu0 %7621
  %7623 = vrot.lane.b32.xlu0 %v7290, 19
  %v7624 = vpop.permute.xlu0 %7623
  %7625 = vrot.lane.b32.xlu0 %v7291, 19
  %v7626 = vpop.permute.xlu0 %7625
  %7627 = vrot.lane.b32.xlu0 %v7292, 19
  %v7628 = vpop.permute.xlu0 %7627
  %7629 = vrot.lane.b32.xlu0 %v7293, 19
  %v7630 = vpop.permute.xlu0 %7629
  %7631 = vrot.lane.b32.xlu0 %v7294, 19
  %v7632 = vpop.permute.xlu0 %7631
  %7633 = vrot.lane.b32.xlu0 %v7331, 19
  %v7634 = vpop.permute.xlu0 %7633
  %7635 = vrot.lane.b32.xlu0 %v7332, 19
  %v7636 = vpop.permute.xlu0 %7635
  %7637 = vrot.lane.b32.xlu0 %v7333, 19
  %v7638 = vpop.permute.xlu0 %7637
  %7639 = vrot.lane.b32.xlu0 %v7312, 19
  %v7640 = vpop.permute.xlu0 %7639
  %7641 = vrot.lane.b32.xlu0 %v7334, 19
  %v7642 = vpop.permute.xlu0 %7641
  %7643 = vrot.lane.b32.xlu0 %v7335, 19
  %v7644 = vpop.permute.xlu0 %7643
  %7645 = vrot.lane.b32.xlu0 %v7336, 19
  %v7646 = vpop.permute.xlu0 %7645
  %7647 = vrot.lane.b32.xlu0 %v7318, 19
  %v7648 = vpop.permute.xlu0 %7647
  %7649 = vrot.lane.b32.xlu0 %v7337, 19
  %v7650 = vpop.permute.xlu0 %7649
  %7651 = vrot.lane.b32.xlu0 %v7338, 19
  %v7652 = vpop.permute.xlu0 %7651
  %7653 = vrot.lane.b32.xlu0 %v7339, 19
  %v7654 = vpop.permute.xlu0 %7653
  %7655 = vrot.lane.b32.xlu0 %v7324, 19
  %v7656 = vpop.permute.xlu0 %7655
  %7657 = vrot.lane.b32.xlu0 %v7340, 19
  %v7658 = vpop.permute.xlu0 %7657
  %7659 = vrot.lane.b32.xlu0 %v7341, 19
  %v7660 = vpop.permute.xlu0 %7659
  %7661 = vrot.lane.b32.xlu0 %v7342, 19
  %v7662 = vpop.permute.xlu0 %7661
  %7663 = vrot.lane.b32.xlu0 %v7330, 19
  %v7664 = vpop.permute.xlu0 %7663
  %7665 = vrot.lane.b32.xlu0 %v7367, 19
  %v7666 = vpop.permute.xlu0 %7665
  %7667 = vrot.lane.b32.xlu0 %v7368, 19
  %v7668 = vpop.permute.xlu0 %7667
  %7669 = vrot.lane.b32.xlu0 %v7369, 19
  %v7670 = vpop.permute.xlu0 %7669
  %7671 = vrot.lane.b32.xlu0 %v7348, 19
  %v7672 = vpop.permute.xlu0 %7671
  %7673 = vrot.lane.b32.xlu0 %v7370, 19
  %v7674 = vpop.permute.xlu0 %7673
  %7675 = vrot.lane.b32.xlu0 %v7371, 19
  %v7676 = vpop.permute.xlu0 %7675
  %7677 = vrot.lane.b32.xlu0 %v7372, 19
  %v7678 = vpop.permute.xlu0 %7677
  %7679 = vrot.lane.b32.xlu0 %v7354, 19
  %v7680 = vpop.permute.xlu0 %7679
  %7681 = vrot.lane.b32.xlu0 %v7373, 19
  %v7682 = vpop.permute.xlu0 %7681
  %7683 = vrot.lane.b32.xlu0 %v7374, 19
  %v7684 = vpop.permute.xlu0 %7683
  %7685 = vrot.lane.b32.xlu0 %v7375, 19
  %v7686 = vpop.permute.xlu0 %7685
  %7687 = vrot.lane.b32.xlu0 %v7360, 19
  %v7688 = vpop.permute.xlu0 %7687
  %7689 = vrot.lane.b32.xlu0 %v7376, 19
  %v7690 = vpop.permute.xlu0 %7689
  %7691 = vrot.lane.b32.xlu0 %v7377, 19
  %v7692 = vpop.permute.xlu0 %7691
  %7693 = vrot.lane.b32.xlu0 %v7378, 19
  %v7694 = vpop.permute.xlu0 %7693
  %7695 = vrot.lane.b32.xlu0 %v7366, 19
  %v7696 = vpop.permute.xlu0 %7695
  %7697 = vrot.lane.b32.xlu0 %v7403, 19
  %v7698 = vpop.permute.xlu0 %7697
  %7699 = vrot.lane.b32.xlu0 %v7404, 19
  %v7700 = vpop.permute.xlu0 %7699
  %7701 = vrot.lane.b32.xlu0 %v7405, 19
  %v7702 = vpop.permute.xlu0 %7701
  %7703 = vrot.lane.b32.xlu0 %v7384, 19
  %v7704 = vpop.permute.xlu0 %7703
  %7705 = vrot.lane.b32.xlu0 %v7406, 19
  %v7706 = vpop.permute.xlu0 %7705
  %7707 = vrot.lane.b32.xlu0 %v7407, 19
  %v7708 = vpop.permute.xlu0 %7707
  %7709 = vrot.lane.b32.xlu0 %v7408, 19
  %v7710 = vpop.permute.xlu0 %7709
  %7711 = vrot.lane.b32.xlu0 %v7390, 19
  %v7712 = vpop.permute.xlu0 %7711
  %7713 = vrot.lane.b32.xlu0 %v7409, 19
  %v7714 = vpop.permute.xlu0 %7713
  %7715 = vrot.lane.b32.xlu0 %v7410, 19
  %v7716 = vpop.permute.xlu0 %7715
  %7717 = vrot.lane.b32.xlu0 %v7411, 19
  %v7718 = vpop.permute.xlu0 %7717
  %7719 = vrot.lane.b32.xlu0 %v7396, 19
  %v7720 = vpop.permute.xlu0 %7719
  %7721 = vrot.lane.b32.xlu0 %v7412, 19
  %v7722 = vpop.permute.xlu0 %7721
  %7723 = vrot.lane.b32.xlu0 %v7413, 19
  %v7724 = vpop.permute.xlu0 %7723
  %7725 = vrot.lane.b32.xlu0 %v7414, 19
  %v7726 = vpop.permute.xlu0 %7725
  %7727 = vrot.lane.b32.xlu0 %v7402, 19
  %v7728 = vpop.permute.xlu0 %7727
  %7729 = vrot.lane.b32.xlu0 %v7416, 19
  %v7730 = vpop.permute.xlu0 %7729
  %7731 = vrot.lane.b32.xlu0 %v7439, 19
  %v7732 = vpop.permute.xlu0 %7731
  %7733 = vrot.lane.b32.xlu0 %v7440, 19
  %v7734 = vpop.permute.xlu0 %7733
  %7735 = vrot.lane.b32.xlu0 %v7420, 19
  %v7736 = vpop.permute.xlu0 %7735
  %7737 = vrot.lane.b32.xlu0 %v7422, 19
  %v7738 = vpop.permute.xlu0 %7737
  %7739 = vrot.lane.b32.xlu0 %v7441, 19
  %v7740 = vpop.permute.xlu0 %7739
  %7741 = vrot.lane.b32.xlu0 %v7442, 19
  %v7742 = vpop.permute.xlu0 %7741
  %7743 = vrot.lane.b32.xlu0 %v7426, 19
  %v7744 = vpop.permute.xlu0 %7743
  %7745 = vrot.lane.b32.xlu0 %v7428, 19
  %v7746 = vpop.permute.xlu0 %7745
  %7747 = vrot.lane.b32.xlu0 %v7443, 19
  %v7748 = vpop.permute.xlu0 %7747
  %7749 = vrot.lane.b32.xlu0 %v7444, 19
  %v7750 = vpop.permute.xlu0 %7749
  %7751 = vrot.lane.b32.xlu0 %v7432, 19
  %v7752 = vpop.permute.xlu0 %7751
  %7753 = vrot.lane.b32.xlu0 %v7434, 19
  %v7754 = vpop.permute.xlu0 %7753
  %7755 = vrot.lane.b32.xlu0 %v7445, 19
  %v7756 = vpop.permute.xlu0 %7755
  %7757 = vrot.lane.b32.xlu0 %v7446, 19
  %v7758 = vpop.permute.xlu0 %7757
  %7759 = vrot.lane.b32.xlu0 %v7438, 19
  %v7760 = vpop.permute.xlu0 %7759
  %7761 = vrot.lane.b32.xlu0 %v7448, 19
  %v7762 = vpop.permute.xlu0 %7761
  %7763 = vrot.lane.b32.xlu0 %v7471, 19
  %v7764 = vpop.permute.xlu0 %7763
  %7765 = vrot.lane.b32.xlu0 %v7472, 19
  %v7766 = vpop.permute.xlu0 %7765
  %7767 = vrot.lane.b32.xlu0 %v7473, 19
  %v7768 = vpop.permute.xlu0 %7767
  %7769 = vrot.lane.b32.xlu0 %v7454, 19
  %v7770 = vpop.permute.xlu0 %7769
  %7771 = vrot.lane.b32.xlu0 %v7474, 19
  %v7772 = vpop.permute.xlu0 %7771
  %7773 = vrot.lane.b32.xlu0 %v7475, 19
  %v7774 = vpop.permute.xlu0 %7773
  %7775 = vrot.lane.b32.xlu0 %v7476, 19
  %v7776 = vpop.permute.xlu0 %7775
  %7777 = vrot.lane.b32.xlu0 %v7460, 19
  %v7778 = vpop.permute.xlu0 %7777
  %7779 = vrot.lane.b32.xlu0 %v7477, 19
  %v7780 = vpop.permute.xlu0 %7779
  %7781 = vrot.lane.b32.xlu0 %v7478, 19
  %v7782 = vpop.permute.xlu0 %7781
  %7783 = vrot.lane.b32.xlu0 %v7479, 19
  %v7784 = vpop.permute.xlu0 %7783
  %7785 = vrot.lane.b32.xlu0 %v7466, 19
  %v7786 = vpop.permute.xlu0 %7785
  %7787 = vrot.lane.b32.xlu0 %v7480, 19
  %v7788 = vpop.permute.xlu0 %7787
  %7789 = vrot.lane.b32.xlu0 %v7481, 19
  %v7790 = vpop.permute.xlu0 %7789
  %7791 = vrot.lane.b32.xlu0 %v7482, 19
  %v7792 = vpop.permute.xlu0 %7791
  %7793 = vrot.lane.b32.xlu0 %v7484, 19
  %v7794 = vpop.permute.xlu0 %7793
  %7795 = vrot.lane.b32.xlu0 %v7507, 19
  %v7796 = vpop.permute.xlu0 %7795
  %7797 = vrot.lane.b32.xlu0 %v7508, 19
  %v7798 = vpop.permute.xlu0 %7797
  %7799 = vrot.lane.b32.xlu0 %v7509, 19
  %v7800 = vpop.permute.xlu0 %7799
  %7801 = vrot.lane.b32.xlu0 %v7490, 19
  %v7802 = vpop.permute.xlu0 %7801
  %7803 = vrot.lane.b32.xlu0 %v7510, 19
  %v7804 = vpop.permute.xlu0 %7803
  %7805 = vrot.lane.b32.xlu0 %v7511, 19
  %v7806 = vpop.permute.xlu0 %7805
  %7807 = vrot.lane.b32.xlu0 %v7512, 19
  %v7808 = vpop.permute.xlu0 %7807
  %7809 = vrot.lane.b32.xlu0 %v7496, 19
  %v7810 = vpop.permute.xlu0 %7809
  %7811 = vrot.lane.b32.xlu0 %v7513, 19
  %v7812 = vpop.permute.xlu0 %7811
  %7813 = vrot.lane.b32.xlu0 %v7514, 19
  %v7814 = vpop.permute.xlu0 %7813
  %7815 = vrot.lane.b32.xlu0 %v7515, 19
  %v7816 = vpop.permute.xlu0 %7815
  %7817 = vrot.lane.b32.xlu0 %v7502, 19
  %v7818 = vpop.permute.xlu0 %7817
  %7819 = vrot.lane.b32.xlu0 %v7516, 19
  %v7820 = vpop.permute.xlu0 %7819
  %7821 = vrot.lane.b32.xlu0 %v7517, 19
  %v7822 = vpop.permute.xlu0 %7821
  %7823 = vrot.lane.b32.xlu0 %v7518, 19
  %v7824 = vpop.permute.xlu0 %7823
  %7825 = vrot.lane.b32.xlu0 %v7520, 19
  %v7826 = vpop.permute.xlu0 %7825
  %7827 = vrot.lane.b32.xlu0 %v7543, 19
  %v7828 = vpop.permute.xlu0 %7827
  %7829 = vrot.lane.b32.xlu0 %v7544, 19
  %v7830 = vpop.permute.xlu0 %7829
  %7831 = vrot.lane.b32.xlu0 %v7545, 19
  %v7832 = vpop.permute.xlu0 %7831
  %7833 = vrot.lane.b32.xlu0 %v7526, 19
  %v7834 = vpop.permute.xlu0 %7833
  %7835 = vrot.lane.b32.xlu0 %v7546, 19
  %v7836 = vpop.permute.xlu0 %7835
  %7837 = vrot.lane.b32.xlu0 %v7547, 19
  %v7838 = vpop.permute.xlu0 %7837
  %7839 = vrot.lane.b32.xlu0 %v7548, 19
  %v7840 = vpop.permute.xlu0 %7839
  %7841 = vrot.lane.b32.xlu0 %v7532, 19
  %v7842 = vpop.permute.xlu0 %7841
  %7843 = vrot.lane.b32.xlu0 %v7549, 19
  %v7844 = vpop.permute.xlu0 %7843
  %7845 = vrot.lane.b32.xlu0 %v7550, 19
  %v7846 = vpop.permute.xlu0 %7845
  %7847 = vrot.lane.b32.xlu0 %v7551, 19
  %v7848 = vpop.permute.xlu0 %7847
  %7849 = vrot.lane.b32.xlu0 %v7538, 19
  %v7850 = vpop.permute.xlu0 %7849
  %7851 = vrot.lane.b32.xlu0 %v7552, 19
  %v7852 = vpop.permute.xlu0 %7851
  %7853 = vrot.lane.b32.xlu0 %v7553, 19
  %v7854 = vpop.permute.xlu0 %7853
  %7855 = vrot.lane.b32.xlu0 %v7554, 19
  %v7856 = vpop.permute.xlu0 %7855
  %7857 = vrot.lane.b32.xlu0 %v7556, 19
  %v7858 = vpop.permute.xlu0 %7857
  %7859 = vrot.lane.b32.xlu0 %v7579, 19
  %v7860 = vpop.permute.xlu0 %7859
  %7861 = vrot.lane.b32.xlu0 %v7580, 19
  %v7862 = vpop.permute.xlu0 %7861
  %7863 = vrot.lane.b32.xlu0 %v7581, 19
  %v7864 = vpop.permute.xlu0 %7863
  %7865 = vrot.lane.b32.xlu0 %v7562, 19
  %v7866 = vpop.permute.xlu0 %7865
  %7867 = vrot.lane.b32.xlu0 %v7582, 19
  %v7868 = vpop.permute.xlu0 %7867
  %7869 = vrot.lane.b32.xlu0 %v7583, 19
  %v7870 = vpop.permute.xlu0 %7869
  %7871 = vrot.lane.b32.xlu0 %v7584, 19
  %v7872 = vpop.permute.xlu0 %7871
  %7873 = vrot.lane.b32.xlu0 %v7568, 19
  %v7874 = vpop.permute.xlu0 %7873
  %7875 = vrot.lane.b32.xlu0 %v7585, 19
  %v7876 = vpop.permute.xlu0 %7875
  %7877 = vrot.lane.b32.xlu0 %v7586, 19
  %v7878 = vpop.permute.xlu0 %7877
  %7879 = vrot.lane.b32.xlu0 %v7587, 19
  %v7880 = vpop.permute.xlu0 %7879
  %7881 = vrot.lane.b32.xlu0 %v7574, 19
  %v7882 = vpop.permute.xlu0 %7881
  %7883 = vrot.lane.b32.xlu0 %v7588, 19
  %v7884 = vpop.permute.xlu0 %7883
  %7885 = vrot.lane.b32.xlu0 %v7589, 19
  %v7886 = vpop.permute.xlu0 %7885
  %7887 = vrot.lane.b32.xlu0 %v7590, 19
  %v7888 = vpop.permute.xlu0 %7887
  %v7889 = vsel %vm1009, %v760, %v7610
  %v7890 = vsel %vm1009, %v7610, %v7612
  %v7891 = vsel %vm1009, %v7612, %v7614
  %v7892 = vsel %vm1009, %v760, %v7616
  %v7893 = vsel %vm1009, %v7616, %v7618
  %v7894 = vsel %vm1009, %v7618, %v7620
  %v7895 = vsel %vm1009, %v760, %v7622
  %v7896 = vsel %vm1009, %v7622, %v7624
  %v7897 = vsel %vm1009, %v7624, %v7626
  %v7898 = vsel %vm1009, %v760, %v7628
  %v7899 = vsel %vm1009, %v7628, %v7630
  %v7900 = vsel %vm1009, %v7630, %v7632
  %v7901 = vsel %vm1009, %v7634, %v7636
  %v7902 = vsel %vm1009, %v7636, %v7638
  %v7903 = vsel %vm1009, %v7638, %v7640
  %v7904 = vsel %vm1009, %v7642, %v7644
  %v7905 = vsel %vm1009, %v7644, %v7646
  %v7906 = vsel %vm1009, %v7646, %v7648
  %v7907 = vsel %vm1009, %v7650, %v7652
  %v7908 = vsel %vm1009, %v7652, %v7654
  %v7909 = vsel %vm1009, %v7654, %v7656
  %v7910 = vsel %vm1009, %v7658, %v7660
  %v7911 = vsel %vm1009, %v7660, %v7662
  %v7912 = vsel %vm1009, %v7662, %v7664
  %v7913 = vsel %vm1009, %v7666, %v7668
  %v7914 = vsel %vm1009, %v7668, %v7670
  %v7915 = vsel %vm1009, %v7670, %v7672
  %v7916 = vsel %vm1009, %v7674, %v7676
  %v7917 = vsel %vm1009, %v7676, %v7678
  %v7918 = vsel %vm1009, %v7678, %v7680
  %v7919 = vsel %vm1009, %v7682, %v7684
  %v7920 = vsel %vm1009, %v7684, %v7686
  %v7921 = vsel %vm1009, %v7686, %v7688
  %v7922 = vsel %vm1009, %v7690, %v7692
  %v7923 = vsel %vm1009, %v7692, %v7694
  %v7924 = vsel %vm1009, %v7694, %v7696
  %v7925 = vsel %vm1009, %v7698, %v7700
  %v7926 = vsel %vm1009, %v7700, %v7702
  %v7927 = vsel %vm1009, %v7702, %v7704
  %v7928 = vsel %vm1009, %v7706, %v7708
  %v7929 = vsel %vm1009, %v7708, %v7710
  %v7930 = vsel %vm1009, %v7710, %v7712
  %v7931 = vsel %vm1009, %v7714, %v7716
  %v7932 = vsel %vm1009, %v7716, %v7718
  %v7933 = vsel %vm1009, %v7718, %v7720
  %v7934 = vsel %vm1009, %v7722, %v7724
  %v7935 = vsel %vm1009, %v7724, %v7726
  %v7936 = vsel %vm1009, %v7726, %v7728
  %v7937 = vsel %vm1009, %v7730, %v7732
  %v7938 = vsel %vm1009, %v7732, %v7734
  %v7939 = vsel %vm1009, %v7734, %v7736
  %v7940 = vsel %vm1009, %v7738, %v7740
  %v7941 = vsel %vm1009, %v7740, %v7742
  %v7942 = vsel %vm1009, %v7742, %v7744
  %v7943 = vsel %vm1009, %v7746, %v7748
  %v7944 = vsel %vm1009, %v7748, %v7750
  %v7945 = vsel %vm1009, %v7750, %v7752
  %v7946 = vsel %vm1009, %v7754, %v7756
  %v7947 = vsel %vm1009, %v7756, %v7758
  %v7948 = vsel %vm1009, %v7758, %v7760
  %v7949 = vsel %vm1009, %v7762, %v7764
  %v7950 = vsel %vm1009, %v7764, %v7766
  %v7951 = vsel %vm1009, %v7766, %v7768
  %v7952 = vsel %vm1009, %v7770, %v7772
  %v7953 = vsel %vm1009, %v7772, %v7774
  %v7954 = vsel %vm1009, %v7774, %v7776
  %v7955 = vsel %vm1009, %v7778, %v7780
  %v7956 = vsel %vm1009, %v7780, %v7782
  %v7957 = vsel %vm1009, %v7782, %v7784
  %v7958 = vsel %vm1009, %v7786, %v7788
  %v7959 = vsel %vm1009, %v7788, %v7790
  %v7960 = vsel %vm1009, %v7790, %v7792
  %v7961 = vsel %vm1009, %v7794, %v7796
  %v7962 = vsel %vm1009, %v7796, %v7798
  %v7963 = vsel %vm1009, %v7798, %v7800
  %v7964 = vsel %vm1009, %v7802, %v7804
  %v7965 = vsel %vm1009, %v7804, %v7806
  %v7966 = vsel %vm1009, %v7806, %v7808
  %v7967 = vsel %vm1009, %v7810, %v7812
  %v7968 = vsel %vm1009, %v7812, %v7814
  %v7969 = vsel %vm1009, %v7814, %v7816
  %v7970 = vsel %vm1009, %v7818, %v7820
  %v7971 = vsel %vm1009, %v7820, %v7822
  %v7972 = vsel %vm1009, %v7822, %v7824
  %v7973 = vsel %vm1009, %v7826, %v7828
  %v7974 = vsel %vm1009, %v7828, %v7830
  %v7975 = vsel %vm1009, %v7830, %v7832
  %v7976 = vsel %vm1009, %v7834, %v7836
  %v7977 = vsel %vm1009, %v7836, %v7838
  %v7978 = vsel %vm1009, %v7838, %v7840
  %v7979 = vsel %vm1009, %v7842, %v7844
  %v7980 = vsel %vm1009, %v7844, %v7846
  %v7981 = vsel %vm1009, %v7846, %v7848
  %v7982 = vsel %vm1009, %v7850, %v7852
  %v7983 = vsel %vm1009, %v7852, %v7854
  %v7984 = vsel %vm1009, %v7854, %v7856
  %v7985 = vsel %vm1009, %v7858, %v7860
  %v7986 = vsel %vm1009, %v7860, %v7862
  %v7987 = vsel %vm1009, %v7862, %v7864
  %v7988 = vsel %vm1009, %v7866, %v7868
  %v7989 = vsel %vm1009, %v7868, %v7870
  %v7990 = vsel %vm1009, %v7870, %v7872
  %v7991 = vsel %vm1009, %v7874, %v7876
  %v7992 = vsel %vm1009, %v7876, %v7878
  %v7993 = vsel %vm1009, %v7878, %v7880
  %v7994 = vsel %vm1009, %v7882, %v7884
  %v7995 = vsel %vm1009, %v7884, %v7886
  %v7996 = vsel %vm1009, %v7886, %v7888
  %v8106 = vsel %vm1582, %v7593, 0
  %v8109 = vsel %vm1582, %v7596, 0
  %8111 = vmatprep.subr.mxu0 %v7935
  %8112 = vmatpush1.msra.mxu0 %v7934
  %8113 = vmatprep.subr.mxu0 %v7932
  %8114 = vmatpush1.msra.mxu0 %v7931
  %8115 = vmatprep.subr.mxu0 %v7929
  %8116 = vmatpush1.msra.mxu0 %v7928
  %8117 = vmatprep.subr.mxu0 %v7926
  %8118 = vmatpush1.msra.mxu0 %v7925
  %8119 = vmatprep.subr.mxu0 %v7923
  %8120 = vmatpush1.msra.mxu0 %v7922
  %8121 = vmatprep.subr.mxu0 %v7920
  %8122 = vmatpush1.msra.mxu0 %v7919
  %8123 = vmatprep.subr.mxu0 %v7917
  %8124 = vmatpush1.msra.mxu0 %v7916
  %8125 = vmatprep.subr.mxu0 %v7914
  %8126 = vmatpush1.msra.mxu0 %v7913
  %8127 = vmatprep.subr.mxu0 %v7911
  %8128 = vmatpush1.msra.mxu0 %v7910
  %8129 = vmatprep.subr.mxu0 %v7908
  %8130 = vmatpush1.msra.mxu0 %v7907
  %8131 = vmatprep.subr.mxu0 %v7905
  %8132 = vmatpush1.msra.mxu0 %v7904
  %8133 = vmatprep.subr.mxu0 %v7902
  %8134 = vmatpush1.msra.mxu0 %v7901
  %8135 = vmatprep.subr.mxu0 %v7899
  %8136 = vmatpush1.msra.mxu0 %v7898
  %8137 = vmatprep.subr.mxu0 %v7896
  %8138 = vmatpush1.msra.mxu0 %v7895
  %8139 = vmatprep.subr.mxu0 %v7893
  %8140 = vmatpush1.msra.mxu0 %v7892
  %8141 = vmatprep.subr.mxu0 %v7890
  %8142 = vmatpush1.msra.mxu0 %v7889
  %8143 = vmatprep.subr.mxu0 %v7983
  %8144 = vmatpush2.msra.mxu0 %v7982
  %8145 = vmatprep.subr.mxu0 %v7980
  %8146 = vmatpush2.msra.mxu0 %v7979
  %8147 = vmatprep.subr.mxu0 %v7977
  %8148 = vmatpush2.msra.mxu0 %v7976
  %8149 = vmatprep.subr.mxu0 %v7974
  %8150 = vmatpush2.msra.mxu0 %v7973
  %8151 = vmatprep.subr.mxu0 %v7971
  %8152 = vmatpush2.msra.mxu0 %v7970
  %8153 = vmatprep.subr.mxu0 %v7968
  %8154 = vmatpush2.msra.mxu0 %v7967
  %8155 = vmatprep.subr.mxu0 %v7965
  %8156 = vmatpush2.msra.mxu0 %v7964
  %8157 = vmatprep.subr.mxu0 %v7962
  %8158 = vmatpush2.msra.mxu0 %v7961
  %8159 = vmatprep.subr.mxu0 %v7959
  %8160 = vmatpush2.msra.mxu0 %v7958
  %8161 = vmatprep.subr.mxu0 %v7956
  %8162 = vmatpush2.msra.mxu0 %v7955
  %8163 = vmatprep.subr.mxu0 %v7953
  %8164 = vmatpush2.msra.mxu0 %v7952
  %8165 = vmatprep.subr.mxu0 %v7950
  %8166 = vmatpush2.msra.mxu0 %v7949
  %8167 = vmatprep.subr.mxu0 %v7947
  %8168 = vmatpush2.msra.mxu0 %v7946
  %8169 = vmatprep.subr.mxu0 %v7944
  %8170 = vmatpush2.msra.mxu0 %v7943
  %8171 = vmatprep.subr.mxu0 %v7941
  %8172 = vmatpush2.msra.mxu0 %v7940
  %8173 = vmatprep.subr.mxu0 %v7938
  %8174 = vmatpush2.msra.mxu0 %v7937
  %8175 = vmatprep.mubr.f32.mxu0 %v7592
  %8176 = vmatmul.mubr.f32.gmra.mxu0 %v7591
  %v8177 = vpop.f32.mrf.mxu0
  %v8178 = vadd.f32 %v7602, %v8177
  %v8179 = vpop.f32.mrf.mxu0
  %v8180 = vadd.f32 %v7602, %v8179
  %8181 = vmatprep.mubr.f32.mxu0 %v7595
  %8182 = vmatmul.mubr.f32.gmra.mxu0 %v7594
  %v8183 = vpop.f32.mrf.mxu0
  %v8184 = vadd.f32 %v7607, %v8183
  %v8185 = vpop.f32.mrf.mxu0
  %v8186 = vadd.f32 %v7607, %v8185
  %8187 = vdwg.mxu0
  %8188 = vmatprep.subr.mxu0 0.0
  %8189 = vmatpush1.msra.mxu0 0.0
  %8190 = vmatprep.subr.mxu0 0.0
  %8191 = vmatpush1.msra.mxu0 0.0
  %8192 = vmatprep.subr.mxu0 0.0
  %8193 = vmatpush1.msra.mxu0 0.0
  %8194 = vmatprep.subr.mxu0 0.0
  %8195 = vmatpush1.msra.mxu0 0.0
  %8196 = vmatprep.subr.mxu0 0.0
  %8197 = vmatpush1.msra.mxu0 0.0
  %8198 = vmatprep.subr.mxu0 0.0
  %8199 = vmatpush1.msra.mxu0 0.0
  %8200 = vmatprep.subr.mxu0 0.0
  %8201 = vmatpush1.msra.mxu0 0.0
  %8202 = vmatprep.subr.mxu0 0.0
  %8203 = vmatpush1.msra.mxu0 0.0
  %8204 = vmatprep.subr.mxu0 0.0
  %8205 = vmatpush1.msra.mxu0 0.0
  %8206 = vmatprep.subr.mxu0 0.0
  %8207 = vmatpush1.msra.mxu0 0.0
  %8208 = vmatprep.subr.mxu0 0.0
  %8209 = vmatpush1.msra.mxu0 0.0
  %8210 = vmatprep.subr.mxu0 0.0
  %8211 = vmatpush1.msra.mxu0 0.0
  %8212 = vmatprep.subr.mxu0 %v7995
  %8213 = vmatpush1.msra.mxu0 %v7994
  %8214 = vmatprep.subr.mxu0 %v7992
  %8215 = vmatpush1.msra.mxu0 %v7991
  %8216 = vmatprep.subr.mxu0 %v7989
  %8217 = vmatpush1.msra.mxu0 %v7988
  %8218 = vmatprep.subr.mxu0 %v7986
  %8219 = vmatpush1.msra.mxu0 %v7985
  %8220 = vmatprep.subr.mxu0 0.0
  %8221 = vmatpush2.msra.mxu0 0.0
  %8222 = vmatprep.subr.mxu0 0.0
  %8223 = vmatpush2.msra.mxu0 0.0
  %8224 = vmatprep.subr.mxu0 0.0
  %8225 = vmatpush2.msra.mxu0 0.0
  %8226 = vmatprep.subr.mxu0 0.0
  %8227 = vmatpush2.msra.mxu0 0.0
  %8228 = vmatprep.subr.mxu0 0.0
  %8229 = vmatpush2.msra.mxu0 0.0
  %8230 = vmatprep.subr.mxu0 0.0
  %8231 = vmatpush2.msra.mxu0 0.0
  %8232 = vmatprep.subr.mxu0 0.0
  %8233 = vmatpush2.msra.mxu0 0.0
  %8234 = vmatprep.subr.mxu0 0.0
  %8235 = vmatpush2.msra.mxu0 0.0
  %8236 = vmatprep.subr.mxu0 0.0
  %8237 = vmatpush2.msra.mxu0 0.0
  %8238 = vmatprep.subr.mxu0 0.0
  %8239 = vmatpush2.msra.mxu0 0.0
  %8240 = vmatprep.subr.mxu0 0.0
  %8241 = vmatpush2.msra.mxu0 0.0
  %8242 = vmatprep.subr.mxu0 0.0
  %8243 = vmatpush2.msra.mxu0 0.0
  %8244 = vmatprep.subr.mxu0 0.0
  %8245 = vmatpush2.msra.mxu0 0.0
  %8246 = vmatprep.subr.mxu0 0.0
  %8247 = vmatpush2.msra.mxu0 0.0
  %8248 = vmatprep.subr.mxu0 0.0
  %8249 = vmatpush2.msra.mxu0 0.0
  %8250 = vmatprep.subr.mxu0 0.0
  %8251 = vmatpush2.msra.mxu0 0.0
  %8252 = vmatprep.mubr.f32.mxu0 0.0
  %8253 = vmatmul.mubr.f32.gmra.mxu0 %v8106
  %v8254 = vpop.f32.mrf.mxu0
  %v8255 = vadd.f32 %v8178, %v8254
  %v8256 = vpop.f32.mrf.mxu0
  %v8257 = vadd.f32 %v8180, %v8256
  %8258 = vmatprep.mubr.f32.mxu0 0.0
  %8259 = vmatmul.mubr.f32.gmra.mxu0 %v8109
  %v8260 = vpop.f32.mrf.mxu0
  %v8261 = vadd.f32 %v8184, %v8260
  %v8262 = vpop.f32.mrf.mxu0
  %v8263 = vadd.f32 %v8186, %v8262
  %8264 = vdwg.mxu0
  %8265 = vmatprep.subr.mxu0 0.0
  %8266 = vmatpush1.msra.mxu0 %v7936
  %8267 = vmatprep.subr.mxu0 0.0
  %8268 = vmatpush1.msra.mxu0 %v7933
  %8269 = vmatprep.subr.mxu0 0.0
  %8270 = vmatpush1.msra.mxu0 %v7930
  %8271 = vmatprep.subr.mxu0 0.0
  %8272 = vmatpush1.msra.mxu0 %v7927
  %8273 = vmatprep.subr.mxu0 0.0
  %8274 = vmatpush1.msra.mxu0 %v7924
  %8275 = vmatprep.subr.mxu0 0.0
  %8276 = vmatpush1.msra.mxu0 %v7921
  %8277 = vmatprep.subr.mxu0 0.0
  %8278 = vmatpush1.msra.mxu0 %v7918
  %8279 = vmatprep.subr.mxu0 0.0
  %8280 = vmatpush1.msra.mxu0 %v7915
  %8281 = vmatprep.subr.mxu0 0.0
  %8282 = vmatpush1.msra.mxu0 %v7912
  %8283 = vmatprep.subr.mxu0 0.0
  %8284 = vmatpush1.msra.mxu0 %v7909
  %8285 = vmatprep.subr.mxu0 0.0
  %8286 = vmatpush1.msra.mxu0 %v7906
  %8287 = vmatprep.subr.mxu0 0.0
  %8288 = vmatpush1.msra.mxu0 %v7903
  %8289 = vmatprep.subr.mxu0 0.0
  %8290 = vmatpush1.msra.mxu0 %v7900
  %8291 = vmatprep.subr.mxu0 0.0
  %8292 = vmatpush1.msra.mxu0 %v7897
  %8293 = vmatprep.subr.mxu0 0.0
  %8294 = vmatpush1.msra.mxu0 %v7894
  %8295 = vmatprep.subr.mxu0 0.0
  %8296 = vmatpush1.msra.mxu0 %v7891
  %8297 = vmatprep.subr.mxu0 0.0
  %8298 = vmatpush2.msra.mxu0 %v7984
  %8299 = vmatprep.subr.mxu0 0.0
  %8300 = vmatpush2.msra.mxu0 %v7981
  %8301 = vmatprep.subr.mxu0 0.0
  %8302 = vmatpush2.msra.mxu0 %v7978
  %8303 = vmatprep.subr.mxu0 0.0
  %8304 = vmatpush2.msra.mxu0 %v7975
  %8305 = vmatprep.subr.mxu0 0.0
  %8306 = vmatpush2.msra.mxu0 %v7972
  %8307 = vmatprep.subr.mxu0 0.0
  %8308 = vmatpush2.msra.mxu0 %v7969
  %8309 = vmatprep.subr.mxu0 0.0
  %8310 = vmatpush2.msra.mxu0 %v7966
  %8311 = vmatprep.subr.mxu0 0.0
  %8312 = vmatpush2.msra.mxu0 %v7963
  %8313 = vmatprep.subr.mxu0 0.0
  %8314 = vmatpush2.msra.mxu0 %v7960
  %8315 = vmatprep.subr.mxu0 0.0
  %8316 = vmatpush2.msra.mxu0 %v7957
  %8317 = vmatprep.subr.mxu0 0.0
  %8318 = vmatpush2.msra.mxu0 %v7954
  %8319 = vmatprep.subr.mxu0 0.0
  %8320 = vmatpush2.msra.mxu0 %v7951
  %8321 = vmatprep.subr.mxu0 0.0
  %8322 = vmatpush2.msra.mxu0 %v7948
  %8323 = vmatprep.subr.mxu0 0.0
  %8324 = vmatpush2.msra.mxu0 %v7945
  %8325 = vmatprep.subr.mxu0 0.0
  %8326 = vmatpush2.msra.mxu0 %v7942
  %8327 = vmatprep.subr.mxu0 0.0
  %8328 = vmatpush2.msra.mxu0 %v7939
  %8329 = vmatprep.mubr.f32.mxu0 %v7592
  %8330 = vmatmul.mubr.f32.gmra.mxu0 %v7591
  %v8331 = vpop.f32.mrf.mxu0
  %v8332 = vadd.f32 %v7602, %v8331
  %v8333 = vpop.f32.mrf.mxu0
  %8334 = vmatprep.mubr.f32.mxu0 %v7595
  %8335 = vmatmul.mubr.f32.gmra.mxu0 %v7594
  %v8336 = vpop.f32.mrf.mxu0
  %v8337 = vadd.f32 %v7607, %v8336
  %v8338 = vpop.f32.mrf.mxu0
  %8339 = vdwg.mxu0
  %8340 = vmatprep.subr.mxu0 0.0
  %8341 = vmatpush1.msra.mxu0 0.0
  %8342 = vmatprep.subr.mxu0 0.0
  %8343 = vmatpush1.msra.mxu0 0.0
  %8344 = vmatprep.subr.mxu0 0.0
  %8345 = vmatpush1.msra.mxu0 0.0
  %8346 = vmatprep.subr.mxu0 0.0
  %8347 = vmatpush1.msra.mxu0 0.0
  %8348 = vmatprep.subr.mxu0 0.0
  %8349 = vmatpush1.msra.mxu0 0.0
  %8350 = vmatprep.subr.mxu0 0.0
  %8351 = vmatpush1.msra.mxu0 0.0
  %8352 = vmatprep.subr.mxu0 0.0
  %8353 = vmatpush1.msra.mxu0 0.0
  %8354 = vmatprep.subr.mxu0 0.0
  %8355 = vmatpush1.msra.mxu0 0.0
  %8356 = vmatprep.subr.mxu0 0.0
  %8357 = vmatpush1.msra.mxu0 0.0
  %8358 = vmatprep.subr.mxu0 0.0
  %8359 = vmatpush1.msra.mxu0 0.0
  %8360 = vmatprep.subr.mxu0 0.0
  %8361 = vmatpush1.msra.mxu0 0.0
  %8362 = vmatprep.subr.mxu0 0.0
  %8363 = vmatpush1.msra.mxu0 0.0
  %8364 = vmatprep.subr.mxu0 0.0
  %8365 = vmatpush1.msra.mxu0 %v7996
  %8366 = vmatprep.subr.mxu0 0.0
  %8367 = vmatpush1.msra.mxu0 %v7993
  %8368 = vmatprep.subr.mxu0 0.0
  %8369 = vmatpush1.msra.mxu0 %v7990
  %8370 = vmatprep.subr.mxu0 0.0
  %8371 = vmatpush1.msra.mxu0 %v7987
  %8372 = vmatprep.subr.mxu0 0.0
  %8373 = vmatpush2.msra.mxu0 0.0
  %8374 = vmatprep.subr.mxu0 0.0
  %8375 = vmatpush2.msra.mxu0 0.0
  %8376 = vmatprep.subr.mxu0 0.0
  %8377 = vmatpush2.msra.mxu0 0.0
  %8378 = vmatprep.subr.mxu0 0.0
  %8379 = vmatpush2.msra.mxu0 0.0
  %8380 = vmatprep.subr.mxu0 0.0
  %8381 = vmatpush2.msra.mxu0 0.0
  %8382 = vmatprep.subr.mxu0 0.0
  %8383 = vmatpush2.msra.mxu0 0.0
  %8384 = vmatprep.subr.mxu0 0.0
  %8385 = vmatpush2.msra.mxu0 0.0
  %8386 = vmatprep.subr.mxu0 0.0
  %8387 = vmatpush2.msra.mxu0 0.0
  %8388 = vmatprep.subr.mxu0 0.0
  %8389 = vmatpush2.msra.mxu0 0.0
  %8390 = vmatprep.subr.mxu0 0.0
  %8391 = vmatpush2.msra.mxu0 0.0
  %8392 = vmatprep.subr.mxu0 0.0
  %8393 = vmatpush2.msra.mxu0 0.0
  %8394 = vmatprep.subr.mxu0 0.0
  %8395 = vmatpush2.msra.mxu0 0.0
  %8396 = vmatprep.subr.mxu0 0.0
  %8397 = vmatpush2.msra.mxu0 0.0
  %8398 = vmatprep.subr.mxu0 0.0
  %8399 = vmatpush2.msra.mxu0 0.0
  %8400 = vmatprep.subr.mxu0 0.0
  %8401 = vmatpush2.msra.mxu0 0.0
  %8402 = vmatprep.subr.mxu0 0.0
  %8403 = vmatpush2.msra.mxu0 0.0
  %8404 = vmatprep.mubr.f32.mxu0 0.0
  %8405 = vmatmul.mubr.f32.gmra.mxu0 %v8106
  %v8406 = vpop.f32.mrf.mxu0
  %v8407 = vadd.f32 %v8332, %v8406
  %v8408 = vpop.f32.mrf.mxu0
  %8409 = vmatprep.mubr.f32.mxu0 0.0
  %8410 = vmatmul.mubr.f32.gmra.mxu0 %v8109
  %v8411 = vpop.f32.mrf.mxu0
  %v8412 = vadd.f32 %v8337, %v8411
  %v8413 = vpop.f32.mrf.mxu0
  %8414 = vdwg.mxu0
  %v8415 = vmax.f32 %v8255, 0.0
  %v8416 = vmax.f32 %v8257, 0.0
  %v8417 = vmax.f32 %v8407, 0.0
  %v8418 = vmax.f32 %v8261, 0.0
  %v8419 = vmax.f32 %v8263, 0.0
  %v8420 = vmax.f32 %v8412, 0.0
  %v8421 = vmul.f32 %v8415, %v367
  %v8422 = vmul.f32 %v8416, %v371
  %v8423 = vmul.f32 %v8417, %v375
  %v8424 = vmul.f32 %v8418, %v367
  %v8425 = vmul.f32 %v8419, %v371
  %v8426 = vmul.f32 %v8420, %v375
  %8433 = vrot.lane.b32.xlu0 %v8421, 127
  %v8434 = vpop.permute.xlu0 %8433
  %8435 = vrot.lane.b32.xlu0 %v8422, 127
  %v8436 = vpop.permute.xlu0 %8435
  %8437 = vrot.lane.b32.xlu0 %v8423, 127
  %v8438 = vpop.permute.xlu0 %8437
  %8439 = vrot.lane.b32.xlu0 %v8424, 127
  %v8440 = vpop.permute.xlu0 %8439
  %8441 = vrot.lane.b32.xlu0 %v8425, 127
  %v8442 = vpop.permute.xlu0 %8441
  %8443 = vrot.lane.b32.xlu0 %v8426, 127
  %v8444 = vpop.permute.xlu0 %8443
  %v8445 = vsel %vm445, %v420, %v8434
  %v8446 = vsel %vm445, %v8434, %v8436
  %v8447 = vsel %vm445, %v8436, %v8438
  %v8448 = vsel %vm445, %v420, %v8440
  %v8449 = vsel %vm445, %v8440, %v8442
  %v8450 = vsel %vm445, %v8442, %v8444
  %8451 = vrot.lane.b32.xlu0 %v8421, 126
  %v8452 = vpop.permute.xlu0 %8451
  %8453 = vrot.lane.b32.xlu0 %v8422, 126
  %v8454 = vpop.permute.xlu0 %8453
  %8455 = vrot.lane.b32.xlu0 %v8423, 126
  %v8456 = vpop.permute.xlu0 %8455
  %8457 = vrot.lane.b32.xlu0 %v8424, 126
  %v8458 = vpop.permute.xlu0 %8457
  %8459 = vrot.lane.b32.xlu0 %v8425, 126
  %v8460 = vpop.permute.xlu0 %8459
  %8461 = vrot.lane.b32.xlu0 %v8426, 126
  %v8462 = vpop.permute.xlu0 %8461
  %v8463 = vsel %vm484, %v459, %v8452
  %v8464 = vsel %vm484, %v8452, %v8454
  %v8465 = vsel %vm484, %v8454, %v8456
  %v8466 = vsel %vm484, %v459, %v8458
  %v8467 = vsel %vm484, %v8458, %v8460
  %v8468 = vsel %vm484, %v8460, %v8462
  %8469 = vrot.lane.b32.xlu0 %v8421, 110
  %v8470 = vpop.permute.xlu0 %8469
  %8471 = vrot.lane.b32.xlu0 %v8422, 110
  %v8472 = vpop.permute.xlu0 %8471
  %8473 = vrot.lane.b32.xlu0 %v8423, 110
  %v8474 = vpop.permute.xlu0 %8473
  %8475 = vrot.lane.b32.xlu0 %v8424, 110
  %v8476 = vpop.permute.xlu0 %8475
  %8477 = vrot.lane.b32.xlu0 %v8425, 110
  %v8478 = vpop.permute.xlu0 %8477
  %8479 = vrot.lane.b32.xlu0 %v8426, 110
  %v8480 = vpop.permute.xlu0 %8479
  %v8481 = vsel %vm523, %v498, %v8470
  %v8482 = vsel %vm523, %v8470, %v8472
  %v8483 = vsel %vm523, %v8472, %v8474
  %v8484 = vsel %vm523, %v498, %v8476
  %v8485 = vsel %vm523, %v8476, %v8478
  %v8486 = vsel %vm523, %v8478, %v8480
  %8487 = vrot.lane.b32.xlu0 %v8421, 109
  %v8488 = vpop.permute.xlu0 %8487
  %8489 = vrot.lane.b32.xlu0 %v8422, 109
  %v8490 = vpop.permute.xlu0 %8489
  %8491 = vrot.lane.b32.xlu0 %v8423, 109
  %v8492 = vpop.permute.xlu0 %8491
  %8493 = vrot.lane.b32.xlu0 %v8424, 109
  %v8494 = vpop.permute.xlu0 %8493
  %8495 = vrot.lane.b32.xlu0 %v8425, 109
  %v8496 = vpop.permute.xlu0 %8495
  %8497 = vrot.lane.b32.xlu0 %v8426, 109
  %v8498 = vpop.permute.xlu0 %8497
  %v8499 = vsel %vm560, %v8488, %v8490
  %v8500 = vsel %vm560, %v8490, %v8492
  %v8501 = vsel %vm560, %v8494, %v8496
  %v8502 = vsel %vm560, %v8496, %v8498
  %8503 = vrot.lane.b32.xlu0 %v8421, 108
  %v8504 = vpop.permute.xlu0 %8503
  %8505 = vrot.lane.b32.xlu0 %v8422, 108
  %v8506 = vpop.permute.xlu0 %8505
  %8507 = vrot.lane.b32.xlu0 %v8423, 108
  %v8508 = vpop.permute.xlu0 %8507
  %8509 = vrot.lane.b32.xlu0 %v8424, 108
  %v8510 = vpop.permute.xlu0 %8509
  %8511 = vrot.lane.b32.xlu0 %v8425, 108
  %v8512 = vpop.permute.xlu0 %8511
  %8513 = vrot.lane.b32.xlu0 %v8426, 108
  %v8514 = vpop.permute.xlu0 %8513
  %v8515 = vsel %vm597, %v8504, %v8506
  %v8516 = vsel %vm597, %v8506, %v8508
  %v8517 = vsel %vm597, %v8508, %v584
  %v8518 = vsel %vm597, %v8510, %v8512
  %v8519 = vsel %vm597, %v8512, %v8514
  %v8520 = vsel %vm597, %v8514, %v584
  %8521 = vrot.lane.b32.xlu0 %v8421, 92
  %v8522 = vpop.permute.xlu0 %8521
  %8523 = vrot.lane.b32.xlu0 %v8422, 92
  %v8524 = vpop.permute.xlu0 %8523
  %8525 = vrot.lane.b32.xlu0 %v8423, 92
  %v8526 = vpop.permute.xlu0 %8525
  %8527 = vrot.lane.b32.xlu0 %v8424, 92
  %v8528 = vpop.permute.xlu0 %8527
  %8529 = vrot.lane.b32.xlu0 %v8425, 92
  %v8530 = vpop.permute.xlu0 %8529
  %8531 = vrot.lane.b32.xlu0 %v8426, 92
  %v8532 = vpop.permute.xlu0 %8531
  %v8533 = vsel %vm636, %v8522, %v8524
  %v8534 = vsel %vm636, %v8524, %v8526
  %v8535 = vsel %vm636, %v8526, %v623
  %v8536 = vsel %vm636, %v8528, %v8530
  %v8537 = vsel %vm636, %v8530, %v8532
  %v8538 = vsel %vm636, %v8532, %v623
  %8539 = vrot.lane.b32.xlu0 %v8421, 91
  %v8540 = vpop.permute.xlu0 %8539
  %8541 = vrot.lane.b32.xlu0 %v8422, 91
  %v8542 = vpop.permute.xlu0 %8541
  %8543 = vrot.lane.b32.xlu0 %v8423, 91
  %v8544 = vpop.permute.xlu0 %8543
  %8545 = vrot.lane.b32.xlu0 %v8424, 91
  %v8546 = vpop.permute.xlu0 %8545
  %8547 = vrot.lane.b32.xlu0 %v8425, 91
  %v8548 = vpop.permute.xlu0 %8547
  %8549 = vrot.lane.b32.xlu0 %v8426, 91
  %v8550 = vpop.permute.xlu0 %8549
  %v8551 = vsel %vm675, %v8540, %v8542
  %v8552 = vsel %vm675, %v8542, %v8544
  %v8553 = vsel %vm675, %v8544, %v662
  %v8554 = vsel %vm675, %v8546, %v8548
  %v8555 = vsel %vm675, %v8548, %v8550
  %v8556 = vsel %vm675, %v8550, %v662
  %8557 = vrot.lane.b32.xlu0 %v8421, 90
  %v8558 = vpop.permute.xlu0 %8557
  %8559 = vrot.lane.b32.xlu0 %v8422, 90
  %v8560 = vpop.permute.xlu0 %8559
  %8561 = vrot.lane.b32.xlu0 %v8423, 90
  %v8562 = vpop.permute.xlu0 %8561
  %8563 = vrot.lane.b32.xlu0 %v8424, 90
  %v8564 = vpop.permute.xlu0 %8563
  %8565 = vrot.lane.b32.xlu0 %v8425, 90
  %v8566 = vpop.permute.xlu0 %8565
  %8567 = vrot.lane.b32.xlu0 %v8426, 90
  %v8568 = vpop.permute.xlu0 %8567
  %v8569 = vsel %vm714, %v8558, %v8560
  %v8570 = vsel %vm714, %v8560, %v8562
  %v8571 = vsel %vm714, %v8562, %v701
  %v8572 = vsel %vm714, %v8564, %v8566
  %v8573 = vsel %vm714, %v8566, %v8568
  %v8574 = vsel %vm714, %v8568, %v701
  %v8575 = vld [vmem:[%s16] sm:$0xff]
  %v8576 = vld [vmem:[%s16 + $0x8] sm:$0xff]
  %v8577 = vld [vmem:[%s17] sm:$0xff]
  %8579 = vset.pattern.permute.xlu0 0
  %8580 = vperm.xlu0 %8579, %v8577
  %v8581 = vpop.permute.xlu0 %8580
  %8583 = vrot.lane.b32.xlu0 %v8421, 19
  %v8584 = vpop.permute.xlu0 %8583
  %8585 = vrot.lane.b32.xlu0 %v8422, 19
  %v8586 = vpop.permute.xlu0 %8585
  %8587 = vrot.lane.b32.xlu0 %v8423, 19
  %v8588 = vpop.permute.xlu0 %8587
  %8589 = vrot.lane.b32.xlu0 %v8424, 19
  %v8590 = vpop.permute.xlu0 %8589
  %8591 = vrot.lane.b32.xlu0 %v8425, 19
  %v8592 = vpop.permute.xlu0 %8591
  %8593 = vrot.lane.b32.xlu0 %v8426, 19
  %v8594 = vpop.permute.xlu0 %8593
  %8595 = vrot.lane.b32.xlu0 %v8445, 19
  %v8596 = vpop.permute.xlu0 %8595
  %8597 = vrot.lane.b32.xlu0 %v8446, 19
  %v8598 = vpop.permute.xlu0 %8597
  %8599 = vrot.lane.b32.xlu0 %v8447, 19
  %v8600 = vpop.permute.xlu0 %8599
  %8601 = vrot.lane.b32.xlu0 %v8438, 19
  %v8602 = vpop.permute.xlu0 %8601
  %8603 = vrot.lane.b32.xlu0 %v8448, 19
  %v8604 = vpop.permute.xlu0 %8603
  %8605 = vrot.lane.b32.xlu0 %v8449, 19
  %v8606 = vpop.permute.xlu0 %8605
  %8607 = vrot.lane.b32.xlu0 %v8450, 19
  %v8608 = vpop.permute.xlu0 %8607
  %8609 = vrot.lane.b32.xlu0 %v8444, 19
  %v8610 = vpop.permute.xlu0 %8609
  %8611 = vrot.lane.b32.xlu0 %v8463, 19
  %v8612 = vpop.permute.xlu0 %8611
  %8613 = vrot.lane.b32.xlu0 %v8464, 19
  %v8614 = vpop.permute.xlu0 %8613
  %8615 = vrot.lane.b32.xlu0 %v8465, 19
  %v8616 = vpop.permute.xlu0 %8615
  %8617 = vrot.lane.b32.xlu0 %v8456, 19
  %v8618 = vpop.permute.xlu0 %8617
  %8619 = vrot.lane.b32.xlu0 %v8466, 19
  %v8620 = vpop.permute.xlu0 %8619
  %8621 = vrot.lane.b32.xlu0 %v8467, 19
  %v8622 = vpop.permute.xlu0 %8621
  %8623 = vrot.lane.b32.xlu0 %v8468, 19
  %v8624 = vpop.permute.xlu0 %8623
  %8625 = vrot.lane.b32.xlu0 %v8462, 19
  %v8626 = vpop.permute.xlu0 %8625
  %8627 = vrot.lane.b32.xlu0 %v8481, 19
  %v8628 = vpop.permute.xlu0 %8627
  %8629 = vrot.lane.b32.xlu0 %v8482, 19
  %v8630 = vpop.permute.xlu0 %8629
  %8631 = vrot.lane.b32.xlu0 %v8483, 19
  %v8632 = vpop.permute.xlu0 %8631
  %8633 = vrot.lane.b32.xlu0 %v8474, 19
  %v8634 = vpop.permute.xlu0 %8633
  %8635 = vrot.lane.b32.xlu0 %v8484, 19
  %v8636 = vpop.permute.xlu0 %8635
  %8637 = vrot.lane.b32.xlu0 %v8485, 19
  %v8638 = vpop.permute.xlu0 %8637
  %8639 = vrot.lane.b32.xlu0 %v8486, 19
  %v8640 = vpop.permute.xlu0 %8639
  %8641 = vrot.lane.b32.xlu0 %v8480, 19
  %v8642 = vpop.permute.xlu0 %8641
  %8643 = vrot.lane.b32.xlu0 %v8488, 19
  %v8644 = vpop.permute.xlu0 %8643
  %8645 = vrot.lane.b32.xlu0 %v8499, 19
  %v8646 = vpop.permute.xlu0 %8645
  %8647 = vrot.lane.b32.xlu0 %v8500, 19
  %v8648 = vpop.permute.xlu0 %8647
  %8649 = vrot.lane.b32.xlu0 %v8492, 19
  %v8650 = vpop.permute.xlu0 %8649
  %8651 = vrot.lane.b32.xlu0 %v8494, 19
  %v8652 = vpop.permute.xlu0 %8651
  %8653 = vrot.lane.b32.xlu0 %v8501, 19
  %v8654 = vpop.permute.xlu0 %8653
  %8655 = vrot.lane.b32.xlu0 %v8502, 19
  %v8656 = vpop.permute.xlu0 %8655
  %8657 = vrot.lane.b32.xlu0 %v8498, 19
  %v8658 = vpop.permute.xlu0 %8657
  %8659 = vrot.lane.b32.xlu0 %v8504, 19
  %v8660 = vpop.permute.xlu0 %8659
  %8661 = vrot.lane.b32.xlu0 %v8515, 19
  %v8662 = vpop.permute.xlu0 %8661
  %8663 = vrot.lane.b32.xlu0 %v8516, 19
  %v8664 = vpop.permute.xlu0 %8663
  %8665 = vrot.lane.b32.xlu0 %v8517, 19
  %v8666 = vpop.permute.xlu0 %8665
  %8667 = vrot.lane.b32.xlu0 %v8510, 19
  %v8668 = vpop.permute.xlu0 %8667
  %8669 = vrot.lane.b32.xlu0 %v8518, 19
  %v8670 = vpop.permute.xlu0 %8669
  %8671 = vrot.lane.b32.xlu0 %v8519, 19
  %v8672 = vpop.permute.xlu0 %8671
  %8673 = vrot.lane.b32.xlu0 %v8520, 19
  %v8674 = vpop.permute.xlu0 %8673
  %8675 = vrot.lane.b32.xlu0 %v8522, 19
  %v8676 = vpop.permute.xlu0 %8675
  %8677 = vrot.lane.b32.xlu0 %v8533, 19
  %v8678 = vpop.permute.xlu0 %8677
  %8679 = vrot.lane.b32.xlu0 %v8534, 19
  %v8680 = vpop.permute.xlu0 %8679
  %8681 = vrot.lane.b32.xlu0 %v8535, 19
  %v8682 = vpop.permute.xlu0 %8681
  %8683 = vrot.lane.b32.xlu0 %v8528, 19
  %v8684 = vpop.permute.xlu0 %8683
  %8685 = vrot.lane.b32.xlu0 %v8536, 19
  %v8686 = vpop.permute.xlu0 %8685
  %8687 = vrot.lane.b32.xlu0 %v8537, 19
  %v8688 = vpop.permute.xlu0 %8687
  %8689 = vrot.lane.b32.xlu0 %v8538, 19
  %v8690 = vpop.permute.xlu0 %8689
  %8691 = vrot.lane.b32.xlu0 %v8540, 19
  %v8692 = vpop.permute.xlu0 %8691
  %8693 = vrot.lane.b32.xlu0 %v8551, 19
  %v8694 = vpop.permute.xlu0 %8693
  %8695 = vrot.lane.b32.xlu0 %v8552, 19
  %v8696 = vpop.permute.xlu0 %8695
  %8697 = vrot.lane.b32.xlu0 %v8553, 19
  %v8698 = vpop.permute.xlu0 %8697
  %8699 = vrot.lane.b32.xlu0 %v8546, 19
  %v8700 = vpop.permute.xlu0 %8699
  %8701 = vrot.lane.b32.xlu0 %v8554, 19
  %v8702 = vpop.permute.xlu0 %8701
  %8703 = vrot.lane.b32.xlu0 %v8555, 19
  %v8704 = vpop.permute.xlu0 %8703
  %8705 = vrot.lane.b32.xlu0 %v8556, 19
  %v8706 = vpop.permute.xlu0 %8705
  %8707 = vrot.lane.b32.xlu0 %v8558, 19
  %v8708 = vpop.permute.xlu0 %8707
  %8709 = vrot.lane.b32.xlu0 %v8569, 19
  %v8710 = vpop.permute.xlu0 %8709
  %8711 = vrot.lane.b32.xlu0 %v8570, 19
  %v8712 = vpop.permute.xlu0 %8711
  %8713 = vrot.lane.b32.xlu0 %v8571, 19
  %v8714 = vpop.permute.xlu0 %8713
  %8715 = vrot.lane.b32.xlu0 %v8564, 19
  %v8716 = vpop.permute.xlu0 %8715
  %8717 = vrot.lane.b32.xlu0 %v8572, 19
  %v8718 = vpop.permute.xlu0 %8717
  %8719 = vrot.lane.b32.xlu0 %v8573, 19
  %v8720 = vpop.permute.xlu0 %8719
  %8721 = vrot.lane.b32.xlu0 %v8574, 19
  %v8722 = vpop.permute.xlu0 %8721
  %v8723 = vsel %vm1009, %v760, %v8584
  %v8724 = vsel %vm1009, %v8584, %v8586
  %v8725 = vsel %vm1009, %v8586, %v8588
  %v8726 = vsel %vm1009, %v760, %v8590
  %v8727 = vsel %vm1009, %v8590, %v8592
  %v8728 = vsel %vm1009, %v8592, %v8594
  %v8729 = vsel %vm1009, %v8596, %v8598
  %v8730 = vsel %vm1009, %v8598, %v8600
  %v8731 = vsel %vm1009, %v8600, %v8602
  %v8732 = vsel %vm1009, %v8604, %v8606
  %v8733 = vsel %vm1009, %v8606, %v8608
  %v8734 = vsel %vm1009, %v8608, %v8610
  %v8735 = vsel %vm1009, %v8612, %v8614
  %v8736 = vsel %vm1009, %v8614, %v8616
  %v8737 = vsel %vm1009, %v8616, %v8618
  %v8738 = vsel %vm1009, %v8620, %v8622
  %v8739 = vsel %vm1009, %v8622, %v8624
  %v8740 = vsel %vm1009, %v8624, %v8626
  %v8741 = vsel %vm1009, %v8628, %v8630
  %v8742 = vsel %vm1009, %v8630, %v8632
  %v8743 = vsel %vm1009, %v8632, %v8634
  %v8744 = vsel %vm1009, %v8636, %v8638
  %v8745 = vsel %vm1009, %v8638, %v8640
  %v8746 = vsel %vm1009, %v8640, %v8642
  %v8747 = vsel %vm1009, %v8644, %v8646
  %v8748 = vsel %vm1009, %v8646, %v8648
  %v8749 = vsel %vm1009, %v8648, %v8650
  %v8750 = vsel %vm1009, %v8652, %v8654
  %v8751 = vsel %vm1009, %v8654, %v8656
  %v8752 = vsel %vm1009, %v8656, %v8658
  %v8753 = vsel %vm1009, %v8660, %v8662
  %v8754 = vsel %vm1009, %v8662, %v8664
  %v8755 = vsel %vm1009, %v8664, %v8666
  %v8756 = vsel %vm1009, %v8668, %v8670
  %v8757 = vsel %vm1009, %v8670, %v8672
  %v8758 = vsel %vm1009, %v8672, %v8674
  %v8759 = vsel %vm1009, %v8676, %v8678
  %v8760 = vsel %vm1009, %v8678, %v8680
  %v8761 = vsel %vm1009, %v8680, %v8682
  %v8762 = vsel %vm1009, %v8684, %v8686
  %v8763 = vsel %vm1009, %v8686, %v8688
  %v8764 = vsel %vm1009, %v8688, %v8690
  %v8765 = vsel %vm1009, %v8692, %v8694
  %v8766 = vsel %vm1009, %v8694, %v8696
  %v8767 = vsel %vm1009, %v8696, %v8698
  %v8768 = vsel %vm1009, %v8700, %v8702
  %v8769 = vsel %vm1009, %v8702, %v8704
  %v8770 = vsel %vm1009, %v8704, %v8706
  %v8771 = vsel %vm1009, %v8708, %v8710
  %v8772 = vsel %vm1009, %v8710, %v8712
  %v8773 = vsel %vm1009, %v8712, %v8714
  %v8774 = vsel %vm1009, %v8716, %v8718
  %v8775 = vsel %vm1009, %v8718, %v8720
  %v8776 = vsel %vm1009, %v8720, %v8722
  %v8832 = vsel %vm1226, %v8576, 0
  %8834 = vmatprep.subr.mxu0 %v8769
  %8835 = vmatpush1.msra.mxu0 %v8768
  %8836 = vmatprep.subr.mxu0 %v8766
  %8837 = vmatpush1.msra.mxu0 %v8765
  %8838 = vmatprep.subr.mxu0 %v8763
  %8839 = vmatpush1.msra.mxu0 %v8762
  %8840 = vmatprep.subr.mxu0 %v8760
  %8841 = vmatpush1.msra.mxu0 %v8759
  %8842 = vmatprep.subr.mxu0 %v8757
  %8843 = vmatpush1.msra.mxu0 %v8756
  %8844 = vmatprep.subr.mxu0 %v8754
  %8845 = vmatpush1.msra.mxu0 %v8753
  %8846 = vmatprep.subr.mxu0 %v8751
  %8847 = vmatpush1.msra.mxu0 %v8750
  %8848 = vmatprep.subr.mxu0 %v8748
  %8849 = vmatpush1.msra.mxu0 %v8747
  %8850 = vmatprep.subr.mxu0 %v8745
  %8851 = vmatpush1.msra.mxu0 %v8744
  %8852 = vmatprep.subr.mxu0 %v8742
  %8853 = vmatpush1.msra.mxu0 %v8741
  %8854 = vmatprep.subr.mxu0 %v8739
  %8855 = vmatpush1.msra.mxu0 %v8738
  %8856 = vmatprep.subr.mxu0 %v8736
  %8857 = vmatpush1.msra.mxu0 %v8735
  %8858 = vmatprep.subr.mxu0 %v8733
  %8859 = vmatpush1.msra.mxu0 %v8732
  %8860 = vmatprep.subr.mxu0 %v8730
  %8861 = vmatpush1.msra.mxu0 %v8729
  %8862 = vmatprep.subr.mxu0 %v8727
  %8863 = vmatpush1.msra.mxu0 %v8726
  %8864 = vmatprep.subr.mxu0 %v8724
  %8865 = vmatpush1.msra.mxu0 %v8723
  %8866 = vmatprep.subr.mxu0 0.0
  %8867 = vmatpush2.msra.mxu0 0.0
  %8868 = vmatprep.subr.mxu0 0.0
  %8869 = vmatpush2.msra.mxu0 0.0
  %8870 = vmatprep.subr.mxu0 0.0
  %8871 = vmatpush2.msra.mxu0 0.0
  %8872 = vmatprep.subr.mxu0 0.0
  %8873 = vmatpush2.msra.mxu0 0.0
  %8874 = vmatprep.subr.mxu0 0.0
  %8875 = vmatpush2.msra.mxu0 0.0
  %8876 = vmatprep.subr.mxu0 0.0
  %8877 = vmatpush2.msra.mxu0 0.0
  %8878 = vmatprep.subr.mxu0 0.0
  %8879 = vmatpush2.msra.mxu0 0.0
  %8880 = vmatprep.subr.mxu0 0.0
  %8881 = vmatpush2.msra.mxu0 0.0
  %8882 = vmatprep.subr.mxu0 0.0
  %8883 = vmatpush2.msra.mxu0 0.0
  %8884 = vmatprep.subr.mxu0 0.0
  %8885 = vmatpush2.msra.mxu0 0.0
  %8886 = vmatprep.subr.mxu0 0.0
  %8887 = vmatpush2.msra.mxu0 0.0
  %8888 = vmatprep.subr.mxu0 0.0
  %8889 = vmatpush2.msra.mxu0 0.0
  %8890 = vmatprep.subr.mxu0 0.0
  %8891 = vmatpush2.msra.mxu0 0.0
  %8892 = vmatprep.subr.mxu0 0.0
  %8893 = vmatpush2.msra.mxu0 0.0
  %8894 = vmatprep.subr.mxu0 %v8775
  %8895 = vmatpush2.msra.mxu0 %v8774
  %8896 = vmatprep.subr.mxu0 %v8772
  %8897 = vmatpush2.msra.mxu0 %v8771
  %8898 = vmatprep.mubr.f32.mxu0 %v8832
  %8899 = vmatmul.mubr.f32.gmra.mxu0 %v8575
  %v8900 = vpop.f32.mrf.mxu0
  %v8901 = vadd.f32 %v8581, %v8900
  %v8902 = vpop.f32.mrf.mxu0
  %v8903 = vadd.f32 %v8581, %v8902
  %8904 = vdwg.mxu0
  %8905 = vmatprep.subr.mxu0 0.0
  %8906 = vmatpush1.msra.mxu0 %v8770
  %8907 = vmatprep.subr.mxu0 0.0
  %8908 = vmatpush1.msra.mxu0 %v8767
  %8909 = vmatprep.subr.mxu0 0.0
  %8910 = vmatpush1.msra.mxu0 %v8764
  %8911 = vmatprep.subr.mxu0 0.0
  %8912 = vmatpush1.msra.mxu0 %v8761
  %8913 = vmatprep.subr.mxu0 0.0
  %8914 = vmatpush1.msra.mxu0 %v8758
  %8915 = vmatprep.subr.mxu0 0.0
  %8916 = vmatpush1.msra.mxu0 %v8755
  %8917 = vmatprep.subr.mxu0 0.0
  %8918 = vmatpush1.msra.mxu0 %v8752
  %8919 = vmatprep.subr.mxu0 0.0
  %8920 = vmatpush1.msra.mxu0 %v8749
  %8921 = vmatprep.subr.mxu0 0.0
  %8922 = vmatpush1.msra.mxu0 %v8746
  %8923 = vmatprep.subr.mxu0 0.0
  %8924 = vmatpush1.msra.mxu0 %v8743
  %8925 = vmatprep.subr.mxu0 0.0
  %8926 = vmatpush1.msra.mxu0 %v8740
  %8927 = vmatprep.subr.mxu0 0.0
  %8928 = vmatpush1.msra.mxu0 %v8737
  %8929 = vmatprep.subr.mxu0 0.0
  %8930 = vmatpush1.msra.mxu0 %v8734
  %8931 = vmatprep.subr.mxu0 0.0
  %8932 = vmatpush1.msra.mxu0 %v8731
  %8933 = vmatprep.subr.mxu0 0.0
  %8934 = vmatpush1.msra.mxu0 %v8728
  %8935 = vmatprep.subr.mxu0 0.0
  %8936 = vmatpush1.msra.mxu0 %v8725
  %8937 = vmatprep.subr.mxu0 0.0
  %8938 = vmatpush2.msra.mxu0 0.0
  %8939 = vmatprep.subr.mxu0 0.0
  %8940 = vmatpush2.msra.mxu0 0.0
  %8941 = vmatprep.subr.mxu0 0.0
  %8942 = vmatpush2.msra.mxu0 0.0
  %8943 = vmatprep.subr.mxu0 0.0
  %8944 = vmatpush2.msra.mxu0 0.0
  %8945 = vmatprep.subr.mxu0 0.0
  %8946 = vmatpush2.msra.mxu0 0.0
  %8947 = vmatprep.subr.mxu0 0.0
  %8948 = vmatpush2.msra.mxu0 0.0
  %8949 = vmatprep.subr.mxu0 0.0
  %8950 = vmatpush2.msra.mxu0 0.0
  %8951 = vmatprep.subr.mxu0 0.0
  %8952 = vmatpush2.msra.mxu0 0.0
  %8953 = vmatprep.subr.mxu0 0.0
  %8954 = vmatpush2.msra.mxu0 0.0
  %8955 = vmatprep.subr.mxu0 0.0
  %8956 = vmatpush2.msra.mxu0 0.0
  %8957 = vmatprep.subr.mxu0 0.0
  %8958 = vmatpush2.msra.mxu0 0.0
  %8959 = vmatprep.subr.mxu0 0.0
  %8960 = vmatpush2.msra.mxu0 0.0
  %8961 = vmatprep.subr.mxu0 0.0
  %8962 = vmatpush2.msra.mxu0 0.0
  %8963 = vmatprep.subr.mxu0 0.0
  %8964 = vmatpush2.msra.mxu0 0.0
  %8965 = vmatprep.subr.mxu0 0.0
  %8966 = vmatpush2.msra.mxu0 %v8776
  %8967 = vmatprep.subr.mxu0 0.0
  %8968 = vmatpush2.msra.mxu0 %v8773
  %8969 = vmatprep.mubr.f32.mxu0 %v8832
  %8970 = vmatmul.mubr.f32.gmra.mxu0 %v8575
  %v8971 = vpop.f32.mrf.mxu0
  %v8972 = vadd.f32 %v8581, %v8971
  %v8973 = vpop.f32.mrf.mxu0
  %8974 = vdwg.mxu0
  %v8975 = vmax.f32 %v8901, 0.0
  %v8976 = vmax.f32 %v8903, 0.0
  %v8977 = vmax.f32 %v8972, 0.0
  %v8978 = vmul.f32 %v8975, %v367
  %v8979 = vmul.f32 %v8976, %v371
  %v8980 = vmul.f32 %v8977, %v375
  %8984 = vrot.lane.b32.xlu0 %v8978, 127
  %v8985 = vpop.permute.xlu0 %8984
  %8986 = vrot.lane.b32.xlu0 %v8979, 127
  %v8987 = vpop.permute.xlu0 %8986
  %8988 = vrot.lane.b32.xlu0 %v8980, 127
  %v8989 = vpop.permute.xlu0 %8988
  %v8990 = vsel %vm445, %v420, %v8985
  %v8991 = vsel %vm445, %v8985, %v8987
  %v8992 = vsel %vm445, %v8987, %v8989
  %8993 = vrot.lane.b32.xlu0 %v8978, 126
  %v8994 = vpop.permute.xlu0 %8993
  %8995 = vrot.lane.b32.xlu0 %v8979, 126
  %v8996 = vpop.permute.xlu0 %8995
  %8997 = vrot.lane.b32.xlu0 %v8980, 126
  %v8998 = vpop.permute.xlu0 %8997
  %v8999 = vsel %vm484, %v459, %v8994
  %v9000 = vsel %vm484, %v8994, %v8996
  %v9001 = vsel %vm484, %v8996, %v8998
  %9002 = vrot.lane.b32.xlu0 %v8978, 110
  %v9003 = vpop.permute.xlu0 %9002
  %9004 = vrot.lane.b32.xlu0 %v8979, 110
  %v9005 = vpop.permute.xlu0 %9004
  %9006 = vrot.lane.b32.xlu0 %v8980, 110
  %v9007 = vpop.permute.xlu0 %9006
  %v9008 = vsel %vm523, %v498, %v9003
  %v9009 = vsel %vm523, %v9003, %v9005
  %v9010 = vsel %vm523, %v9005, %v9007
  %9011 = vrot.lane.b32.xlu0 %v8978, 109
  %v9012 = vpop.permute.xlu0 %9011
  %9013 = vrot.lane.b32.xlu0 %v8979, 109
  %v9014 = vpop.permute.xlu0 %9013
  %9015 = vrot.lane.b32.xlu0 %v8980, 109
  %v9016 = vpop.permute.xlu0 %9015
  %v9017 = vsel %vm560, %v9012, %v9014
  %v9018 = vsel %vm560, %v9014, %v9016
  %9019 = vrot.lane.b32.xlu0 %v8978, 108
  %v9020 = vpop.permute.xlu0 %9019
  %9021 = vrot.lane.b32.xlu0 %v8979, 108
  %v9022 = vpop.permute.xlu0 %9021
  %9023 = vrot.lane.b32.xlu0 %v8980, 108
  %v9024 = vpop.permute.xlu0 %9023
  %v9025 = vsel %vm597, %v9020, %v9022
  %v9026 = vsel %vm597, %v9022, %v9024
  %v9027 = vsel %vm597, %v9024, %v584
  %9028 = vrot.lane.b32.xlu0 %v8978, 92
  %v9029 = vpop.permute.xlu0 %9028
  %9030 = vrot.lane.b32.xlu0 %v8979, 92
  %v9031 = vpop.permute.xlu0 %9030
  %9032 = vrot.lane.b32.xlu0 %v8980, 92
  %v9033 = vpop.permute.xlu0 %9032
  %v9034 = vsel %vm636, %v9029, %v9031
  %v9035 = vsel %vm636, %v9031, %v9033
  %v9036 = vsel %vm636, %v9033, %v623
  %9037 = vrot.lane.b32.xlu0 %v8978, 91
  %v9038 = vpop.permute.xlu0 %9037
  %9039 = vrot.lane.b32.xlu0 %v8979, 91
  %v9040 = vpop.permute.xlu0 %9039
  %9041 = vrot.lane.b32.xlu0 %v8980, 91
  %v9042 = vpop.permute.xlu0 %9041
  %v9043 = vsel %vm675, %v9038, %v9040
  %v9044 = vsel %vm675, %v9040, %v9042
  %v9045 = vsel %vm675, %v9042, %v662
  %9046 = vrot.lane.b32.xlu0 %v8978, 90
  %v9047 = vpop.permute.xlu0 %9046
  %9048 = vrot.lane.b32.xlu0 %v8979, 90
  %v9049 = vpop.permute.xlu0 %9048
  %9050 = vrot.lane.b32.xlu0 %v8980, 90
  %v9051 = vpop.permute.xlu0 %9050
  %v9052 = vsel %vm714, %v9047, %v9049
  %v9053 = vsel %vm714, %v9049, %v9051
  %v9054 = vsel %vm714, %v9051, %v701
  %v9055 = vld [vmem:[%s18] sm:$0x1]
  %v9056 = vld [vmem:[#allocation2] sm:$0x1]
  %9058 = vset.pattern.permute.xlu0 0
  %9059 = vperm.xlu0 %9058, %v9056
  %v9060 = vpop.permute.xlu0 %9059
  %v9062 = vlaneseq
  %v9063 = vshrl.u32 %v9062, 7
  %v9064 = vsub.s32 0, %v9063
  %v9065 = vrot.slane %v9060, %v9064
  %9066 = vrot.lane.b32.xlu0 %v8978, 19
  %v9067 = vpop.permute.xlu0 %9066
  %9068 = vrot.lane.b32.xlu0 %v8979, 19
  %v9069 = vpop.permute.xlu0 %9068
  %9070 = vrot.lane.b32.xlu0 %v8980, 19
  %v9071 = vpop.permute.xlu0 %9070
  %9072 = vrot.lane.b32.xlu0 %v8990, 19
  %v9073 = vpop.permute.xlu0 %9072
  %9074 = vrot.lane.b32.xlu0 %v8991, 19
  %v9075 = vpop.permute.xlu0 %9074
  %9076 = vrot.lane.b32.xlu0 %v8992, 19
  %v9077 = vpop.permute.xlu0 %9076
  %9078 = vrot.lane.b32.xlu0 %v8989, 19
  %v9079 = vpop.permute.xlu0 %9078
  %9080 = vrot.lane.b32.xlu0 %v8999, 19
  %v9081 = vpop.permute.xlu0 %9080
  %9082 = vrot.lane.b32.xlu0 %v9000, 19
  %v9083 = vpop.permute.xlu0 %9082
  %9084 = vrot.lane.b32.xlu0 %v9001, 19
  %v9085 = vpop.permute.xlu0 %9084
  %9086 = vrot.lane.b32.xlu0 %v8998, 19
  %v9087 = vpop.permute.xlu0 %9086
  %9088 = vrot.lane.b32.xlu0 %v9008, 19
  %v9089 = vpop.permute.xlu0 %9088
  %9090 = vrot.lane.b32.xlu0 %v9009, 19
  %v9091 = vpop.permute.xlu0 %9090
  %9092 = vrot.lane.b32.xlu0 %v9010, 19
  %v9093 = vpop.permute.xlu0 %9092
  %9094 = vrot.lane.b32.xlu0 %v9007, 19
  %v9095 = vpop.permute.xlu0 %9094
  %9096 = vrot.lane.b32.xlu0 %v9012, 19
  %v9097 = vpop.permute.xlu0 %9096
  %9098 = vrot.lane.b32.xlu0 %v9017, 19
  %v9099 = vpop.permute.xlu0 %9098
  %9100 = vrot.lane.b32.xlu0 %v9018, 19
  %v9101 = vpop.permute.xlu0 %9100
  %9102 = vrot.lane.b32.xlu0 %v9016, 19
  %v9103 = vpop.permute.xlu0 %9102
  %9104 = vrot.lane.b32.xlu0 %v9020, 19
  %v9105 = vpop.permute.xlu0 %9104
  %9106 = vrot.lane.b32.xlu0 %v9025, 19
  %v9107 = vpop.permute.xlu0 %9106
  %9108 = vrot.lane.b32.xlu0 %v9026, 19
  %v9109 = vpop.permute.xlu0 %9108
  %9110 = vrot.lane.b32.xlu0 %v9027, 19
  %v9111 = vpop.permute.xlu0 %9110
  %9112 = vrot.lane.b32.xlu0 %v9029, 19
  %v9113 = vpop.permute.xlu0 %9112
  %9114 = vrot.lane.b32.xlu0 %v9034, 19
  %v9115 = vpop.permute.xlu0 %9114
  %9116 = vrot.lane.b32.xlu0 %v9035, 19
  %v9117 = vpop.permute.xlu0 %9116
  %9118 = vrot.lane.b32.xlu0 %v9036, 19
  %v9119 = vpop.permute.xlu0 %9118
  %9120 = vrot.lane.b32.xlu0 %v9038, 19
  %v9121 = vpop.permute.xlu0 %9120
  %9122 = vrot.lane.b32.xlu0 %v9043, 19
  %v9123 = vpop.permute.xlu0 %9122
  %9124 = vrot.lane.b32.xlu0 %v9044, 19
  %v9125 = vpop.permute.xlu0 %9124
  %9126 = vrot.lane.b32.xlu0 %v9045, 19
  %v9127 = vpop.permute.xlu0 %9126
  %9128 = vrot.lane.b32.xlu0 %v9047, 19
  %v9129 = vpop.permute.xlu0 %9128
  %9130 = vrot.lane.b32.xlu0 %v9052, 19
  %v9131 = vpop.permute.xlu0 %9130
  %9132 = vrot.lane.b32.xlu0 %v9053, 19
  %v9133 = vpop.permute.xlu0 %9132
  %9134 = vrot.lane.b32.xlu0 %v9054, 19
  %v9135 = vpop.permute.xlu0 %9134
  %v9136 = vsel %vm1009, %v760, %v9067
  %v9137 = vsel %vm1009, %v9067, %v9069
  %v9138 = vsel %vm1009, %v9069, %v9071
  %v9139 = vsel %vm1009, %v9073, %v9075
  %v9140 = vsel %vm1009, %v9075, %v9077
  %v9141 = vsel %vm1009, %v9077, %v9079
  %v9142 = vsel %vm1009, %v9081, %v9083
  %v9143 = vsel %vm1009, %v9083, %v9085
  %v9144 = vsel %vm1009, %v9085, %v9087
  %v9145 = vsel %vm1009, %v9089, %v9091
  %v9146 = vsel %vm1009, %v9091, %v9093
  %v9147 = vsel %vm1009, %v9093, %v9095
  %v9148 = vsel %vm1009, %v9097, %v9099
  %v9149 = vsel %vm1009, %v9099, %v9101
  %v9150 = vsel %vm1009, %v9101, %v9103
  %v9151 = vsel %vm1009, %v9105, %v9107
  %v9152 = vsel %vm1009, %v9107, %v9109
  %v9153 = vsel %vm1009, %v9109, %v9111
  %v9154 = vsel %vm1009, %v9113, %v9115
  %v9155 = vsel %vm1009, %v9115, %v9117
  %v9156 = vsel %vm1009, %v9117, %v9119
  %v9157 = vsel %vm1009, %v9121, %v9123
  %v9158 = vsel %vm1009, %v9123, %v9125
  %v9159 = vsel %vm1009, %v9125, %v9127
  %v9160 = vsel %vm1009, %v9129, %v9131
  %v9161 = vsel %vm1009, %v9131, %v9133
  %v9162 = vsel %vm1009, %v9133, %v9135
  %v9191 = vsel %vm2298, %v9055, 0
  %9193 = vmatprep.subr.mxu0 0.0
  %9194 = vmatpush1.msra.mxu0 0.0
  %9195 = vmatprep.subr.mxu0 0.0
  %9196 = vmatpush1.msra.mxu0 0.0
  %9197 = vmatprep.subr.mxu0 0.0
  %9198 = vmatpush1.msra.mxu0 0.0
  %9199 = vmatprep.subr.mxu0 0.0
  %9200 = vmatpush1.msra.mxu0 0.0
  %9201 = vmatprep.subr.mxu0 0.0
  %9202 = vmatpush1.msra.mxu0 0.0
  %9203 = vmatprep.subr.mxu0 0.0
  %9204 = vmatpush1.msra.mxu0 0.0
  %9205 = vmatprep.subr.mxu0 0.0
  %9206 = vmatpush1.msra.mxu0 0.0
  %9207 = vmatprep.subr.mxu0 %v9161
  %9208 = vmatpush1.msra.mxu0 %v9160
  %9209 = vmatprep.subr.mxu0 %v9158
  %9210 = vmatpush1.msra.mxu0 %v9157
  %9211 = vmatprep.subr.mxu0 %v9155
  %9212 = vmatpush1.msra.mxu0 %v9154
  %9213 = vmatprep.subr.mxu0 %v9152
  %9214 = vmatpush1.msra.mxu0 %v9151
  %9215 = vmatprep.subr.mxu0 %v9149
  %9216 = vmatpush1.msra.mxu0 %v9148
  %9217 = vmatprep.subr.mxu0 %v9146
  %9218 = vmatpush1.msra.mxu0 %v9145
  %9219 = vmatprep.subr.mxu0 %v9143
  %9220 = vmatpush1.msra.mxu0 %v9142
  %9221 = vmatprep.subr.mxu0 %v9140
  %9222 = vmatpush1.msra.mxu0 %v9139
  %9223 = vmatprep.subr.mxu0 %v9137
  %9224 = vmatpush1.msra.mxu0 %v9136
  %9225 = vmatprep.subr.mxu0 0.0
  %9226 = vmatpush2.msra.mxu0 0.0
  %9227 = vmatprep.subr.mxu0 0.0
  %9228 = vmatpush2.msra.mxu0 0.0
  %9229 = vmatprep.subr.mxu0 0.0
  %9230 = vmatpush2.msra.mxu0 0.0
  %9231 = vmatprep.subr.mxu0 0.0
  %9232 = vmatpush2.msra.mxu0 0.0
  %9233 = vmatprep.subr.mxu0 0.0
  %9234 = vmatpush2.msra.mxu0 0.0
  %9235 = vmatprep.subr.mxu0 0.0
  %9236 = vmatpush2.msra.mxu0 0.0
  %9237 = vmatprep.subr.mxu0 0.0
  %9238 = vmatpush2.msra.mxu0 0.0
  %9239 = vmatprep.subr.mxu0 0.0
  %9240 = vmatpush2.msra.mxu0 0.0
  %9241 = vmatprep.subr.mxu0 0.0
  %9242 = vmatpush2.msra.mxu0 0.0
  %9243 = vmatprep.subr.mxu0 0.0
  %9244 = vmatpush2.msra.mxu0 0.0
  %9245 = vmatprep.subr.mxu0 0.0
  %9246 = vmatpush2.msra.mxu0 0.0
  %9247 = vmatprep.subr.mxu0 0.0
  %9248 = vmatpush2.msra.mxu0 0.0
  %9249 = vmatprep.subr.mxu0 0.0
  %9250 = vmatpush2.msra.mxu0 0.0
  %9251 = vmatprep.subr.mxu0 0.0
  %9252 = vmatpush2.msra.mxu0 0.0
  %9253 = vmatprep.subr.mxu0 0.0
  %9254 = vmatpush2.msra.mxu0 0.0
  %9255 = vmatprep.subr.mxu0 0.0
  %9256 = vmatpush2.msra.mxu0 0.0
  %9257 = vmatprep.mubr.f32.mxu0 0.0
  %9258 = vmatmul.mubr.f32.gmra.mxu0 %v9191
  %v9259 = vpop.f32.mrf.mxu0
  %v9260 = vadd.f32 %v9065, %v9259
  %v9261 = vpop.f32.mrf.mxu0
  %v9262 = vadd.f32 %v9065, %v9261
  %9263 = vdwg.mxu0
  %9264 = vmatprep.subr.mxu0 0.0
  %9265 = vmatpush1.msra.mxu0 0.0
  %9266 = vmatprep.subr.mxu0 0.0
  %9267 = vmatpush1.msra.mxu0 0.0
  %9268 = vmatprep.subr.mxu0 0.0
  %9269 = vmatpush1.msra.mxu0 0.0
  %9270 = vmatprep.subr.mxu0 0.0
  %9271 = vmatpush1.msra.mxu0 0.0
  %9272 = vmatprep.subr.mxu0 0.0
  %9273 = vmatpush1.msra.mxu0 0.0
  %9274 = vmatprep.subr.mxu0 0.0
  %9275 = vmatpush1.msra.mxu0 0.0
  %9276 = vmatprep.subr.mxu0 0.0
  %9277 = vmatpush1.msra.mxu0 0.0
  %9278 = vmatprep.subr.mxu0 0.0
  %9279 = vmatpush1.msra.mxu0 %v9162
  %9280 = vmatprep.subr.mxu0 0.0
  %9281 = vmatpush1.msra.mxu0 %v9159
  %9282 = vmatprep.subr.mxu0 0.0
  %9283 = vmatpush1.msra.mxu0 %v9156
  %9284 = vmatprep.subr.mxu0 0.0
  %9285 = vmatpush1.msra.mxu0 %v9153
  %9286 = vmatprep.subr.mxu0 0.0
  %9287 = vmatpush1.msra.mxu0 %v9150
  %9288 = vmatprep.subr.mxu0 0.0
  %9289 = vmatpush1.msra.mxu0 %v9147
  %9290 = vmatprep.subr.mxu0 0.0
  %9291 = vmatpush1.msra.mxu0 %v9144
  %9292 = vmatprep.subr.mxu0 0.0
  %9293 = vmatpush1.msra.mxu0 %v9141
  %9294 = vmatprep.subr.mxu0 0.0
  %9295 = vmatpush1.msra.mxu0 %v9138
  %9296 = vmatprep.subr.mxu0 0.0
  %9297 = vmatpush2.msra.mxu0 0.0
  %9298 = vmatprep.subr.mxu0 0.0
  %9299 = vmatpush2.msra.mxu0 0.0
  %9300 = vmatprep.subr.mxu0 0.0
  %9301 = vmatpush2.msra.mxu0 0.0
  %9302 = vmatprep.subr.mxu0 0.0
  %9303 = vmatpush2.msra.mxu0 0.0
  %9304 = vmatprep.subr.mxu0 0.0
  %9305 = vmatpush2.msra.mxu0 0.0
  %9306 = vmatprep.subr.mxu0 0.0
  %9307 = vmatpush2.msra.mxu0 0.0
  %9308 = vmatprep.subr.mxu0 0.0
  %9309 = vmatpush2.msra.mxu0 0.0
  %9310 = vmatprep.subr.mxu0 0.0
  %9311 = vmatpush2.msra.mxu0 0.0
  %9312 = vmatprep.subr.mxu0 0.0
  %9313 = vmatpush2.msra.mxu0 0.0
  %9314 = vmatprep.subr.mxu0 0.0
  %9315 = vmatpush2.msra.mxu0 0.0
  %9316 = vmatprep.subr.mxu0 0.0
  %9317 = vmatpush2.msra.mxu0 0.0
  %9318 = vmatprep.subr.mxu0 0.0
  %9319 = vmatpush2.msra.mxu0 0.0
  %9320 = vmatprep.subr.mxu0 0.0
  %9321 = vmatpush2.msra.mxu0 0.0
  %9322 = vmatprep.subr.mxu0 0.0
  %9323 = vmatpush2.msra.mxu0 0.0
  %9324 = vmatprep.subr.mxu0 0.0
  %9325 = vmatpush2.msra.mxu0 0.0
  %9326 = vmatprep.subr.mxu0 0.0
  %9327 = vmatpush2.msra.mxu0 0.0
  %9328 = vmatprep.mubr.f32.mxu0 0.0
  %9329 = vmatmul.mubr.f32.gmra.mxu0 %v9191
  %v9330 = vpop.f32.mrf.mxu0
  %v9331 = vadd.f32 %v9065, %v9330
  %v9332 = vpop.f32.mrf.mxu0
  %9333 = vdwg.mxu0
  %v9337 = vcombine.low %v9260, %v9262
  %v9339 = vunpack.c.l.s4 1966171168
  %v9340 = vunpack.c.0.s8 %v9339
  %v9341 = vlaneseq
  %v9342 = vshrl.u32 %v9341, 7
  %v9343 = vsub.s32 %v9340, %v9342
  %v9344 = vrot.slane %v9337, %v9343
  %v9346 = vunpack.c.l.s4 1966171168
  %v9347 = vunpack.c.0.s8 %v9346
  %v9348 = vlaneseq
  %v9349 = vshrl.u32 %v9348, 7
  %v9350 = vsub.s32 %v9347, %v9349
  %v9351 = vrot.slane %v9331, %v9350
  %v9352 = vcombine.low %v9344, %v9351
  %v9354 = vunpack.c.l.s4 1966171168
  %v9355 = vunpack.c.0.s8 %v9354
  %v9356 = vlaneseq
  %v9357 = vshrl.u32 %v9356, 7
  %v9358 = vsub.s32 %v9355, %v9357
  %v9359 = vrot.slane %v9352, %v9358
  %v9361 = vlaneseq
  %vm9362 = vcmp.ge.s32.totalorder %v9361, 0
  %vm9363 = vcmp.lt.s32.totalorder %v9361, 384
  %vm9364 = vmand %vm9362, %vm9363
  %9365 = vst.msk [vmem:[%s20] sm:$0x7] %vm9364, %v9359
  // Predicated region
  $region82: #{generative_net.1} parent=0 // pred_check
    _
  $region83: #{generative_net.1} parent=0 // pred_check_branch
    %9367 = sbr.rel (0) target = $region85
  $region84: #{generative_net.1} parent=0 // pred_region
    _
  $region85: #{generative_net.1} parent=0 // pred_fallthru
    _
  // Predicated region
  $region86: #{generative_net.1} parent=0 // pred_check
    _
  $region87: #{generative_net.1} parent=0 // pred_check_branch
    %9369 = sbr.rel (0) target = $region89
  $region88: #{generative_net.1} parent=0 // pred_region
    _
  $region89: #{generative_net.1} parent=0 // pred_fallthru
    _

</llo_original>
